<compile_context>
chip_gen: v7x
topology: tpu7x:2x2x1
jax: 0.10.0
libtpu: 0.0.40
codegen_flags: <defaults>
</compile_context>

<pallas_src>
import numpy as np
import jax
import jax.numpy as jnp
from jax.experimental import pallas as pl
from jax.experimental.pallas import tpu as pltpu


TB = 32                  # samples per grid step (32..64 recommended)
M1 = TB * 16 - 4         # conv1 matmul rows: 16 pooled-row slots/sample (12 valid),
                         #   last 4 rows dropped so stride-2 reads stay in bounds
M2 = TB * 8              # conv2 matmul rows: 8 pooled-row slots/sample (4 valid)
P1_ROWS = TB * 16 + 8    # conv1-output scratch rows (padded tail is zeroed)


# ------------------------------ fused kernel --------------------------------

def _cnn_kernel(x_ref, w1_ref, b1_ref, w2_ref, b2_ref,
                wfc1_ref, bfc1_ref, wfc2_ref, bfc2_ref,
                out_ref, p1_ref, p2_ref):
    f32, bf16 = jnp.float32, jnp.bfloat16

    # ---- conv1 + bias + relu + 2x2 maxpool: one MXU matmul ------------------
    # LHS row r = b*16 + ip holds x rows (b*32 + 2*ip + o) for sublane offsets
    # o = 0..5 side by side (six 32-lane K blocks).  Output lane block
    # q = 2*ph + pw is conv(row 2*ip+ph, col 2*jp+pw) laid out as jp*10 + co,
    # so the max over the 4 blocks is exactly the 2x2 max-pool.
    lhs1 = jnp.concatenate(
        [x_ref[pl.ds(o, M1, stride=2), :] for o in range(6)], axis=1)  # (M1,192)
    y1 = jnp.dot(lhs1.astype(bf16), w1_ref[...], preferred_element_type=f32)
    a1 = jnp.maximum(jnp.maximum(y1[:, 0:128], y1[:, 128:256]),
                     jnp.maximum(y1[:, 256:384], y1[:, 384:512]))
    p1_ref[pl.ds(0, M1), :] = jnp.maximum(a1 + b1_ref[...], 0.0)      # (M1,128)
    # Zero the scratch tail so the strided conv2 reads below never see junk.
    p1_ref[pl.ds(M1, P1_ROWS - M1), :] = jnp.zeros((P1_ROWS - M1, 128), f32)

    # ---- conv2 + bias + relu + 2x2 maxpool: one MXU matmul ------------------
    lhs2 = jnp.concatenate(
        [p1_ref[pl.ds(o, M2, stride=2), :] for o in range(6)], axis=1)  # (M2,768)
    y2 = jnp.dot(lhs2.astype(bf16), w2_ref[...], preferred_element_type=f32)
    a2 = jnp.maximum(jnp.maximum(y2[:, 0:128], y2[:, 128:256]),
                     jnp.maximum(y2[:, 256:384], y2[:, 384:512]))
    p2_ref[...] = jnp.maximum(a2 + b2_ref[...], 0.0)                   # (M2,128)

    # ---- fc1 + relu (Dropout2d is identity in eval mode) --------------------
    # Row b of the LHS gathers the 4 valid pooled rows of sample b (stride-8
    # reads of the p2 scratch) into four 128-lane blocks -> one K=512 matmul.
    lhs3 = jnp.concatenate(
        [p2_ref[pl.ds(hp, TB, stride=8), :] for hp in range(4)], axis=1)  # (TB,512)
    z1 = jnp.dot(lhs3.astype(bf16), wfc1_ref[...], preferred_element_type=f32)
    h1 = jnp.maximum(z1 + bfc1_ref[...], 0.0)                          # (TB,64)

    # ---- fc2 + log_softmax (padded classes carry a -1e30 bias) --------------
    z2 = jnp.dot(h1.astype(bf16), wfc2_ref[...], preferred_element_type=f32)
    z2 = z2 + bfc2_ref[...]
    m = jnp.max(z2, axis=-1, keepdims=True)
    lse = jnp.log(jnp.sum(jnp.exp(z2 - m), axis=-1, keepdims=True)) + m
    out_ref[...] = z2 - lse                                            # (TB,128)


# ------------------------------ weight prep ----------------------------------

def prepare_params(params):
    """One-time re-layout of torch-format weights into kernel-format slabs."""
    w1 = np.asarray(params["conv1_w"], np.float32)   # (10, 1, 5, 5)
    b1 = np.asarray(params["conv1_b"], np.float32)   # (10,)
    w2 = np.asarray(params["conv2_w"], np.float32)   # (20, 10, 5, 5)
    b2 = np.asarray(params["conv2_b"], np.float32)   # (20,)
    f1w = np.asarray(params["fc1_w"], np.float32)    # (50, 320)
    f1b = np.asarray(params["fc1_b"], np.float32)    # (50,)
    f2w = np.asarray(params["fc2_w"], np.float32)    # (37, 50)
    f2b = np.asarray(params["fc2_b"], np.float32)    # (37,)

    # conv1: K block o (32 lanes) = stride-2 input-row slab at sublane offset o;
    # output block q = 2*ph+pw holds conv(row 2ip+ph, col 2jp+pw) as jp*10+co.
    W1 = np.zeros((192, 512), np.float32)
    for ph in range(2):
        for pw in range(2):
            q = 2 * ph + pw
            for dh in range(5):
                o = ph + dh
                for dw in range(5):
                    for jp in range(12):
                        jj = 2 * jp + pw + dw
                        W1[o * 32 + jj,
                           q * 128 + jp * 10:q * 128 + jp * 10 + 10] = w1[:, 0, dh, dw]
    b1p = np.zeros((1, 128), np.float32)
    for jp in range(12):
        b1p[0, jp * 10:jp * 10 + 10] = b1

    # conv2: K block o (128 lanes, layout jp*10+ci) = stride-2 pooled-conv1 row
    # slab at offset o; output block q holds conv2(row 2hp+ph, col 2jp2+pw).
    W2 = np.zeros((768, 512), np.float32)
    for ph in range(2):
        for pw in range(2):
            q = 2 * ph + pw
            for dh in range(5):
                o = ph + dh
                for dw in range(5):
                    blk = w2[:, :, dh, dw].T                        # (ci=10, co=20)
                    for jp2 in range(4):
                        jj = 2 * jp2 + pw + dw
                        W2[o * 128 + jj * 10:o * 128 + jj * 10 + 10,
                           q * 128 + jp2 * 20:q * 128 + jp2 * 20 + 20] = blk
    b2p = np.zeros((1, 128), np.float32)
    for jp2 in range(4):
        b2p[0, jp2 * 20:jp2 * 20 + 20] = b2

    # fc1: LHS lane hp*128 + jp2*20 + co  <->  torch flatten index co*16 + hp*4 + jp2.
    Wfc1 = np.zeros((512, 64), np.float32)
    for hp in range(4):
        for jp2 in range(4):
            for co in range(20):
                Wfc1[hp * 128 + jp2 * 20 + co, :50] = f1w[:, co * 16 + hp * 4 + jp2]
    bfc1 = np.zeros((1, 64), np.float32)
    bfc1[0, :50] = f1b

    # fc2: pad classes 37 -> 128; padded logits get a -1e30 bias (exact log_softmax).
    Wfc2 = np.zeros((64, 128), np.float32)
    Wfc2[:50, :37] = f2w.T
    bfc2 = np.full((1, 128), -1e30, np.float32)
    bfc2[0, :37] = f2b

    bf16 = jnp.bfloat16
    return {
        "W1": jnp.asarray(W1, bf16), "b1": jnp.asarray(b1p),
        "W2": jnp.asarray(W2, bf16), "b2": jnp.asarray(b2p),
        "Wfc1": jnp.asarray(Wfc1, bf16), "bfc1": jnp.asarray(bfc1),
        "Wfc2": jnp.asarray(Wfc2, bf16), "bfc2": jnp.asarray(bfc2),
    }


# -------------------------------- forward ------------------------------------

def cnn_emnist_forward(x_nchw, prepped):
    # x_nchw: (N, 1, 28, 28) float32 -> log-probs (N, 37)
    assert tuple(x_nchw.shape[1:]) == (1, 28, 28)
    n = x_nchw.shape[0]
    n_tiles = pl.cdiv(n, TB)
    npad = n_tiles * TB

    x = x_nchw.reshape(n, 28, 28).astype(jnp.float32)
    # 32 rows (28 image + 4 zero) x 32 lanes (28 image + 4 zero) per sample.
    x = jnp.pad(x, ((0, npad - n), (0, 4), (0, 4)))
    x2d = x.reshape(npad * 32, 32)

    grid_spec = pltpu.PrefetchScalarGridSpec(
        num_scalar_prefetch=0,
        grid=(n_tiles,),
        in_specs=[
            pl.BlockSpec((TB * 32, 32), lambda i: (i, 0)),     # x tile
            pl.BlockSpec((192, 512), lambda i: (0, 0)),        # W1
            pl.BlockSpec((1, 128), lambda i: (0, 0)),          # b1
            pl.BlockSpec((768, 512), lambda i: (0, 0)),        # W2
            pl.BlockSpec((1, 128), lambda i: (0, 0)),          # b2
            pl.BlockSpec((512, 64), lambda i: (0, 0)),         # Wfc1
            pl.BlockSpec((1, 64), lambda i: (0, 0)),           # bfc1
            pl.BlockSpec((64, 128), lambda i: (0, 0)),         # Wfc2
            pl.BlockSpec((1, 128), lambda i: (0, 0)),          # bfc2
        ],
        out_specs=pl.BlockSpec((TB, 128), lambda i: (i, 0)),
        scratch_shapes=[
            pltpu.VMEM((P1_ROWS, 128), jnp.float32),           # pooled conv1
            pltpu.VMEM((M2, 128), jnp.float32),                # pooled conv2
        ],
    )

    flops = 2 * n_tiles * (M1 * 192 * 512 + M2 * 768 * 512
                           + TB * 512 * 64 + TB * 64 * 128)
    bytes_accessed = (x2d.size * 4 + npad * 128 * 4
                      + (192 * 512 + 768 * 512 + 512 * 64 + 64 * 128) * 2
                      + 4 * 128 * 4)

    out = pl.pallas_call(
        _cnn_kernel,
        out_shape=jax.ShapeDtypeStruct((npad, 128), jnp.float32),
        grid_spec=grid_spec,
        compiler_params=pltpu.CompilerParams(
            dimension_semantics=("parallel",),
            vmem_limit_bytes=32 * 1024 * 1024),
        cost_estimate=pl.CostEstimate(
            flops=flops,
            transcendentals=n_tiles * TB * 128,
            bytes_accessed=bytes_accessed),
    )(x2d, prepped["W1"], prepped["b1"], prepped["W2"], prepped["b2"],
      prepped["Wfc1"], prepped["bfc1"], prepped["Wfc2"], prepped["bfc2"])

    return out[:n, :37]


# ----------------------------- reference model -------------------------------

def reference_forward(x, params):
    """Pure-JAX/XLA reference (mirrors the PyTorch module) for validation."""
    y = jax.lax.conv_general_dilated(
        x, params["conv1_w"], (1, 1), "VALID",
        dimension_numbers=("NCHW", "OIHW", "NCHW"))
    y = jnp.maximum(y + params["conv1_b"][None, :, None, None], 0.0)
    y = jax.lax.reduce_window(y, -jnp.inf, jax.lax.max,
                              (1, 1, 2, 2), (1, 1, 2, 2), "VALID")
    y = jax.lax.conv_general_dilated(
        y, params["conv2_w"], (1, 1), "VALID",
        dimension_numbers=("NCHW", "OIHW", "NCHW"))
    y = jnp.maximum(y + params["conv2_b"][None, :, None, None], 0.0)
    y = jax.lax.reduce_window(y, -jnp.inf, jax.lax.max,
                              (1, 1, 2, 2), (1, 1, 2, 2), "VALID")
    y = y.reshape(y.shape[0], -1)                                   # NCHW flatten
    y = jnp.maximum(y @ params["fc1_w"].T + params["fc1_b"], 0.0)
    z = y @ params["fc2_w"].T + params["fc2_b"]
    return jax.nn.log_softmax(z, axis=1)


def init_params(key):
    ks = jax.random.split(key, 8)
    s = 0.05
    return {
        # torch conv weight layout: (out_c, in_c, kh, kw)
        "conv1_w": s * jax.random.normal(ks[0], (10, 1, 5, 5), jnp.float32),
        "conv1_b": s * jax.random.normal(ks[1], (10,), jnp.float32),
        "conv2_w": s * jax.random.normal(ks[2], (20, 10, 5, 5), jnp.float32),
        "conv2_b": s * jax.random.normal(ks[3], (20,), jnp.float32),
        # torch linear weight layout: (out_features, in_features)
        "fc1_w": s * jax.random.normal(ks[4], (50, 320), jnp.float32),
        "fc1_b": s * jax.random.normal(ks[5], (50,), jnp.float32),
        "fc2_w": s * jax.random.normal(ks[6], (37, 50), jnp.float32),
        "fc2_b": s * jax.random.normal(ks[7], (37,), jnp.float32),
    }


if __name__ == "__main__":
    key = jax.random.PRNGKey(0)
    k_x, k_p = jax.random.split(key)
    # EMNIST geometry is required: 28x28 single-channel so the flatten is 320.
    x = jax.random.normal(k_x, (2, 1, 28, 28), jnp.float32)
    params = init_params(k_p)
    prepped = prepare_params(params)

    fwd = jax.jit(cnn_emnist_forward)
    out = jax.block_until_ready(fwd(x, prepped))
    assert out.shape == (2, 37)
    # log-softmax rows must (approximately) sum to 1 in prob space.
    assert bool(jnp.allclose(jnp.sum(jnp.exp(out), axis=1), 1.0, atol=1e-3))

    # Cross-check against a pure-XLA reference (tolerance covers bf16 MXU operands).
    ref = jax.block_until_ready(reference_forward(x, params))
    err = float(jnp.max(jnp.abs(out - ref)))
    assert err < 5e-2, f"mismatch vs reference: {err}"
    print("KERNEL_OK")
</pallas_src>

<mosaic_0001>
module attributes {stable_mosaic.version = 11 : i64} {
  func.func @_cnn_kernel(%arg0: i32, %arg1: memref<1024x32xf32, #tpu.memory_space<vmem>>, %arg2: memref<192x512xbf16, #tpu.memory_space<vmem>>, %arg3: memref<1x128xf32, #tpu.memory_space<vmem>>, %arg4: memref<768x512xbf16, #tpu.memory_space<vmem>>, %arg5: memref<1x128xf32, #tpu.memory_space<vmem>>, %arg6: memref<512x64xbf16, #tpu.memory_space<vmem>>, %arg7: memref<1x64xf32, #tpu.memory_space<vmem>>, %arg8: memref<64x128xbf16, #tpu.memory_space<vmem>>, %arg9: memref<1x128xf32, #tpu.memory_space<vmem>>, %arg10: memref<32x128xf32, #tpu.memory_space<vmem>>, %arg11: memref<520x128xf32, #tpu.memory_space<vmem>>, %arg12: memref<256x128xf32, #tpu.memory_space<vmem>>) attributes {dimension_semantics = [#tpu.dimension_semantics<parallel>], iteration_bounds = array<i64: 1>, scalar_prefetch = 0 : i64, scratch_operands = 2 : i64, tpu.core_type = #tpu.core_type<tc>, window_params = [{transform_indices = @transform_0, window_bounds = array<i64: 1024, 32>}, {pipeline_mode = #tpu.pipeline_mode<synchronous>, transform_indices = @transform_1, window_bounds = array<i64: 192, 512>}, {pipeline_mode = #tpu.pipeline_mode<synchronous>, transform_indices = @transform_2, window_bounds = array<i64: 1, 128>}, {pipeline_mode = #tpu.pipeline_mode<synchronous>, transform_indices = @transform_3, window_bounds = array<i64: 768, 512>}, {pipeline_mode = #tpu.pipeline_mode<synchronous>, transform_indices = @transform_4, window_bounds = array<i64: 1, 128>}, {pipeline_mode = #tpu.pipeline_mode<synchronous>, transform_indices = @transform_5, window_bounds = array<i64: 512, 64>}, {pipeline_mode = #tpu.pipeline_mode<synchronous>, transform_indices = @transform_6, window_bounds = array<i64: 1, 64>}, {pipeline_mode = #tpu.pipeline_mode<synchronous>, transform_indices = @transform_7, window_bounds = array<i64: 64, 128>}, {pipeline_mode = #tpu.pipeline_mode<synchronous>, transform_indices = @transform_8, window_bounds = array<i64: 1, 128>}, {transform_indices = @transform_9, window_bounds = array<i64: 32, 128>}]} {
    %c0 = arith.constant 0 : index
    %c0_0 = arith.constant 0 : index
    %0 = tpu.strided_load %arg1[%c0, %c0_0] {strides = array<i32: 2, 1>} : memref<1024x32xf32, #tpu.memory_space<vmem>>, vector<508x32xf32>
    %c1 = arith.constant 1 : index
    %c0_1 = arith.constant 0 : index
    %1 = tpu.strided_load %arg1[%c1, %c0_1] {strides = array<i32: 2, 1>} : memref<1024x32xf32, #tpu.memory_space<vmem>>, vector<508x32xf32>
    %c2 = arith.constant 2 : index
    %c0_2 = arith.constant 0 : index
    %2 = tpu.strided_load %arg1[%c2, %c0_2] {strides = array<i32: 2, 1>} : memref<1024x32xf32, #tpu.memory_space<vmem>>, vector<508x32xf32>
    %c3 = arith.constant 3 : index
    %c0_3 = arith.constant 0 : index
    %3 = tpu.strided_load %arg1[%c3, %c0_3] {strides = array<i32: 2, 1>} : memref<1024x32xf32, #tpu.memory_space<vmem>>, vector<508x32xf32>
    %c4 = arith.constant 4 : index
    %c0_4 = arith.constant 0 : index
    %4 = tpu.strided_load %arg1[%c4, %c0_4] {strides = array<i32: 2, 1>} : memref<1024x32xf32, #tpu.memory_space<vmem>>, vector<508x32xf32>
    %c5 = arith.constant 5 : index
    %c0_5 = arith.constant 0 : index
    %5 = tpu.strided_load %arg1[%c5, %c0_5] {strides = array<i32: 2, 1>} : memref<1024x32xf32, #tpu.memory_space<vmem>>, vector<508x32xf32>
    %6 = tpu.concatenate %0, %1, %2, %3, %4, %5 in 1 : vector<508x32xf32>, vector<508x32xf32>, vector<508x32xf32>, vector<508x32xf32>, vector<508x32xf32>, vector<508x32xf32> -> vector<508x192xf32>
    %7 = arith.truncf %6 : vector<508x192xf32> to vector<508x192xbf16>
    %c0_6 = arith.constant 0 : index
    %c0_7 = arith.constant 0 : index
    %8 = vector.load %arg2[%c0_6, %c0_7] : memref<192x512xbf16, #tpu.memory_space<vmem>>, vector<192x512xbf16>
    %cst = arith.constant dense<0.000000e+00> : vector<508x512xf32>
    %9 = tpu.matmul %7, %8, %cst {dimension_numbers = #tpu.dot_dimension_numbers<[1], [0], [0], [1], [0, 0, 1, 1], [], []>} : vector<508x192xbf16>, vector<192x512xbf16>, vector<508x512xf32> -> vector<508x512xf32>
    %10 = vector.extract_strided_slice %9 {offsets = [0, 0], sizes = [508, 128], strides = [1, 1]} : vector<508x512xf32> to vector<508x128xf32>
    %11 = vector.extract_strided_slice %9 {offsets = [0, 128], sizes = [508, 128], strides = [1, 1]} : vector<508x512xf32> to vector<508x128xf32>
    %12 = arith.maximumf %10, %11 : vector<508x128xf32>
    %13 = vector.extract_strided_slice %9 {offsets = [0, 256], sizes = [508, 128], strides = [1, 1]} : vector<508x512xf32> to vector<508x128xf32>
    %14 = vector.extract_strided_slice %9 {offsets = [0, 384], sizes = [508, 128], strides = [1, 1]} : vector<508x512xf32> to vector<508x128xf32>
    %15 = arith.maximumf %13, %14 : vector<508x128xf32>
    %16 = arith.maximumf %12, %15 : vector<508x128xf32>
    %c0_8 = arith.constant 0 : index
    %c0_9 = arith.constant 0 : index
    %17 = vector.load %arg3[%c0_8, %c0_9] : memref<1x128xf32, #tpu.memory_space<vmem>>, vector<1x128xf32>
    %18 = vector.broadcast %17 : vector<1x128xf32> to vector<508x128xf32>
    %19 = arith.addf %16, %18 : vector<508x128xf32>
    %cst_10 = arith.constant 0.000000e+00 : f32
    %20 = vector.broadcast %cst_10 : f32 to vector<508x128xf32>
    %21 = arith.maximumf %19, %20 : vector<508x128xf32>
    %c0_11 = arith.constant 0 : index
    %c0_12 = arith.constant 0 : index
    %22 = vector.load %arg11[%c0_11, %c0_12] : memref<520x128xf32, #tpu.memory_space<vmem>>, vector<508x128xf32>
    tpu.vector_store %arg11[%c0_11, %c0_12], %21 {strides = array<i32>} : memref<520x128xf32, #tpu.memory_space<vmem>>, vector<508x128xf32>,
    %cst_13 = arith.constant 0.000000e+00 : f32
    %23 = vector.broadcast %cst_13 : f32 to vector<12x128xf32>
    %c508 = arith.constant 508 : index
    %c0_14 = arith.constant 0 : index
    %24 = vector.load %arg11[%c508, %c0_14] : memref<520x128xf32, #tpu.memory_space<vmem>>, vector<12x128xf32>
    tpu.vector_store %arg11[%c508, %c0_14], %23 {strides = array<i32>} : memref<520x128xf32, #tpu.memory_space<vmem>>, vector<12x128xf32>,
    %c0_15 = arith.constant 0 : index
    %c0_16 = arith.constant 0 : index
    %25 = tpu.strided_load %arg11[%c0_15, %c0_16] {strides = array<i32: 2, 1>} : memref<520x128xf32, #tpu.memory_space<vmem>>, vector<256x128xf32>
    %c1_17 = arith.constant 1 : index
    %c0_18 = arith.constant 0 : index
    %26 = tpu.strided_load %arg11[%c1_17, %c0_18] {strides = array<i32: 2, 1>} : memref<520x128xf32, #tpu.memory_space<vmem>>, vector<256x128xf32>
    %c2_19 = arith.constant 2 : index
    %c0_20 = arith.constant 0 : index
    %27 = tpu.strided_load %arg11[%c2_19, %c0_20] {strides = array<i32: 2, 1>} : memref<520x128xf32, #tpu.memory_space<vmem>>, vector<256x128xf32>
    %c3_21 = arith.constant 3 : index
    %c0_22 = arith.constant 0 : index
    %28 = tpu.strided_load %arg11[%c3_21, %c0_22] {strides = array<i32: 2, 1>} : memref<520x128xf32, #tpu.memory_space<vmem>>, vector<256x128xf32>
    %c4_23 = arith.constant 4 : index
    %c0_24 = arith.constant 0 : index
    %29 = tpu.strided_load %arg11[%c4_23, %c0_24] {strides = array<i32: 2, 1>} : memref<520x128xf32, #tpu.memory_space<vmem>>, vector<256x128xf32>
    %c5_25 = arith.constant 5 : index
    %c0_26 = arith.constant 0 : index
    %30 = tpu.strided_load %arg11[%c5_25, %c0_26] {strides = array<i32: 2, 1>} : memref<520x128xf32, #tpu.memory_space<vmem>>, vector<256x128xf32>
    %31 = tpu.concatenate %25, %26, %27, %28, %29, %30 in 1 : vector<256x128xf32>, vector<256x128xf32>, vector<256x128xf32>, vector<256x128xf32>, vector<256x128xf32>, vector<256x128xf32> -> vector<256x768xf32>
    %32 = arith.truncf %31 : vector<256x768xf32> to vector<256x768xbf16>
    %c0_27 = arith.constant 0 : index
    %c0_28 = arith.constant 0 : index
    %33 = vector.load %arg4[%c0_27, %c0_28] : memref<768x512xbf16, #tpu.memory_space<vmem>>, vector<768x512xbf16>
    %cst_29 = arith.constant dense<0.000000e+00> : vector<256x512xf32>
    %34 = tpu.matmul %32, %33, %cst_29 {dimension_numbers = #tpu.dot_dimension_numbers<[1], [0], [0], [1], [0, 0, 1, 1], [], []>} : vector<256x768xbf16>, vector<768x512xbf16>, vector<256x512xf32> -> vector<256x512xf32>
    %35 = vector.extract_strided_slice %34 {offsets = [0, 0], sizes = [256, 128], strides = [1, 1]} : vector<256x512xf32> to vector<256x128xf32>
    %36 = vector.extract_strided_slice %34 {offsets = [0, 128], sizes = [256, 128], strides = [1, 1]} : vector<256x512xf32> to vector<256x128xf32>
    %37 = arith.maximumf %35, %36 : vector<256x128xf32>
    %38 = vector.extract_strided_slice %34 {offsets = [0, 256], sizes = [256, 128], strides = [1, 1]} : vector<256x512xf32> to vector<256x128xf32>
    %39 = vector.extract_strided_slice %34 {offsets = [0, 384], sizes = [256, 128], strides = [1, 1]} : vector<256x512xf32> to vector<256x128xf32>
    %40 = arith.maximumf %38, %39 : vector<256x128xf32>
    %41 = arith.maximumf %37, %40 : vector<256x128xf32>
    %c0_30 = arith.constant 0 : index
    %c0_31 = arith.constant 0 : index
    %42 = vector.load %arg5[%c0_30, %c0_31] : memref<1x128xf32, #tpu.memory_space<vmem>>, vector<1x128xf32>
    %43 = vector.broadcast %42 : vector<1x128xf32> to vector<256x128xf32>
    %44 = arith.addf %41, %43 : vector<256x128xf32>
    %cst_32 = arith.constant 0.000000e+00 : f32
    %45 = vector.broadcast %cst_32 : f32 to vector<256x128xf32>
    %46 = arith.maximumf %44, %45 : vector<256x128xf32>
    %c0_33 = arith.constant 0 : index
    %c0_34 = arith.constant 0 : index
    %47 = vector.load %arg12[%c0_33, %c0_34] : memref<256x128xf32, #tpu.memory_space<vmem>>, vector<256x128xf32>
    tpu.vector_store %arg12[%c0_33, %c0_34], %46 {strides = array<i32>} : memref<256x128xf32, #tpu.memory_space<vmem>>, vector<256x128xf32>,
    %c0_35 = arith.constant 0 : index
    %c0_36 = arith.constant 0 : index
    %48 = tpu.strided_load %arg12[%c0_35, %c0_36] {strides = array<i32: 8, 1>} : memref<256x128xf32, #tpu.memory_space<vmem>>, vector<32x128xf32>
    %c1_37 = arith.constant 1 : index
    %c0_38 = arith.constant 0 : index
    %49 = tpu.strided_load %arg12[%c1_37, %c0_38] {strides = array<i32: 8, 1>} : memref<256x128xf32, #tpu.memory_space<vmem>>, vector<32x128xf32>
    %c2_39 = arith.constant 2 : index
    %c0_40 = arith.constant 0 : index
    %50 = tpu.strided_load %arg12[%c2_39, %c0_40] {strides = array<i32: 8, 1>} : memref<256x128xf32, #tpu.memory_space<vmem>>, vector<32x128xf32>
    %c3_41 = arith.constant 3 : index
    %c0_42 = arith.constant 0 : index
    %51 = tpu.strided_load %arg12[%c3_41, %c0_42] {strides = array<i32: 8, 1>} : memref<256x128xf32, #tpu.memory_space<vmem>>, vector<32x128xf32>
    %52 = tpu.concatenate %48, %49, %50, %51 in 1 : vector<32x128xf32>, vector<32x128xf32>, vector<32x128xf32>, vector<32x128xf32> -> vector<32x512xf32>
    %53 = arith.truncf %52 : vector<32x512xf32> to vector<32x512xbf16>
    %c0_43 = arith.constant 0 : index
    %c0_44 = arith.constant 0 : index
    %54 = vector.load %arg6[%c0_43, %c0_44] : memref<512x64xbf16, #tpu.memory_space<vmem>>, vector<512x64xbf16>
    %cst_45 = arith.constant dense<0.000000e+00> : vector<32x64xf32>
    %55 = tpu.matmul %53, %54, %cst_45 {dimension_numbers = #tpu.dot_dimension_numbers<[1], [0], [0], [1], [0, 0, 1, 1], [], []>} : vector<32x512xbf16>, vector<512x64xbf16>, vector<32x64xf32> -> vector<32x64xf32>
    %c0_46 = arith.constant 0 : index
    %c0_47 = arith.constant 0 : index
    %56 = vector.load %arg7[%c0_46, %c0_47] : memref<1x64xf32, #tpu.memory_space<vmem>>, vector<1x64xf32>
    %57 = vector.broadcast %56 : vector<1x64xf32> to vector<32x64xf32>
    %58 = arith.addf %55, %57 : vector<32x64xf32>
    %cst_48 = arith.constant 0.000000e+00 : f32
    %59 = vector.broadcast %cst_48 : f32 to vector<32x64xf32>
    %60 = arith.maximumf %58, %59 : vector<32x64xf32>
    %61 = arith.truncf %60 : vector<32x64xf32> to vector<32x64xbf16>
    %c0_49 = arith.constant 0 : index
    %c0_50 = arith.constant 0 : index
    %62 = vector.load %arg8[%c0_49, %c0_50] : memref<64x128xbf16, #tpu.memory_space<vmem>>, vector<64x128xbf16>
    %cst_51 = arith.constant dense<0.000000e+00> : vector<32x128xf32>
    %63 = tpu.matmul %61, %62, %cst_51 {dimension_numbers = #tpu.dot_dimension_numbers<[1], [0], [0], [1], [0, 0, 1, 1], [], []>} : vector<32x64xbf16>, vector<64x128xbf16>, vector<32x128xf32> -> vector<32x128xf32>
    %c0_52 = arith.constant 0 : index
    %c0_53 = arith.constant 0 : index
    %64 = vector.load %arg9[%c0_52, %c0_53] : memref<1x128xf32, #tpu.memory_space<vmem>>, vector<1x128xf32>
    %65 = vector.broadcast %64 : vector<1x128xf32> to vector<32x128xf32>
    %66 = arith.addf %63, %65 : vector<32x128xf32>
    %cst_54 = arith.constant dense<0xFF800000> : vector<32xf32>
    %67 = vector.multi_reduction <maximumf>, %66, %cst_54 [1] : vector<32x128xf32> to vector<32xf32>
    %68 = vector.shape_cast %67 : vector<32xf32> to vector<32x1xf32>
    %69 = vector.broadcast %68 : vector<32x1xf32> to vector<32x128xf32>
    %70 = arith.subf %66, %69 : vector<32x128xf32>
    %71 = math.exp %70 : vector<32x128xf32>
    %cst_55 = arith.constant dense<0.000000e+00> : vector<32xf32>
    %72 = vector.multi_reduction <add>, %71, %cst_55 [1] : vector<32x128xf32> to vector<32xf32>
    %73 = vector.shape_cast %72 : vector<32xf32> to vector<32x1xf32>
    %74 = math.log %73 : vector<32x1xf32>
    %75 = arith.addf %74, %68 : vector<32x1xf32>
    %76 = vector.broadcast %75 : vector<32x1xf32> to vector<32x128xf32>
    %77 = arith.subf %66, %76 : vector<32x128xf32>
    %c0_56 = arith.constant 0 : index
    %c0_57 = arith.constant 0 : index
    %78 = vector.load %arg10[%c0_56, %c0_57] : memref<32x128xf32, #tpu.memory_space<vmem>>, vector<32x128xf32>
    tpu.vector_store %arg10[%c0_56, %c0_57], %77 {strides = array<i32>} : memref<32x128xf32, #tpu.memory_space<vmem>>, vector<32x128xf32>,
    return
  }
  func.func @transform_0(%arg0: i32) -> (i32, i32) {
    %c0_i32 = arith.constant 0 : i32
    %c0_i32_0 = arith.constant 0 : i32
    return %arg0, %c0_i32 : i32, i32
  }
  func.func @transform_1(%arg0: i32) -> (i32, i32) {
    %c0_i32 = arith.constant 0 : i32
    %c0_i32_0 = arith.constant 0 : i32
    %c0_i32_1 = arith.constant 0 : i32
    return %c0_i32, %c0_i32_0 : i32, i32
  }
  func.func @transform_2(%arg0: i32) -> (i32, i32) {
    %c0_i32 = arith.constant 0 : i32
    %c0_i32_0 = arith.constant 0 : i32
    %c0_i32_1 = arith.constant 0 : i32
    return %c0_i32, %c0_i32_0 : i32, i32
  }
  func.func @transform_3(%arg0: i32) -> (i32, i32) {
    %c0_i32 = arith.constant 0 : i32
    %c0_i32_0 = arith.constant 0 : i32
    %c0_i32_1 = arith.constant 0 : i32
    return %c0_i32, %c0_i32_0 : i32, i32
  }
  func.func @transform_4(%arg0: i32) -> (i32, i32) {
    %c0_i32 = arith.constant 0 : i32
    %c0_i32_0 = arith.constant 0 : i32
    %c0_i32_1 = arith.constant 0 : i32
    return %c0_i32, %c0_i32_0 : i32, i32
  }
  func.func @transform_5(%arg0: i32) -> (i32, i32) {
    %c0_i32 = arith.constant 0 : i32
    %c0_i32_0 = arith.constant 0 : i32
    %c0_i32_1 = arith.constant 0 : i32
    return %c0_i32, %c0_i32_0 : i32, i32
  }
  func.func @transform_6(%arg0: i32) -> (i32, i32) {
    %c0_i32 = arith.constant 0 : i32
    %c0_i32_0 = arith.constant 0 : i32
    %c0_i32_1 = arith.constant 0 : i32
    return %c0_i32, %c0_i32_0 : i32, i32
  }
  func.func @transform_7(%arg0: i32) -> (i32, i32) {
    %c0_i32 = arith.constant 0 : i32
    %c0_i32_0 = arith.constant 0 : i32
    %c0_i32_1 = arith.constant 0 : i32
    return %c0_i32, %c0_i32_0 : i32, i32
  }
  func.func @transform_8(%arg0: i32) -> (i32, i32) {
    %c0_i32 = arith.constant 0 : i32
    %c0_i32_0 = arith.constant 0 : i32
    %c0_i32_1 = arith.constant 0 : i32
    return %c0_i32, %c0_i32_0 : i32, i32
  }
  func.func @transform_9(%arg0: i32) -> (i32, i32) {
    %c0_i32 = arith.constant 0 : i32
    %c0_i32_0 = arith.constant 0 : i32
    return %arg0, %c0_i32 : i32, i32
  }
}

</mosaic_0001>

<llo_original>
// kernel: cnn_emnist_forward.1
$region0: #{cnn_emnist_forward.1}
  #allocation0 [shape = 'u32[]', space=smem, size = 0x4, offset = 0x4, fixed_abs, tag = 'smem constant byte address 0x4 - core index']
  #allocation1 [shape = 'u32[144,128]{1,0:T(1,128)}', space=vmem, size = 0x12000, scoped, tag = 'internal scratch']
  #allocation2 [shape = 'f32[520,128]{1,0:T(8,128)}', space=vmem, size = 0x41000, scoped, tag = 'scratch operand']
  #allocation3 [shape = 'f32[256,128]{1,0:T(8,128)}', space=vmem, size = 0x20000, scoped, tag = 'scratch operand']
  %s0 = inlined_call_operand.vmem [shape: f32[1024,32], index: 0, kind: input, shape index: {}]
  %s1 = inlined_call_operand.hbm [shape: bf16[192,512], index: 1, kind: input, shape index: {}]
  %s2 = inlined_call_operand.vmem [shape: f32[1,128], index: 2, kind: input, shape index: {}]
  %s3 = inlined_call_operand.vmem [shape: bf16[768,512], index: 3, kind: input, shape index: {}]
  %s4 = inlined_call_operand.vmem [shape: f32[1,128], index: 4, kind: input, shape index: {}]
  %s5 = inlined_call_operand.vmem [shape: bf16[512,64], index: 5, kind: input, shape index: {}]
  %s6 = inlined_call_operand.vmem [shape: f32[1,64], index: 6, kind: input, shape index: {}]
  %s7 = inlined_call_operand.vmem [shape: bf16[64,128], index: 7, kind: input, shape index: {}]
  %s8 = inlined_call_operand.vmem [shape: f32[1,128], index: 8, kind: input, shape index: {}]
  %s9 = inlined_call_operand.vmem [shape: f32[32,128], index: 9, kind: output, shape index: {}]
  %s10 = sld [smem:[#allocation0]]
  $region50: #{cnn_emnist_forward.1} parent=0
    _
  %s12 = ssub.s32 1, %s10
  %s13 = scalar_select 0, %s12, %s10
  $region1: #{cnn_emnist_forward.1} parent=0
    #allocation4 [shape = 'u8[196608]{0}', space=vmem, size = 0x30000, scoped, tag = 'input window, operand 1, single buffered']
    #allocation5 [shape = 's32[1]{0}', space=sflag, size = 0x4, scoped, tag = 'scoped memory for cnn_emnist_forward.1']
    %14 = vsyncpa [#allocation5], 0
    // Predicated region
    $region2: #{cnn_emnist_forward.1} parent=1 // pred_check
      _
    $region3: #{cnn_emnist_forward.1} parent=1 // pred_check_branch
      %16 = sbr.rel (0) target = $region5
    $region4: #{cnn_emnist_forward.1} parent=1 // pred_region
      _
    $region5: #{cnn_emnist_forward.1} parent=1 // pred_fallthru
      _
    // Predicated region
    $region6: #{cnn_emnist_forward.1} parent=1 // pred_check
      _
    $region7: #{cnn_emnist_forward.1} parent=1 // pred_check_branch
      %18 = sbr.rel (0) target = $region9
    $region8: #{cnn_emnist_forward.1} parent=1 // pred_region
      %s20 = ssub.s32 6144, 6144
      %21 = vsyncadd [#allocation5], %s20
      %s22 = sshll.u32 [#allocation4], 4
      %s23 = int_to_ptr.vmem [resolvable:$true] %s22
      %28 = dma.hbm_to_vmem [thread:$0]  %s1, 6144, %s23, [#allocation5], 256, 256, 16
    $region9: #{cnn_emnist_forward.1} parent=1 // pred_fallthru
      _
    // Predicated region
    $region10: #{cnn_emnist_forward.1} parent=1 // pred_check
      _
    $region11: #{cnn_emnist_forward.1} parent=1 // pred_check_branch
      %30 = sbr.rel (0) target = $region13
    $region12: #{cnn_emnist_forward.1} parent=1 // pred_region
      _
    $region13: #{cnn_emnist_forward.1} parent=1 // pred_fallthru
      _
    // Predicated region
    $region14: #{cnn_emnist_forward.1} parent=1 // pred_check
      _
    $region15: #{cnn_emnist_forward.1} parent=1 // pred_check_branch
      %32 = sbr.rel (0) target = $region17
    $region16: #{cnn_emnist_forward.1} parent=1 // pred_region
      _
    $region17: #{cnn_emnist_forward.1} parent=1 // pred_fallthru
      _
    // Predicated region
    $region18: #{cnn_emnist_forward.1} parent=1 // pred_check
      _
    $region19: #{cnn_emnist_forward.1} parent=1 // pred_check_branch
      %34 = sbr.rel (0) target = $region21
    $region20: #{cnn_emnist_forward.1} parent=1 // pred_region
      _
    $region21: #{cnn_emnist_forward.1} parent=1 // pred_fallthru
      _
    // Predicated region
    $region22: #{cnn_emnist_forward.1} parent=1 // pred_check
      _
    $region23: #{cnn_emnist_forward.1} parent=1 // pred_check_branch
      %36 = sbr.rel (0) target = $region25
    $region24: #{cnn_emnist_forward.1} parent=1 // pred_region
      _
    $region25: #{cnn_emnist_forward.1} parent=1 // pred_fallthru
      _
    // Predicated region
    $region26: #{cnn_emnist_forward.1} parent=1 // pred_check
      _
    $region27: #{cnn_emnist_forward.1} parent=1 // pred_check_branch
      %38 = sbr.rel (0) target = $region29
    $region28: #{cnn_emnist_forward.1} parent=1 // pred_region
      _
    $region29: #{cnn_emnist_forward.1} parent=1 // pred_fallthru
      _
    // Predicated region
    $region30: #{cnn_emnist_forward.1} parent=1 // pred_check
      _
    $region31: #{cnn_emnist_forward.1} parent=1 // pred_check_branch
      %40 = sbr.rel (0) target = $region33
    $region32: #{cnn_emnist_forward.1} parent=1 // pred_region
      _
    $region33: #{cnn_emnist_forward.1} parent=1 // pred_fallthru
      _
    // Predicated region
    $region34: #{cnn_emnist_forward.1} parent=1 // pred_check
      _
    $region35: #{cnn_emnist_forward.1} parent=1 // pred_check_branch
      %42 = sbr.rel (0) target = $region37
    $region36: #{cnn_emnist_forward.1} parent=1 // pred_region
      _
    $region37: #{cnn_emnist_forward.1} parent=1 // pred_fallthru
      _
    // Predicated region
    $region38: #{cnn_emnist_forward.1} parent=1 // pred_check
      _
    $region39: #{cnn_emnist_forward.1} parent=1 // pred_check_branch
      %44 = sbr.rel (0) target = $region41
    $region40: #{cnn_emnist_forward.1} parent=1 // pred_region
      %45 = dma.done [#allocation5], 6144
    $region41: #{cnn_emnist_forward.1} parent=1 // pred_fallthru
      _
    %v47 = vld [vmem:[%s0] ss:$2 sm:$0xff]
    %s48 = scalar_lea.vmem %s0, 16
    %v49 = vld [vmem:[%s48] ss:$2 sm:$0xff]
    %s50 = scalar_lea.vmem %s0, 32
    %v51 = vld [vmem:[%s50] ss:$2 sm:$0xff]
    %s52 = scalar_lea.vmem %s0, 48
    %v53 = vld [vmem:[%s52] ss:$2 sm:$0xff]
    %s54 = scalar_lea.vmem %s0, 64
    %v55 = vld [vmem:[%s54] ss:$2 sm:$0xff]
    %s56 = scalar_lea.vmem %s0, 80
    %v57 = vld [vmem:[%s56] ss:$2 sm:$0xff]
    %s58 = scalar_lea.vmem %s0, 96
    %v59 = vld [vmem:[%s58] ss:$2 sm:$0xff]
    %s60 = scalar_lea.vmem %s0, 112
    %v61 = vld [vmem:[%s60] ss:$2 sm:$0xff]
    %s62 = scalar_lea.vmem %s0, 128
    %v63 = vld [vmem:[%s62] ss:$2 sm:$0xff]
    %s64 = scalar_lea.vmem %s0, 144
    %v65 = vld [vmem:[%s64] ss:$2 sm:$0xff]
    %s66 = scalar_lea.vmem %s0, 160
    %v67 = vld [vmem:[%s66] ss:$2 sm:$0xff]
    %s68 = scalar_lea.vmem %s0, 176
    %v69 = vld [vmem:[%s68] ss:$2 sm:$0xff]
    %s70 = scalar_lea.vmem %s0, 192
    %v71 = vld [vmem:[%s70] ss:$2 sm:$0xff]
    %s72 = scalar_lea.vmem %s0, 208
    %v73 = vld [vmem:[%s72] ss:$2 sm:$0xff]
    %s74 = scalar_lea.vmem %s0, 224
    %v75 = vld [vmem:[%s74] ss:$2 sm:$0xff]
    %s76 = scalar_lea.vmem %s0, 240
    %v77 = vld [vmem:[%s76] ss:$2 sm:$0xff]
    %s78 = scalar_lea.vmem %s0, 256
    %v79 = vld [vmem:[%s78] ss:$2 sm:$0xff]
    %s80 = scalar_lea.vmem %s0, 272
    %v81 = vld [vmem:[%s80] ss:$2 sm:$0xff]
    %s82 = scalar_lea.vmem %s0, 288
    %v83 = vld [vmem:[%s82] ss:$2 sm:$0xff]
    %s84 = scalar_lea.vmem %s0, 304
    %v85 = vld [vmem:[%s84] ss:$2 sm:$0xff]
    %s86 = scalar_lea.vmem %s0, 320
    %v87 = vld [vmem:[%s86] ss:$2 sm:$0xff]
    %s88 = scalar_lea.vmem %s0, 336
    %v89 = vld [vmem:[%s88] ss:$2 sm:$0xff]
    %s90 = scalar_lea.vmem %s0, 352
    %v91 = vld [vmem:[%s90] ss:$2 sm:$0xff]
    %s92 = scalar_lea.vmem %s0, 368
    %v93 = vld [vmem:[%s92] ss:$2 sm:$0xff]
    %s94 = scalar_lea.vmem %s0, 384
    %v95 = vld [vmem:[%s94] ss:$2 sm:$0xff]
    %s96 = scalar_lea.vmem %s0, 400
    %v97 = vld [vmem:[%s96] ss:$2 sm:$0xff]
    %s98 = scalar_lea.vmem %s0, 416
    %v99 = vld [vmem:[%s98] ss:$2 sm:$0xff]
    %s100 = scalar_lea.vmem %s0, 432
    %v101 = vld [vmem:[%s100] ss:$2 sm:$0xff]
    %s102 = scalar_lea.vmem %s0, 448
    %v103 = vld [vmem:[%s102] ss:$2 sm:$0xff]
    %s104 = scalar_lea.vmem %s0, 464
    %v105 = vld [vmem:[%s104] ss:$2 sm:$0xff]
    %s106 = scalar_lea.vmem %s0, 480
    %v107 = vld [vmem:[%s106] ss:$2 sm:$0xff]
    %s108 = scalar_lea.vmem %s0, 496
    %v109 = vld [vmem:[%s108] ss:$2 sm:$0xff]
    %s110 = scalar_lea.vmem %s0, 512
    %v111 = vld [vmem:[%s110] ss:$2 sm:$0xff]
    %s112 = scalar_lea.vmem %s0, 528
    %v113 = vld [vmem:[%s112] ss:$2 sm:$0xff]
    %s114 = scalar_lea.vmem %s0, 544
    %v115 = vld [vmem:[%s114] ss:$2 sm:$0xff]
    %s116 = scalar_lea.vmem %s0, 560
    %v117 = vld [vmem:[%s116] ss:$2 sm:$0xff]
    %s118 = scalar_lea.vmem %s0, 576
    %v119 = vld [vmem:[%s118] ss:$2 sm:$0xff]
    %s120 = scalar_lea.vmem %s0, 592
    %v121 = vld [vmem:[%s120] ss:$2 sm:$0xff]
    %s122 = scalar_lea.vmem %s0, 608
    %v123 = vld [vmem:[%s122] ss:$2 sm:$0xff]
    %s124 = scalar_lea.vmem %s0, 624
    %v125 = vld [vmem:[%s124] ss:$2 sm:$0xff]
    %s126 = scalar_lea.vmem %s0, 640
    %v127 = vld [vmem:[%s126] ss:$2 sm:$0xff]
    %s128 = scalar_lea.vmem %s0, 656
    %v129 = vld [vmem:[%s128] ss:$2 sm:$0xff]
    %s130 = scalar_lea.vmem %s0, 672
    %v131 = vld [vmem:[%s130] ss:$2 sm:$0xff]
    %s132 = scalar_lea.vmem %s0, 688
    %v133 = vld [vmem:[%s132] ss:$2 sm:$0xff]
    %s134 = scalar_lea.vmem %s0, 704
    %v135 = vld [vmem:[%s134] ss:$2 sm:$0xff]
    %s136 = scalar_lea.vmem %s0, 720
    %v137 = vld [vmem:[%s136] ss:$2 sm:$0xff]
    %s138 = scalar_lea.vmem %s0, 736
    %v139 = vld [vmem:[%s138] ss:$2 sm:$0xff]
    %s140 = scalar_lea.vmem %s0, 752
    %v141 = vld [vmem:[%s140] ss:$2 sm:$0xff]
    %s142 = scalar_lea.vmem %s0, 768
    %v143 = vld [vmem:[%s142] ss:$2 sm:$0xff]
    %s144 = scalar_lea.vmem %s0, 784
    %v145 = vld [vmem:[%s144] ss:$2 sm:$0xff]
    %s146 = scalar_lea.vmem %s0, 800
    %v147 = vld [vmem:[%s146] ss:$2 sm:$0xff]
    %s148 = scalar_lea.vmem %s0, 816
    %v149 = vld [vmem:[%s148] ss:$2 sm:$0xff]
    %s150 = scalar_lea.vmem %s0, 832
    %v151 = vld [vmem:[%s150] ss:$2 sm:$0xff]
    %s152 = scalar_lea.vmem %s0, 848
    %v153 = vld [vmem:[%s152] ss:$2 sm:$0xff]
    %s154 = scalar_lea.vmem %s0, 864
    %v155 = vld [vmem:[%s154] ss:$2 sm:$0xff]
    %s156 = scalar_lea.vmem %s0, 880
    %v157 = vld [vmem:[%s156] ss:$2 sm:$0xff]
    %s158 = scalar_lea.vmem %s0, 896
    %v159 = vld [vmem:[%s158] ss:$2 sm:$0xff]
    %s160 = scalar_lea.vmem %s0, 912
    %v161 = vld [vmem:[%s160] ss:$2 sm:$0xff]
    %s162 = scalar_lea.vmem %s0, 928
    %v163 = vld [vmem:[%s162] ss:$2 sm:$0xff]
    %s164 = scalar_lea.vmem %s0, 944
    %v165 = vld [vmem:[%s164] ss:$2 sm:$0xff]
    %s166 = scalar_lea.vmem %s0, 960
    %v167 = vld [vmem:[%s166] ss:$2 sm:$0xff]
    %s168 = scalar_lea.vmem %s0, 976
    %v169 = vld [vmem:[%s168] ss:$2 sm:$0xff]
    %s170 = scalar_lea.vmem %s0, 992
    %v171 = vld [vmem:[%s170] ss:$2 sm:$0xff]
    %s172 = scalar_lea.vmem %s0, 1008
    %v173 = vld [vmem:[%s172] ss:$2 sm:$0xf]
    %s174 = scalar_lea.vmem %s0, 1
    %v175 = vld [vmem:[%s174] ss:$2 sm:$0xff]
    %s176 = scalar_lea.vmem %s0, 17
    %v177 = vld [vmem:[%s176] ss:$2 sm:$0xff]
    %s178 = scalar_lea.vmem %s0, 33
    %v179 = vld [vmem:[%s178] ss:$2 sm:$0xff]
    %s180 = scalar_lea.vmem %s0, 49
    %v181 = vld [vmem:[%s180] ss:$2 sm:$0xff]
    %s182 = scalar_lea.vmem %s0, 65
    %v183 = vld [vmem:[%s182] ss:$2 sm:$0xff]
    %s184 = scalar_lea.vmem %s0, 81
    %v185 = vld [vmem:[%s184] ss:$2 sm:$0xff]
    %s186 = scalar_lea.vmem %s0, 97
    %v187 = vld [vmem:[%s186] ss:$2 sm:$0xff]
    %s188 = scalar_lea.vmem %s0, 113
    %v189 = vld [vmem:[%s188] ss:$2 sm:$0xff]
    %s190 = scalar_lea.vmem %s0, 129
    %v191 = vld [vmem:[%s190] ss:$2 sm:$0xff]
    %s192 = scalar_lea.vmem %s0, 145
    %v193 = vld [vmem:[%s192] ss:$2 sm:$0xff]
    %s194 = scalar_lea.vmem %s0, 161
    %v195 = vld [vmem:[%s194] ss:$2 sm:$0xff]
    %s196 = scalar_lea.vmem %s0, 177
    %v197 = vld [vmem:[%s196] ss:$2 sm:$0xff]
    %s198 = scalar_lea.vmem %s0, 193
    %v199 = vld [vmem:[%s198] ss:$2 sm:$0xff]
    %s200 = scalar_lea.vmem %s0, 209
    %v201 = vld [vmem:[%s200] ss:$2 sm:$0xff]
    %s202 = scalar_lea.vmem %s0, 225
    %v203 = vld [vmem:[%s202] ss:$2 sm:$0xff]
    %s204 = scalar_lea.vmem %s0, 241
    %v205 = vld [vmem:[%s204] ss:$2 sm:$0xff]
    %s206 = scalar_lea.vmem %s0, 257
    %v207 = vld [vmem:[%s206] ss:$2 sm:$0xff]
    %s208 = scalar_lea.vmem %s0, 273
    %v209 = vld [vmem:[%s208] ss:$2 sm:$0xff]
    %s210 = scalar_lea.vmem %s0, 289
    %v211 = vld [vmem:[%s210] ss:$2 sm:$0xff]
    %s212 = scalar_lea.vmem %s0, 305
    %v213 = vld [vmem:[%s212] ss:$2 sm:$0xff]
    %s214 = scalar_lea.vmem %s0, 321
    %v215 = vld [vmem:[%s214] ss:$2 sm:$0xff]
    %s216 = scalar_lea.vmem %s0, 337
    %v217 = vld [vmem:[%s216] ss:$2 sm:$0xff]
    %s218 = scalar_lea.vmem %s0, 353
    %v219 = vld [vmem:[%s218] ss:$2 sm:$0xff]
    %s220 = scalar_lea.vmem %s0, 369
    %v221 = vld [vmem:[%s220] ss:$2 sm:$0xff]
    %s222 = scalar_lea.vmem %s0, 385
    %v223 = vld [vmem:[%s222] ss:$2 sm:$0xff]
    %s224 = scalar_lea.vmem %s0, 401
    %v225 = vld [vmem:[%s224] ss:$2 sm:$0xff]
    %s226 = scalar_lea.vmem %s0, 417
    %v227 = vld [vmem:[%s226] ss:$2 sm:$0xff]
    %s228 = scalar_lea.vmem %s0, 433
    %v229 = vld [vmem:[%s228] ss:$2 sm:$0xff]
    %s230 = scalar_lea.vmem %s0, 449
    %v231 = vld [vmem:[%s230] ss:$2 sm:$0xff]
    %s232 = scalar_lea.vmem %s0, 465
    %v233 = vld [vmem:[%s232] ss:$2 sm:$0xff]
    %s234 = scalar_lea.vmem %s0, 481
    %v235 = vld [vmem:[%s234] ss:$2 sm:$0xff]
    %s236 = scalar_lea.vmem %s0, 497
    %v237 = vld [vmem:[%s236] ss:$2 sm:$0xff]
    %s238 = scalar_lea.vmem %s0, 513
    %v239 = vld [vmem:[%s238] ss:$2 sm:$0xff]
    %s240 = scalar_lea.vmem %s0, 529
    %v241 = vld [vmem:[%s240] ss:$2 sm:$0xff]
    %s242 = scalar_lea.vmem %s0, 545
    %v243 = vld [vmem:[%s242] ss:$2 sm:$0xff]
    %s244 = scalar_lea.vmem %s0, 561
    %v245 = vld [vmem:[%s244] ss:$2 sm:$0xff]
    %s246 = scalar_lea.vmem %s0, 577
    %v247 = vld [vmem:[%s246] ss:$2 sm:$0xff]
    %s248 = scalar_lea.vmem %s0, 593
    %v249 = vld [vmem:[%s248] ss:$2 sm:$0xff]
    %s250 = scalar_lea.vmem %s0, 609
    %v251 = vld [vmem:[%s250] ss:$2 sm:$0xff]
    %s252 = scalar_lea.vmem %s0, 625
    %v253 = vld [vmem:[%s252] ss:$2 sm:$0xff]
    %s254 = scalar_lea.vmem %s0, 641
    %v255 = vld [vmem:[%s254] ss:$2 sm:$0xff]
    %s256 = scalar_lea.vmem %s0, 657
    %v257 = vld [vmem:[%s256] ss:$2 sm:$0xff]
    %s258 = scalar_lea.vmem %s0, 673
    %v259 = vld [vmem:[%s258] ss:$2 sm:$0xff]
    %s260 = scalar_lea.vmem %s0, 689
    %v261 = vld [vmem:[%s260] ss:$2 sm:$0xff]
    %s262 = scalar_lea.vmem %s0, 705
    %v263 = vld [vmem:[%s262] ss:$2 sm:$0xff]
    %s264 = scalar_lea.vmem %s0, 721
    %v265 = vld [vmem:[%s264] ss:$2 sm:$0xff]
    %s266 = scalar_lea.vmem %s0, 737
    %v267 = vld [vmem:[%s266] ss:$2 sm:$0xff]
    %s268 = scalar_lea.vmem %s0, 753
    %v269 = vld [vmem:[%s268] ss:$2 sm:$0xff]
    %s270 = scalar_lea.vmem %s0, 769
    %v271 = vld [vmem:[%s270] ss:$2 sm:$0xff]
    %s272 = scalar_lea.vmem %s0, 785
    %v273 = vld [vmem:[%s272] ss:$2 sm:$0xff]
    %s274 = scalar_lea.vmem %s0, 801
    %v275 = vld [vmem:[%s274] ss:$2 sm:$0xff]
    %s276 = scalar_lea.vmem %s0, 817
    %v277 = vld [vmem:[%s276] ss:$2 sm:$0xff]
    %s278 = scalar_lea.vmem %s0, 833
    %v279 = vld [vmem:[%s278] ss:$2 sm:$0xff]
    %s280 = scalar_lea.vmem %s0, 849
    %v281 = vld [vmem:[%s280] ss:$2 sm:$0xff]
    %s282 = scalar_lea.vmem %s0, 865
    %v283 = vld [vmem:[%s282] ss:$2 sm:$0xff]
    %s284 = scalar_lea.vmem %s0, 881
    %v285 = vld [vmem:[%s284] ss:$2 sm:$0xff]
    %s286 = scalar_lea.vmem %s0, 897
    %v287 = vld [vmem:[%s286] ss:$2 sm:$0xff]
    %s288 = scalar_lea.vmem %s0, 913
    %v289 = vld [vmem:[%s288] ss:$2 sm:$0xff]
    %s290 = scalar_lea.vmem %s0, 929
    %v291 = vld [vmem:[%s290] ss:$2 sm:$0xff]
    %s292 = scalar_lea.vmem %s0, 945
    %v293 = vld [vmem:[%s292] ss:$2 sm:$0xff]
    %s294 = scalar_lea.vmem %s0, 961
    %v295 = vld [vmem:[%s294] ss:$2 sm:$0xff]
    %s296 = scalar_lea.vmem %s0, 977
    %v297 = vld [vmem:[%s296] ss:$2 sm:$0xff]
    %s298 = scalar_lea.vmem %s0, 993
    %v299 = vld [vmem:[%s298] ss:$2 sm:$0xff]
    %s300 = scalar_lea.vmem %s0, 1009
    %v301 = vld [vmem:[%s300] ss:$2 sm:$0xf]
    %s302 = scalar_lea.vmem %s0, 2
    %v303 = vld [vmem:[%s302] ss:$2 sm:$0xff]
    %s304 = scalar_lea.vmem %s0, 18
    %v305 = vld [vmem:[%s304] ss:$2 sm:$0xff]
    %s306 = scalar_lea.vmem %s0, 34
    %v307 = vld [vmem:[%s306] ss:$2 sm:$0xff]
    %s308 = scalar_lea.vmem %s0, 50
    %v309 = vld [vmem:[%s308] ss:$2 sm:$0xff]
    %s310 = scalar_lea.vmem %s0, 66
    %v311 = vld [vmem:[%s310] ss:$2 sm:$0xff]
    %s312 = scalar_lea.vmem %s0, 82
    %v313 = vld [vmem:[%s312] ss:$2 sm:$0xff]
    %s314 = scalar_lea.vmem %s0, 98
    %v315 = vld [vmem:[%s314] ss:$2 sm:$0xff]
    %s316 = scalar_lea.vmem %s0, 114
    %v317 = vld [vmem:[%s316] ss:$2 sm:$0xff]
    %s318 = scalar_lea.vmem %s0, 130
    %v319 = vld [vmem:[%s318] ss:$2 sm:$0xff]
    %s320 = scalar_lea.vmem %s0, 146
    %v321 = vld [vmem:[%s320] ss:$2 sm:$0xff]
    %s322 = scalar_lea.vmem %s0, 162
    %v323 = vld [vmem:[%s322] ss:$2 sm:$0xff]
    %s324 = scalar_lea.vmem %s0, 178
    %v325 = vld [vmem:[%s324] ss:$2 sm:$0xff]
    %s326 = scalar_lea.vmem %s0, 194
    %v327 = vld [vmem:[%s326] ss:$2 sm:$0xff]
    %s328 = scalar_lea.vmem %s0, 210
    %v329 = vld [vmem:[%s328] ss:$2 sm:$0xff]
    %s330 = scalar_lea.vmem %s0, 226
    %v331 = vld [vmem:[%s330] ss:$2 sm:$0xff]
    %s332 = scalar_lea.vmem %s0, 242
    %v333 = vld [vmem:[%s332] ss:$2 sm:$0xff]
    %s334 = scalar_lea.vmem %s0, 258
    %v335 = vld [vmem:[%s334] ss:$2 sm:$0xff]
    %s336 = scalar_lea.vmem %s0, 274
    %v337 = vld [vmem:[%s336] ss:$2 sm:$0xff]
    %s338 = scalar_lea.vmem %s0, 290
    %v339 = vld [vmem:[%s338] ss:$2 sm:$0xff]
    %s340 = scalar_lea.vmem %s0, 306
    %v341 = vld [vmem:[%s340] ss:$2 sm:$0xff]
    %s342 = scalar_lea.vmem %s0, 322
    %v343 = vld [vmem:[%s342] ss:$2 sm:$0xff]
    %s344 = scalar_lea.vmem %s0, 338
    %v345 = vld [vmem:[%s344] ss:$2 sm:$0xff]
    %s346 = scalar_lea.vmem %s0, 354
    %v347 = vld [vmem:[%s346] ss:$2 sm:$0xff]
    %s348 = scalar_lea.vmem %s0, 370
    %v349 = vld [vmem:[%s348] ss:$2 sm:$0xff]
    %s350 = scalar_lea.vmem %s0, 386
    %v351 = vld [vmem:[%s350] ss:$2 sm:$0xff]
    %s352 = scalar_lea.vmem %s0, 402
    %v353 = vld [vmem:[%s352] ss:$2 sm:$0xff]
    %s354 = scalar_lea.vmem %s0, 418
    %v355 = vld [vmem:[%s354] ss:$2 sm:$0xff]
    %s356 = scalar_lea.vmem %s0, 434
    %v357 = vld [vmem:[%s356] ss:$2 sm:$0xff]
    %s358 = scalar_lea.vmem %s0, 450
    %v359 = vld [vmem:[%s358] ss:$2 sm:$0xff]
    %s360 = scalar_lea.vmem %s0, 466
    %v361 = vld [vmem:[%s360] ss:$2 sm:$0xff]
    %s362 = scalar_lea.vmem %s0, 482
    %v363 = vld [vmem:[%s362] ss:$2 sm:$0xff]
    %s364 = scalar_lea.vmem %s0, 498
    %v365 = vld [vmem:[%s364] ss:$2 sm:$0xff]
    %s366 = scalar_lea.vmem %s0, 514
    %v367 = vld [vmem:[%s366] ss:$2 sm:$0xff]
    %s368 = scalar_lea.vmem %s0, 530
    %v369 = vld [vmem:[%s368] ss:$2 sm:$0xff]
    %s370 = scalar_lea.vmem %s0, 546
    %v371 = vld [vmem:[%s370] ss:$2 sm:$0xff]
    %s372 = scalar_lea.vmem %s0, 562
    %v373 = vld [vmem:[%s372] ss:$2 sm:$0xff]
    %s374 = scalar_lea.vmem %s0, 578
    %v375 = vld [vmem:[%s374] ss:$2 sm:$0xff]
    %s376 = scalar_lea.vmem %s0, 594
    %v377 = vld [vmem:[%s376] ss:$2 sm:$0xff]
    %s378 = scalar_lea.vmem %s0, 610
    %v379 = vld [vmem:[%s378] ss:$2 sm:$0xff]
    %s380 = scalar_lea.vmem %s0, 626
    %v381 = vld [vmem:[%s380] ss:$2 sm:$0xff]
    %s382 = scalar_lea.vmem %s0, 642
    %v383 = vld [vmem:[%s382] ss:$2 sm:$0xff]
    %s384 = scalar_lea.vmem %s0, 658
    %v385 = vld [vmem:[%s384] ss:$2 sm:$0xff]
    %s386 = scalar_lea.vmem %s0, 674
    %v387 = vld [vmem:[%s386] ss:$2 sm:$0xff]
    %s388 = scalar_lea.vmem %s0, 690
    %v389 = vld [vmem:[%s388] ss:$2 sm:$0xff]
    %s390 = scalar_lea.vmem %s0, 706
    %v391 = vld [vmem:[%s390] ss:$2 sm:$0xff]
    %s392 = scalar_lea.vmem %s0, 722
    %v393 = vld [vmem:[%s392] ss:$2 sm:$0xff]
    %s394 = scalar_lea.vmem %s0, 738
    %v395 = vld [vmem:[%s394] ss:$2 sm:$0xff]
    %s396 = scalar_lea.vmem %s0, 754
    %v397 = vld [vmem:[%s396] ss:$2 sm:$0xff]
    %s398 = scalar_lea.vmem %s0, 770
    %v399 = vld [vmem:[%s398] ss:$2 sm:$0xff]
    %s400 = scalar_lea.vmem %s0, 786
    %v401 = vld [vmem:[%s400] ss:$2 sm:$0xff]
    %s402 = scalar_lea.vmem %s0, 802
    %v403 = vld [vmem:[%s402] ss:$2 sm:$0xff]
    %s404 = scalar_lea.vmem %s0, 818
    %v405 = vld [vmem:[%s404] ss:$2 sm:$0xff]
    %s406 = scalar_lea.vmem %s0, 834
    %v407 = vld [vmem:[%s406] ss:$2 sm:$0xff]
    %s408 = scalar_lea.vmem %s0, 850
    %v409 = vld [vmem:[%s408] ss:$2 sm:$0xff]
    %s410 = scalar_lea.vmem %s0, 866
    %v411 = vld [vmem:[%s410] ss:$2 sm:$0xff]
    %s412 = scalar_lea.vmem %s0, 882
    %v413 = vld [vmem:[%s412] ss:$2 sm:$0xff]
    %s414 = scalar_lea.vmem %s0, 898
    %v415 = vld [vmem:[%s414] ss:$2 sm:$0xff]
    %s416 = scalar_lea.vmem %s0, 914
    %v417 = vld [vmem:[%s416] ss:$2 sm:$0xff]
    %s418 = scalar_lea.vmem %s0, 930
    %v419 = vld [vmem:[%s418] ss:$2 sm:$0xff]
    %s420 = scalar_lea.vmem %s0, 946
    %v421 = vld [vmem:[%s420] ss:$2 sm:$0xff]
    %s422 = scalar_lea.vmem %s0, 962
    %v423 = vld [vmem:[%s422] ss:$2 sm:$0xff]
    %s424 = scalar_lea.vmem %s0, 978
    %v425 = vld [vmem:[%s424] ss:$2 sm:$0xff]
    %s426 = scalar_lea.vmem %s0, 994
    %v427 = vld [vmem:[%s426] ss:$2 sm:$0xff]
    %s428 = scalar_lea.vmem %s0, 1010
    %v429 = vld [vmem:[%s428] ss:$2 sm:$0xf]
    %s430 = scalar_lea.vmem %s0, 3
    %v431 = vld [vmem:[%s430] ss:$2 sm:$0xff]
    %s432 = scalar_lea.vmem %s0, 19
    %v433 = vld [vmem:[%s432] ss:$2 sm:$0xff]
    %s434 = scalar_lea.vmem %s0, 35
    %v435 = vld [vmem:[%s434] ss:$2 sm:$0xff]
    %s436 = scalar_lea.vmem %s0, 51
    %v437 = vld [vmem:[%s436] ss:$2 sm:$0xff]
    %s438 = scalar_lea.vmem %s0, 67
    %v439 = vld [vmem:[%s438] ss:$2 sm:$0xff]
    %s440 = scalar_lea.vmem %s0, 83
    %v441 = vld [vmem:[%s440] ss:$2 sm:$0xff]
    %s442 = scalar_lea.vmem %s0, 99
    %v443 = vld [vmem:[%s442] ss:$2 sm:$0xff]
    %s444 = scalar_lea.vmem %s0, 115
    %v445 = vld [vmem:[%s444] ss:$2 sm:$0xff]
    %s446 = scalar_lea.vmem %s0, 131
    %v447 = vld [vmem:[%s446] ss:$2 sm:$0xff]
    %s448 = scalar_lea.vmem %s0, 147
    %v449 = vld [vmem:[%s448] ss:$2 sm:$0xff]
    %s450 = scalar_lea.vmem %s0, 163
    %v451 = vld [vmem:[%s450] ss:$2 sm:$0xff]
    %s452 = scalar_lea.vmem %s0, 179
    %v453 = vld [vmem:[%s452] ss:$2 sm:$0xff]
    %s454 = scalar_lea.vmem %s0, 195
    %v455 = vld [vmem:[%s454] ss:$2 sm:$0xff]
    %s456 = scalar_lea.vmem %s0, 211
    %v457 = vld [vmem:[%s456] ss:$2 sm:$0xff]
    %s458 = scalar_lea.vmem %s0, 227
    %v459 = vld [vmem:[%s458] ss:$2 sm:$0xff]
    %s460 = scalar_lea.vmem %s0, 243
    %v461 = vld [vmem:[%s460] ss:$2 sm:$0xff]
    %s462 = scalar_lea.vmem %s0, 259
    %v463 = vld [vmem:[%s462] ss:$2 sm:$0xff]
    %s464 = scalar_lea.vmem %s0, 275
    %v465 = vld [vmem:[%s464] ss:$2 sm:$0xff]
    %s466 = scalar_lea.vmem %s0, 291
    %v467 = vld [vmem:[%s466] ss:$2 sm:$0xff]
    %s468 = scalar_lea.vmem %s0, 307
    %v469 = vld [vmem:[%s468] ss:$2 sm:$0xff]
    %s470 = scalar_lea.vmem %s0, 323
    %v471 = vld [vmem:[%s470] ss:$2 sm:$0xff]
    %s472 = scalar_lea.vmem %s0, 339
    %v473 = vld [vmem:[%s472] ss:$2 sm:$0xff]
    %s474 = scalar_lea.vmem %s0, 355
    %v475 = vld [vmem:[%s474] ss:$2 sm:$0xff]
    %s476 = scalar_lea.vmem %s0, 371
    %v477 = vld [vmem:[%s476] ss:$2 sm:$0xff]
    %s478 = scalar_lea.vmem %s0, 387
    %v479 = vld [vmem:[%s478] ss:$2 sm:$0xff]
    %s480 = scalar_lea.vmem %s0, 403
    %v481 = vld [vmem:[%s480] ss:$2 sm:$0xff]
    %s482 = scalar_lea.vmem %s0, 419
    %v483 = vld [vmem:[%s482] ss:$2 sm:$0xff]
    %s484 = scalar_lea.vmem %s0, 435
    %v485 = vld [vmem:[%s484] ss:$2 sm:$0xff]
    %s486 = scalar_lea.vmem %s0, 451
    %v487 = vld [vmem:[%s486] ss:$2 sm:$0xff]
    %s488 = scalar_lea.vmem %s0, 467
    %v489 = vld [vmem:[%s488] ss:$2 sm:$0xff]
    %s490 = scalar_lea.vmem %s0, 483
    %v491 = vld [vmem:[%s490] ss:$2 sm:$0xff]
    %s492 = scalar_lea.vmem %s0, 499
    %v493 = vld [vmem:[%s492] ss:$2 sm:$0xff]
    %s494 = scalar_lea.vmem %s0, 515
    %v495 = vld [vmem:[%s494] ss:$2 sm:$0xff]
    %s496 = scalar_lea.vmem %s0, 531
    %v497 = vld [vmem:[%s496] ss:$2 sm:$0xff]
    %s498 = scalar_lea.vmem %s0, 547
    %v499 = vld [vmem:[%s498] ss:$2 sm:$0xff]
    %s500 = scalar_lea.vmem %s0, 563
    %v501 = vld [vmem:[%s500] ss:$2 sm:$0xff]
    %s502 = scalar_lea.vmem %s0, 579
    %v503 = vld [vmem:[%s502] ss:$2 sm:$0xff]
    %s504 = scalar_lea.vmem %s0, 595
    %v505 = vld [vmem:[%s504] ss:$2 sm:$0xff]
    %s506 = scalar_lea.vmem %s0, 611
    %v507 = vld [vmem:[%s506] ss:$2 sm:$0xff]
    %s508 = scalar_lea.vmem %s0, 627
    %v509 = vld [vmem:[%s508] ss:$2 sm:$0xff]
    %s510 = scalar_lea.vmem %s0, 643
    %v511 = vld [vmem:[%s510] ss:$2 sm:$0xff]
    %s512 = scalar_lea.vmem %s0, 659
    %v513 = vld [vmem:[%s512] ss:$2 sm:$0xff]
    %s514 = scalar_lea.vmem %s0, 675
    %v515 = vld [vmem:[%s514] ss:$2 sm:$0xff]
    %s516 = scalar_lea.vmem %s0, 691
    %v517 = vld [vmem:[%s516] ss:$2 sm:$0xff]
    %s518 = scalar_lea.vmem %s0, 707
    %v519 = vld [vmem:[%s518] ss:$2 sm:$0xff]
    %s520 = scalar_lea.vmem %s0, 723
    %v521 = vld [vmem:[%s520] ss:$2 sm:$0xff]
    %s522 = scalar_lea.vmem %s0, 739
    %v523 = vld [vmem:[%s522] ss:$2 sm:$0xff]
    %s524 = scalar_lea.vmem %s0, 755
    %v525 = vld [vmem:[%s524] ss:$2 sm:$0xff]
    %s526 = scalar_lea.vmem %s0, 771
    %v527 = vld [vmem:[%s526] ss:$2 sm:$0xff]
    %s528 = scalar_lea.vmem %s0, 787
    %v529 = vld [vmem:[%s528] ss:$2 sm:$0xff]
    %s530 = scalar_lea.vmem %s0, 803
    %v531 = vld [vmem:[%s530] ss:$2 sm:$0xff]
    %s532 = scalar_lea.vmem %s0, 819
    %v533 = vld [vmem:[%s532] ss:$2 sm:$0xff]
    %s534 = scalar_lea.vmem %s0, 835
    %v535 = vld [vmem:[%s534] ss:$2 sm:$0xff]
    %s536 = scalar_lea.vmem %s0, 851
    %v537 = vld [vmem:[%s536] ss:$2 sm:$0xff]
    %s538 = scalar_lea.vmem %s0, 867
    %v539 = vld [vmem:[%s538] ss:$2 sm:$0xff]
    %s540 = scalar_lea.vmem %s0, 883
    %v541 = vld [vmem:[%s540] ss:$2 sm:$0xff]
    %s542 = scalar_lea.vmem %s0, 899
    %v543 = vld [vmem:[%s542] ss:$2 sm:$0xff]
    %s544 = scalar_lea.vmem %s0, 915
    %v545 = vld [vmem:[%s544] ss:$2 sm:$0xff]
    %s546 = scalar_lea.vmem %s0, 931
    %v547 = vld [vmem:[%s546] ss:$2 sm:$0xff]
    %s548 = scalar_lea.vmem %s0, 947
    %v549 = vld [vmem:[%s548] ss:$2 sm:$0xff]
    %s550 = scalar_lea.vmem %s0, 963
    %v551 = vld [vmem:[%s550] ss:$2 sm:$0xff]
    %s552 = scalar_lea.vmem %s0, 979
    %v553 = vld [vmem:[%s552] ss:$2 sm:$0xff]
    %s554 = scalar_lea.vmem %s0, 995
    %v555 = vld [vmem:[%s554] ss:$2 sm:$0xff]
    %s556 = scalar_lea.vmem %s0, 1011
    %v557 = vld [vmem:[%s556] ss:$2 sm:$0xf]
    %s558 = scalar_lea.vmem %s0, 4
    %v559 = vld [vmem:[%s558] ss:$2 sm:$0xff]
    %s560 = scalar_lea.vmem %s0, 20
    %v561 = vld [vmem:[%s560] ss:$2 sm:$0xff]
    %s562 = scalar_lea.vmem %s0, 36
    %v563 = vld [vmem:[%s562] ss:$2 sm:$0xff]
    %s564 = scalar_lea.vmem %s0, 52
    %v565 = vld [vmem:[%s564] ss:$2 sm:$0xff]
    %s566 = scalar_lea.vmem %s0, 68
    %v567 = vld [vmem:[%s566] ss:$2 sm:$0xff]
    %s568 = scalar_lea.vmem %s0, 84
    %v569 = vld [vmem:[%s568] ss:$2 sm:$0xff]
    %s570 = scalar_lea.vmem %s0, 100
    %v571 = vld [vmem:[%s570] ss:$2 sm:$0xff]
    %s572 = scalar_lea.vmem %s0, 116
    %v573 = vld [vmem:[%s572] ss:$2 sm:$0xff]
    %s574 = scalar_lea.vmem %s0, 132
    %v575 = vld [vmem:[%s574] ss:$2 sm:$0xff]
    %s576 = scalar_lea.vmem %s0, 148
    %v577 = vld [vmem:[%s576] ss:$2 sm:$0xff]
    %s578 = scalar_lea.vmem %s0, 164
    %v579 = vld [vmem:[%s578] ss:$2 sm:$0xff]
    %s580 = scalar_lea.vmem %s0, 180
    %v581 = vld [vmem:[%s580] ss:$2 sm:$0xff]
    %s582 = scalar_lea.vmem %s0, 196
    %v583 = vld [vmem:[%s582] ss:$2 sm:$0xff]
    %s584 = scalar_lea.vmem %s0, 212
    %v585 = vld [vmem:[%s584] ss:$2 sm:$0xff]
    %s586 = scalar_lea.vmem %s0, 228
    %v587 = vld [vmem:[%s586] ss:$2 sm:$0xff]
    %s588 = scalar_lea.vmem %s0, 244
    %v589 = vld [vmem:[%s588] ss:$2 sm:$0xff]
    %s590 = scalar_lea.vmem %s0, 260
    %v591 = vld [vmem:[%s590] ss:$2 sm:$0xff]
    %s592 = scalar_lea.vmem %s0, 276
    %v593 = vld [vmem:[%s592] ss:$2 sm:$0xff]
    %s594 = scalar_lea.vmem %s0, 292
    %v595 = vld [vmem:[%s594] ss:$2 sm:$0xff]
    %s596 = scalar_lea.vmem %s0, 308
    %v597 = vld [vmem:[%s596] ss:$2 sm:$0xff]
    %s598 = scalar_lea.vmem %s0, 324
    %v599 = vld [vmem:[%s598] ss:$2 sm:$0xff]
    %s600 = scalar_lea.vmem %s0, 340
    %v601 = vld [vmem:[%s600] ss:$2 sm:$0xff]
    %s602 = scalar_lea.vmem %s0, 356
    %v603 = vld [vmem:[%s602] ss:$2 sm:$0xff]
    %s604 = scalar_lea.vmem %s0, 372
    %v605 = vld [vmem:[%s604] ss:$2 sm:$0xff]
    %s606 = scalar_lea.vmem %s0, 388
    %v607 = vld [vmem:[%s606] ss:$2 sm:$0xff]
    %s608 = scalar_lea.vmem %s0, 404
    %v609 = vld [vmem:[%s608] ss:$2 sm:$0xff]
    %s610 = scalar_lea.vmem %s0, 420
    %v611 = vld [vmem:[%s610] ss:$2 sm:$0xff]
    %s612 = scalar_lea.vmem %s0, 436
    %v613 = vld [vmem:[%s612] ss:$2 sm:$0xff]
    %s614 = scalar_lea.vmem %s0, 452
    %v615 = vld [vmem:[%s614] ss:$2 sm:$0xff]
    %s616 = scalar_lea.vmem %s0, 468
    %v617 = vld [vmem:[%s616] ss:$2 sm:$0xff]
    %s618 = scalar_lea.vmem %s0, 484
    %v619 = vld [vmem:[%s618] ss:$2 sm:$0xff]
    %s620 = scalar_lea.vmem %s0, 500
    %v621 = vld [vmem:[%s620] ss:$2 sm:$0xff]
    %s622 = scalar_lea.vmem %s0, 516
    %v623 = vld [vmem:[%s622] ss:$2 sm:$0xff]
    %s624 = scalar_lea.vmem %s0, 532
    %v625 = vld [vmem:[%s624] ss:$2 sm:$0xff]
    %s626 = scalar_lea.vmem %s0, 548
    %v627 = vld [vmem:[%s626] ss:$2 sm:$0xff]
    %s628 = scalar_lea.vmem %s0, 564
    %v629 = vld [vmem:[%s628] ss:$2 sm:$0xff]
    %s630 = scalar_lea.vmem %s0, 580
    %v631 = vld [vmem:[%s630] ss:$2 sm:$0xff]
    %s632 = scalar_lea.vmem %s0, 596
    %v633 = vld [vmem:[%s632] ss:$2 sm:$0xff]
    %s634 = scalar_lea.vmem %s0, 612
    %v635 = vld [vmem:[%s634] ss:$2 sm:$0xff]
    %s636 = scalar_lea.vmem %s0, 628
    %v637 = vld [vmem:[%s636] ss:$2 sm:$0xff]
    %s638 = scalar_lea.vmem %s0, 644
    %v639 = vld [vmem:[%s638] ss:$2 sm:$0xff]
    %s640 = scalar_lea.vmem %s0, 660
    %v641 = vld [vmem:[%s640] ss:$2 sm:$0xff]
    %s642 = scalar_lea.vmem %s0, 676
    %v643 = vld [vmem:[%s642] ss:$2 sm:$0xff]
    %s644 = scalar_lea.vmem %s0, 692
    %v645 = vld [vmem:[%s644] ss:$2 sm:$0xff]
    %s646 = scalar_lea.vmem %s0, 708
    %v647 = vld [vmem:[%s646] ss:$2 sm:$0xff]
    %s648 = scalar_lea.vmem %s0, 724
    %v649 = vld [vmem:[%s648] ss:$2 sm:$0xff]
    %s650 = scalar_lea.vmem %s0, 740
    %v651 = vld [vmem:[%s650] ss:$2 sm:$0xff]
    %s652 = scalar_lea.vmem %s0, 756
    %v653 = vld [vmem:[%s652] ss:$2 sm:$0xff]
    %s654 = scalar_lea.vmem %s0, 772
    %v655 = vld [vmem:[%s654] ss:$2 sm:$0xff]
    %s656 = scalar_lea.vmem %s0, 788
    %v657 = vld [vmem:[%s656] ss:$2 sm:$0xff]
    %s658 = scalar_lea.vmem %s0, 804
    %v659 = vld [vmem:[%s658] ss:$2 sm:$0xff]
    %s660 = scalar_lea.vmem %s0, 820
    %v661 = vld [vmem:[%s660] ss:$2 sm:$0xff]
    %s662 = scalar_lea.vmem %s0, 836
    %v663 = vld [vmem:[%s662] ss:$2 sm:$0xff]
    %s664 = scalar_lea.vmem %s0, 852
    %v665 = vld [vmem:[%s664] ss:$2 sm:$0xff]
    %s666 = scalar_lea.vmem %s0, 868
    %v667 = vld [vmem:[%s666] ss:$2 sm:$0xff]
    %s668 = scalar_lea.vmem %s0, 884
    %v669 = vld [vmem:[%s668] ss:$2 sm:$0xff]
    %s670 = scalar_lea.vmem %s0, 900
    %v671 = vld [vmem:[%s670] ss:$2 sm:$0xff]
    %s672 = scalar_lea.vmem %s0, 916
    %v673 = vld [vmem:[%s672] ss:$2 sm:$0xff]
    %s674 = scalar_lea.vmem %s0, 932
    %v675 = vld [vmem:[%s674] ss:$2 sm:$0xff]
    %s676 = scalar_lea.vmem %s0, 948
    %v677 = vld [vmem:[%s676] ss:$2 sm:$0xff]
    %s678 = scalar_lea.vmem %s0, 964
    %v679 = vld [vmem:[%s678] ss:$2 sm:$0xff]
    %s680 = scalar_lea.vmem %s0, 980
    %v681 = vld [vmem:[%s680] ss:$2 sm:$0xff]
    %s682 = scalar_lea.vmem %s0, 996
    %v683 = vld [vmem:[%s682] ss:$2 sm:$0xff]
    %s684 = scalar_lea.vmem %s0, 1012
    %v685 = vld [vmem:[%s684] ss:$2 sm:$0xf]
    %s686 = scalar_lea.vmem %s0, 5
    %v687 = vld [vmem:[%s686] ss:$2 sm:$0xff]
    %s688 = scalar_lea.vmem %s0, 21
    %v689 = vld [vmem:[%s688] ss:$2 sm:$0xff]
    %s690 = scalar_lea.vmem %s0, 37
    %v691 = vld [vmem:[%s690] ss:$2 sm:$0xff]
    %s692 = scalar_lea.vmem %s0, 53
    %v693 = vld [vmem:[%s692] ss:$2 sm:$0xff]
    %s694 = scalar_lea.vmem %s0, 69
    %v695 = vld [vmem:[%s694] ss:$2 sm:$0xff]
    %s696 = scalar_lea.vmem %s0, 85
    %v697 = vld [vmem:[%s696] ss:$2 sm:$0xff]
    %s698 = scalar_lea.vmem %s0, 101
    %v699 = vld [vmem:[%s698] ss:$2 sm:$0xff]
    %s700 = scalar_lea.vmem %s0, 117
    %v701 = vld [vmem:[%s700] ss:$2 sm:$0xff]
    %s702 = scalar_lea.vmem %s0, 133
    %v703 = vld [vmem:[%s702] ss:$2 sm:$0xff]
    %s704 = scalar_lea.vmem %s0, 149
    %v705 = vld [vmem:[%s704] ss:$2 sm:$0xff]
    %s706 = scalar_lea.vmem %s0, 165
    %v707 = vld [vmem:[%s706] ss:$2 sm:$0xff]
    %s708 = scalar_lea.vmem %s0, 181
    %v709 = vld [vmem:[%s708] ss:$2 sm:$0xff]
    %s710 = scalar_lea.vmem %s0, 197
    %v711 = vld [vmem:[%s710] ss:$2 sm:$0xff]
    %s712 = scalar_lea.vmem %s0, 213
    %v713 = vld [vmem:[%s712] ss:$2 sm:$0xff]
    %s714 = scalar_lea.vmem %s0, 229
    %v715 = vld [vmem:[%s714] ss:$2 sm:$0xff]
    %s716 = scalar_lea.vmem %s0, 245
    %v717 = vld [vmem:[%s716] ss:$2 sm:$0xff]
    %s718 = scalar_lea.vmem %s0, 261
    %v719 = vld [vmem:[%s718] ss:$2 sm:$0xff]
    %s720 = scalar_lea.vmem %s0, 277
    %v721 = vld [vmem:[%s720] ss:$2 sm:$0xff]
    %s722 = scalar_lea.vmem %s0, 293
    %v723 = vld [vmem:[%s722] ss:$2 sm:$0xff]
    %s724 = scalar_lea.vmem %s0, 309
    %v725 = vld [vmem:[%s724] ss:$2 sm:$0xff]
    %s726 = scalar_lea.vmem %s0, 325
    %v727 = vld [vmem:[%s726] ss:$2 sm:$0xff]
    %s728 = scalar_lea.vmem %s0, 341
    %v729 = vld [vmem:[%s728] ss:$2 sm:$0xff]
    %s730 = scalar_lea.vmem %s0, 357
    %v731 = vld [vmem:[%s730] ss:$2 sm:$0xff]
    %s732 = scalar_lea.vmem %s0, 373
    %v733 = vld [vmem:[%s732] ss:$2 sm:$0xff]
    %s734 = scalar_lea.vmem %s0, 389
    %v735 = vld [vmem:[%s734] ss:$2 sm:$0xff]
    %s736 = scalar_lea.vmem %s0, 405
    %v737 = vld [vmem:[%s736] ss:$2 sm:$0xff]
    %s738 = scalar_lea.vmem %s0, 421
    %v739 = vld [vmem:[%s738] ss:$2 sm:$0xff]
    %s740 = scalar_lea.vmem %s0, 437
    %v741 = vld [vmem:[%s740] ss:$2 sm:$0xff]
    %s742 = scalar_lea.vmem %s0, 453
    %v743 = vld [vmem:[%s742] ss:$2 sm:$0xff]
    %s744 = scalar_lea.vmem %s0, 469
    %v745 = vld [vmem:[%s744] ss:$2 sm:$0xff]
    %s746 = scalar_lea.vmem %s0, 485
    %v747 = vld [vmem:[%s746] ss:$2 sm:$0xff]
    %s748 = scalar_lea.vmem %s0, 501
    %v749 = vld [vmem:[%s748] ss:$2 sm:$0xff]
    %s750 = scalar_lea.vmem %s0, 517
    %v751 = vld [vmem:[%s750] ss:$2 sm:$0xff]
    %s752 = scalar_lea.vmem %s0, 533
    %v753 = vld [vmem:[%s752] ss:$2 sm:$0xff]
    %s754 = scalar_lea.vmem %s0, 549
    %v755 = vld [vmem:[%s754] ss:$2 sm:$0xff]
    %s756 = scalar_lea.vmem %s0, 565
    %v757 = vld [vmem:[%s756] ss:$2 sm:$0xff]
    %s758 = scalar_lea.vmem %s0, 581
    %v759 = vld [vmem:[%s758] ss:$2 sm:$0xff]
    %s760 = scalar_lea.vmem %s0, 597
    %v761 = vld [vmem:[%s760] ss:$2 sm:$0xff]
    %s762 = scalar_lea.vmem %s0, 613
    %v763 = vld [vmem:[%s762] ss:$2 sm:$0xff]
    %s764 = scalar_lea.vmem %s0, 629
    %v765 = vld [vmem:[%s764] ss:$2 sm:$0xff]
    %s766 = scalar_lea.vmem %s0, 645
    %v767 = vld [vmem:[%s766] ss:$2 sm:$0xff]
    %s768 = scalar_lea.vmem %s0, 661
    %v769 = vld [vmem:[%s768] ss:$2 sm:$0xff]
    %s770 = scalar_lea.vmem %s0, 677
    %v771 = vld [vmem:[%s770] ss:$2 sm:$0xff]
    %s772 = scalar_lea.vmem %s0, 693
    %v773 = vld [vmem:[%s772] ss:$2 sm:$0xff]
    %s774 = scalar_lea.vmem %s0, 709
    %v775 = vld [vmem:[%s774] ss:$2 sm:$0xff]
    %s776 = scalar_lea.vmem %s0, 725
    %v777 = vld [vmem:[%s776] ss:$2 sm:$0xff]
    %s778 = scalar_lea.vmem %s0, 741
    %v779 = vld [vmem:[%s778] ss:$2 sm:$0xff]
    %s780 = scalar_lea.vmem %s0, 757
    %v781 = vld [vmem:[%s780] ss:$2 sm:$0xff]
    %s782 = scalar_lea.vmem %s0, 773
    %v783 = vld [vmem:[%s782] ss:$2 sm:$0xff]
    %s784 = scalar_lea.vmem %s0, 789
    %v785 = vld [vmem:[%s784] ss:$2 sm:$0xff]
    %s786 = scalar_lea.vmem %s0, 805
    %v787 = vld [vmem:[%s786] ss:$2 sm:$0xff]
    %s788 = scalar_lea.vmem %s0, 821
    %v789 = vld [vmem:[%s788] ss:$2 sm:$0xff]
    %s790 = scalar_lea.vmem %s0, 837
    %v791 = vld [vmem:[%s790] ss:$2 sm:$0xff]
    %s792 = scalar_lea.vmem %s0, 853
    %v793 = vld [vmem:[%s792] ss:$2 sm:$0xff]
    %s794 = scalar_lea.vmem %s0, 869
    %v795 = vld [vmem:[%s794] ss:$2 sm:$0xff]
    %s796 = scalar_lea.vmem %s0, 885
    %v797 = vld [vmem:[%s796] ss:$2 sm:$0xff]
    %s798 = scalar_lea.vmem %s0, 901
    %v799 = vld [vmem:[%s798] ss:$2 sm:$0xff]
    %s800 = scalar_lea.vmem %s0, 917
    %v801 = vld [vmem:[%s800] ss:$2 sm:$0xff]
    %s802 = scalar_lea.vmem %s0, 933
    %v803 = vld [vmem:[%s802] ss:$2 sm:$0xff]
    %s804 = scalar_lea.vmem %s0, 949
    %v805 = vld [vmem:[%s804] ss:$2 sm:$0xff]
    %s806 = scalar_lea.vmem %s0, 965
    %v807 = vld [vmem:[%s806] ss:$2 sm:$0xff]
    %s808 = scalar_lea.vmem %s0, 981
    %v809 = vld [vmem:[%s808] ss:$2 sm:$0xff]
    %s810 = scalar_lea.vmem %s0, 997
    %v811 = vld [vmem:[%s810] ss:$2 sm:$0xff]
    %s812 = scalar_lea.vmem %s0, 1013
    %v813 = vld [vmem:[%s812] ss:$2 sm:$0xf]
    %878 = vrot.lane.b32.xlu0 %v175, 32
    %v879 = vpop.permute.xlu0 %878
    %880 = vrot.lane.b32.xlu0 %v177, 32
    %v881 = vpop.permute.xlu0 %880
    %882 = vrot.lane.b32.xlu0 %v179, 32
    %v883 = vpop.permute.xlu0 %882
    %884 = vrot.lane.b32.xlu0 %v181, 32
    %v885 = vpop.permute.xlu0 %884
    %886 = vrot.lane.b32.xlu0 %v183, 32
    %v887 = vpop.permute.xlu0 %886
    %888 = vrot.lane.b32.xlu0 %v185, 32
    %v889 = vpop.permute.xlu0 %888
    %890 = vrot.lane.b32.xlu0 %v187, 32
    %v891 = vpop.permute.xlu0 %890
    %892 = vrot.lane.b32.xlu0 %v189, 32
    %v893 = vpop.permute.xlu0 %892
    %894 = vrot.lane.b32.xlu0 %v191, 32
    %v895 = vpop.permute.xlu0 %894
    %896 = vrot.lane.b32.xlu0 %v193, 32
    %v897 = vpop.permute.xlu0 %896
    %898 = vrot.lane.b32.xlu0 %v195, 32
    %v899 = vpop.permute.xlu0 %898
    %900 = vrot.lane.b32.xlu0 %v197, 32
    %v901 = vpop.permute.xlu0 %900
    %902 = vrot.lane.b32.xlu0 %v199, 32
    %v903 = vpop.permute.xlu0 %902
    %904 = vrot.lane.b32.xlu0 %v201, 32
    %v905 = vpop.permute.xlu0 %904
    %906 = vrot.lane.b32.xlu0 %v203, 32
    %v907 = vpop.permute.xlu0 %906
    %908 = vrot.lane.b32.xlu0 %v205, 32
    %v909 = vpop.permute.xlu0 %908
    %910 = vrot.lane.b32.xlu0 %v207, 32
    %v911 = vpop.permute.xlu0 %910
    %912 = vrot.lane.b32.xlu0 %v209, 32
    %v913 = vpop.permute.xlu0 %912
    %914 = vrot.lane.b32.xlu0 %v211, 32
    %v915 = vpop.permute.xlu0 %914
    %916 = vrot.lane.b32.xlu0 %v213, 32
    %v917 = vpop.permute.xlu0 %916
    %918 = vrot.lane.b32.xlu0 %v215, 32
    %v919 = vpop.permute.xlu0 %918
    %920 = vrot.lane.b32.xlu0 %v217, 32
    %v921 = vpop.permute.xlu0 %920
    %922 = vrot.lane.b32.xlu0 %v219, 32
    %v923 = vpop.permute.xlu0 %922
    %924 = vrot.lane.b32.xlu0 %v221, 32
    %v925 = vpop.permute.xlu0 %924
    %926 = vrot.lane.b32.xlu0 %v223, 32
    %v927 = vpop.permute.xlu0 %926
    %928 = vrot.lane.b32.xlu0 %v225, 32
    %v929 = vpop.permute.xlu0 %928
    %930 = vrot.lane.b32.xlu0 %v227, 32
    %v931 = vpop.permute.xlu0 %930
    %932 = vrot.lane.b32.xlu0 %v229, 32
    %v933 = vpop.permute.xlu0 %932
    %934 = vrot.lane.b32.xlu0 %v231, 32
    %v935 = vpop.permute.xlu0 %934
    %936 = vrot.lane.b32.xlu0 %v233, 32
    %v937 = vpop.permute.xlu0 %936
    %938 = vrot.lane.b32.xlu0 %v235, 32
    %v939 = vpop.permute.xlu0 %938
    %940 = vrot.lane.b32.xlu0 %v237, 32
    %v941 = vpop.permute.xlu0 %940
    %942 = vrot.lane.b32.xlu0 %v239, 32
    %v943 = vpop.permute.xlu0 %942
    %944 = vrot.lane.b32.xlu0 %v241, 32
    %v945 = vpop.permute.xlu0 %944
    %946 = vrot.lane.b32.xlu0 %v243, 32
    %v947 = vpop.permute.xlu0 %946
    %948 = vrot.lane.b32.xlu0 %v245, 32
    %v949 = vpop.permute.xlu0 %948
    %950 = vrot.lane.b32.xlu0 %v247, 32
    %v951 = vpop.permute.xlu0 %950
    %952 = vrot.lane.b32.xlu0 %v249, 32
    %v953 = vpop.permute.xlu0 %952
    %954 = vrot.lane.b32.xlu0 %v251, 32
    %v955 = vpop.permute.xlu0 %954
    %956 = vrot.lane.b32.xlu0 %v253, 32
    %v957 = vpop.permute.xlu0 %956
    %958 = vrot.lane.b32.xlu0 %v255, 32
    %v959 = vpop.permute.xlu0 %958
    %960 = vrot.lane.b32.xlu0 %v257, 32
    %v961 = vpop.permute.xlu0 %960
    %962 = vrot.lane.b32.xlu0 %v259, 32
    %v963 = vpop.permute.xlu0 %962
    %964 = vrot.lane.b32.xlu0 %v261, 32
    %v965 = vpop.permute.xlu0 %964
    %966 = vrot.lane.b32.xlu0 %v263, 32
    %v967 = vpop.permute.xlu0 %966
    %968 = vrot.lane.b32.xlu0 %v265, 32
    %v969 = vpop.permute.xlu0 %968
    %970 = vrot.lane.b32.xlu0 %v267, 32
    %v971 = vpop.permute.xlu0 %970
    %972 = vrot.lane.b32.xlu0 %v269, 32
    %v973 = vpop.permute.xlu0 %972
    %974 = vrot.lane.b32.xlu0 %v271, 32
    %v975 = vpop.permute.xlu0 %974
    %976 = vrot.lane.b32.xlu0 %v273, 32
    %v977 = vpop.permute.xlu0 %976
    %978 = vrot.lane.b32.xlu0 %v275, 32
    %v979 = vpop.permute.xlu0 %978
    %980 = vrot.lane.b32.xlu0 %v277, 32
    %v981 = vpop.permute.xlu0 %980
    %982 = vrot.lane.b32.xlu0 %v279, 32
    %v983 = vpop.permute.xlu0 %982
    %984 = vrot.lane.b32.xlu0 %v281, 32
    %v985 = vpop.permute.xlu0 %984
    %986 = vrot.lane.b32.xlu0 %v283, 32
    %v987 = vpop.permute.xlu0 %986
    %988 = vrot.lane.b32.xlu0 %v285, 32
    %v989 = vpop.permute.xlu0 %988
    %990 = vrot.lane.b32.xlu0 %v287, 32
    %v991 = vpop.permute.xlu0 %990
    %992 = vrot.lane.b32.xlu0 %v289, 32
    %v993 = vpop.permute.xlu0 %992
    %994 = vrot.lane.b32.xlu0 %v291, 32
    %v995 = vpop.permute.xlu0 %994
    %996 = vrot.lane.b32.xlu0 %v293, 32
    %v997 = vpop.permute.xlu0 %996
    %998 = vrot.lane.b32.xlu0 %v295, 32
    %v999 = vpop.permute.xlu0 %998
    %1000 = vrot.lane.b32.xlu0 %v297, 32
    %v1001 = vpop.permute.xlu0 %1000
    %1002 = vrot.lane.b32.xlu0 %v299, 32
    %v1003 = vpop.permute.xlu0 %1002
    %1004 = vrot.lane.b32.xlu0 %v301, 32
    %v1005 = vpop.permute.xlu0 %1004
    %1134 = vrot.lane.b32.xlu0 %v303, 64
    %v1135 = vpop.permute.xlu0 %1134
    %1136 = vrot.lane.b32.xlu0 %v305, 64
    %v1137 = vpop.permute.xlu0 %1136
    %1138 = vrot.lane.b32.xlu0 %v307, 64
    %v1139 = vpop.permute.xlu0 %1138
    %1140 = vrot.lane.b32.xlu0 %v309, 64
    %v1141 = vpop.permute.xlu0 %1140
    %1142 = vrot.lane.b32.xlu0 %v311, 64
    %v1143 = vpop.permute.xlu0 %1142
    %1144 = vrot.lane.b32.xlu0 %v313, 64
    %v1145 = vpop.permute.xlu0 %1144
    %1146 = vrot.lane.b32.xlu0 %v315, 64
    %v1147 = vpop.permute.xlu0 %1146
    %1148 = vrot.lane.b32.xlu0 %v317, 64
    %v1149 = vpop.permute.xlu0 %1148
    %1150 = vrot.lane.b32.xlu0 %v319, 64
    %v1151 = vpop.permute.xlu0 %1150
    %1152 = vrot.lane.b32.xlu0 %v321, 64
    %v1153 = vpop.permute.xlu0 %1152
    %1154 = vrot.lane.b32.xlu0 %v323, 64
    %v1155 = vpop.permute.xlu0 %1154
    %1156 = vrot.lane.b32.xlu0 %v325, 64
    %v1157 = vpop.permute.xlu0 %1156
    %1158 = vrot.lane.b32.xlu0 %v327, 64
    %v1159 = vpop.permute.xlu0 %1158
    %1160 = vrot.lane.b32.xlu0 %v329, 64
    %v1161 = vpop.permute.xlu0 %1160
    %1162 = vrot.lane.b32.xlu0 %v331, 64
    %v1163 = vpop.permute.xlu0 %1162
    %1164 = vrot.lane.b32.xlu0 %v333, 64
    %v1165 = vpop.permute.xlu0 %1164
    %1166 = vrot.lane.b32.xlu0 %v335, 64
    %v1167 = vpop.permute.xlu0 %1166
    %1168 = vrot.lane.b32.xlu0 %v337, 64
    %v1169 = vpop.permute.xlu0 %1168
    %1170 = vrot.lane.b32.xlu0 %v339, 64
    %v1171 = vpop.permute.xlu0 %1170
    %1172 = vrot.lane.b32.xlu0 %v341, 64
    %v1173 = vpop.permute.xlu0 %1172
    %1174 = vrot.lane.b32.xlu0 %v343, 64
    %v1175 = vpop.permute.xlu0 %1174
    %1176 = vrot.lane.b32.xlu0 %v345, 64
    %v1177 = vpop.permute.xlu0 %1176
    %1178 = vrot.lane.b32.xlu0 %v347, 64
    %v1179 = vpop.permute.xlu0 %1178
    %1180 = vrot.lane.b32.xlu0 %v349, 64
    %v1181 = vpop.permute.xlu0 %1180
    %1182 = vrot.lane.b32.xlu0 %v351, 64
    %v1183 = vpop.permute.xlu0 %1182
    %1184 = vrot.lane.b32.xlu0 %v353, 64
    %v1185 = vpop.permute.xlu0 %1184
    %1186 = vrot.lane.b32.xlu0 %v355, 64
    %v1187 = vpop.permute.xlu0 %1186
    %1188 = vrot.lane.b32.xlu0 %v357, 64
    %v1189 = vpop.permute.xlu0 %1188
    %1190 = vrot.lane.b32.xlu0 %v359, 64
    %v1191 = vpop.permute.xlu0 %1190
    %1192 = vrot.lane.b32.xlu0 %v361, 64
    %v1193 = vpop.permute.xlu0 %1192
    %1194 = vrot.lane.b32.xlu0 %v363, 64
    %v1195 = vpop.permute.xlu0 %1194
    %1196 = vrot.lane.b32.xlu0 %v365, 64
    %v1197 = vpop.permute.xlu0 %1196
    %1198 = vrot.lane.b32.xlu0 %v367, 64
    %v1199 = vpop.permute.xlu0 %1198
    %1200 = vrot.lane.b32.xlu0 %v369, 64
    %v1201 = vpop.permute.xlu0 %1200
    %1202 = vrot.lane.b32.xlu0 %v371, 64
    %v1203 = vpop.permute.xlu0 %1202
    %1204 = vrot.lane.b32.xlu0 %v373, 64
    %v1205 = vpop.permute.xlu0 %1204
    %1206 = vrot.lane.b32.xlu0 %v375, 64
    %v1207 = vpop.permute.xlu0 %1206
    %1208 = vrot.lane.b32.xlu0 %v377, 64
    %v1209 = vpop.permute.xlu0 %1208
    %1210 = vrot.lane.b32.xlu0 %v379, 64
    %v1211 = vpop.permute.xlu0 %1210
    %1212 = vrot.lane.b32.xlu0 %v381, 64
    %v1213 = vpop.permute.xlu0 %1212
    %1214 = vrot.lane.b32.xlu0 %v383, 64
    %v1215 = vpop.permute.xlu0 %1214
    %1216 = vrot.lane.b32.xlu0 %v385, 64
    %v1217 = vpop.permute.xlu0 %1216
    %1218 = vrot.lane.b32.xlu0 %v387, 64
    %v1219 = vpop.permute.xlu0 %1218
    %1220 = vrot.lane.b32.xlu0 %v389, 64
    %v1221 = vpop.permute.xlu0 %1220
    %1222 = vrot.lane.b32.xlu0 %v391, 64
    %v1223 = vpop.permute.xlu0 %1222
    %1224 = vrot.lane.b32.xlu0 %v393, 64
    %v1225 = vpop.permute.xlu0 %1224
    %1226 = vrot.lane.b32.xlu0 %v395, 64
    %v1227 = vpop.permute.xlu0 %1226
    %1228 = vrot.lane.b32.xlu0 %v397, 64
    %v1229 = vpop.permute.xlu0 %1228
    %1230 = vrot.lane.b32.xlu0 %v399, 64
    %v1231 = vpop.permute.xlu0 %1230
    %1232 = vrot.lane.b32.xlu0 %v401, 64
    %v1233 = vpop.permute.xlu0 %1232
    %1234 = vrot.lane.b32.xlu0 %v403, 64
    %v1235 = vpop.permute.xlu0 %1234
    %1236 = vrot.lane.b32.xlu0 %v405, 64
    %v1237 = vpop.permute.xlu0 %1236
    %1238 = vrot.lane.b32.xlu0 %v407, 64
    %v1239 = vpop.permute.xlu0 %1238
    %1240 = vrot.lane.b32.xlu0 %v409, 64
    %v1241 = vpop.permute.xlu0 %1240
    %1242 = vrot.lane.b32.xlu0 %v411, 64
    %v1243 = vpop.permute.xlu0 %1242
    %1244 = vrot.lane.b32.xlu0 %v413, 64
    %v1245 = vpop.permute.xlu0 %1244
    %1246 = vrot.lane.b32.xlu0 %v415, 64
    %v1247 = vpop.permute.xlu0 %1246
    %1248 = vrot.lane.b32.xlu0 %v417, 64
    %v1249 = vpop.permute.xlu0 %1248
    %1250 = vrot.lane.b32.xlu0 %v419, 64
    %v1251 = vpop.permute.xlu0 %1250
    %1252 = vrot.lane.b32.xlu0 %v421, 64
    %v1253 = vpop.permute.xlu0 %1252
    %1254 = vrot.lane.b32.xlu0 %v423, 64
    %v1255 = vpop.permute.xlu0 %1254
    %1256 = vrot.lane.b32.xlu0 %v425, 64
    %v1257 = vpop.permute.xlu0 %1256
    %1258 = vrot.lane.b32.xlu0 %v427, 64
    %v1259 = vpop.permute.xlu0 %1258
    %1260 = vrot.lane.b32.xlu0 %v429, 64
    %v1261 = vpop.permute.xlu0 %1260
    %1390 = vrot.lane.b32.xlu0 %v431, 96
    %v1391 = vpop.permute.xlu0 %1390
    %1392 = vrot.lane.b32.xlu0 %v433, 96
    %v1393 = vpop.permute.xlu0 %1392
    %1394 = vrot.lane.b32.xlu0 %v435, 96
    %v1395 = vpop.permute.xlu0 %1394
    %1396 = vrot.lane.b32.xlu0 %v437, 96
    %v1397 = vpop.permute.xlu0 %1396
    %1398 = vrot.lane.b32.xlu0 %v439, 96
    %v1399 = vpop.permute.xlu0 %1398
    %1400 = vrot.lane.b32.xlu0 %v441, 96
    %v1401 = vpop.permute.xlu0 %1400
    %1402 = vrot.lane.b32.xlu0 %v443, 96
    %v1403 = vpop.permute.xlu0 %1402
    %1404 = vrot.lane.b32.xlu0 %v445, 96
    %v1405 = vpop.permute.xlu0 %1404
    %1406 = vrot.lane.b32.xlu0 %v447, 96
    %v1407 = vpop.permute.xlu0 %1406
    %1408 = vrot.lane.b32.xlu0 %v449, 96
    %v1409 = vpop.permute.xlu0 %1408
    %1410 = vrot.lane.b32.xlu0 %v451, 96
    %v1411 = vpop.permute.xlu0 %1410
    %1412 = vrot.lane.b32.xlu0 %v453, 96
    %v1413 = vpop.permute.xlu0 %1412
    %1414 = vrot.lane.b32.xlu0 %v455, 96
    %v1415 = vpop.permute.xlu0 %1414
    %1416 = vrot.lane.b32.xlu0 %v457, 96
    %v1417 = vpop.permute.xlu0 %1416
    %1418 = vrot.lane.b32.xlu0 %v459, 96
    %v1419 = vpop.permute.xlu0 %1418
    %1420 = vrot.lane.b32.xlu0 %v461, 96
    %v1421 = vpop.permute.xlu0 %1420
    %1422 = vrot.lane.b32.xlu0 %v463, 96
    %v1423 = vpop.permute.xlu0 %1422
    %1424 = vrot.lane.b32.xlu0 %v465, 96
    %v1425 = vpop.permute.xlu0 %1424
    %1426 = vrot.lane.b32.xlu0 %v467, 96
    %v1427 = vpop.permute.xlu0 %1426
    %1428 = vrot.lane.b32.xlu0 %v469, 96
    %v1429 = vpop.permute.xlu0 %1428
    %1430 = vrot.lane.b32.xlu0 %v471, 96
    %v1431 = vpop.permute.xlu0 %1430
    %1432 = vrot.lane.b32.xlu0 %v473, 96
    %v1433 = vpop.permute.xlu0 %1432
    %1434 = vrot.lane.b32.xlu0 %v475, 96
    %v1435 = vpop.permute.xlu0 %1434
    %1436 = vrot.lane.b32.xlu0 %v477, 96
    %v1437 = vpop.permute.xlu0 %1436
    %1438 = vrot.lane.b32.xlu0 %v479, 96
    %v1439 = vpop.permute.xlu0 %1438
    %1440 = vrot.lane.b32.xlu0 %v481, 96
    %v1441 = vpop.permute.xlu0 %1440
    %1442 = vrot.lane.b32.xlu0 %v483, 96
    %v1443 = vpop.permute.xlu0 %1442
    %1444 = vrot.lane.b32.xlu0 %v485, 96
    %v1445 = vpop.permute.xlu0 %1444
    %1446 = vrot.lane.b32.xlu0 %v487, 96
    %v1447 = vpop.permute.xlu0 %1446
    %1448 = vrot.lane.b32.xlu0 %v489, 96
    %v1449 = vpop.permute.xlu0 %1448
    %1450 = vrot.lane.b32.xlu0 %v491, 96
    %v1451 = vpop.permute.xlu0 %1450
    %1452 = vrot.lane.b32.xlu0 %v493, 96
    %v1453 = vpop.permute.xlu0 %1452
    %1454 = vrot.lane.b32.xlu0 %v495, 96
    %v1455 = vpop.permute.xlu0 %1454
    %1456 = vrot.lane.b32.xlu0 %v497, 96
    %v1457 = vpop.permute.xlu0 %1456
    %1458 = vrot.lane.b32.xlu0 %v499, 96
    %v1459 = vpop.permute.xlu0 %1458
    %1460 = vrot.lane.b32.xlu0 %v501, 96
    %v1461 = vpop.permute.xlu0 %1460
    %1462 = vrot.lane.b32.xlu0 %v503, 96
    %v1463 = vpop.permute.xlu0 %1462
    %1464 = vrot.lane.b32.xlu0 %v505, 96
    %v1465 = vpop.permute.xlu0 %1464
    %1466 = vrot.lane.b32.xlu0 %v507, 96
    %v1467 = vpop.permute.xlu0 %1466
    %1468 = vrot.lane.b32.xlu0 %v509, 96
    %v1469 = vpop.permute.xlu0 %1468
    %1470 = vrot.lane.b32.xlu0 %v511, 96
    %v1471 = vpop.permute.xlu0 %1470
    %1472 = vrot.lane.b32.xlu0 %v513, 96
    %v1473 = vpop.permute.xlu0 %1472
    %1474 = vrot.lane.b32.xlu0 %v515, 96
    %v1475 = vpop.permute.xlu0 %1474
    %1476 = vrot.lane.b32.xlu0 %v517, 96
    %v1477 = vpop.permute.xlu0 %1476
    %1478 = vrot.lane.b32.xlu0 %v519, 96
    %v1479 = vpop.permute.xlu0 %1478
    %1480 = vrot.lane.b32.xlu0 %v521, 96
    %v1481 = vpop.permute.xlu0 %1480
    %1482 = vrot.lane.b32.xlu0 %v523, 96
    %v1483 = vpop.permute.xlu0 %1482
    %1484 = vrot.lane.b32.xlu0 %v525, 96
    %v1485 = vpop.permute.xlu0 %1484
    %1486 = vrot.lane.b32.xlu0 %v527, 96
    %v1487 = vpop.permute.xlu0 %1486
    %1488 = vrot.lane.b32.xlu0 %v529, 96
    %v1489 = vpop.permute.xlu0 %1488
    %1490 = vrot.lane.b32.xlu0 %v531, 96
    %v1491 = vpop.permute.xlu0 %1490
    %1492 = vrot.lane.b32.xlu0 %v533, 96
    %v1493 = vpop.permute.xlu0 %1492
    %1494 = vrot.lane.b32.xlu0 %v535, 96
    %v1495 = vpop.permute.xlu0 %1494
    %1496 = vrot.lane.b32.xlu0 %v537, 96
    %v1497 = vpop.permute.xlu0 %1496
    %1498 = vrot.lane.b32.xlu0 %v539, 96
    %v1499 = vpop.permute.xlu0 %1498
    %1500 = vrot.lane.b32.xlu0 %v541, 96
    %v1501 = vpop.permute.xlu0 %1500
    %1502 = vrot.lane.b32.xlu0 %v543, 96
    %v1503 = vpop.permute.xlu0 %1502
    %1504 = vrot.lane.b32.xlu0 %v545, 96
    %v1505 = vpop.permute.xlu0 %1504
    %1506 = vrot.lane.b32.xlu0 %v547, 96
    %v1507 = vpop.permute.xlu0 %1506
    %1508 = vrot.lane.b32.xlu0 %v549, 96
    %v1509 = vpop.permute.xlu0 %1508
    %1510 = vrot.lane.b32.xlu0 %v551, 96
    %v1511 = vpop.permute.xlu0 %1510
    %1512 = vrot.lane.b32.xlu0 %v553, 96
    %v1513 = vpop.permute.xlu0 %1512
    %1514 = vrot.lane.b32.xlu0 %v555, 96
    %v1515 = vpop.permute.xlu0 %1514
    %1516 = vrot.lane.b32.xlu0 %v557, 96
    %v1517 = vpop.permute.xlu0 %1516
    %1646 = vrot.lane.b32.xlu0 %v687, 32
    %v1647 = vpop.permute.xlu0 %1646
    %1648 = vrot.lane.b32.xlu0 %v689, 32
    %v1649 = vpop.permute.xlu0 %1648
    %1650 = vrot.lane.b32.xlu0 %v691, 32
    %v1651 = vpop.permute.xlu0 %1650
    %1652 = vrot.lane.b32.xlu0 %v693, 32
    %v1653 = vpop.permute.xlu0 %1652
    %1654 = vrot.lane.b32.xlu0 %v695, 32
    %v1655 = vpop.permute.xlu0 %1654
    %1656 = vrot.lane.b32.xlu0 %v697, 32
    %v1657 = vpop.permute.xlu0 %1656
    %1658 = vrot.lane.b32.xlu0 %v699, 32
    %v1659 = vpop.permute.xlu0 %1658
    %1660 = vrot.lane.b32.xlu0 %v701, 32
    %v1661 = vpop.permute.xlu0 %1660
    %1662 = vrot.lane.b32.xlu0 %v703, 32
    %v1663 = vpop.permute.xlu0 %1662
    %1664 = vrot.lane.b32.xlu0 %v705, 32
    %v1665 = vpop.permute.xlu0 %1664
    %1666 = vrot.lane.b32.xlu0 %v707, 32
    %v1667 = vpop.permute.xlu0 %1666
    %1668 = vrot.lane.b32.xlu0 %v709, 32
    %v1669 = vpop.permute.xlu0 %1668
    %1670 = vrot.lane.b32.xlu0 %v711, 32
    %v1671 = vpop.permute.xlu0 %1670
    %1672 = vrot.lane.b32.xlu0 %v713, 32
    %v1673 = vpop.permute.xlu0 %1672
    %1674 = vrot.lane.b32.xlu0 %v715, 32
    %v1675 = vpop.permute.xlu0 %1674
    %1676 = vrot.lane.b32.xlu0 %v717, 32
    %v1677 = vpop.permute.xlu0 %1676
    %1678 = vrot.lane.b32.xlu0 %v719, 32
    %v1679 = vpop.permute.xlu0 %1678
    %1680 = vrot.lane.b32.xlu0 %v721, 32
    %v1681 = vpop.permute.xlu0 %1680
    %1682 = vrot.lane.b32.xlu0 %v723, 32
    %v1683 = vpop.permute.xlu0 %1682
    %1684 = vrot.lane.b32.xlu0 %v725, 32
    %v1685 = vpop.permute.xlu0 %1684
    %1686 = vrot.lane.b32.xlu0 %v727, 32
    %v1687 = vpop.permute.xlu0 %1686
    %1688 = vrot.lane.b32.xlu0 %v729, 32
    %v1689 = vpop.permute.xlu0 %1688
    %1690 = vrot.lane.b32.xlu0 %v731, 32
    %v1691 = vpop.permute.xlu0 %1690
    %1692 = vrot.lane.b32.xlu0 %v733, 32
    %v1693 = vpop.permute.xlu0 %1692
    %1694 = vrot.lane.b32.xlu0 %v735, 32
    %v1695 = vpop.permute.xlu0 %1694
    %1696 = vrot.lane.b32.xlu0 %v737, 32
    %v1697 = vpop.permute.xlu0 %1696
    %1698 = vrot.lane.b32.xlu0 %v739, 32
    %v1699 = vpop.permute.xlu0 %1698
    %1700 = vrot.lane.b32.xlu0 %v741, 32
    %v1701 = vpop.permute.xlu0 %1700
    %1702 = vrot.lane.b32.xlu0 %v743, 32
    %v1703 = vpop.permute.xlu0 %1702
    %1704 = vrot.lane.b32.xlu0 %v745, 32
    %v1705 = vpop.permute.xlu0 %1704
    %1706 = vrot.lane.b32.xlu0 %v747, 32
    %v1707 = vpop.permute.xlu0 %1706
    %1708 = vrot.lane.b32.xlu0 %v749, 32
    %v1709 = vpop.permute.xlu0 %1708
    %1710 = vrot.lane.b32.xlu0 %v751, 32
    %v1711 = vpop.permute.xlu0 %1710
    %1712 = vrot.lane.b32.xlu0 %v753, 32
    %v1713 = vpop.permute.xlu0 %1712
    %1714 = vrot.lane.b32.xlu0 %v755, 32
    %v1715 = vpop.permute.xlu0 %1714
    %1716 = vrot.lane.b32.xlu0 %v757, 32
    %v1717 = vpop.permute.xlu0 %1716
    %1718 = vrot.lane.b32.xlu0 %v759, 32
    %v1719 = vpop.permute.xlu0 %1718
    %1720 = vrot.lane.b32.xlu0 %v761, 32
    %v1721 = vpop.permute.xlu0 %1720
    %1722 = vrot.lane.b32.xlu0 %v763, 32
    %v1723 = vpop.permute.xlu0 %1722
    %1724 = vrot.lane.b32.xlu0 %v765, 32
    %v1725 = vpop.permute.xlu0 %1724
    %1726 = vrot.lane.b32.xlu0 %v767, 32
    %v1727 = vpop.permute.xlu0 %1726
    %1728 = vrot.lane.b32.xlu0 %v769, 32
    %v1729 = vpop.permute.xlu0 %1728
    %1730 = vrot.lane.b32.xlu0 %v771, 32
    %v1731 = vpop.permute.xlu0 %1730
    %1732 = vrot.lane.b32.xlu0 %v773, 32
    %v1733 = vpop.permute.xlu0 %1732
    %1734 = vrot.lane.b32.xlu0 %v775, 32
    %v1735 = vpop.permute.xlu0 %1734
    %1736 = vrot.lane.b32.xlu0 %v777, 32
    %v1737 = vpop.permute.xlu0 %1736
    %1738 = vrot.lane.b32.xlu0 %v779, 32
    %v1739 = vpop.permute.xlu0 %1738
    %1740 = vrot.lane.b32.xlu0 %v781, 32
    %v1741 = vpop.permute.xlu0 %1740
    %1742 = vrot.lane.b32.xlu0 %v783, 32
    %v1743 = vpop.permute.xlu0 %1742
    %1744 = vrot.lane.b32.xlu0 %v785, 32
    %v1745 = vpop.permute.xlu0 %1744
    %1746 = vrot.lane.b32.xlu0 %v787, 32
    %v1747 = vpop.permute.xlu0 %1746
    %1748 = vrot.lane.b32.xlu0 %v789, 32
    %v1749 = vpop.permute.xlu0 %1748
    %1750 = vrot.lane.b32.xlu0 %v791, 32
    %v1751 = vpop.permute.xlu0 %1750
    %1752 = vrot.lane.b32.xlu0 %v793, 32
    %v1753 = vpop.permute.xlu0 %1752
    %1754 = vrot.lane.b32.xlu0 %v795, 32
    %v1755 = vpop.permute.xlu0 %1754
    %1756 = vrot.lane.b32.xlu0 %v797, 32
    %v1757 = vpop.permute.xlu0 %1756
    %1758 = vrot.lane.b32.xlu0 %v799, 32
    %v1759 = vpop.permute.xlu0 %1758
    %1760 = vrot.lane.b32.xlu0 %v801, 32
    %v1761 = vpop.permute.xlu0 %1760
    %1762 = vrot.lane.b32.xlu0 %v803, 32
    %v1763 = vpop.permute.xlu0 %1762
    %1764 = vrot.lane.b32.xlu0 %v805, 32
    %v1765 = vpop.permute.xlu0 %1764
    %1766 = vrot.lane.b32.xlu0 %v807, 32
    %v1767 = vpop.permute.xlu0 %1766
    %1768 = vrot.lane.b32.xlu0 %v809, 32
    %v1769 = vpop.permute.xlu0 %1768
    %1770 = vrot.lane.b32.xlu0 %v811, 32
    %v1771 = vpop.permute.xlu0 %1770
    %1772 = vrot.lane.b32.xlu0 %v813, 32
    %v1773 = vpop.permute.xlu0 %1772
    %vm1838 = vcmask 261120
    %v1839 = vsel %vm1838, %v47, %v879
    %v1840 = vsel %vm1838, %v49, %v881
    %v1841 = vsel %vm1838, %v51, %v883
    %v1842 = vsel %vm1838, %v53, %v885
    %v1843 = vsel %vm1838, %v55, %v887
    %v1844 = vsel %vm1838, %v57, %v889
    %v1845 = vsel %vm1838, %v59, %v891
    %v1846 = vsel %vm1838, %v61, %v893
    %v1847 = vsel %vm1838, %v63, %v895
    %v1848 = vsel %vm1838, %v65, %v897
    %v1849 = vsel %vm1838, %v67, %v899
    %v1850 = vsel %vm1838, %v69, %v901
    %v1851 = vsel %vm1838, %v71, %v903
    %v1852 = vsel %vm1838, %v73, %v905
    %v1853 = vsel %vm1838, %v75, %v907
    %v1854 = vsel %vm1838, %v77, %v909
    %v1855 = vsel %vm1838, %v79, %v911
    %v1856 = vsel %vm1838, %v81, %v913
    %v1857 = vsel %vm1838, %v83, %v915
    %v1858 = vsel %vm1838, %v85, %v917
    %v1859 = vsel %vm1838, %v87, %v919
    %v1860 = vsel %vm1838, %v89, %v921
    %v1861 = vsel %vm1838, %v91, %v923
    %v1862 = vsel %vm1838, %v93, %v925
    %v1863 = vsel %vm1838, %v95, %v927
    %v1864 = vsel %vm1838, %v97, %v929
    %v1865 = vsel %vm1838, %v99, %v931
    %v1866 = vsel %vm1838, %v101, %v933
    %v1867 = vsel %vm1838, %v103, %v935
    %v1868 = vsel %vm1838, %v105, %v937
    %v1869 = vsel %vm1838, %v107, %v939
    %v1870 = vsel %vm1838, %v109, %v941
    %v1871 = vsel %vm1838, %v111, %v943
    %v1872 = vsel %vm1838, %v113, %v945
    %v1873 = vsel %vm1838, %v115, %v947
    %v1874 = vsel %vm1838, %v117, %v949
    %v1875 = vsel %vm1838, %v119, %v951
    %v1876 = vsel %vm1838, %v121, %v953
    %v1877 = vsel %vm1838, %v123, %v955
    %v1878 = vsel %vm1838, %v125, %v957
    %v1879 = vsel %vm1838, %v127, %v959
    %v1880 = vsel %vm1838, %v129, %v961
    %v1881 = vsel %vm1838, %v131, %v963
    %v1882 = vsel %vm1838, %v133, %v965
    %v1883 = vsel %vm1838, %v135, %v967
    %v1884 = vsel %vm1838, %v137, %v969
    %v1885 = vsel %vm1838, %v139, %v971
    %v1886 = vsel %vm1838, %v141, %v973
    %v1887 = vsel %vm1838, %v143, %v975
    %v1888 = vsel %vm1838, %v145, %v977
    %v1889 = vsel %vm1838, %v147, %v979
    %v1890 = vsel %vm1838, %v149, %v981
    %v1891 = vsel %vm1838, %v151, %v983
    %v1892 = vsel %vm1838, %v153, %v985
    %v1893 = vsel %vm1838, %v155, %v987
    %v1894 = vsel %vm1838, %v157, %v989
    %v1895 = vsel %vm1838, %v159, %v991
    %v1896 = vsel %vm1838, %v161, %v993
    %v1897 = vsel %vm1838, %v163, %v995
    %v1898 = vsel %vm1838, %v165, %v997
    %v1899 = vsel %vm1838, %v167, %v999
    %v1900 = vsel %vm1838, %v169, %v1001
    %v1901 = vsel %vm1838, %v171, %v1003
    %v1902 = vsel %vm1838, %v173, %v1005
    %vm1903 = vcmask 523264
    %v1904 = vsel %vm1903, %v1839, %v1135
    %v1905 = vsel %vm1903, %v1840, %v1137
    %v1906 = vsel %vm1903, %v1841, %v1139
    %v1907 = vsel %vm1903, %v1842, %v1141
    %v1908 = vsel %vm1903, %v1843, %v1143
    %v1909 = vsel %vm1903, %v1844, %v1145
    %v1910 = vsel %vm1903, %v1845, %v1147
    %v1911 = vsel %vm1903, %v1846, %v1149
    %v1912 = vsel %vm1903, %v1847, %v1151
    %v1913 = vsel %vm1903, %v1848, %v1153
    %v1914 = vsel %vm1903, %v1849, %v1155
    %v1915 = vsel %vm1903, %v1850, %v1157
    %v1916 = vsel %vm1903, %v1851, %v1159
    %v1917 = vsel %vm1903, %v1852, %v1161
    %v1918 = vsel %vm1903, %v1853, %v1163
    %v1919 = vsel %vm1903, %v1854, %v1165
    %v1920 = vsel %vm1903, %v1855, %v1167
    %v1921 = vsel %vm1903, %v1856, %v1169
    %v1922 = vsel %vm1903, %v1857, %v1171
    %v1923 = vsel %vm1903, %v1858, %v1173
    %v1924 = vsel %vm1903, %v1859, %v1175
    %v1925 = vsel %vm1903, %v1860, %v1177
    %v1926 = vsel %vm1903, %v1861, %v1179
    %v1927 = vsel %vm1903, %v1862, %v1181
    %v1928 = vsel %vm1903, %v1863, %v1183
    %v1929 = vsel %vm1903, %v1864, %v1185
    %v1930 = vsel %vm1903, %v1865, %v1187
    %v1931 = vsel %vm1903, %v1866, %v1189
    %v1932 = vsel %vm1903, %v1867, %v1191
    %v1933 = vsel %vm1903, %v1868, %v1193
    %v1934 = vsel %vm1903, %v1869, %v1195
    %v1935 = vsel %vm1903, %v1870, %v1197
    %v1936 = vsel %vm1903, %v1871, %v1199
    %v1937 = vsel %vm1903, %v1872, %v1201
    %v1938 = vsel %vm1903, %v1873, %v1203
    %v1939 = vsel %vm1903, %v1874, %v1205
    %v1940 = vsel %vm1903, %v1875, %v1207
    %v1941 = vsel %vm1903, %v1876, %v1209
    %v1942 = vsel %vm1903, %v1877, %v1211
    %v1943 = vsel %vm1903, %v1878, %v1213
    %v1944 = vsel %vm1903, %v1879, %v1215
    %v1945 = vsel %vm1903, %v1880, %v1217
    %v1946 = vsel %vm1903, %v1881, %v1219
    %v1947 = vsel %vm1903, %v1882, %v1221
    %v1948 = vsel %vm1903, %v1883, %v1223
    %v1949 = vsel %vm1903, %v1884, %v1225
    %v1950 = vsel %vm1903, %v1885, %v1227
    %v1951 = vsel %vm1903, %v1886, %v1229
    %v1952 = vsel %vm1903, %v1887, %v1231
    %v1953 = vsel %vm1903, %v1888, %v1233
    %v1954 = vsel %vm1903, %v1889, %v1235
    %v1955 = vsel %vm1903, %v1890, %v1237
    %v1956 = vsel %vm1903, %v1891, %v1239
    %v1957 = vsel %vm1903, %v1892, %v1241
    %v1958 = vsel %vm1903, %v1893, %v1243
    %v1959 = vsel %vm1903, %v1894, %v1245
    %v1960 = vsel %vm1903, %v1895, %v1247
    %v1961 = vsel %vm1903, %v1896, %v1249
    %v1962 = vsel %vm1903, %v1897, %v1251
    %v1963 = vsel %vm1903, %v1898, %v1253
    %v1964 = vsel %vm1903, %v1899, %v1255
    %v1965 = vsel %vm1903, %v1900, %v1257
    %v1966 = vsel %vm1903, %v1901, %v1259
    %v1967 = vsel %vm1903, %v1902, %v1261
    %vm1968 = vcmask 785408
    %v1969 = vsel %vm1968, %v1904, %v1391
    %v1970 = vsel %vm1968, %v1905, %v1393
    %v1971 = vsel %vm1968, %v1906, %v1395
    %v1972 = vsel %vm1968, %v1907, %v1397
    %v1973 = vsel %vm1968, %v1908, %v1399
    %v1974 = vsel %vm1968, %v1909, %v1401
    %v1975 = vsel %vm1968, %v1910, %v1403
    %v1976 = vsel %vm1968, %v1911, %v1405
    %v1977 = vsel %vm1968, %v1912, %v1407
    %v1978 = vsel %vm1968, %v1913, %v1409
    %v1979 = vsel %vm1968, %v1914, %v1411
    %v1980 = vsel %vm1968, %v1915, %v1413
    %v1981 = vsel %vm1968, %v1916, %v1415
    %v1982 = vsel %vm1968, %v1917, %v1417
    %v1983 = vsel %vm1968, %v1918, %v1419
    %v1984 = vsel %vm1968, %v1919, %v1421
    %v1985 = vsel %vm1968, %v1920, %v1423
    %v1986 = vsel %vm1968, %v1921, %v1425
    %v1987 = vsel %vm1968, %v1922, %v1427
    %v1988 = vsel %vm1968, %v1923, %v1429
    %v1989 = vsel %vm1968, %v1924, %v1431
    %v1990 = vsel %vm1968, %v1925, %v1433
    %v1991 = vsel %vm1968, %v1926, %v1435
    %v1992 = vsel %vm1968, %v1927, %v1437
    %v1993 = vsel %vm1968, %v1928, %v1439
    %v1994 = vsel %vm1968, %v1929, %v1441
    %v1995 = vsel %vm1968, %v1930, %v1443
    %v1996 = vsel %vm1968, %v1931, %v1445
    %v1997 = vsel %vm1968, %v1932, %v1447
    %v1998 = vsel %vm1968, %v1933, %v1449
    %v1999 = vsel %vm1968, %v1934, %v1451
    %v2000 = vsel %vm1968, %v1935, %v1453
    %v2001 = vsel %vm1968, %v1936, %v1455
    %v2002 = vsel %vm1968, %v1937, %v1457
    %v2003 = vsel %vm1968, %v1938, %v1459
    %v2004 = vsel %vm1968, %v1939, %v1461
    %v2005 = vsel %vm1968, %v1940, %v1463
    %v2006 = vsel %vm1968, %v1941, %v1465
    %v2007 = vsel %vm1968, %v1942, %v1467
    %v2008 = vsel %vm1968, %v1943, %v1469
    %v2009 = vsel %vm1968, %v1944, %v1471
    %v2010 = vsel %vm1968, %v1945, %v1473
    %v2011 = vsel %vm1968, %v1946, %v1475
    %v2012 = vsel %vm1968, %v1947, %v1477
    %v2013 = vsel %vm1968, %v1948, %v1479
    %v2014 = vsel %vm1968, %v1949, %v1481
    %v2015 = vsel %vm1968, %v1950, %v1483
    %v2016 = vsel %vm1968, %v1951, %v1485
    %v2017 = vsel %vm1968, %v1952, %v1487
    %v2018 = vsel %vm1968, %v1953, %v1489
    %v2019 = vsel %vm1968, %v1954, %v1491
    %v2020 = vsel %vm1968, %v1955, %v1493
    %v2021 = vsel %vm1968, %v1956, %v1495
    %v2022 = vsel %vm1968, %v1957, %v1497
    %v2023 = vsel %vm1968, %v1958, %v1499
    %v2024 = vsel %vm1968, %v1959, %v1501
    %v2025 = vsel %vm1968, %v1960, %v1503
    %v2026 = vsel %vm1968, %v1961, %v1505
    %v2027 = vsel %vm1968, %v1962, %v1507
    %v2028 = vsel %vm1968, %v1963, %v1509
    %v2029 = vsel %vm1968, %v1964, %v1511
    %v2030 = vsel %vm1968, %v1965, %v1513
    %v2031 = vsel %vm1968, %v1966, %v1515
    %v2032 = vsel %vm1968, %v1967, %v1517
    %v2033 = vsel %vm1838, %v559, %v1647
    %v2034 = vsel %vm1838, %v561, %v1649
    %v2035 = vsel %vm1838, %v563, %v1651
    %v2036 = vsel %vm1838, %v565, %v1653
    %v2037 = vsel %vm1838, %v567, %v1655
    %v2038 = vsel %vm1838, %v569, %v1657
    %v2039 = vsel %vm1838, %v571, %v1659
    %v2040 = vsel %vm1838, %v573, %v1661
    %v2041 = vsel %vm1838, %v575, %v1663
    %v2042 = vsel %vm1838, %v577, %v1665
    %v2043 = vsel %vm1838, %v579, %v1667
    %v2044 = vsel %vm1838, %v581, %v1669
    %v2045 = vsel %vm1838, %v583, %v1671
    %v2046 = vsel %vm1838, %v585, %v1673
    %v2047 = vsel %vm1838, %v587, %v1675
    %v2048 = vsel %vm1838, %v589, %v1677
    %v2049 = vsel %vm1838, %v591, %v1679
    %v2050 = vsel %vm1838, %v593, %v1681
    %v2051 = vsel %vm1838, %v595, %v1683
    %v2052 = vsel %vm1838, %v597, %v1685
    %v2053 = vsel %vm1838, %v599, %v1687
    %v2054 = vsel %vm1838, %v601, %v1689
    %v2055 = vsel %vm1838, %v603, %v1691
    %v2056 = vsel %vm1838, %v605, %v1693
    %v2057 = vsel %vm1838, %v607, %v1695
    %v2058 = vsel %vm1838, %v609, %v1697
    %v2059 = vsel %vm1838, %v611, %v1699
    %v2060 = vsel %vm1838, %v613, %v1701
    %v2061 = vsel %vm1838, %v615, %v1703
    %v2062 = vsel %vm1838, %v617, %v1705
    %v2063 = vsel %vm1838, %v619, %v1707
    %v2064 = vsel %vm1838, %v621, %v1709
    %v2065 = vsel %vm1838, %v623, %v1711
    %v2066 = vsel %vm1838, %v625, %v1713
    %v2067 = vsel %vm1838, %v627, %v1715
    %v2068 = vsel %vm1838, %v629, %v1717
    %v2069 = vsel %vm1838, %v631, %v1719
    %v2070 = vsel %vm1838, %v633, %v1721
    %v2071 = vsel %vm1838, %v635, %v1723
    %v2072 = vsel %vm1838, %v637, %v1725
    %v2073 = vsel %vm1838, %v639, %v1727
    %v2074 = vsel %vm1838, %v641, %v1729
    %v2075 = vsel %vm1838, %v643, %v1731
    %v2076 = vsel %vm1838, %v645, %v1733
    %v2077 = vsel %vm1838, %v647, %v1735
    %v2078 = vsel %vm1838, %v649, %v1737
    %v2079 = vsel %vm1838, %v651, %v1739
    %v2080 = vsel %vm1838, %v653, %v1741
    %v2081 = vsel %vm1838, %v655, %v1743
    %v2082 = vsel %vm1838, %v657, %v1745
    %v2083 = vsel %vm1838, %v659, %v1747
    %v2084 = vsel %vm1838, %v661, %v1749
    %v2085 = vsel %vm1838, %v663, %v1751
    %v2086 = vsel %vm1838, %v665, %v1753
    %v2087 = vsel %vm1838, %v667, %v1755
    %v2088 = vsel %vm1838, %v669, %v1757
    %v2089 = vsel %vm1838, %v671, %v1759
    %v2090 = vsel %vm1838, %v673, %v1761
    %v2091 = vsel %vm1838, %v675, %v1763
    %v2092 = vsel %vm1838, %v677, %v1765
    %v2093 = vsel %vm1838, %v679, %v1767
    %v2094 = vsel %vm1838, %v681, %v1769
    %v2095 = vsel %vm1838, %v683, %v1771
    %v2096 = vsel %vm1838, %v685, %v1773
    %v2097 = vpack.c.bf16 %v1970, %v1969
    %v2098 = vpack.c.bf16 %v2034, %v2033
    %v2099 = vpack.c.bf16 %v1972, %v1971
    %v2100 = vpack.c.bf16 %v2036, %v2035
    %v2101 = vpack.c.bf16 %v1974, %v1973
    %v2102 = vpack.c.bf16 %v2038, %v2037
    %v2103 = vpack.c.bf16 %v1976, %v1975
    %v2104 = vpack.c.bf16 %v2040, %v2039
    %v2105 = vpack.c.bf16 %v1978, %v1977
    %v2106 = vpack.c.bf16 %v2042, %v2041
    %v2107 = vpack.c.bf16 %v1980, %v1979
    %v2108 = vpack.c.bf16 %v2044, %v2043
    %v2109 = vpack.c.bf16 %v1982, %v1981
    %v2110 = vpack.c.bf16 %v2046, %v2045
    %v2111 = vpack.c.bf16 %v1984, %v1983
    %v2112 = vpack.c.bf16 %v2048, %v2047
    %v2113 = vpack.c.bf16 %v1986, %v1985
    %v2114 = vpack.c.bf16 %v2050, %v2049
    %v2115 = vpack.c.bf16 %v1988, %v1987
    %v2116 = vpack.c.bf16 %v2052, %v2051
    %v2117 = vpack.c.bf16 %v1990, %v1989
    %v2118 = vpack.c.bf16 %v2054, %v2053
    %v2119 = vpack.c.bf16 %v1992, %v1991
    %v2120 = vpack.c.bf16 %v2056, %v2055
    %v2121 = vpack.c.bf16 %v1994, %v1993
    %v2122 = vpack.c.bf16 %v2058, %v2057
    %v2123 = vpack.c.bf16 %v1996, %v1995
    %v2124 = vpack.c.bf16 %v2060, %v2059
    %v2125 = vpack.c.bf16 %v1998, %v1997
    %v2126 = vpack.c.bf16 %v2062, %v2061
    %v2127 = vpack.c.bf16 %v2000, %v1999
    %v2128 = vpack.c.bf16 %v2064, %v2063
    %v2129 = vpack.c.bf16 %v2002, %v2001
    %v2130 = vpack.c.bf16 %v2066, %v2065
    %v2131 = vpack.c.bf16 %v2004, %v2003
    %v2132 = vpack.c.bf16 %v2068, %v2067
    %v2133 = vpack.c.bf16 %v2006, %v2005
    %v2134 = vpack.c.bf16 %v2070, %v2069
    %v2135 = vpack.c.bf16 %v2008, %v2007
    %v2136 = vpack.c.bf16 %v2072, %v2071
    %v2137 = vpack.c.bf16 %v2010, %v2009
    %v2138 = vpack.c.bf16 %v2074, %v2073
    %v2139 = vpack.c.bf16 %v2012, %v2011
    %v2140 = vpack.c.bf16 %v2076, %v2075
    %v2141 = vpack.c.bf16 %v2014, %v2013
    %v2142 = vpack.c.bf16 %v2078, %v2077
    %v2143 = vpack.c.bf16 %v2016, %v2015
    %v2144 = vpack.c.bf16 %v2080, %v2079
    %v2145 = vpack.c.bf16 %v2018, %v2017
    %v2146 = vpack.c.bf16 %v2082, %v2081
    %v2147 = vpack.c.bf16 %v2020, %v2019
    %v2148 = vpack.c.bf16 %v2084, %v2083
    %v2149 = vpack.c.bf16 %v2022, %v2021
    %v2150 = vpack.c.bf16 %v2086, %v2085
    %v2151 = vpack.c.bf16 %v2024, %v2023
    %v2152 = vpack.c.bf16 %v2088, %v2087
    %v2153 = vpack.c.bf16 %v2026, %v2025
    %v2154 = vpack.c.bf16 %v2090, %v2089
    %v2155 = vpack.c.bf16 %v2028, %v2027
    %v2156 = vpack.c.bf16 %v2092, %v2091
    %v2157 = vpack.c.bf16 %v2030, %v2029
    %v2158 = vpack.c.bf16 %v2094, %v2093
    %v2159 = vpack.c.bf16 %v2032, %v2031
    %v2160 = vpack.c.bf16 %v2096, %v2095
    %v2161 = vld [vmem:[#allocation4] sm:$0xff]
    %v2162 = vld [vmem:[#allocation4 + $0x8] sm:$0xff]
    %v2163 = vld [vmem:[#allocation4 + $0x10] sm:$0xff]
    %v2164 = vld [vmem:[#allocation4 + $0x18] sm:$0xff]
    %v2165 = vld [vmem:[#allocation4 + $0x20] sm:$0xff]
    %v2166 = vld [vmem:[#allocation4 + $0x28] sm:$0xff]
    %v2167 = vld [vmem:[#allocation4 + $0x30] sm:$0xff]
    %v2168 = vld [vmem:[#allocation4 + $0x38] sm:$0xff]
    %v2169 = vld [vmem:[#allocation4 + $0x40] sm:$0xff]
    %v2170 = vld [vmem:[#allocation4 + $0x48] sm:$0xff]
    %v2171 = vld [vmem:[#allocation4 + $0x50] sm:$0xff]
    %v2172 = vld [vmem:[#allocation4 + $0x58] sm:$0xff]
    %v2173 = vld [vmem:[#allocation4 + $0x60] sm:$0xff]
    %v2174 = vld [vmem:[#allocation4 + $0x68] sm:$0xff]
    %v2175 = vld [vmem:[#allocation4 + $0x70] sm:$0xff]
    %v2176 = vld [vmem:[#allocation4 + $0x78] sm:$0xff]
    %v2177 = vld [vmem:[#allocation4 + $0x80] sm:$0xff]
    %v2178 = vld [vmem:[#allocation4 + $0x88] sm:$0xff]
    %v2179 = vld [vmem:[#allocation4 + $0x90] sm:$0xff]
    %v2180 = vld [vmem:[#allocation4 + $0x98] sm:$0xff]
    %v2181 = vld [vmem:[#allocation4 + $0xa0] sm:$0xff]
    %v2182 = vld [vmem:[#allocation4 + $0xa8] sm:$0xff]
    %v2183 = vld [vmem:[#allocation4 + $0xb0] sm:$0xff]
    %v2184 = vld [vmem:[#allocation4 + $0xb8] sm:$0xff]
    %v2185 = vld [vmem:[#allocation4 + $0xc0] sm:$0xff]
    %v2186 = vld [vmem:[#allocation4 + $0xc8] sm:$0xff]
    %v2187 = vld [vmem:[#allocation4 + $0xd0] sm:$0xff]
    %v2188 = vld [vmem:[#allocation4 + $0xd8] sm:$0xff]
    %v2189 = vld [vmem:[#allocation4 + $0xe0] sm:$0xff]
    %v2190 = vld [vmem:[#allocation4 + $0xe8] sm:$0xff]
    %v2191 = vld [vmem:[#allocation4 + $0xf0] sm:$0xff]
    %v2192 = vld [vmem:[#allocation4 + $0xf8] sm:$0xff]
    %v2193 = vld [vmem:[#allocation4 + $0x100] sm:$0xff]
    %v2194 = vld [vmem:[#allocation4 + $0x108] sm:$0xff]
    %v2195 = vld [vmem:[#allocation4 + $0x110] sm:$0xff]
    %v2196 = vld [vmem:[#allocation4 + $0x118] sm:$0xff]
    %v2197 = vld [vmem:[#allocation4 + $0x120] sm:$0xff]
    %v2198 = vld [vmem:[#allocation4 + $0x128] sm:$0xff]
    %v2199 = vld [vmem:[#allocation4 + $0x130] sm:$0xff]
    %v2200 = vld [vmem:[#allocation4 + $0x138] sm:$0xff]
    %v2201 = vld [vmem:[#allocation4 + $0x140] sm:$0xff]
    %v2202 = vld [vmem:[#allocation4 + $0x148] sm:$0xff]
    %v2203 = vld [vmem:[#allocation4 + $0x150] sm:$0xff]
    %v2204 = vld [vmem:[#allocation4 + $0x158] sm:$0xff]
    %v2205 = vld [vmem:[#allocation4 + $0x160] sm:$0xff]
    %v2206 = vld [vmem:[#allocation4 + $0x168] sm:$0xff]
    %v2207 = vld [vmem:[#allocation4 + $0x170] sm:$0xff]
    %v2208 = vld [vmem:[#allocation4 + $0x178] sm:$0xff]
    %v2257 = vunpack.c.l.b16 %v2161
    %v2258 = vunpack.c.h.b16 %v2161
    %v2259 = vunpack.c.l.b16 %v2162
    %v2260 = vunpack.c.h.b16 %v2162
    %v2261 = vunpack.c.l.b16 %v2163
    %v2262 = vunpack.c.h.b16 %v2163
    %v2263 = vunpack.c.l.b16 %v2164
    %v2264 = vunpack.c.h.b16 %v2164
    %v2265 = vunpack.c.l.b16 %v2165
    %v2266 = vunpack.c.h.b16 %v2165
    %v2267 = vunpack.c.l.b16 %v2166
    %v2268 = vunpack.c.h.b16 %v2166
    %v2269 = vunpack.c.l.b16 %v2167
    %v2270 = vunpack.c.h.b16 %v2167
    %v2271 = vunpack.c.l.b16 %v2168
    %v2272 = vunpack.c.h.b16 %v2168
    %v2273 = vunpack.c.l.b16 %v2169
    %v2274 = vunpack.c.h.b16 %v2169
    %v2275 = vunpack.c.l.b16 %v2170
    %v2276 = vunpack.c.h.b16 %v2170
    %v2277 = vunpack.c.l.b16 %v2171
    %v2278 = vunpack.c.h.b16 %v2171
    %v2279 = vunpack.c.l.b16 %v2172
    %v2280 = vunpack.c.h.b16 %v2172
    %v2281 = vunpack.c.l.b16 %v2173
    %v2282 = vunpack.c.h.b16 %v2173
    %v2283 = vunpack.c.l.b16 %v2174
    %v2284 = vunpack.c.h.b16 %v2174
    %v2285 = vunpack.c.l.b16 %v2175
    %v2286 = vunpack.c.h.b16 %v2175
    %v2287 = vunpack.c.l.b16 %v2176
    %v2288 = vunpack.c.h.b16 %v2176
    %v2289 = vunpack.c.l.b16 %v2177
    %v2290 = vunpack.c.h.b16 %v2177
    %v2291 = vunpack.c.l.b16 %v2178
    %v2292 = vunpack.c.h.b16 %v2178
    %v2293 = vunpack.c.l.b16 %v2179
    %v2294 = vunpack.c.h.b16 %v2179
    %v2295 = vunpack.c.l.b16 %v2180
    %v2296 = vunpack.c.h.b16 %v2180
    %v2297 = vunpack.c.l.b16 %v2181
    %v2298 = vunpack.c.h.b16 %v2181
    %v2299 = vunpack.c.l.b16 %v2182
    %v2300 = vunpack.c.h.b16 %v2182
    %v2301 = vunpack.c.l.b16 %v2183
    %v2302 = vunpack.c.h.b16 %v2183
    %v2303 = vunpack.c.l.b16 %v2184
    %v2304 = vunpack.c.h.b16 %v2184
    %v2305 = vunpack.c.l.b16 %v2185
    %v2306 = vunpack.c.h.b16 %v2185
    %v2307 = vunpack.c.l.b16 %v2186
    %v2308 = vunpack.c.h.b16 %v2186
    %v2309 = vunpack.c.l.b16 %v2187
    %v2310 = vunpack.c.h.b16 %v2187
    %v2311 = vunpack.c.l.b16 %v2188
    %v2312 = vunpack.c.h.b16 %v2188
    %v2313 = vunpack.c.l.b16 %v2189
    %v2314 = vunpack.c.h.b16 %v2189
    %v2315 = vunpack.c.l.b16 %v2190
    %v2316 = vunpack.c.h.b16 %v2190
    %v2317 = vunpack.c.l.b16 %v2191
    %v2318 = vunpack.c.h.b16 %v2191
    %v2319 = vunpack.c.l.b16 %v2192
    %v2320 = vunpack.c.h.b16 %v2192
    %v2321 = vunpack.c.l.b16 %v2193
    %v2322 = vunpack.c.h.b16 %v2193
    %v2323 = vunpack.c.l.b16 %v2194
    %v2324 = vunpack.c.h.b16 %v2194
    %v2325 = vunpack.c.l.b16 %v2195
    %v2326 = vunpack.c.h.b16 %v2195
    %v2327 = vunpack.c.l.b16 %v2196
    %v2328 = vunpack.c.h.b16 %v2196
    %v2329 = vunpack.c.l.b16 %v2197
    %v2330 = vunpack.c.h.b16 %v2197
    %v2331 = vunpack.c.l.b16 %v2198
    %v2332 = vunpack.c.h.b16 %v2198
    %v2333 = vunpack.c.l.b16 %v2199
    %v2334 = vunpack.c.h.b16 %v2199
    %v2335 = vunpack.c.l.b16 %v2200
    %v2336 = vunpack.c.h.b16 %v2200
    %v2337 = vunpack.c.l.b16 %v2201
    %v2338 = vunpack.c.h.b16 %v2201
    %v2339 = vunpack.c.l.b16 %v2202
    %v2340 = vunpack.c.h.b16 %v2202
    %v2341 = vunpack.c.l.b16 %v2203
    %v2342 = vunpack.c.h.b16 %v2203
    %v2343 = vunpack.c.l.b16 %v2204
    %v2344 = vunpack.c.h.b16 %v2204
    %v2345 = vunpack.c.l.b16 %v2205
    %v2346 = vunpack.c.h.b16 %v2205
    %v2347 = vunpack.c.l.b16 %v2206
    %v2348 = vunpack.c.h.b16 %v2206
    %v2349 = vunpack.c.l.b16 %v2207
    %v2350 = vunpack.c.h.b16 %v2207
    %v2351 = vunpack.c.l.b16 %v2208
    %v2352 = vunpack.c.h.b16 %v2208
    %v2353 = vpack.c.b16 %v2261, %v2257
    %v2354 = vpack.c.b16 %v2262, %v2258
    %v2355 = vpack.c.b16 %v2263, %v2259
    %v2356 = vpack.c.b16 %v2264, %v2260
    %v2357 = vpack.c.b16 %v2269, %v2265
    %v2358 = vpack.c.b16 %v2270, %v2266
    %v2359 = vpack.c.b16 %v2271, %v2267
    %v2360 = vpack.c.b16 %v2272, %v2268
    %v2361 = vpack.c.b16 %v2277, %v2273
    %v2362 = vpack.c.b16 %v2278, %v2274
    %v2363 = vpack.c.b16 %v2279, %v2275
    %v2364 = vpack.c.b16 %v2280, %v2276
    %v2365 = vpack.c.b16 %v2285, %v2281
    %v2366 = vpack.c.b16 %v2286, %v2282
    %v2367 = vpack.c.b16 %v2287, %v2283
    %v2368 = vpack.c.b16 %v2288, %v2284
    %v2369 = vpack.c.b16 %v2293, %v2289
    %v2370 = vpack.c.b16 %v2294, %v2290
    %v2371 = vpack.c.b16 %v2295, %v2291
    %v2372 = vpack.c.b16 %v2296, %v2292
    %v2373 = vpack.c.b16 %v2301, %v2297
    %v2374 = vpack.c.b16 %v2302, %v2298
    %v2375 = vpack.c.b16 %v2303, %v2299
    %v2376 = vpack.c.b16 %v2304, %v2300
    %v2377 = vpack.c.b16 %v2309, %v2305
    %v2378 = vpack.c.b16 %v2310, %v2306
    %v2379 = vpack.c.b16 %v2311, %v2307
    %v2380 = vpack.c.b16 %v2312, %v2308
    %v2381 = vpack.c.b16 %v2317, %v2313
    %v2382 = vpack.c.b16 %v2318, %v2314
    %v2383 = vpack.c.b16 %v2319, %v2315
    %v2384 = vpack.c.b16 %v2320, %v2316
    %v2385 = vpack.c.b16 %v2325, %v2321
    %v2386 = vpack.c.b16 %v2326, %v2322
    %v2387 = vpack.c.b16 %v2327, %v2323
    %v2388 = vpack.c.b16 %v2328, %v2324
    %v2389 = vpack.c.b16 %v2333, %v2329
    %v2390 = vpack.c.b16 %v2334, %v2330
    %v2391 = vpack.c.b16 %v2335, %v2331
    %v2392 = vpack.c.b16 %v2336, %v2332
    %v2393 = vpack.c.b16 %v2341, %v2337
    %v2394 = vpack.c.b16 %v2342, %v2338
    %v2395 = vpack.c.b16 %v2343, %v2339
    %v2396 = vpack.c.b16 %v2344, %v2340
    %v2397 = vpack.c.b16 %v2349, %v2345
    %v2398 = vpack.c.b16 %v2350, %v2346
    %v2399 = vpack.c.b16 %v2351, %v2347
    %v2400 = vpack.c.b16 %v2352, %v2348
    %v2450 = vsel %vm1903, %v2098, 0
    %v2453 = vsel %vm1903, %v2100, 0
    %v2456 = vsel %vm1903, %v2102, 0
    %v2459 = vsel %vm1903, %v2104, 0
    %v2462 = vsel %vm1903, %v2106, 0
    %v2465 = vsel %vm1903, %v2108, 0
    %v2468 = vsel %vm1903, %v2110, 0
    %v2471 = vsel %vm1903, %v2112, 0
    %v2474 = vsel %vm1903, %v2114, 0
    %v2477 = vsel %vm1903, %v2116, 0
    %v2480 = vsel %vm1903, %v2118, 0
    %v2483 = vsel %vm1903, %v2120, 0
    %v2486 = vsel %vm1903, %v2122, 0
    %v2489 = vsel %vm1903, %v2124, 0
    %v2492 = vsel %vm1903, %v2126, 0
    %v2495 = vsel %vm1903, %v2128, 0
    %v2498 = vsel %vm1903, %v2130, 0
    %v2501 = vsel %vm1903, %v2132, 0
    %v2504 = vsel %vm1903, %v2134, 0
    %v2507 = vsel %vm1903, %v2136, 0
    %v2510 = vsel %vm1903, %v2138, 0
    %v2513 = vsel %vm1903, %v2140, 0
    %v2516 = vsel %vm1903, %v2142, 0
    %v2519 = vsel %vm1903, %v2144, 0
    %v2522 = vsel %vm1903, %v2146, 0
    %v2525 = vsel %vm1903, %v2148, 0
    %v2528 = vsel %vm1903, %v2150, 0
    %v2531 = vsel %vm1903, %v2152, 0
    %v2534 = vsel %vm1903, %v2154, 0
    %v2537 = vsel %vm1903, %v2156, 0
    %v2540 = vsel %vm1903, %v2158, 0
    %v2543 = vsel %vm1903, %v2160, 0
    %2545 = vmatprep.subr.bf16.mxu0 %v2354
    %2546 = vmatpush1.bf16.msra.mxu0 %v2353
    %2547 = vmatprep.subr.bf16.mxu0 %v2358
    %2548 = vmatpush1.bf16.msra.mxu0 %v2357
    %2549 = vmatprep.subr.bf16.mxu0 %v2362
    %2550 = vmatpush1.bf16.msra.mxu0 %v2361
    %2551 = vmatprep.subr.bf16.mxu0 %v2366
    %2552 = vmatpush1.bf16.msra.mxu0 %v2365
    %2553 = vmatprep.subr.bf16.mxu0 %v2370
    %2554 = vmatpush1.bf16.msra.mxu0 %v2369
    %2555 = vmatprep.subr.bf16.mxu0 %v2374
    %2556 = vmatpush1.bf16.msra.mxu0 %v2373
    %2557 = vmatprep.subr.bf16.mxu0 %v2378
    %2558 = vmatpush1.bf16.msra.mxu0 %v2377
    %2559 = vmatprep.subr.bf16.mxu0 %v2382
    %2560 = vmatpush1.bf16.msra.mxu0 %v2381
    %2561 = vmatprep.subr.bf16.mxu0 %v2386
    %2562 = vmatpush1.bf16.msra.mxu0 %v2385
    %2563 = vmatprep.subr.bf16.mxu0 %v2390
    %2564 = vmatpush1.bf16.msra.mxu0 %v2389
    %2565 = vmatprep.subr.bf16.mxu0 %v2394
    %2566 = vmatpush1.bf16.msra.mxu0 %v2393
    %2567 = vmatprep.subr.bf16.mxu0 %v2398
    %2568 = vmatpush1.bf16.msra.mxu0 %v2397
    %2569 = vmatprep.subr.bf16.mxu0 0
    %2570 = vmatpush1.bf16.msra.mxu0 0
    %2571 = vmatprep.subr.bf16.mxu0 0
    %2572 = vmatpush1.bf16.msra.mxu0 0
    %2573 = vmatprep.subr.bf16.mxu0 0
    %2574 = vmatpush1.bf16.msra.mxu0 0
    %2575 = vmatprep.subr.bf16.mxu0 0
    %2576 = vmatpush1.bf16.msra.mxu0 0
    %2577 = vmatprep.mubr.bf16.mxu0 %v2450
    %2578 = vmatmul.mubr.bf16.gmra.mrb[0].mxu0 %v2097
    %v2579 = vpop.f32.mrb[0].mxu0
    %v2580 = vadd.f32 0.0, %v2579
    %v2581 = vpop.f32.mrb[0].mxu0
    %v2582 = vadd.f32 0.0, %v2581
    %v2583 = vpop.f32.mrb[0].mxu0
    %v2584 = vadd.f32 0.0, %v2583
    %v2585 = vpop.f32.mrb[0].mxu0
    %v2586 = vadd.f32 0.0, %v2585
    %2587 = vmatprep.mubr.bf16.mxu0 %v2453
    %2588 = vmatmul.mubr.bf16.gmra.mrb[0].mxu0 %v2099
    %v2589 = vpop.f32.mrb[0].mxu0
    %v2590 = vadd.f32 0.0, %v2589
    %v2591 = vpop.f32.mrb[0].mxu0
    %v2592 = vadd.f32 0.0, %v2591
    %v2593 = vpop.f32.mrb[0].mxu0
    %v2594 = vadd.f32 0.0, %v2593
    %v2595 = vpop.f32.mrb[0].mxu0
    %v2596 = vadd.f32 0.0, %v2595
    %2597 = vmatprep.mubr.bf16.mxu0 %v2456
    %2598 = vmatmul.mubr.bf16.gmra.mrb[0].mxu0 %v2101
    %v2599 = vpop.f32.mrb[0].mxu0
    %v2600 = vadd.f32 0.0, %v2599
    %v2601 = vpop.f32.mrb[0].mxu0
    %v2602 = vadd.f32 0.0, %v2601
    %v2603 = vpop.f32.mrb[0].mxu0
    %v2604 = vadd.f32 0.0, %v2603
    %v2605 = vpop.f32.mrb[0].mxu0
    %v2606 = vadd.f32 0.0, %v2605
    %2607 = vmatprep.mubr.bf16.mxu0 %v2459
    %2608 = vmatmul.mubr.bf16.gmra.mrb[0].mxu0 %v2103
    %v2609 = vpop.f32.mrb[0].mxu0
    %v2610 = vadd.f32 0.0, %v2609
    %v2611 = vpop.f32.mrb[0].mxu0
    %v2612 = vadd.f32 0.0, %v2611
    %v2613 = vpop.f32.mrb[0].mxu0
    %v2614 = vadd.f32 0.0, %v2613
    %v2615 = vpop.f32.mrb[0].mxu0
    %v2616 = vadd.f32 0.0, %v2615
    %2617 = vmatprep.mubr.bf16.mxu0 %v2462
    %2618 = vmatmul.mubr.bf16.gmra.mrb[0].mxu0 %v2105
    %v2619 = vpop.f32.mrb[0].mxu0
    %v2620 = vadd.f32 0.0, %v2619
    %v2621 = vpop.f32.mrb[0].mxu0
    %v2622 = vadd.f32 0.0, %v2621
    %v2623 = vpop.f32.mrb[0].mxu0
    %v2624 = vadd.f32 0.0, %v2623
    %v2625 = vpop.f32.mrb[0].mxu0
    %v2626 = vadd.f32 0.0, %v2625
    %2627 = vmatprep.mubr.bf16.mxu0 %v2465
    %2628 = vmatmul.mubr.bf16.gmra.mrb[0].mxu0 %v2107
    %v2629 = vpop.f32.mrb[0].mxu0
    %v2630 = vadd.f32 0.0, %v2629
    %v2631 = vpop.f32.mrb[0].mxu0
    %v2632 = vadd.f32 0.0, %v2631
    %v2633 = vpop.f32.mrb[0].mxu0
    %v2634 = vadd.f32 0.0, %v2633
    %v2635 = vpop.f32.mrb[0].mxu0
    %v2636 = vadd.f32 0.0, %v2635
    %2637 = vmatprep.mubr.bf16.mxu0 %v2468
    %2638 = vmatmul.mubr.bf16.gmra.mrb[0].mxu0 %v2109
    %v2639 = vpop.f32.mrb[0].mxu0
    %v2640 = vadd.f32 0.0, %v2639
    %v2641 = vpop.f32.mrb[0].mxu0
    %v2642 = vadd.f32 0.0, %v2641
    %v2643 = vpop.f32.mrb[0].mxu0
    %v2644 = vadd.f32 0.0, %v2643
    %v2645 = vpop.f32.mrb[0].mxu0
    %v2646 = vadd.f32 0.0, %v2645
    %2647 = vmatprep.mubr.bf16.mxu0 %v2471
    %2648 = vmatmul.mubr.bf16.gmra.mrb[0].mxu0 %v2111
    %v2649 = vpop.f32.mrb[0].mxu0
    %v2650 = vadd.f32 0.0, %v2649
    %v2651 = vpop.f32.mrb[0].mxu0
    %v2652 = vadd.f32 0.0, %v2651
    %v2653 = vpop.f32.mrb[0].mxu0
    %v2654 = vadd.f32 0.0, %v2653
    %v2655 = vpop.f32.mrb[0].mxu0
    %v2656 = vadd.f32 0.0, %v2655
    %2657 = vmatprep.mubr.bf16.mxu0 %v2474
    %2658 = vmatmul.mubr.bf16.gmra.mrb[0].mxu0 %v2113
    %v2659 = vpop.f32.mrb[0].mxu0
    %v2660 = vadd.f32 0.0, %v2659
    %v2661 = vpop.f32.mrb[0].mxu0
    %v2662 = vadd.f32 0.0, %v2661
    %v2663 = vpop.f32.mrb[0].mxu0
    %v2664 = vadd.f32 0.0, %v2663
    %v2665 = vpop.f32.mrb[0].mxu0
    %v2666 = vadd.f32 0.0, %v2665
    %2667 = vmatprep.mubr.bf16.mxu0 %v2477
    %2668 = vmatmul.mubr.bf16.gmra.mrb[0].mxu0 %v2115
    %v2669 = vpop.f32.mrb[0].mxu0
    %v2670 = vadd.f32 0.0, %v2669
    %v2671 = vpop.f32.mrb[0].mxu0
    %v2672 = vadd.f32 0.0, %v2671
    %v2673 = vpop.f32.mrb[0].mxu0
    %v2674 = vadd.f32 0.0, %v2673
    %v2675 = vpop.f32.mrb[0].mxu0
    %v2676 = vadd.f32 0.0, %v2675
    %2677 = vmatprep.mubr.bf16.mxu0 %v2480
    %2678 = vmatmul.mubr.bf16.gmra.mrb[0].mxu0 %v2117
    %v2679 = vpop.f32.mrb[0].mxu0
    %v2680 = vadd.f32 0.0, %v2679
    %v2681 = vpop.f32.mrb[0].mxu0
    %v2682 = vadd.f32 0.0, %v2681
    %v2683 = vpop.f32.mrb[0].mxu0
    %v2684 = vadd.f32 0.0, %v2683
    %v2685 = vpop.f32.mrb[0].mxu0
    %v2686 = vadd.f32 0.0, %v2685
    %2687 = vmatprep.mubr.bf16.mxu0 %v2483
    %2688 = vmatmul.mubr.bf16.gmra.mrb[0].mxu0 %v2119
    %v2689 = vpop.f32.mrb[0].mxu0
    %v2690 = vadd.f32 0.0, %v2689
    %v2691 = vpop.f32.mrb[0].mxu0
    %v2692 = vadd.f32 0.0, %v2691
    %v2693 = vpop.f32.mrb[0].mxu0
    %v2694 = vadd.f32 0.0, %v2693
    %v2695 = vpop.f32.mrb[0].mxu0
    %v2696 = vadd.f32 0.0, %v2695
    %2697 = vmatprep.mubr.bf16.mxu0 %v2486
    %2698 = vmatmul.mubr.bf16.gmra.mrb[0].mxu0 %v2121
    %v2699 = vpop.f32.mrb[0].mxu0
    %v2700 = vadd.f32 0.0, %v2699
    %v2701 = vpop.f32.mrb[0].mxu0
    %v2702 = vadd.f32 0.0, %v2701
    %v2703 = vpop.f32.mrb[0].mxu0
    %v2704 = vadd.f32 0.0, %v2703
    %v2705 = vpop.f32.mrb[0].mxu0
    %v2706 = vadd.f32 0.0, %v2705
    %2707 = vmatprep.mubr.bf16.mxu0 %v2489
    %2708 = vmatmul.mubr.bf16.gmra.mrb[0].mxu0 %v2123
    %v2709 = vpop.f32.mrb[0].mxu0
    %v2710 = vadd.f32 0.0, %v2709
    %v2711 = vpop.f32.mrb[0].mxu0
    %v2712 = vadd.f32 0.0, %v2711
    %v2713 = vpop.f32.mrb[0].mxu0
    %v2714 = vadd.f32 0.0, %v2713
    %v2715 = vpop.f32.mrb[0].mxu0
    %v2716 = vadd.f32 0.0, %v2715
    %2717 = vmatprep.mubr.bf16.mxu0 %v2492
    %2718 = vmatmul.mubr.bf16.gmra.mrb[0].mxu0 %v2125
    %v2719 = vpop.f32.mrb[0].mxu0
    %v2720 = vadd.f32 0.0, %v2719
    %v2721 = vpop.f32.mrb[0].mxu0
    %v2722 = vadd.f32 0.0, %v2721
    %v2723 = vpop.f32.mrb[0].mxu0
    %v2724 = vadd.f32 0.0, %v2723
    %v2725 = vpop.f32.mrb[0].mxu0
    %v2726 = vadd.f32 0.0, %v2725
    %2727 = vmatprep.mubr.bf16.mxu0 %v2495
    %2728 = vmatmul.mubr.bf16.gmra.mrb[0].mxu0 %v2127
    %v2729 = vpop.f32.mrb[0].mxu0
    %v2730 = vadd.f32 0.0, %v2729
    %v2731 = vpop.f32.mrb[0].mxu0
    %v2732 = vadd.f32 0.0, %v2731
    %v2733 = vpop.f32.mrb[0].mxu0
    %v2734 = vadd.f32 0.0, %v2733
    %v2735 = vpop.f32.mrb[0].mxu0
    %v2736 = vadd.f32 0.0, %v2735
    %2737 = vmatprep.mubr.bf16.mxu0 %v2498
    %2738 = vmatmul.mubr.bf16.gmra.mrb[0].mxu0 %v2129
    %v2739 = vpop.f32.mrb[0].mxu0
    %v2740 = vadd.f32 0.0, %v2739
    %v2741 = vpop.f32.mrb[0].mxu0
    %v2742 = vadd.f32 0.0, %v2741
    %v2743 = vpop.f32.mrb[0].mxu0
    %v2744 = vadd.f32 0.0, %v2743
    %v2745 = vpop.f32.mrb[0].mxu0
    %v2746 = vadd.f32 0.0, %v2745
    %2747 = vmatprep.mubr.bf16.mxu0 %v2501
    %2748 = vmatmul.mubr.bf16.gmra.mrb[0].mxu0 %v2131
    %v2749 = vpop.f32.mrb[0].mxu0
    %v2750 = vadd.f32 0.0, %v2749
    %v2751 = vpop.f32.mrb[0].mxu0
    %v2752 = vadd.f32 0.0, %v2751
    %v2753 = vpop.f32.mrb[0].mxu0
    %v2754 = vadd.f32 0.0, %v2753
    %v2755 = vpop.f32.mrb[0].mxu0
    %v2756 = vadd.f32 0.0, %v2755
    %2757 = vmatprep.mubr.bf16.mxu0 %v2504
    %2758 = vmatmul.mubr.bf16.gmra.mrb[0].mxu0 %v2133
    %v2759 = vpop.f32.mrb[0].mxu0
    %v2760 = vadd.f32 0.0, %v2759
    %v2761 = vpop.f32.mrb[0].mxu0
    %v2762 = vadd.f32 0.0, %v2761
    %v2763 = vpop.f32.mrb[0].mxu0
    %v2764 = vadd.f32 0.0, %v2763
    %v2765 = vpop.f32.mrb[0].mxu0
    %v2766 = vadd.f32 0.0, %v2765
    %2767 = vmatprep.mubr.bf16.mxu0 %v2507
    %2768 = vmatmul.mubr.bf16.gmra.mrb[0].mxu0 %v2135
    %v2769 = vpop.f32.mrb[0].mxu0
    %v2770 = vadd.f32 0.0, %v2769
    %v2771 = vpop.f32.mrb[0].mxu0
    %v2772 = vadd.f32 0.0, %v2771
    %v2773 = vpop.f32.mrb[0].mxu0
    %v2774 = vadd.f32 0.0, %v2773
    %v2775 = vpop.f32.mrb[0].mxu0
    %v2776 = vadd.f32 0.0, %v2775
    %2777 = vmatprep.mubr.bf16.mxu0 %v2510
    %2778 = vmatmul.mubr.bf16.gmra.mrb[0].mxu0 %v2137
    %v2779 = vpop.f32.mrb[0].mxu0
    %v2780 = vadd.f32 0.0, %v2779
    %v2781 = vpop.f32.mrb[0].mxu0
    %v2782 = vadd.f32 0.0, %v2781
    %v2783 = vpop.f32.mrb[0].mxu0
    %v2784 = vadd.f32 0.0, %v2783
    %v2785 = vpop.f32.mrb[0].mxu0
    %v2786 = vadd.f32 0.0, %v2785
    %2787 = vmatprep.mubr.bf16.mxu0 %v2513
    %2788 = vmatmul.mubr.bf16.gmra.mrb[0].mxu0 %v2139
    %v2789 = vpop.f32.mrb[0].mxu0
    %v2790 = vadd.f32 0.0, %v2789
    %v2791 = vpop.f32.mrb[0].mxu0
    %v2792 = vadd.f32 0.0, %v2791
    %v2793 = vpop.f32.mrb[0].mxu0
    %v2794 = vadd.f32 0.0, %v2793
    %v2795 = vpop.f32.mrb[0].mxu0
    %v2796 = vadd.f32 0.0, %v2795
    %2797 = vmatprep.mubr.bf16.mxu0 %v2516
    %2798 = vmatmul.mubr.bf16.gmra.mrb[0].mxu0 %v2141
    %v2799 = vpop.f32.mrb[0].mxu0
    %v2800 = vadd.f32 0.0, %v2799
    %v2801 = vpop.f32.mrb[0].mxu0
    %v2802 = vadd.f32 0.0, %v2801
    %v2803 = vpop.f32.mrb[0].mxu0
    %v2804 = vadd.f32 0.0, %v2803
    %v2805 = vpop.f32.mrb[0].mxu0
    %v2806 = vadd.f32 0.0, %v2805
    %2807 = vmatprep.mubr.bf16.mxu0 %v2519
    %2808 = vmatmul.mubr.bf16.gmra.mrb[0].mxu0 %v2143
    %v2809 = vpop.f32.mrb[0].mxu0
    %v2810 = vadd.f32 0.0, %v2809
    %v2811 = vpop.f32.mrb[0].mxu0
    %v2812 = vadd.f32 0.0, %v2811
    %v2813 = vpop.f32.mrb[0].mxu0
    %v2814 = vadd.f32 0.0, %v2813
    %v2815 = vpop.f32.mrb[0].mxu0
    %v2816 = vadd.f32 0.0, %v2815
    %2817 = vmatprep.mubr.bf16.mxu0 %v2522
    %2818 = vmatmul.mubr.bf16.gmra.mrb[0].mxu0 %v2145
    %v2819 = vpop.f32.mrb[0].mxu0
    %v2820 = vadd.f32 0.0, %v2819
    %v2821 = vpop.f32.mrb[0].mxu0
    %v2822 = vadd.f32 0.0, %v2821
    %v2823 = vpop.f32.mrb[0].mxu0
    %v2824 = vadd.f32 0.0, %v2823
    %v2825 = vpop.f32.mrb[0].mxu0
    %v2826 = vadd.f32 0.0, %v2825
    %2827 = vmatprep.mubr.bf16.mxu0 %v2525
    %2828 = vmatmul.mubr.bf16.gmra.mrb[0].mxu0 %v2147
    %v2829 = vpop.f32.mrb[0].mxu0
    %v2830 = vadd.f32 0.0, %v2829
    %v2831 = vpop.f32.mrb[0].mxu0
    %v2832 = vadd.f32 0.0, %v2831
    %v2833 = vpop.f32.mrb[0].mxu0
    %v2834 = vadd.f32 0.0, %v2833
    %v2835 = vpop.f32.mrb[0].mxu0
    %v2836 = vadd.f32 0.0, %v2835
    %2837 = vmatprep.mubr.bf16.mxu0 %v2528
    %2838 = vmatmul.mubr.bf16.gmra.mrb[0].mxu0 %v2149
    %v2839 = vpop.f32.mrb[0].mxu0
    %v2840 = vadd.f32 0.0, %v2839
    %v2841 = vpop.f32.mrb[0].mxu0
    %v2842 = vadd.f32 0.0, %v2841
    %v2843 = vpop.f32.mrb[0].mxu0
    %v2844 = vadd.f32 0.0, %v2843
    %v2845 = vpop.f32.mrb[0].mxu0
    %v2846 = vadd.f32 0.0, %v2845
    %2847 = vmatprep.mubr.bf16.mxu0 %v2531
    %2848 = vmatmul.mubr.bf16.gmra.mrb[0].mxu0 %v2151
    %v2849 = vpop.f32.mrb[0].mxu0
    %v2850 = vadd.f32 0.0, %v2849
    %v2851 = vpop.f32.mrb[0].mxu0
    %v2852 = vadd.f32 0.0, %v2851
    %v2853 = vpop.f32.mrb[0].mxu0
    %v2854 = vadd.f32 0.0, %v2853
    %v2855 = vpop.f32.mrb[0].mxu0
    %v2856 = vadd.f32 0.0, %v2855
    %2857 = vmatprep.mubr.bf16.mxu0 %v2534
    %2858 = vmatmul.mubr.bf16.gmra.mrb[0].mxu0 %v2153
    %v2859 = vpop.f32.mrb[0].mxu0
    %v2860 = vadd.f32 0.0, %v2859
    %v2861 = vpop.f32.mrb[0].mxu0
    %v2862 = vadd.f32 0.0, %v2861
    %v2863 = vpop.f32.mrb[0].mxu0
    %v2864 = vadd.f32 0.0, %v2863
    %v2865 = vpop.f32.mrb[0].mxu0
    %v2866 = vadd.f32 0.0, %v2865
    %2867 = vmatprep.mubr.bf16.mxu0 %v2537
    %2868 = vmatmul.mubr.bf16.gmra.mrb[0].mxu0 %v2155
    %v2869 = vpop.f32.mrb[0].mxu0
    %v2870 = vadd.f32 0.0, %v2869
    %v2871 = vpop.f32.mrb[0].mxu0
    %v2872 = vadd.f32 0.0, %v2871
    %v2873 = vpop.f32.mrb[0].mxu0
    %v2874 = vadd.f32 0.0, %v2873
    %v2875 = vpop.f32.mrb[0].mxu0
    %v2876 = vadd.f32 0.0, %v2875
    %2877 = vmatprep.mubr.bf16.mxu0 %v2540
    %2878 = vmatmul.mubr.bf16.gmra.mrb[0].mxu0 %v2157
    %v2879 = vpop.f32.mrb[0].mxu0
    %v2880 = vadd.f32 0.0, %v2879
    %v2881 = vpop.f32.mrb[0].mxu0
    %v2882 = vadd.f32 0.0, %v2881
    %v2883 = vpop.f32.mrb[0].mxu0
    %v2884 = vadd.f32 0.0, %v2883
    %v2885 = vpop.f32.mrb[0].mxu0
    %v2886 = vadd.f32 0.0, %v2885
    %2887 = vmatprep.mubr.bf16.mxu0 %v2543
    %2888 = vmatmul.mubr.bf16.gmra.mrb[0].mxu0 %v2159
    %v2889 = vpop.f32.mrb[0].mxu0
    %v2890 = vadd.f32 0.0, %v2889
    %v2891 = vpop.f32.mrb[0].mxu0
    %v2892 = vadd.f32 0.0, %v2891
    %v2893 = vpop.f32.mrb[0].mxu0
    %v2894 = vadd.f32 0.0, %v2893
    %v2895 = vpop.f32.mrb[0].mxu0
    %v2896 = vadd.f32 0.0, %v2895
    %2897 = vdwg.mxu0
    %2898 = vmatprep.subr.bf16.mxu0 %v2356
    %2899 = vmatpush1.bf16.msra.mxu0 %v2355
    %2900 = vmatprep.subr.bf16.mxu0 %v2360
    %2901 = vmatpush1.bf16.msra.mxu0 %v2359
    %2902 = vmatprep.subr.bf16.mxu0 %v2364
    %2903 = vmatpush1.bf16.msra.mxu0 %v2363
    %2904 = vmatprep.subr.bf16.mxu0 %v2368
    %2905 = vmatpush1.bf16.msra.mxu0 %v2367
    %2906 = vmatprep.subr.bf16.mxu0 %v2372
    %2907 = vmatpush1.bf16.msra.mxu0 %v2371
    %2908 = vmatprep.subr.bf16.mxu0 %v2376
    %2909 = vmatpush1.bf16.msra.mxu0 %v2375
    %2910 = vmatprep.subr.bf16.mxu0 %v2380
    %2911 = vmatpush1.bf16.msra.mxu0 %v2379
    %2912 = vmatprep.subr.bf16.mxu0 %v2384
    %2913 = vmatpush1.bf16.msra.mxu0 %v2383
    %2914 = vmatprep.subr.bf16.mxu0 %v2388
    %2915 = vmatpush1.bf16.msra.mxu0 %v2387
    %2916 = vmatprep.subr.bf16.mxu0 %v2392
    %2917 = vmatpush1.bf16.msra.mxu0 %v2391
    %2918 = vmatprep.subr.bf16.mxu0 %v2396
    %2919 = vmatpush1.bf16.msra.mxu0 %v2395
    %2920 = vmatprep.subr.bf16.mxu0 %v2400
    %2921 = vmatpush1.bf16.msra.mxu0 %v2399
    %2922 = vmatprep.subr.bf16.mxu0 0
    %2923 = vmatpush1.bf16.msra.mxu0 0
    %2924 = vmatprep.subr.bf16.mxu0 0
    %2925 = vmatpush1.bf16.msra.mxu0 0
    %2926 = vmatprep.subr.bf16.mxu0 0
    %2927 = vmatpush1.bf16.msra.mxu0 0
    %2928 = vmatprep.subr.bf16.mxu0 0
    %2929 = vmatpush1.bf16.msra.mxu0 0
    %2930 = vmatprep.mubr.bf16.mxu0 %v2450
    %2931 = vmatmul.mubr.bf16.gmra.mrb[0].mxu0 %v2097
    %v2932 = vpop.f32.mrb[0].mxu0
    %v2933 = vadd.f32 0.0, %v2932
    %v2934 = vpop.f32.mrb[0].mxu0
    %v2935 = vadd.f32 0.0, %v2934
    %v2936 = vpop.f32.mrb[0].mxu0
    %v2937 = vadd.f32 0.0, %v2936
    %v2938 = vpop.f32.mrb[0].mxu0
    %v2939 = vadd.f32 0.0, %v2938
    %2940 = vmatprep.mubr.bf16.mxu0 %v2453
    %2941 = vmatmul.mubr.bf16.gmra.mrb[0].mxu0 %v2099
    %v2942 = vpop.f32.mrb[0].mxu0
    %v2943 = vadd.f32 0.0, %v2942
    %v2944 = vpop.f32.mrb[0].mxu0
    %v2945 = vadd.f32 0.0, %v2944
    %v2946 = vpop.f32.mrb[0].mxu0
    %v2947 = vadd.f32 0.0, %v2946
    %v2948 = vpop.f32.mrb[0].mxu0
    %v2949 = vadd.f32 0.0, %v2948
    %2950 = vmatprep.mubr.bf16.mxu0 %v2456
    %2951 = vmatmul.mubr.bf16.gmra.mrb[0].mxu0 %v2101
    %v2952 = vpop.f32.mrb[0].mxu0
    %v2953 = vadd.f32 0.0, %v2952
    %v2954 = vpop.f32.mrb[0].mxu0
    %v2955 = vadd.f32 0.0, %v2954
    %v2956 = vpop.f32.mrb[0].mxu0
    %v2957 = vadd.f32 0.0, %v2956
    %v2958 = vpop.f32.mrb[0].mxu0
    %v2959 = vadd.f32 0.0, %v2958
    %2960 = vmatprep.mubr.bf16.mxu0 %v2459
    %2961 = vmatmul.mubr.bf16.gmra.mrb[0].mxu0 %v2103
    %v2962 = vpop.f32.mrb[0].mxu0
    %v2963 = vadd.f32 0.0, %v2962
    %v2964 = vpop.f32.mrb[0].mxu0
    %v2965 = vadd.f32 0.0, %v2964
    %v2966 = vpop.f32.mrb[0].mxu0
    %v2967 = vadd.f32 0.0, %v2966
    %v2968 = vpop.f32.mrb[0].mxu0
    %v2969 = vadd.f32 0.0, %v2968
    %2970 = vmatprep.mubr.bf16.mxu0 %v2462
    %2971 = vmatmul.mubr.bf16.gmra.mrb[0].mxu0 %v2105
    %v2972 = vpop.f32.mrb[0].mxu0
    %v2973 = vadd.f32 0.0, %v2972
    %v2974 = vpop.f32.mrb[0].mxu0
    %v2975 = vadd.f32 0.0, %v2974
    %v2976 = vpop.f32.mrb[0].mxu0
    %v2977 = vadd.f32 0.0, %v2976
    %v2978 = vpop.f32.mrb[0].mxu0
    %v2979 = vadd.f32 0.0, %v2978
    %2980 = vmatprep.mubr.bf16.mxu0 %v2465
    %2981 = vmatmul.mubr.bf16.gmra.mrb[0].mxu0 %v2107
    %v2982 = vpop.f32.mrb[0].mxu0
    %v2983 = vadd.f32 0.0, %v2982
    %v2984 = vpop.f32.mrb[0].mxu0
    %v2985 = vadd.f32 0.0, %v2984
    %v2986 = vpop.f32.mrb[0].mxu0
    %v2987 = vadd.f32 0.0, %v2986
    %v2988 = vpop.f32.mrb[0].mxu0
    %v2989 = vadd.f32 0.0, %v2988
    %2990 = vmatprep.mubr.bf16.mxu0 %v2468
    %2991 = vmatmul.mubr.bf16.gmra.mrb[0].mxu0 %v2109
    %v2992 = vpop.f32.mrb[0].mxu0
    %v2993 = vadd.f32 0.0, %v2992
    %v2994 = vpop.f32.mrb[0].mxu0
    %v2995 = vadd.f32 0.0, %v2994
    %v2996 = vpop.f32.mrb[0].mxu0
    %v2997 = vadd.f32 0.0, %v2996
    %v2998 = vpop.f32.mrb[0].mxu0
    %v2999 = vadd.f32 0.0, %v2998
    %3000 = vmatprep.mubr.bf16.mxu0 %v2471
    %3001 = vmatmul.mubr.bf16.gmra.mrb[0].mxu0 %v2111
    %v3002 = vpop.f32.mrb[0].mxu0
    %v3003 = vadd.f32 0.0, %v3002
    %v3004 = vpop.f32.mrb[0].mxu0
    %v3005 = vadd.f32 0.0, %v3004
    %v3006 = vpop.f32.mrb[0].mxu0
    %v3007 = vadd.f32 0.0, %v3006
    %v3008 = vpop.f32.mrb[0].mxu0
    %v3009 = vadd.f32 0.0, %v3008
    %3010 = vmatprep.mubr.bf16.mxu0 %v2474
    %3011 = vmatmul.mubr.bf16.gmra.mrb[0].mxu0 %v2113
    %v3012 = vpop.f32.mrb[0].mxu0
    %v3013 = vadd.f32 0.0, %v3012
    %v3014 = vpop.f32.mrb[0].mxu0
    %v3015 = vadd.f32 0.0, %v3014
    %v3016 = vpop.f32.mrb[0].mxu0
    %v3017 = vadd.f32 0.0, %v3016
    %v3018 = vpop.f32.mrb[0].mxu0
    %v3019 = vadd.f32 0.0, %v3018
    %3020 = vmatprep.mubr.bf16.mxu0 %v2477
    %3021 = vmatmul.mubr.bf16.gmra.mrb[0].mxu0 %v2115
    %v3022 = vpop.f32.mrb[0].mxu0
    %v3023 = vadd.f32 0.0, %v3022
    %v3024 = vpop.f32.mrb[0].mxu0
    %v3025 = vadd.f32 0.0, %v3024
    %v3026 = vpop.f32.mrb[0].mxu0
    %v3027 = vadd.f32 0.0, %v3026
    %v3028 = vpop.f32.mrb[0].mxu0
    %v3029 = vadd.f32 0.0, %v3028
    %3030 = vmatprep.mubr.bf16.mxu0 %v2480
    %3031 = vmatmul.mubr.bf16.gmra.mrb[0].mxu0 %v2117
    %v3032 = vpop.f32.mrb[0].mxu0
    %v3033 = vadd.f32 0.0, %v3032
    %v3034 = vpop.f32.mrb[0].mxu0
    %v3035 = vadd.f32 0.0, %v3034
    %v3036 = vpop.f32.mrb[0].mxu0
    %v3037 = vadd.f32 0.0, %v3036
    %v3038 = vpop.f32.mrb[0].mxu0
    %v3039 = vadd.f32 0.0, %v3038
    %3040 = vmatprep.mubr.bf16.mxu0 %v2483
    %3041 = vmatmul.mubr.bf16.gmra.mrb[0].mxu0 %v2119
    %v3042 = vpop.f32.mrb[0].mxu0
    %v3043 = vadd.f32 0.0, %v3042
    %v3044 = vpop.f32.mrb[0].mxu0
    %v3045 = vadd.f32 0.0, %v3044
    %v3046 = vpop.f32.mrb[0].mxu0
    %v3047 = vadd.f32 0.0, %v3046
    %v3048 = vpop.f32.mrb[0].mxu0
    %v3049 = vadd.f32 0.0, %v3048
    %3050 = vmatprep.mubr.bf16.mxu0 %v2486
    %3051 = vmatmul.mubr.bf16.gmra.mrb[0].mxu0 %v2121
    %v3052 = vpop.f32.mrb[0].mxu0
    %v3053 = vadd.f32 0.0, %v3052
    %v3054 = vpop.f32.mrb[0].mxu0
    %v3055 = vadd.f32 0.0, %v3054
    %v3056 = vpop.f32.mrb[0].mxu0
    %v3057 = vadd.f32 0.0, %v3056
    %v3058 = vpop.f32.mrb[0].mxu0
    %v3059 = vadd.f32 0.0, %v3058
    %3060 = vmatprep.mubr.bf16.mxu0 %v2489
    %3061 = vmatmul.mubr.bf16.gmra.mrb[0].mxu0 %v2123
    %v3062 = vpop.f32.mrb[0].mxu0
    %v3063 = vadd.f32 0.0, %v3062
    %v3064 = vpop.f32.mrb[0].mxu0
    %v3065 = vadd.f32 0.0, %v3064
    %v3066 = vpop.f32.mrb[0].mxu0
    %v3067 = vadd.f32 0.0, %v3066
    %v3068 = vpop.f32.mrb[0].mxu0
    %v3069 = vadd.f32 0.0, %v3068
    %3070 = vmatprep.mubr.bf16.mxu0 %v2492
    %3071 = vmatmul.mubr.bf16.gmra.mrb[0].mxu0 %v2125
    %v3072 = vpop.f32.mrb[0].mxu0
    %v3073 = vadd.f32 0.0, %v3072
    %v3074 = vpop.f32.mrb[0].mxu0
    %v3075 = vadd.f32 0.0, %v3074
    %v3076 = vpop.f32.mrb[0].mxu0
    %v3077 = vadd.f32 0.0, %v3076
    %v3078 = vpop.f32.mrb[0].mxu0
    %v3079 = vadd.f32 0.0, %v3078
    %3080 = vmatprep.mubr.bf16.mxu0 %v2495
    %3081 = vmatmul.mubr.bf16.gmra.mrb[0].mxu0 %v2127
    %v3082 = vpop.f32.mrb[0].mxu0
    %v3083 = vadd.f32 0.0, %v3082
    %v3084 = vpop.f32.mrb[0].mxu0
    %v3085 = vadd.f32 0.0, %v3084
    %v3086 = vpop.f32.mrb[0].mxu0
    %v3087 = vadd.f32 0.0, %v3086
    %v3088 = vpop.f32.mrb[0].mxu0
    %v3089 = vadd.f32 0.0, %v3088
    %3090 = vmatprep.mubr.bf16.mxu0 %v2498
    %3091 = vmatmul.mubr.bf16.gmra.mrb[0].mxu0 %v2129
    %v3092 = vpop.f32.mrb[0].mxu0
    %v3093 = vadd.f32 0.0, %v3092
    %v3094 = vpop.f32.mrb[0].mxu0
    %v3095 = vadd.f32 0.0, %v3094
    %v3096 = vpop.f32.mrb[0].mxu0
    %v3097 = vadd.f32 0.0, %v3096
    %v3098 = vpop.f32.mrb[0].mxu0
    %v3099 = vadd.f32 0.0, %v3098
    %3100 = vmatprep.mubr.bf16.mxu0 %v2501
    %3101 = vmatmul.mubr.bf16.gmra.mrb[0].mxu0 %v2131
    %v3102 = vpop.f32.mrb[0].mxu0
    %v3103 = vadd.f32 0.0, %v3102
    %v3104 = vpop.f32.mrb[0].mxu0
    %v3105 = vadd.f32 0.0, %v3104
    %v3106 = vpop.f32.mrb[0].mxu0
    %v3107 = vadd.f32 0.0, %v3106
    %v3108 = vpop.f32.mrb[0].mxu0
    %v3109 = vadd.f32 0.0, %v3108
    %3110 = vmatprep.mubr.bf16.mxu0 %v2504
    %3111 = vmatmul.mubr.bf16.gmra.mrb[0].mxu0 %v2133
    %v3112 = vpop.f32.mrb[0].mxu0
    %v3113 = vadd.f32 0.0, %v3112
    %v3114 = vpop.f32.mrb[0].mxu0
    %v3115 = vadd.f32 0.0, %v3114
    %v3116 = vpop.f32.mrb[0].mxu0
    %v3117 = vadd.f32 0.0, %v3116
    %v3118 = vpop.f32.mrb[0].mxu0
    %v3119 = vadd.f32 0.0, %v3118
    %3120 = vmatprep.mubr.bf16.mxu0 %v2507
    %3121 = vmatmul.mubr.bf16.gmra.mrb[0].mxu0 %v2135
    %v3122 = vpop.f32.mrb[0].mxu0
    %v3123 = vadd.f32 0.0, %v3122
    %v3124 = vpop.f32.mrb[0].mxu0
    %v3125 = vadd.f32 0.0, %v3124
    %v3126 = vpop.f32.mrb[0].mxu0
    %v3127 = vadd.f32 0.0, %v3126
    %v3128 = vpop.f32.mrb[0].mxu0
    %v3129 = vadd.f32 0.0, %v3128
    %3130 = vmatprep.mubr.bf16.mxu0 %v2510
    %3131 = vmatmul.mubr.bf16.gmra.mrb[0].mxu0 %v2137
    %v3132 = vpop.f32.mrb[0].mxu0
    %v3133 = vadd.f32 0.0, %v3132
    %v3134 = vpop.f32.mrb[0].mxu0
    %v3135 = vadd.f32 0.0, %v3134
    %v3136 = vpop.f32.mrb[0].mxu0
    %v3137 = vadd.f32 0.0, %v3136
    %v3138 = vpop.f32.mrb[0].mxu0
    %v3139 = vadd.f32 0.0, %v3138
    %3140 = vmatprep.mubr.bf16.mxu0 %v2513
    %3141 = vmatmul.mubr.bf16.gmra.mrb[0].mxu0 %v2139
    %v3142 = vpop.f32.mrb[0].mxu0
    %v3143 = vadd.f32 0.0, %v3142
    %v3144 = vpop.f32.mrb[0].mxu0
    %v3145 = vadd.f32 0.0, %v3144
    %v3146 = vpop.f32.mrb[0].mxu0
    %v3147 = vadd.f32 0.0, %v3146
    %v3148 = vpop.f32.mrb[0].mxu0
    %v3149 = vadd.f32 0.0, %v3148
    %3150 = vmatprep.mubr.bf16.mxu0 %v2516
    %3151 = vmatmul.mubr.bf16.gmra.mrb[0].mxu0 %v2141
    %v3152 = vpop.f32.mrb[0].mxu0
    %v3153 = vadd.f32 0.0, %v3152
    %v3154 = vpop.f32.mrb[0].mxu0
    %v3155 = vadd.f32 0.0, %v3154
    %v3156 = vpop.f32.mrb[0].mxu0
    %v3157 = vadd.f32 0.0, %v3156
    %v3158 = vpop.f32.mrb[0].mxu0
    %v3159 = vadd.f32 0.0, %v3158
    %3160 = vmatprep.mubr.bf16.mxu0 %v2519
    %3161 = vmatmul.mubr.bf16.gmra.mrb[0].mxu0 %v2143
    %v3162 = vpop.f32.mrb[0].mxu0
    %v3163 = vadd.f32 0.0, %v3162
    %v3164 = vpop.f32.mrb[0].mxu0
    %v3165 = vadd.f32 0.0, %v3164
    %v3166 = vpop.f32.mrb[0].mxu0
    %v3167 = vadd.f32 0.0, %v3166
    %v3168 = vpop.f32.mrb[0].mxu0
    %v3169 = vadd.f32 0.0, %v3168
    %3170 = vmatprep.mubr.bf16.mxu0 %v2522
    %3171 = vmatmul.mubr.bf16.gmra.mrb[0].mxu0 %v2145
    %v3172 = vpop.f32.mrb[0].mxu0
    %v3173 = vadd.f32 0.0, %v3172
    %v3174 = vpop.f32.mrb[0].mxu0
    %v3175 = vadd.f32 0.0, %v3174
    %v3176 = vpop.f32.mrb[0].mxu0
    %v3177 = vadd.f32 0.0, %v3176
    %v3178 = vpop.f32.mrb[0].mxu0
    %v3179 = vadd.f32 0.0, %v3178
    %3180 = vmatprep.mubr.bf16.mxu0 %v2525
    %3181 = vmatmul.mubr.bf16.gmra.mrb[0].mxu0 %v2147
    %v3182 = vpop.f32.mrb[0].mxu0
    %v3183 = vadd.f32 0.0, %v3182
    %v3184 = vpop.f32.mrb[0].mxu0
    %v3185 = vadd.f32 0.0, %v3184
    %v3186 = vpop.f32.mrb[0].mxu0
    %v3187 = vadd.f32 0.0, %v3186
    %v3188 = vpop.f32.mrb[0].mxu0
    %v3189 = vadd.f32 0.0, %v3188
    %3190 = vmatprep.mubr.bf16.mxu0 %v2528
    %3191 = vmatmul.mubr.bf16.gmra.mrb[0].mxu0 %v2149
    %v3192 = vpop.f32.mrb[0].mxu0
    %v3193 = vadd.f32 0.0, %v3192
    %v3194 = vpop.f32.mrb[0].mxu0
    %v3195 = vadd.f32 0.0, %v3194
    %v3196 = vpop.f32.mrb[0].mxu0
    %v3197 = vadd.f32 0.0, %v3196
    %v3198 = vpop.f32.mrb[0].mxu0
    %v3199 = vadd.f32 0.0, %v3198
    %3200 = vmatprep.mubr.bf16.mxu0 %v2531
    %3201 = vmatmul.mubr.bf16.gmra.mrb[0].mxu0 %v2151
    %v3202 = vpop.f32.mrb[0].mxu0
    %v3203 = vadd.f32 0.0, %v3202
    %v3204 = vpop.f32.mrb[0].mxu0
    %v3205 = vadd.f32 0.0, %v3204
    %v3206 = vpop.f32.mrb[0].mxu0
    %v3207 = vadd.f32 0.0, %v3206
    %v3208 = vpop.f32.mrb[0].mxu0
    %v3209 = vadd.f32 0.0, %v3208
    %3210 = vmatprep.mubr.bf16.mxu0 %v2534
    %3211 = vmatmul.mubr.bf16.gmra.mrb[0].mxu0 %v2153
    %v3212 = vpop.f32.mrb[0].mxu0
    %v3213 = vadd.f32 0.0, %v3212
    %v3214 = vpop.f32.mrb[0].mxu0
    %v3215 = vadd.f32 0.0, %v3214
    %v3216 = vpop.f32.mrb[0].mxu0
    %v3217 = vadd.f32 0.0, %v3216
    %v3218 = vpop.f32.mrb[0].mxu0
    %v3219 = vadd.f32 0.0, %v3218
    %3220 = vmatprep.mubr.bf16.mxu0 %v2537
    %3221 = vmatmul.mubr.bf16.gmra.mrb[0].mxu0 %v2155
    %v3222 = vpop.f32.mrb[0].mxu0
    %v3223 = vadd.f32 0.0, %v3222
    %v3224 = vpop.f32.mrb[0].mxu0
    %v3225 = vadd.f32 0.0, %v3224
    %v3226 = vpop.f32.mrb[0].mxu0
    %v3227 = vadd.f32 0.0, %v3226
    %v3228 = vpop.f32.mrb[0].mxu0
    %v3229 = vadd.f32 0.0, %v3228
    %3230 = vmatprep.mubr.bf16.mxu0 %v2540
    %3231 = vmatmul.mubr.bf16.gmra.mrb[0].mxu0 %v2157
    %v3232 = vpop.f32.mrb[0].mxu0
    %v3233 = vadd.f32 0.0, %v3232
    %v3234 = vpop.f32.mrb[0].mxu0
    %v3235 = vadd.f32 0.0, %v3234
    %v3236 = vpop.f32.mrb[0].mxu0
    %v3237 = vadd.f32 0.0, %v3236
    %v3238 = vpop.f32.mrb[0].mxu0
    %v3239 = vadd.f32 0.0, %v3238
    %3240 = vmatprep.mubr.bf16.mxu0 %v2543
    %3241 = vmatmul.mubr.bf16.gmra.mrb[0].mxu0 %v2159
    %v3242 = vpop.f32.mrb[0].mxu0
    %v3243 = vadd.f32 0.0, %v3242
    %v3244 = vpop.f32.mrb[0].mxu0
    %v3245 = vadd.f32 0.0, %v3244
    %v3246 = vpop.f32.mrb[0].mxu0
    %v3247 = vadd.f32 0.0, %v3246
    %v3248 = vpop.f32.mrb[0].mxu0
    %v3249 = vadd.f32 0.0, %v3248
    %3250 = vdwg.mxu0
    %v3251 = vmax.f32 %v2580, %v2582
    %v3252 = vmax.f32 %v2584, %v2586
    %v3253 = vmax.f32 %v2590, %v2592
    %v3254 = vmax.f32 %v2594, %v2596
    %v3255 = vmax.f32 %v2600, %v2602
    %v3256 = vmax.f32 %v2604, %v2606
    %v3257 = vmax.f32 %v2610, %v2612
    %v3258 = vmax.f32 %v2614, %v2616
    %v3259 = vmax.f32 %v2620, %v2622
    %v3260 = vmax.f32 %v2624, %v2626
    %v3261 = vmax.f32 %v2630, %v2632
    %v3262 = vmax.f32 %v2634, %v2636
    %v3263 = vmax.f32 %v2640, %v2642
    %v3264 = vmax.f32 %v2644, %v2646
    %v3265 = vmax.f32 %v2650, %v2652
    %v3266 = vmax.f32 %v2654, %v2656
    %v3267 = vmax.f32 %v2660, %v2662
    %v3268 = vmax.f32 %v2664, %v2666
    %v3269 = vmax.f32 %v2670, %v2672
    %v3270 = vmax.f32 %v2674, %v2676
    %v3271 = vmax.f32 %v2680, %v2682
    %v3272 = vmax.f32 %v2684, %v2686
    %v3273 = vmax.f32 %v2690, %v2692
    %v3274 = vmax.f32 %v2694, %v2696
    %v3275 = vmax.f32 %v2700, %v2702
    %v3276 = vmax.f32 %v2704, %v2706
    %v3277 = vmax.f32 %v2710, %v2712
    %v3278 = vmax.f32 %v2714, %v2716
    %v3279 = vmax.f32 %v2720, %v2722
    %v3280 = vmax.f32 %v2724, %v2726
    %v3281 = vmax.f32 %v2730, %v2732
    %v3282 = vmax.f32 %v2734, %v2736
    %v3283 = vmax.f32 %v2740, %v2742
    %v3284 = vmax.f32 %v2744, %v2746
    %v3285 = vmax.f32 %v2750, %v2752
    %v3286 = vmax.f32 %v2754, %v2756
    %v3287 = vmax.f32 %v2760, %v2762
    %v3288 = vmax.f32 %v2764, %v2766
    %v3289 = vmax.f32 %v2770, %v2772
    %v3290 = vmax.f32 %v2774, %v2776
    %v3291 = vmax.f32 %v2780, %v2782
    %v3292 = vmax.f32 %v2784, %v2786
    %v3293 = vmax.f32 %v2790, %v2792
    %v3294 = vmax.f32 %v2794, %v2796
    %v3295 = vmax.f32 %v2800, %v2802
    %v3296 = vmax.f32 %v2804, %v2806
    %v3297 = vmax.f32 %v2810, %v2812
    %v3298 = vmax.f32 %v2814, %v2816
    %v3299 = vmax.f32 %v2820, %v2822
    %v3300 = vmax.f32 %v2824, %v2826
    %v3301 = vmax.f32 %v2830, %v2832
    %v3302 = vmax.f32 %v2834, %v2836
    %v3303 = vmax.f32 %v2840, %v2842
    %v3304 = vmax.f32 %v2844, %v2846
    %v3305 = vmax.f32 %v2850, %v2852
    %v3306 = vmax.f32 %v2854, %v2856
    %v3307 = vmax.f32 %v2860, %v2862
    %v3308 = vmax.f32 %v2864, %v2866
    %v3309 = vmax.f32 %v2870, %v2872
    %v3310 = vmax.f32 %v2874, %v2876
    %v3311 = vmax.f32 %v2880, %v2882
    %v3312 = vmax.f32 %v2884, %v2886
    %v3313 = vmax.f32 %v2890, %v2892
    %v3314 = vmax.f32 %v2894, %v2896
    %v3315 = vmax.f32 %v2933, %v2935
    %v3316 = vmax.f32 %v2937, %v2939
    %v3317 = vmax.f32 %v2943, %v2945
    %v3318 = vmax.f32 %v2947, %v2949
    %v3319 = vmax.f32 %v2953, %v2955
    %v3320 = vmax.f32 %v2957, %v2959
    %v3321 = vmax.f32 %v2963, %v2965
    %v3322 = vmax.f32 %v2967, %v2969
    %v3323 = vmax.f32 %v2973, %v2975
    %v3324 = vmax.f32 %v2977, %v2979
    %v3325 = vmax.f32 %v2983, %v2985
    %v3326 = vmax.f32 %v2987, %v2989
    %v3327 = vmax.f32 %v2993, %v2995
    %v3328 = vmax.f32 %v2997, %v2999
    %v3329 = vmax.f32 %v3003, %v3005
    %v3330 = vmax.f32 %v3007, %v3009
    %v3331 = vmax.f32 %v3013, %v3015
    %v3332 = vmax.f32 %v3017, %v3019
    %v3333 = vmax.f32 %v3023, %v3025
    %v3334 = vmax.f32 %v3027, %v3029
    %v3335 = vmax.f32 %v3033, %v3035
    %v3336 = vmax.f32 %v3037, %v3039
    %v3337 = vmax.f32 %v3043, %v3045
    %v3338 = vmax.f32 %v3047, %v3049
    %v3339 = vmax.f32 %v3053, %v3055
    %v3340 = vmax.f32 %v3057, %v3059
    %v3341 = vmax.f32 %v3063, %v3065
    %v3342 = vmax.f32 %v3067, %v3069
    %v3343 = vmax.f32 %v3073, %v3075
    %v3344 = vmax.f32 %v3077, %v3079
    %v3345 = vmax.f32 %v3083, %v3085
    %v3346 = vmax.f32 %v3087, %v3089
    %v3347 = vmax.f32 %v3093, %v3095
    %v3348 = vmax.f32 %v3097, %v3099
    %v3349 = vmax.f32 %v3103, %v3105
    %v3350 = vmax.f32 %v3107, %v3109
    %v3351 = vmax.f32 %v3113, %v3115
    %v3352 = vmax.f32 %v3117, %v3119
    %v3353 = vmax.f32 %v3123, %v3125
    %v3354 = vmax.f32 %v3127, %v3129
    %v3355 = vmax.f32 %v3133, %v3135
    %v3356 = vmax.f32 %v3137, %v3139
    %v3357 = vmax.f32 %v3143, %v3145
    %v3358 = vmax.f32 %v3147, %v3149
    %v3359 = vmax.f32 %v3153, %v3155
    %v3360 = vmax.f32 %v3157, %v3159
    %v3361 = vmax.f32 %v3163, %v3165
    %v3362 = vmax.f32 %v3167, %v3169
    %v3363 = vmax.f32 %v3173, %v3175
    %v3364 = vmax.f32 %v3177, %v3179
    %v3365 = vmax.f32 %v3183, %v3185
    %v3366 = vmax.f32 %v3187, %v3189
    %v3367 = vmax.f32 %v3193, %v3195
    %v3368 = vmax.f32 %v3197, %v3199
    %v3369 = vmax.f32 %v3203, %v3205
    %v3370 = vmax.f32 %v3207, %v3209
    %v3371 = vmax.f32 %v3213, %v3215
    %v3372 = vmax.f32 %v3217, %v3219
    %v3373 = vmax.f32 %v3223, %v3225
    %v3374 = vmax.f32 %v3227, %v3229
    %v3375 = vmax.f32 %v3233, %v3235
    %v3376 = vmax.f32 %v3237, %v3239
    %v3377 = vmax.f32 %v3243, %v3245
    %v3378 = vmax.f32 %v3247, %v3249
    %v3379 = vmax.f32 %v3251, %v3315
    %v3380 = vmax.f32 %v3252, %v3316
    %v3381 = vmax.f32 %v3253, %v3317
    %v3382 = vmax.f32 %v3254, %v3318
    %v3383 = vmax.f32 %v3255, %v3319
    %v3384 = vmax.f32 %v3256, %v3320
    %v3385 = vmax.f32 %v3257, %v3321
    %v3386 = vmax.f32 %v3258, %v3322
    %v3387 = vmax.f32 %v3259, %v3323
    %v3388 = vmax.f32 %v3260, %v3324
    %v3389 = vmax.f32 %v3261, %v3325
    %v3390 = vmax.f32 %v3262, %v3326
    %v3391 = vmax.f32 %v3263, %v3327
    %v3392 = vmax.f32 %v3264, %v3328
    %v3393 = vmax.f32 %v3265, %v3329
    %v3394 = vmax.f32 %v3266, %v3330
    %v3395 = vmax.f32 %v3267, %v3331
    %v3396 = vmax.f32 %v3268, %v3332
    %v3397 = vmax.f32 %v3269, %v3333
    %v3398 = vmax.f32 %v3270, %v3334
    %v3399 = vmax.f32 %v3271, %v3335
    %v3400 = vmax.f32 %v3272, %v3336
    %v3401 = vmax.f32 %v3273, %v3337
    %v3402 = vmax.f32 %v3274, %v3338
    %v3403 = vmax.f32 %v3275, %v3339
    %v3404 = vmax.f32 %v3276, %v3340
    %v3405 = vmax.f32 %v3277, %v3341
    %v3406 = vmax.f32 %v3278, %v3342
    %v3407 = vmax.f32 %v3279, %v3343
    %v3408 = vmax.f32 %v3280, %v3344
    %v3409 = vmax.f32 %v3281, %v3345
    %v3410 = vmax.f32 %v3282, %v3346
    %v3411 = vmax.f32 %v3283, %v3347
    %v3412 = vmax.f32 %v3284, %v3348
    %v3413 = vmax.f32 %v3285, %v3349
    %v3414 = vmax.f32 %v3286, %v3350
    %v3415 = vmax.f32 %v3287, %v3351
    %v3416 = vmax.f32 %v3288, %v3352
    %v3417 = vmax.f32 %v3289, %v3353
    %v3418 = vmax.f32 %v3290, %v3354
    %v3419 = vmax.f32 %v3291, %v3355
    %v3420 = vmax.f32 %v3292, %v3356
    %v3421 = vmax.f32 %v3293, %v3357
    %v3422 = vmax.f32 %v3294, %v3358
    %v3423 = vmax.f32 %v3295, %v3359
    %v3424 = vmax.f32 %v3296, %v3360
    %v3425 = vmax.f32 %v3297, %v3361
    %v3426 = vmax.f32 %v3298, %v3362
    %v3427 = vmax.f32 %v3299, %v3363
    %v3428 = vmax.f32 %v3300, %v3364
    %v3429 = vmax.f32 %v3301, %v3365
    %v3430 = vmax.f32 %v3302, %v3366
    %v3431 = vmax.f32 %v3303, %v3367
    %v3432 = vmax.f32 %v3304, %v3368
    %v3433 = vmax.f32 %v3305, %v3369
    %v3434 = vmax.f32 %v3306, %v3370
    %v3435 = vmax.f32 %v3307, %v3371
    %v3436 = vmax.f32 %v3308, %v3372
    %v3437 = vmax.f32 %v3309, %v3373
    %v3438 = vmax.f32 %v3310, %v3374
    %v3439 = vmax.f32 %v3311, %v3375
    %v3440 = vmax.f32 %v3312, %v3376
    %v3441 = vmax.f32 %v3313, %v3377
    %v3442 = vmax.f32 %v3314, %v3378
    %v3443 = vld [vmem:[%s2] sm:$0x1]
    %v3445 = vlaneseq
    %v3446 = vshrl.u32 %v3445, 7
    %v3447 = vsub.s32 0, %v3446
    %v3448 = vrot.slane %v3443, %v3447
    %v3450 = vadd.f32 %v3379, %v3448
    %v3451 = vadd.f32 %v3380, %v3448
    %v3452 = vadd.f32 %v3381, %v3448
    %v3453 = vadd.f32 %v3382, %v3448
    %v3454 = vadd.f32 %v3383, %v3448
    %v3455 = vadd.f32 %v3384, %v3448
    %v3456 = vadd.f32 %v3385, %v3448
    %v3457 = vadd.f32 %v3386, %v3448
    %v3458 = vadd.f32 %v3387, %v3448
    %v3459 = vadd.f32 %v3388, %v3448
    %v3460 = vadd.f32 %v3389, %v3448
    %v3461 = vadd.f32 %v3390, %v3448
    %v3462 = vadd.f32 %v3391, %v3448
    %v3463 = vadd.f32 %v3392, %v3448
    %v3464 = vadd.f32 %v3393, %v3448
    %v3465 = vadd.f32 %v3394, %v3448
    %v3466 = vadd.f32 %v3395, %v3448
    %v3467 = vadd.f32 %v3396, %v3448
    %v3468 = vadd.f32 %v3397, %v3448
    %v3469 = vadd.f32 %v3398, %v3448
    %v3470 = vadd.f32 %v3399, %v3448
    %v3471 = vadd.f32 %v3400, %v3448
    %v3472 = vadd.f32 %v3401, %v3448
    %v3473 = vadd.f32 %v3402, %v3448
    %v3474 = vadd.f32 %v3403, %v3448
    %v3475 = vadd.f32 %v3404, %v3448
    %v3476 = vadd.f32 %v3405, %v3448
    %v3477 = vadd.f32 %v3406, %v3448
    %v3478 = vadd.f32 %v3407, %v3448
    %v3479 = vadd.f32 %v3408, %v3448
    %v3480 = vadd.f32 %v3409, %v3448
    %v3481 = vadd.f32 %v3410, %v3448
    %v3482 = vadd.f32 %v3411, %v3448
    %v3483 = vadd.f32 %v3412, %v3448
    %v3484 = vadd.f32 %v3413, %v3448
    %v3485 = vadd.f32 %v3414, %v3448
    %v3486 = vadd.f32 %v3415, %v3448
    %v3487 = vadd.f32 %v3416, %v3448
    %v3488 = vadd.f32 %v3417, %v3448
    %v3489 = vadd.f32 %v3418, %v3448
    %v3490 = vadd.f32 %v3419, %v3448
    %v3491 = vadd.f32 %v3420, %v3448
    %v3492 = vadd.f32 %v3421, %v3448
    %v3493 = vadd.f32 %v3422, %v3448
    %v3494 = vadd.f32 %v3423, %v3448
    %v3495 = vadd.f32 %v3424, %v3448
    %v3496 = vadd.f32 %v3425, %v3448
    %v3497 = vadd.f32 %v3426, %v3448
    %v3498 = vadd.f32 %v3427, %v3448
    %v3499 = vadd.f32 %v3428, %v3448
    %v3500 = vadd.f32 %v3429, %v3448
    %v3501 = vadd.f32 %v3430, %v3448
    %v3502 = vadd.f32 %v3431, %v3448
    %v3503 = vadd.f32 %v3432, %v3448
    %v3504 = vadd.f32 %v3433, %v3448
    %v3505 = vadd.f32 %v3434, %v3448
    %v3506 = vadd.f32 %v3435, %v3448
    %v3507 = vadd.f32 %v3436, %v3448
    %v3508 = vadd.f32 %v3437, %v3448
    %v3509 = vadd.f32 %v3438, %v3448
    %v3510 = vadd.f32 %v3439, %v3448
    %v3511 = vadd.f32 %v3440, %v3448
    %v3512 = vadd.f32 %v3441, %v3448
    %v3513 = vadd.f32 %v3442, %v3448
    %v3514 = vmax.f32 %v3450, 0.0
    %v3515 = vmax.f32 %v3451, 0.0
    %v3516 = vmax.f32 %v3452, 0.0
    %v3517 = vmax.f32 %v3453, 0.0
    %v3518 = vmax.f32 %v3454, 0.0
    %v3519 = vmax.f32 %v3455, 0.0
    %v3520 = vmax.f32 %v3456, 0.0
    %v3521 = vmax.f32 %v3457, 0.0
    %v3522 = vmax.f32 %v3458, 0.0
    %v3523 = vmax.f32 %v3459, 0.0
    %v3524 = vmax.f32 %v3460, 0.0
    %v3525 = vmax.f32 %v3461, 0.0
    %v3526 = vmax.f32 %v3462, 0.0
    %v3527 = vmax.f32 %v3463, 0.0
    %v3528 = vmax.f32 %v3464, 0.0
    %v3529 = vmax.f32 %v3465, 0.0
    %v3530 = vmax.f32 %v3466, 0.0
    %v3531 = vmax.f32 %v3467, 0.0
    %v3532 = vmax.f32 %v3468, 0.0
    %v3533 = vmax.f32 %v3469, 0.0
    %v3534 = vmax.f32 %v3470, 0.0
    %v3535 = vmax.f32 %v3471, 0.0
    %v3536 = vmax.f32 %v3472, 0.0
    %v3537 = vmax.f32 %v3473, 0.0
    %v3538 = vmax.f32 %v3474, 0.0
    %v3539 = vmax.f32 %v3475, 0.0
    %v3540 = vmax.f32 %v3476, 0.0
    %v3541 = vmax.f32 %v3477, 0.0
    %v3542 = vmax.f32 %v3478, 0.0
    %v3543 = vmax.f32 %v3479, 0.0
    %v3544 = vmax.f32 %v3480, 0.0
    %v3545 = vmax.f32 %v3481, 0.0
    %v3546 = vmax.f32 %v3482, 0.0
    %v3547 = vmax.f32 %v3483, 0.0
    %v3548 = vmax.f32 %v3484, 0.0
    %v3549 = vmax.f32 %v3485, 0.0
    %v3550 = vmax.f32 %v3486, 0.0
    %v3551 = vmax.f32 %v3487, 0.0
    %v3552 = vmax.f32 %v3488, 0.0
    %v3553 = vmax.f32 %v3489, 0.0
    %v3554 = vmax.f32 %v3490, 0.0
    %v3555 = vmax.f32 %v3491, 0.0
    %v3556 = vmax.f32 %v3492, 0.0
    %v3557 = vmax.f32 %v3493, 0.0
    %v3558 = vmax.f32 %v3494, 0.0
    %v3559 = vmax.f32 %v3495, 0.0
    %v3560 = vmax.f32 %v3496, 0.0
    %v3561 = vmax.f32 %v3497, 0.0
    %v3562 = vmax.f32 %v3498, 0.0
    %v3563 = vmax.f32 %v3499, 0.0
    %v3564 = vmax.f32 %v3500, 0.0
    %v3565 = vmax.f32 %v3501, 0.0
    %v3566 = vmax.f32 %v3502, 0.0
    %v3567 = vmax.f32 %v3503, 0.0
    %v3568 = vmax.f32 %v3504, 0.0
    %v3569 = vmax.f32 %v3505, 0.0
    %v3570 = vmax.f32 %v3506, 0.0
    %v3571 = vmax.f32 %v3507, 0.0
    %v3572 = vmax.f32 %v3508, 0.0
    %v3573 = vmax.f32 %v3509, 0.0
    %v3574 = vmax.f32 %v3510, 0.0
    %v3575 = vmax.f32 %v3511, 0.0
    %v3576 = vmax.f32 %v3512, 0.0
    %v3577 = vmax.f32 %v3513, 0.0
    %3578 = vst [vmem:[#allocation2] sm:$0xff] %v3514
    %3579 = vst [vmem:[#allocation2 + $0x8] sm:$0xff] %v3515
    %3580 = vst [vmem:[#allocation2 + $0x10] sm:$0xff] %v3516
    %3581 = vst [vmem:[#allocation2 + $0x18] sm:$0xff] %v3517
    %3582 = vst [vmem:[#allocation2 + $0x20] sm:$0xff] %v3518
    %3583 = vst [vmem:[#allocation2 + $0x28] sm:$0xff] %v3519
    %3584 = vst [vmem:[#allocation2 + $0x30] sm:$0xff] %v3520
    %3585 = vst [vmem:[#allocation2 + $0x38] sm:$0xff] %v3521
    %3586 = vst [vmem:[#allocation2 + $0x40] sm:$0xff] %v3522
    %3587 = vst [vmem:[#allocation2 + $0x48] sm:$0xff] %v3523
    %3588 = vst [vmem:[#allocation2 + $0x50] sm:$0xff] %v3524
    %3589 = vst [vmem:[#allocation2 + $0x58] sm:$0xff] %v3525
    %3590 = vst [vmem:[#allocation2 + $0x60] sm:$0xff] %v3526
    %3591 = vst [vmem:[#allocation2 + $0x68] sm:$0xff] %v3527
    %3592 = vst [vmem:[#allocation2 + $0x70] sm:$0xff] %v3528
    %3593 = vst [vmem:[#allocation2 + $0x78] sm:$0xff] %v3529
    %3594 = vst [vmem:[#allocation2 + $0x80] sm:$0xff] %v3530
    %3595 = vst [vmem:[#allocation2 + $0x88] sm:$0xff] %v3531
    %3596 = vst [vmem:[#allocation2 + $0x90] sm:$0xff] %v3532
    %3597 = vst [vmem:[#allocation2 + $0x98] sm:$0xff] %v3533
    %3598 = vst [vmem:[#allocation2 + $0xa0] sm:$0xff] %v3534
    %3599 = vst [vmem:[#allocation2 + $0xa8] sm:$0xff] %v3535
    %3600 = vst [vmem:[#allocation2 + $0xb0] sm:$0xff] %v3536
    %3601 = vst [vmem:[#allocation2 + $0xb8] sm:$0xff] %v3537
    %3602 = vst [vmem:[#allocation2 + $0xc0] sm:$0xff] %v3538
    %3603 = vst [vmem:[#allocation2 + $0xc8] sm:$0xff] %v3539
    %3604 = vst [vmem:[#allocation2 + $0xd0] sm:$0xff] %v3540
    %3605 = vst [vmem:[#allocation2 + $0xd8] sm:$0xff] %v3541
    %3606 = vst [vmem:[#allocation2 + $0xe0] sm:$0xff] %v3542
    %3607 = vst [vmem:[#allocation2 + $0xe8] sm:$0xff] %v3543
    %3608 = vst [vmem:[#allocation2 + $0xf0] sm:$0xff] %v3544
    %3609 = vst [vmem:[#allocation2 + $0xf8] sm:$0xff] %v3545
    %3610 = vst [vmem:[#allocation2 + $0x100] sm:$0xff] %v3546
    %3611 = vst [vmem:[#allocation2 + $0x108] sm:$0xff] %v3547
    %3612 = vst [vmem:[#allocation2 + $0x110] sm:$0xff] %v3548
    %3613 = vst [vmem:[#allocation2 + $0x118] sm:$0xff] %v3549
    %3614 = vst [vmem:[#allocation2 + $0x120] sm:$0xff] %v3550
    %3615 = vst [vmem:[#allocation2 + $0x128] sm:$0xff] %v3551
    %3616 = vst [vmem:[#allocation2 + $0x130] sm:$0xff] %v3552
    %3617 = vst [vmem:[#allocation2 + $0x138] sm:$0xff] %v3553
    %3618 = vst [vmem:[#allocation2 + $0x140] sm:$0xff] %v3554
    %3619 = vst [vmem:[#allocation2 + $0x148] sm:$0xff] %v3555
    %3620 = vst [vmem:[#allocation2 + $0x150] sm:$0xff] %v3556
    %3621 = vst [vmem:[#allocation2 + $0x158] sm:$0xff] %v3557
    %3622 = vst [vmem:[#allocation2 + $0x160] sm:$0xff] %v3558
    %3623 = vst [vmem:[#allocation2 + $0x168] sm:$0xff] %v3559
    %3624 = vst [vmem:[#allocation2 + $0x170] sm:$0xff] %v3560
    %3625 = vst [vmem:[#allocation2 + $0x178] sm:$0xff] %v3561
    %3626 = vst [vmem:[#allocation2 + $0x180] sm:$0xff] %v3562
    %3627 = vst [vmem:[#allocation2 + $0x188] sm:$0xff] %v3563
    %3628 = vst [vmem:[#allocation2 + $0x190] sm:$0xff] %v3564
    %3629 = vst [vmem:[#allocation2 + $0x198] sm:$0xff] %v3565
    %3630 = vst [vmem:[#allocation2 + $0x1a0] sm:$0xff] %v3566
    %3631 = vst [vmem:[#allocation2 + $0x1a8] sm:$0xff] %v3567
    %3632 = vst [vmem:[#allocation2 + $0x1b0] sm:$0xff] %v3568
    %3633 = vst [vmem:[#allocation2 + $0x1b8] sm:$0xff] %v3569
    %3634 = vst [vmem:[#allocation2 + $0x1c0] sm:$0xff] %v3570
    %3635 = vst [vmem:[#allocation2 + $0x1c8] sm:$0xff] %v3571
    %3636 = vst [vmem:[#allocation2 + $0x1d0] sm:$0xff] %v3572
    %3637 = vst [vmem:[#allocation2 + $0x1d8] sm:$0xff] %v3573
    %3638 = vst [vmem:[#allocation2 + $0x1e0] sm:$0xff] %v3574
    %3639 = vst [vmem:[#allocation2 + $0x1e8] sm:$0xff] %v3575
    %3640 = vst [vmem:[#allocation2 + $0x1f0] sm:$0xff] %v3576
    %3641 = vst [vmem:[#allocation2 + $0x1f8] sm:$0xf] %v3577
    %3642 = vst [vmem:[#allocation2 + $0x1fc] sm:$0xff] 0.0
    %3643 = vst [vmem:[#allocation2 + $0x204] sm:$0xf] 0.0
    %v3644 = vld [vmem:[#allocation2] ss:$2 sm:$0xff]
    %s3645 = scalar_lea.vmem [#allocation2], 16
    %v3646 = vld [vmem:[%s3645] ss:$2 sm:$0xff]
    %s3647 = scalar_lea.vmem [#allocation2], 32
    %v3648 = vld [vmem:[%s3647] ss:$2 sm:$0xff]
    %s3649 = scalar_lea.vmem [#allocation2], 48
    %v3650 = vld [vmem:[%s3649] ss:$2 sm:$0xff]
    %s3651 = scalar_lea.vmem [#allocation2], 64
    %v3652 = vld [vmem:[%s3651] ss:$2 sm:$0xff]
    %s3653 = scalar_lea.vmem [#allocation2], 80
    %v3654 = vld [vmem:[%s3653] ss:$2 sm:$0xff]
    %s3655 = scalar_lea.vmem [#allocation2], 96
    %v3656 = vld [vmem:[%s3655] ss:$2 sm:$0xff]
    %s3657 = scalar_lea.vmem [#allocation2], 112
    %v3658 = vld [vmem:[%s3657] ss:$2 sm:$0xff]
    %s3659 = scalar_lea.vmem [#allocation2], 128
    %v3660 = vld [vmem:[%s3659] ss:$2 sm:$0xff]
    %s3661 = scalar_lea.vmem [#allocation2], 144
    %v3662 = vld [vmem:[%s3661] ss:$2 sm:$0xff]
    %s3663 = scalar_lea.vmem [#allocation2], 160
    %v3664 = vld [vmem:[%s3663] ss:$2 sm:$0xff]
    %s3665 = scalar_lea.vmem [#allocation2], 176
    %v3666 = vld [vmem:[%s3665] ss:$2 sm:$0xff]
    %s3667 = scalar_lea.vmem [#allocation2], 192
    %v3668 = vld [vmem:[%s3667] ss:$2 sm:$0xff]
    %s3669 = scalar_lea.vmem [#allocation2], 208
    %v3670 = vld [vmem:[%s3669] ss:$2 sm:$0xff]
    %s3671 = scalar_lea.vmem [#allocation2], 224
    %v3672 = vld [vmem:[%s3671] ss:$2 sm:$0xff]
    %s3673 = scalar_lea.vmem [#allocation2], 240
    %v3674 = vld [vmem:[%s3673] ss:$2 sm:$0xff]
    %s3675 = scalar_lea.vmem [#allocation2], 256
    %v3676 = vld [vmem:[%s3675] ss:$2 sm:$0xff]
    %s3677 = scalar_lea.vmem [#allocation2], 272
    %v3678 = vld [vmem:[%s3677] ss:$2 sm:$0xff]
    %s3679 = scalar_lea.vmem [#allocation2], 288
    %v3680 = vld [vmem:[%s3679] ss:$2 sm:$0xff]
    %s3681 = scalar_lea.vmem [#allocation2], 304
    %v3682 = vld [vmem:[%s3681] ss:$2 sm:$0xff]
    %s3683 = scalar_lea.vmem [#allocation2], 320
    %v3684 = vld [vmem:[%s3683] ss:$2 sm:$0xff]
    %s3685 = scalar_lea.vmem [#allocation2], 336
    %v3686 = vld [vmem:[%s3685] ss:$2 sm:$0xff]
    %s3687 = scalar_lea.vmem [#allocation2], 352
    %v3688 = vld [vmem:[%s3687] ss:$2 sm:$0xff]
    %s3689 = scalar_lea.vmem [#allocation2], 368
    %v3690 = vld [vmem:[%s3689] ss:$2 sm:$0xff]
    %s3691 = scalar_lea.vmem [#allocation2], 384
    %v3692 = vld [vmem:[%s3691] ss:$2 sm:$0xff]
    %s3693 = scalar_lea.vmem [#allocation2], 400
    %v3694 = vld [vmem:[%s3693] ss:$2 sm:$0xff]
    %s3695 = scalar_lea.vmem [#allocation2], 416
    %v3696 = vld [vmem:[%s3695] ss:$2 sm:$0xff]
    %s3697 = scalar_lea.vmem [#allocation2], 432
    %v3698 = vld [vmem:[%s3697] ss:$2 sm:$0xff]
    %s3699 = scalar_lea.vmem [#allocation2], 448
    %v3700 = vld [vmem:[%s3699] ss:$2 sm:$0xff]
    %s3701 = scalar_lea.vmem [#allocation2], 464
    %v3702 = vld [vmem:[%s3701] ss:$2 sm:$0xff]
    %s3703 = scalar_lea.vmem [#allocation2], 480
    %v3704 = vld [vmem:[%s3703] ss:$2 sm:$0xff]
    %s3705 = scalar_lea.vmem [#allocation2], 496
    %v3706 = vld [vmem:[%s3705] ss:$2 sm:$0xff]
    %s3707 = scalar_lea.vmem [#allocation2], 1
    %v3708 = vld [vmem:[%s3707] ss:$2 sm:$0xff]
    %s3709 = scalar_lea.vmem [#allocation2], 17
    %v3710 = vld [vmem:[%s3709] ss:$2 sm:$0xff]
    %s3711 = scalar_lea.vmem [#allocation2], 33
    %v3712 = vld [vmem:[%s3711] ss:$2 sm:$0xff]
    %s3713 = scalar_lea.vmem [#allocation2], 49
    %v3714 = vld [vmem:[%s3713] ss:$2 sm:$0xff]
    %s3715 = scalar_lea.vmem [#allocation2], 65
    %v3716 = vld [vmem:[%s3715] ss:$2 sm:$0xff]
    %s3717 = scalar_lea.vmem [#allocation2], 81
    %v3718 = vld [vmem:[%s3717] ss:$2 sm:$0xff]
    %s3719 = scalar_lea.vmem [#allocation2], 97
    %v3720 = vld [vmem:[%s3719] ss:$2 sm:$0xff]
    %s3721 = scalar_lea.vmem [#allocation2], 113
    %v3722 = vld [vmem:[%s3721] ss:$2 sm:$0xff]
    %s3723 = scalar_lea.vmem [#allocation2], 129
    %v3724 = vld [vmem:[%s3723] ss:$2 sm:$0xff]
    %s3725 = scalar_lea.vmem [#allocation2], 145
    %v3726 = vld [vmem:[%s3725] ss:$2 sm:$0xff]
    %s3727 = scalar_lea.vmem [#allocation2], 161
    %v3728 = vld [vmem:[%s3727] ss:$2 sm:$0xff]
    %s3729 = scalar_lea.vmem [#allocation2], 177
    %v3730 = vld [vmem:[%s3729] ss:$2 sm:$0xff]
    %s3731 = scalar_lea.vmem [#allocation2], 193
    %v3732 = vld [vmem:[%s3731] ss:$2 sm:$0xff]
    %s3733 = scalar_lea.vmem [#allocation2], 209
    %v3734 = vld [vmem:[%s3733] ss:$2 sm:$0xff]
    %s3735 = scalar_lea.vmem [#allocation2], 225
    %v3736 = vld [vmem:[%s3735] ss:$2 sm:$0xff]
    %s3737 = scalar_lea.vmem [#allocation2], 241
    %v3738 = vld [vmem:[%s3737] ss:$2 sm:$0xff]
    %s3739 = scalar_lea.vmem [#allocation2], 257
    %v3740 = vld [vmem:[%s3739] ss:$2 sm:$0xff]
    %s3741 = scalar_lea.vmem [#allocation2], 273
    %v3742 = vld [vmem:[%s3741] ss:$2 sm:$0xff]
    %s3743 = scalar_lea.vmem [#allocation2], 289
    %v3744 = vld [vmem:[%s3743] ss:$2 sm:$0xff]
    %s3745 = scalar_lea.vmem [#allocation2], 305
    %v3746 = vld [vmem:[%s3745] ss:$2 sm:$0xff]
    %s3747 = scalar_lea.vmem [#allocation2], 321
    %v3748 = vld [vmem:[%s3747] ss:$2 sm:$0xff]
    %s3749 = scalar_lea.vmem [#allocation2], 337
    %v3750 = vld [vmem:[%s3749] ss:$2 sm:$0xff]
    %s3751 = scalar_lea.vmem [#allocation2], 353
    %v3752 = vld [vmem:[%s3751] ss:$2 sm:$0xff]
    %s3753 = scalar_lea.vmem [#allocation2], 369
    %v3754 = vld [vmem:[%s3753] ss:$2 sm:$0xff]
    %s3755 = scalar_lea.vmem [#allocation2], 385
    %v3756 = vld [vmem:[%s3755] ss:$2 sm:$0xff]
    %s3757 = scalar_lea.vmem [#allocation2], 401
    %v3758 = vld [vmem:[%s3757] ss:$2 sm:$0xff]
    %s3759 = scalar_lea.vmem [#allocation2], 417
    %v3760 = vld [vmem:[%s3759] ss:$2 sm:$0xff]
    %s3761 = scalar_lea.vmem [#allocation2], 433
    %v3762 = vld [vmem:[%s3761] ss:$2 sm:$0xff]
    %s3763 = scalar_lea.vmem [#allocation2], 449
    %v3764 = vld [vmem:[%s3763] ss:$2 sm:$0xff]
    %s3765 = scalar_lea.vmem [#allocation2], 465
    %v3766 = vld [vmem:[%s3765] ss:$2 sm:$0xff]
    %s3767 = scalar_lea.vmem [#allocation2], 481
    %v3768 = vld [vmem:[%s3767] ss:$2 sm:$0xff]
    %s3769 = scalar_lea.vmem [#allocation2], 497
    %v3770 = vld [vmem:[%s3769] ss:$2 sm:$0xff]
    %s3771 = scalar_lea.vmem [#allocation2], 2
    %v3772 = vld [vmem:[%s3771] ss:$2 sm:$0xff]
    %s3773 = scalar_lea.vmem [#allocation2], 18
    %v3774 = vld [vmem:[%s3773] ss:$2 sm:$0xff]
    %s3775 = scalar_lea.vmem [#allocation2], 34
    %v3776 = vld [vmem:[%s3775] ss:$2 sm:$0xff]
    %s3777 = scalar_lea.vmem [#allocation2], 50
    %v3778 = vld [vmem:[%s3777] ss:$2 sm:$0xff]
    %s3779 = scalar_lea.vmem [#allocation2], 66
    %v3780 = vld [vmem:[%s3779] ss:$2 sm:$0xff]
    %s3781 = scalar_lea.vmem [#allocation2], 82
    %v3782 = vld [vmem:[%s3781] ss:$2 sm:$0xff]
    %s3783 = scalar_lea.vmem [#allocation2], 98
    %v3784 = vld [vmem:[%s3783] ss:$2 sm:$0xff]
    %s3785 = scalar_lea.vmem [#allocation2], 114
    %v3786 = vld [vmem:[%s3785] ss:$2 sm:$0xff]
    %s3787 = scalar_lea.vmem [#allocation2], 130
    %v3788 = vld [vmem:[%s3787] ss:$2 sm:$0xff]
    %s3789 = scalar_lea.vmem [#allocation2], 146
    %v3790 = vld [vmem:[%s3789] ss:$2 sm:$0xff]
    %s3791 = scalar_lea.vmem [#allocation2], 162
    %v3792 = vld [vmem:[%s3791] ss:$2 sm:$0xff]
    %s3793 = scalar_lea.vmem [#allocation2], 178
    %v3794 = vld [vmem:[%s3793] ss:$2 sm:$0xff]
    %s3795 = scalar_lea.vmem [#allocation2], 194
    %v3796 = vld [vmem:[%s3795] ss:$2 sm:$0xff]
    %s3797 = scalar_lea.vmem [#allocation2], 210
    %v3798 = vld [vmem:[%s3797] ss:$2 sm:$0xff]
    %s3799 = scalar_lea.vmem [#allocation2], 226
    %v3800 = vld [vmem:[%s3799] ss:$2 sm:$0xff]
    %s3801 = scalar_lea.vmem [#allocation2], 242
    %v3802 = vld [vmem:[%s3801] ss:$2 sm:$0xff]
    %s3803 = scalar_lea.vmem [#allocation2], 258
    %v3804 = vld [vmem:[%s3803] ss:$2 sm:$0xff]
    %s3805 = scalar_lea.vmem [#allocation2], 274
    %v3806 = vld [vmem:[%s3805] ss:$2 sm:$0xff]
    %s3807 = scalar_lea.vmem [#allocation2], 290
    %v3808 = vld [vmem:[%s3807] ss:$2 sm:$0xff]
    %s3809 = scalar_lea.vmem [#allocation2], 306
    %v3810 = vld [vmem:[%s3809] ss:$2 sm:$0xff]
    %s3811 = scalar_lea.vmem [#allocation2], 322
    %v3812 = vld [vmem:[%s3811] ss:$2 sm:$0xff]
    %s3813 = scalar_lea.vmem [#allocation2], 338
    %v3814 = vld [vmem:[%s3813] ss:$2 sm:$0xff]
    %s3815 = scalar_lea.vmem [#allocation2], 354
    %v3816 = vld [vmem:[%s3815] ss:$2 sm:$0xff]
    %s3817 = scalar_lea.vmem [#allocation2], 370
    %v3818 = vld [vmem:[%s3817] ss:$2 sm:$0xff]
    %s3819 = scalar_lea.vmem [#allocation2], 386
    %v3820 = vld [vmem:[%s3819] ss:$2 sm:$0xff]
    %s3821 = scalar_lea.vmem [#allocation2], 402
    %v3822 = vld [vmem:[%s3821] ss:$2 sm:$0xff]
    %s3823 = scalar_lea.vmem [#allocation2], 418
    %v3824 = vld [vmem:[%s3823] ss:$2 sm:$0xff]
    %s3825 = scalar_lea.vmem [#allocation2], 434
    %v3826 = vld [vmem:[%s3825] ss:$2 sm:$0xff]
    %s3827 = scalar_lea.vmem [#allocation2], 450
    %v3828 = vld [vmem:[%s3827] ss:$2 sm:$0xff]
    %s3829 = scalar_lea.vmem [#allocation2], 466
    %v3830 = vld [vmem:[%s3829] ss:$2 sm:$0xff]
    %s3831 = scalar_lea.vmem [#allocation2], 482
    %v3832 = vld [vmem:[%s3831] ss:$2 sm:$0xff]
    %s3833 = scalar_lea.vmem [#allocation2], 498
    %v3834 = vld [vmem:[%s3833] ss:$2 sm:$0xff]
    %s3835 = scalar_lea.vmem [#allocation2], 3
    %v3836 = vld [vmem:[%s3835] ss:$2 sm:$0xff]
    %s3837 = scalar_lea.vmem [#allocation2], 19
    %v3838 = vld [vmem:[%s3837] ss:$2 sm:$0xff]
    %s3839 = scalar_lea.vmem [#allocation2], 35
    %v3840 = vld [vmem:[%s3839] ss:$2 sm:$0xff]
    %s3841 = scalar_lea.vmem [#allocation2], 51
    %v3842 = vld [vmem:[%s3841] ss:$2 sm:$0xff]
    %s3843 = scalar_lea.vmem [#allocation2], 67
    %v3844 = vld [vmem:[%s3843] ss:$2 sm:$0xff]
    %s3845 = scalar_lea.vmem [#allocation2], 83
    %v3846 = vld [vmem:[%s3845] ss:$2 sm:$0xff]
    %s3847 = scalar_lea.vmem [#allocation2], 99
    %v3848 = vld [vmem:[%s3847] ss:$2 sm:$0xff]
    %s3849 = scalar_lea.vmem [#allocation2], 115
    %v3850 = vld [vmem:[%s3849] ss:$2 sm:$0xff]
    %s3851 = scalar_lea.vmem [#allocation2], 131
    %v3852 = vld [vmem:[%s3851] ss:$2 sm:$0xff]
    %s3853 = scalar_lea.vmem [#allocation2], 147
    %v3854 = vld [vmem:[%s3853] ss:$2 sm:$0xff]
    %s3855 = scalar_lea.vmem [#allocation2], 163
    %v3856 = vld [vmem:[%s3855] ss:$2 sm:$0xff]
    %s3857 = scalar_lea.vmem [#allocation2], 179
    %v3858 = vld [vmem:[%s3857] ss:$2 sm:$0xff]
    %s3859 = scalar_lea.vmem [#allocation2], 195
    %v3860 = vld [vmem:[%s3859] ss:$2 sm:$0xff]
    %s3861 = scalar_lea.vmem [#allocation2], 211
    %v3862 = vld [vmem:[%s3861] ss:$2 sm:$0xff]
    %s3863 = scalar_lea.vmem [#allocation2], 227
    %v3864 = vld [vmem:[%s3863] ss:$2 sm:$0xff]
    %s3865 = scalar_lea.vmem [#allocation2], 243
    %v3866 = vld [vmem:[%s3865] ss:$2 sm:$0xff]
    %s3867 = scalar_lea.vmem [#allocation2], 259
    %v3868 = vld [vmem:[%s3867] ss:$2 sm:$0xff]
    %s3869 = scalar_lea.vmem [#allocation2], 275
    %v3870 = vld [vmem:[%s3869] ss:$2 sm:$0xff]
    %s3871 = scalar_lea.vmem [#allocation2], 291
    %v3872 = vld [vmem:[%s3871] ss:$2 sm:$0xff]
    %s3873 = scalar_lea.vmem [#allocation2], 307
    %v3874 = vld [vmem:[%s3873] ss:$2 sm:$0xff]
    %s3875 = scalar_lea.vmem [#allocation2], 323
    %v3876 = vld [vmem:[%s3875] ss:$2 sm:$0xff]
    %s3877 = scalar_lea.vmem [#allocation2], 339
    %v3878 = vld [vmem:[%s3877] ss:$2 sm:$0xff]
    %s3879 = scalar_lea.vmem [#allocation2], 355
    %v3880 = vld [vmem:[%s3879] ss:$2 sm:$0xff]
    %s3881 = scalar_lea.vmem [#allocation2], 371
    %v3882 = vld [vmem:[%s3881] ss:$2 sm:$0xff]
    %s3883 = scalar_lea.vmem [#allocation2], 387
    %v3884 = vld [vmem:[%s3883] ss:$2 sm:$0xff]
    %s3885 = scalar_lea.vmem [#allocation2], 403
    %v3886 = vld [vmem:[%s3885] ss:$2 sm:$0xff]
    %s3887 = scalar_lea.vmem [#allocation2], 419
    %v3888 = vld [vmem:[%s3887] ss:$2 sm:$0xff]
    %s3889 = scalar_lea.vmem [#allocation2], 435
    %v3890 = vld [vmem:[%s3889] ss:$2 sm:$0xff]
    %s3891 = scalar_lea.vmem [#allocation2], 451
    %v3892 = vld [vmem:[%s3891] ss:$2 sm:$0xff]
    %s3893 = scalar_lea.vmem [#allocation2], 467
    %v3894 = vld [vmem:[%s3893] ss:$2 sm:$0xff]
    %s3895 = scalar_lea.vmem [#allocation2], 483
    %v3896 = vld [vmem:[%s3895] ss:$2 sm:$0xff]
    %s3897 = scalar_lea.vmem [#allocation2], 499
    %v3898 = vld [vmem:[%s3897] ss:$2 sm:$0xff]
    %s3899 = scalar_lea.vmem [#allocation2], 4
    %v3900 = vld [vmem:[%s3899] ss:$2 sm:$0xff]
    %s3901 = scalar_lea.vmem [#allocation2], 20
    %v3902 = vld [vmem:[%s3901] ss:$2 sm:$0xff]
    %s3903 = scalar_lea.vmem [#allocation2], 36
    %v3904 = vld [vmem:[%s3903] ss:$2 sm:$0xff]
    %s3905 = scalar_lea.vmem [#allocation2], 52
    %v3906 = vld [vmem:[%s3905] ss:$2 sm:$0xff]
    %s3907 = scalar_lea.vmem [#allocation2], 68
    %v3908 = vld [vmem:[%s3907] ss:$2 sm:$0xff]
    %s3909 = scalar_lea.vmem [#allocation2], 84
    %v3910 = vld [vmem:[%s3909] ss:$2 sm:$0xff]
    %s3911 = scalar_lea.vmem [#allocation2], 100
    %v3912 = vld [vmem:[%s3911] ss:$2 sm:$0xff]
    %s3913 = scalar_lea.vmem [#allocation2], 116
    %v3914 = vld [vmem:[%s3913] ss:$2 sm:$0xff]
    %s3915 = scalar_lea.vmem [#allocation2], 132
    %v3916 = vld [vmem:[%s3915] ss:$2 sm:$0xff]
    %s3917 = scalar_lea.vmem [#allocation2], 148
    %v3918 = vld [vmem:[%s3917] ss:$2 sm:$0xff]
    %s3919 = scalar_lea.vmem [#allocation2], 164
    %v3920 = vld [vmem:[%s3919] ss:$2 sm:$0xff]
    %s3921 = scalar_lea.vmem [#allocation2], 180
    %v3922 = vld [vmem:[%s3921] ss:$2 sm:$0xff]
    %s3923 = scalar_lea.vmem [#allocation2], 196
    %v3924 = vld [vmem:[%s3923] ss:$2 sm:$0xff]
    %s3925 = scalar_lea.vmem [#allocation2], 212
    %v3926 = vld [vmem:[%s3925] ss:$2 sm:$0xff]
    %s3927 = scalar_lea.vmem [#allocation2], 228
    %v3928 = vld [vmem:[%s3927] ss:$2 sm:$0xff]
    %s3929 = scalar_lea.vmem [#allocation2], 244
    %v3930 = vld [vmem:[%s3929] ss:$2 sm:$0xff]
    %s3931 = scalar_lea.vmem [#allocation2], 260
    %v3932 = vld [vmem:[%s3931] ss:$2 sm:$0xff]
    %s3933 = scalar_lea.vmem [#allocation2], 276
    %v3934 = vld [vmem:[%s3933] ss:$2 sm:$0xff]
    %s3935 = scalar_lea.vmem [#allocation2], 292
    %v3936 = vld [vmem:[%s3935] ss:$2 sm:$0xff]
    %s3937 = scalar_lea.vmem [#allocation2], 308
    %v3938 = vld [vmem:[%s3937] ss:$2 sm:$0xff]
    %s3939 = scalar_lea.vmem [#allocation2], 324
    %v3940 = vld [vmem:[%s3939] ss:$2 sm:$0xff]
    %s3941 = scalar_lea.vmem [#allocation2], 340
    %v3942 = vld [vmem:[%s3941] ss:$2 sm:$0xff]
    %s3943 = scalar_lea.vmem [#allocation2], 356
    %v3944 = vld [vmem:[%s3943] ss:$2 sm:$0xff]
    %s3945 = scalar_lea.vmem [#allocation2], 372
    %v3946 = vld [vmem:[%s3945] ss:$2 sm:$0xff]
    %s3947 = scalar_lea.vmem [#allocation2], 388
    %v3948 = vld [vmem:[%s3947] ss:$2 sm:$0xff]
    %s3949 = scalar_lea.vmem [#allocation2], 404
    %v3950 = vld [vmem:[%s3949] ss:$2 sm:$0xff]
    %s3951 = scalar_lea.vmem [#allocation2], 420
    %v3952 = vld [vmem:[%s3951] ss:$2 sm:$0xff]
    %s3953 = scalar_lea.vmem [#allocation2], 436
    %v3954 = vld [vmem:[%s3953] ss:$2 sm:$0xff]
    %s3955 = scalar_lea.vmem [#allocation2], 452
    %v3956 = vld [vmem:[%s3955] ss:$2 sm:$0xff]
    %s3957 = scalar_lea.vmem [#allocation2], 468
    %v3958 = vld [vmem:[%s3957] ss:$2 sm:$0xff]
    %s3959 = scalar_lea.vmem [#allocation2], 484
    %v3960 = vld [vmem:[%s3959] ss:$2 sm:$0xff]
    %s3961 = scalar_lea.vmem [#allocation2], 500
    %v3962 = vld [vmem:[%s3961] ss:$2 sm:$0xff]
    %s3963 = scalar_lea.vmem [#allocation2], 5
    %v3964 = vld [vmem:[%s3963] ss:$2 sm:$0xff]
    %s3965 = scalar_lea.vmem [#allocation2], 21
    %v3966 = vld [vmem:[%s3965] ss:$2 sm:$0xff]
    %s3967 = scalar_lea.vmem [#allocation2], 37
    %v3968 = vld [vmem:[%s3967] ss:$2 sm:$0xff]
    %s3969 = scalar_lea.vmem [#allocation2], 53
    %v3970 = vld [vmem:[%s3969] ss:$2 sm:$0xff]
    %s3971 = scalar_lea.vmem [#allocation2], 69
    %v3972 = vld [vmem:[%s3971] ss:$2 sm:$0xff]
    %s3973 = scalar_lea.vmem [#allocation2], 85
    %v3974 = vld [vmem:[%s3973] ss:$2 sm:$0xff]
    %s3975 = scalar_lea.vmem [#allocation2], 101
    %v3976 = vld [vmem:[%s3975] ss:$2 sm:$0xff]
    %s3977 = scalar_lea.vmem [#allocation2], 117
    %v3978 = vld [vmem:[%s3977] ss:$2 sm:$0xff]
    %s3979 = scalar_lea.vmem [#allocation2], 133
    %v3980 = vld [vmem:[%s3979] ss:$2 sm:$0xff]
    %s3981 = scalar_lea.vmem [#allocation2], 149
    %v3982 = vld [vmem:[%s3981] ss:$2 sm:$0xff]
    %s3983 = scalar_lea.vmem [#allocation2], 165
    %v3984 = vld [vmem:[%s3983] ss:$2 sm:$0xff]
    %s3985 = scalar_lea.vmem [#allocation2], 181
    %v3986 = vld [vmem:[%s3985] ss:$2 sm:$0xff]
    %s3987 = scalar_lea.vmem [#allocation2], 197
    %v3988 = vld [vmem:[%s3987] ss:$2 sm:$0xff]
    %s3989 = scalar_lea.vmem [#allocation2], 213
    %v3990 = vld [vmem:[%s3989] ss:$2 sm:$0xff]
    %s3991 = scalar_lea.vmem [#allocation2], 229
    %v3992 = vld [vmem:[%s3991] ss:$2 sm:$0xff]
    %s3993 = scalar_lea.vmem [#allocation2], 245
    %v3994 = vld [vmem:[%s3993] ss:$2 sm:$0xff]
    %s3995 = scalar_lea.vmem [#allocation2], 261
    %v3996 = vld [vmem:[%s3995] ss:$2 sm:$0xff]
    %s3997 = scalar_lea.vmem [#allocation2], 277
    %v3998 = vld [vmem:[%s3997] ss:$2 sm:$0xff]
    %s3999 = scalar_lea.vmem [#allocation2], 293
    %v4000 = vld [vmem:[%s3999] ss:$2 sm:$0xff]
    %s4001 = scalar_lea.vmem [#allocation2], 309
    %v4002 = vld [vmem:[%s4001] ss:$2 sm:$0xff]
    %s4003 = scalar_lea.vmem [#allocation2], 325
    %v4004 = vld [vmem:[%s4003] ss:$2 sm:$0xff]
    %s4005 = scalar_lea.vmem [#allocation2], 341
    %v4006 = vld [vmem:[%s4005] ss:$2 sm:$0xff]
    %s4007 = scalar_lea.vmem [#allocation2], 357
    %v4008 = vld [vmem:[%s4007] ss:$2 sm:$0xff]
    %s4009 = scalar_lea.vmem [#allocation2], 373
    %v4010 = vld [vmem:[%s4009] ss:$2 sm:$0xff]
    %s4011 = scalar_lea.vmem [#allocation2], 389
    %v4012 = vld [vmem:[%s4011] ss:$2 sm:$0xff]
    %s4013 = scalar_lea.vmem [#allocation2], 405
    %v4014 = vld [vmem:[%s4013] ss:$2 sm:$0xff]
    %s4015 = scalar_lea.vmem [#allocation2], 421
    %v4016 = vld [vmem:[%s4015] ss:$2 sm:$0xff]
    %s4017 = scalar_lea.vmem [#allocation2], 437
    %v4018 = vld [vmem:[%s4017] ss:$2 sm:$0xff]
    %s4019 = scalar_lea.vmem [#allocation2], 453
    %v4020 = vld [vmem:[%s4019] ss:$2 sm:$0xff]
    %s4021 = scalar_lea.vmem [#allocation2], 469
    %v4022 = vld [vmem:[%s4021] ss:$2 sm:$0xff]
    %s4023 = scalar_lea.vmem [#allocation2], 485
    %v4024 = vld [vmem:[%s4023] ss:$2 sm:$0xff]
    %s4025 = scalar_lea.vmem [#allocation2], 501
    %v4026 = vld [vmem:[%s4025] ss:$2 sm:$0xff]
    %v4027 = vpack.c.bf16 %v3646, %v3644
    %v4028 = vpack.c.bf16 %v3710, %v3708
    %v4029 = vpack.c.bf16 %v3774, %v3772
    %v4030 = vpack.c.bf16 %v3838, %v3836
    %v4031 = vpack.c.bf16 %v3902, %v3900
    %v4032 = vpack.c.bf16 %v3966, %v3964
    %v4033 = vpack.c.bf16 %v3650, %v3648
    %v4034 = vpack.c.bf16 %v3714, %v3712
    %v4035 = vpack.c.bf16 %v3778, %v3776
    %v4036 = vpack.c.bf16 %v3842, %v3840
    %v4037 = vpack.c.bf16 %v3906, %v3904
    %v4038 = vpack.c.bf16 %v3970, %v3968
    %v4039 = vpack.c.bf16 %v3654, %v3652
    %v4040 = vpack.c.bf16 %v3718, %v3716
    %v4041 = vpack.c.bf16 %v3782, %v3780
    %v4042 = vpack.c.bf16 %v3846, %v3844
    %v4043 = vpack.c.bf16 %v3910, %v3908
    %v4044 = vpack.c.bf16 %v3974, %v3972
    %v4045 = vpack.c.bf16 %v3658, %v3656
    %v4046 = vpack.c.bf16 %v3722, %v3720
    %v4047 = vpack.c.bf16 %v3786, %v3784
    %v4048 = vpack.c.bf16 %v3850, %v3848
    %v4049 = vpack.c.bf16 %v3914, %v3912
    %v4050 = vpack.c.bf16 %v3978, %v3976
    %v4051 = vpack.c.bf16 %v3662, %v3660
    %v4052 = vpack.c.bf16 %v3726, %v3724
    %v4053 = vpack.c.bf16 %v3790, %v3788
    %v4054 = vpack.c.bf16 %v3854, %v3852
    %v4055 = vpack.c.bf16 %v3918, %v3916
    %v4056 = vpack.c.bf16 %v3982, %v3980
    %v4057 = vpack.c.bf16 %v3666, %v3664
    %v4058 = vpack.c.bf16 %v3730, %v3728
    %v4059 = vpack.c.bf16 %v3794, %v3792
    %v4060 = vpack.c.bf16 %v3858, %v3856
    %v4061 = vpack.c.bf16 %v3922, %v3920
    %v4062 = vpack.c.bf16 %v3986, %v3984
    %v4063 = vpack.c.bf16 %v3670, %v3668
    %v4064 = vpack.c.bf16 %v3734, %v3732
    %v4065 = vpack.c.bf16 %v3798, %v3796
    %v4066 = vpack.c.bf16 %v3862, %v3860
    %v4067 = vpack.c.bf16 %v3926, %v3924
    %v4068 = vpack.c.bf16 %v3990, %v3988
    %v4069 = vpack.c.bf16 %v3674, %v3672
    %v4070 = vpack.c.bf16 %v3738, %v3736
    %v4071 = vpack.c.bf16 %v3802, %v3800
    %v4072 = vpack.c.bf16 %v3866, %v3864
    %v4073 = vpack.c.bf16 %v3930, %v3928
    %v4074 = vpack.c.bf16 %v3994, %v3992
    %v4075 = vpack.c.bf16 %v3678, %v3676
    %v4076 = vpack.c.bf16 %v3742, %v3740
    %v4077 = vpack.c.bf16 %v3806, %v3804
    %v4078 = vpack.c.bf16 %v3870, %v3868
    %v4079 = vpack.c.bf16 %v3934, %v3932
    %v4080 = vpack.c.bf16 %v3998, %v3996
    %v4081 = vpack.c.bf16 %v3682, %v3680
    %v4082 = vpack.c.bf16 %v3746, %v3744
    %v4083 = vpack.c.bf16 %v3810, %v3808
    %v4084 = vpack.c.bf16 %v3874, %v3872
    %v4085 = vpack.c.bf16 %v3938, %v3936
    %v4086 = vpack.c.bf16 %v4002, %v4000
    %v4087 = vpack.c.bf16 %v3686, %v3684
    %v4088 = vpack.c.bf16 %v3750, %v3748
    %v4089 = vpack.c.bf16 %v3814, %v3812
    %v4090 = vpack.c.bf16 %v3878, %v3876
    %v4091 = vpack.c.bf16 %v3942, %v3940
    %v4092 = vpack.c.bf16 %v4006, %v4004
    %v4093 = vpack.c.bf16 %v3690, %v3688
    %v4094 = vpack.c.bf16 %v3754, %v3752
    %v4095 = vpack.c.bf16 %v3818, %v3816
    %v4096 = vpack.c.bf16 %v3882, %v3880
    %v4097 = vpack.c.bf16 %v3946, %v3944
    %v4098 = vpack.c.bf16 %v4010, %v4008
    %v4099 = vpack.c.bf16 %v3694, %v3692
    %v4100 = vpack.c.bf16 %v3758, %v3756
    %v4101 = vpack.c.bf16 %v3822, %v3820
    %v4102 = vpack.c.bf16 %v3886, %v3884
    %v4103 = vpack.c.bf16 %v3950, %v3948
    %v4104 = vpack.c.bf16 %v4014, %v4012
    %v4105 = vpack.c.bf16 %v3698, %v3696
    %v4106 = vpack.c.bf16 %v3762, %v3760
    %v4107 = vpack.c.bf16 %v3826, %v3824
    %v4108 = vpack.c.bf16 %v3890, %v3888
    %v4109 = vpack.c.bf16 %v3954, %v3952
    %v4110 = vpack.c.bf16 %v4018, %v4016
    %v4111 = vpack.c.bf16 %v3702, %v3700
    %v4112 = vpack.c.bf16 %v3766, %v3764
    %v4113 = vpack.c.bf16 %v3830, %v3828
    %v4114 = vpack.c.bf16 %v3894, %v3892
    %v4115 = vpack.c.bf16 %v3958, %v3956
    %v4116 = vpack.c.bf16 %v4022, %v4020
    %v4117 = vpack.c.bf16 %v3706, %v3704
    %v4118 = vpack.c.bf16 %v3770, %v3768
    %v4119 = vpack.c.bf16 %v3834, %v3832
    %v4120 = vpack.c.bf16 %v3898, %v3896
    %v4121 = vpack.c.bf16 %v3962, %v3960
    %v4122 = vpack.c.bf16 %v4026, %v4024
    %v4123 = vld [vmem:[%s3] sm:$0xff]
    %v4124 = vld [vmem:[%s3 + $0x8] sm:$0xff]
    %v4125 = vld [vmem:[%s3 + $0x10] sm:$0xff]
    %v4126 = vld [vmem:[%s3 + $0x18] sm:$0xff]
    %v4127 = vld [vmem:[%s3 + $0x20] sm:$0xff]
    %v4128 = vld [vmem:[%s3 + $0x28] sm:$0xff]
    %v4129 = vld [vmem:[%s3 + $0x30] sm:$0xff]
    %v4130 = vld [vmem:[%s3 + $0x38] sm:$0xff]
    %v4131 = vld [vmem:[%s3 + $0x40] sm:$0xff]
    %v4132 = vld [vmem:[%s3 + $0x48] sm:$0xff]
    %v4133 = vld [vmem:[%s3 + $0x50] sm:$0xff]
    %v4134 = vld [vmem:[%s3 + $0x58] sm:$0xff]
    %v4135 = vld [vmem:[%s3 + $0x60] sm:$0xff]
    %v4136 = vld [vmem:[%s3 + $0x68] sm:$0xff]
    %v4137 = vld [vmem:[%s3 + $0x70] sm:$0xff]
    %v4138 = vld [vmem:[%s3 + $0x78] sm:$0xff]
    %v4139 = vld [vmem:[%s3 + $0x80] sm:$0xff]
    %v4140 = vld [vmem:[%s3 + $0x88] sm:$0xff]
    %v4141 = vld [vmem:[%s3 + $0x90] sm:$0xff]
    %v4142 = vld [vmem:[%s3 + $0x98] sm:$0xff]
    %v4143 = vld [vmem:[%s3 + $0xa0] sm:$0xff]
    %v4144 = vld [vmem:[%s3 + $0xa8] sm:$0xff]
    %v4145 = vld [vmem:[%s3 + $0xb0] sm:$0xff]
    %v4146 = vld [vmem:[%s3 + $0xb8] sm:$0xff]
    %v4147 = vld [vmem:[%s3 + $0xc0] sm:$0xff]
    %v4148 = vld [vmem:[%s3 + $0xc8] sm:$0xff]
    %v4149 = vld [vmem:[%s3 + $0xd0] sm:$0xff]
    %v4150 = vld [vmem:[%s3 + $0xd8] sm:$0xff]
    %v4151 = vld [vmem:[%s3 + $0xe0] sm:$0xff]
    %v4152 = vld [vmem:[%s3 + $0xe8] sm:$0xff]
    %v4153 = vld [vmem:[%s3 + $0xf0] sm:$0xff]
    %v4154 = vld [vmem:[%s3 + $0xf8] sm:$0xff]
    %v4155 = vld [vmem:[%s3 + $0x100] sm:$0xff]
    %v4156 = vld [vmem:[%s3 + $0x108] sm:$0xff]
    %v4157 = vld [vmem:[%s3 + $0x110] sm:$0xff]
    %v4158 = vld [vmem:[%s3 + $0x118] sm:$0xff]
    %v4159 = vld [vmem:[%s3 + $0x120] sm:$0xff]
    %v4160 = vld [vmem:[%s3 + $0x128] sm:$0xff]
    %v4161 = vld [vmem:[%s3 + $0x130] sm:$0xff]
    %v4162 = vld [vmem:[%s3 + $0x138] sm:$0xff]
    %v4163 = vld [vmem:[%s3 + $0x140] sm:$0xff]
    %v4164 = vld [vmem:[%s3 + $0x148] sm:$0xff]
    %v4165 = vld [vmem:[%s3 + $0x150] sm:$0xff]
    %v4166 = vld [vmem:[%s3 + $0x158] sm:$0xff]
    %v4167 = vld [vmem:[%s3 + $0x160] sm:$0xff]
    %v4168 = vld [vmem:[%s3 + $0x168] sm:$0xff]
    %v4169 = vld [vmem:[%s3 + $0x170] sm:$0xff]
    %v4170 = vld [vmem:[%s3 + $0x178] sm:$0xff]
    %v4171 = vld [vmem:[%s3 + $0x180] sm:$0xff]
    %v4172 = vld [vmem:[%s3 + $0x188] sm:$0xff]
    %v4173 = vld [vmem:[%s3 + $0x190] sm:$0xff]
    %v4174 = vld [vmem:[%s3 + $0x198] sm:$0xff]
    %v4175 = vld [vmem:[%s3 + $0x1a0] sm:$0xff]
    %v4176 = vld [vmem:[%s3 + $0x1a8] sm:$0xff]
    %v4177 = vld [vmem:[%s3 + $0x1b0] sm:$0xff]
    %v4178 = vld [vmem:[%s3 + $0x1b8] sm:$0xff]
    %v4179 = vld [vmem:[%s3 + $0x1c0] sm:$0xff]
    %v4180 = vld [vmem:[%s3 + $0x1c8] sm:$0xff]
    %v4181 = vld [vmem:[%s3 + $0x1d0] sm:$0xff]
    %v4182 = vld [vmem:[%s3 + $0x1d8] sm:$0xff]
    %v4183 = vld [vmem:[%s3 + $0x1e0] sm:$0xff]
    %v4184 = vld [vmem:[%s3 + $0x1e8] sm:$0xff]
    %v4185 = vld [vmem:[%s3 + $0x1f0] sm:$0xff]
    %v4186 = vld [vmem:[%s3 + $0x1f8] sm:$0xff]
    %v4187 = vld [vmem:[%s3 + $0x200] sm:$0xff]
    %v4188 = vld [vmem:[%s3 + $0x208] sm:$0xff]
    %v4189 = vld [vmem:[%s3 + $0x210] sm:$0xff]
    %v4190 = vld [vmem:[%s3 + $0x218] sm:$0xff]
    %v4191 = vld [vmem:[%s3 + $0x220] sm:$0xff]
    %v4192 = vld [vmem:[%s3 + $0x228] sm:$0xff]
    %v4193 = vld [vmem:[%s3 + $0x230] sm:$0xff]
    %v4194 = vld [vmem:[%s3 + $0x238] sm:$0xff]
    %v4195 = vld [vmem:[%s3 + $0x240] sm:$0xff]
    %v4196 = vld [vmem:[%s3 + $0x248] sm:$0xff]
    %v4197 = vld [vmem:[%s3 + $0x250] sm:$0xff]
    %v4198 = vld [vmem:[%s3 + $0x258] sm:$0xff]
    %v4199 = vld [vmem:[%s3 + $0x260] sm:$0xff]
    %v4200 = vld [vmem:[%s3 + $0x268] sm:$0xff]
    %v4201 = vld [vmem:[%s3 + $0x270] sm:$0xff]
    %v4202 = vld [vmem:[%s3 + $0x278] sm:$0xff]
    %v4203 = vld [vmem:[%s3 + $0x280] sm:$0xff]
    %v4204 = vld [vmem:[%s3 + $0x288] sm:$0xff]
    %v4205 = vld [vmem:[%s3 + $0x290] sm:$0xff]
    %v4206 = vld [vmem:[%s3 + $0x298] sm:$0xff]
    %v4207 = vld [vmem:[%s3 + $0x2a0] sm:$0xff]
    %v4208 = vld [vmem:[%s3 + $0x2a8] sm:$0xff]
    %v4209 = vld [vmem:[%s3 + $0x2b0] sm:$0xff]
    %v4210 = vld [vmem:[%s3 + $0x2b8] sm:$0xff]
    %v4211 = vld [vmem:[%s3 + $0x2c0] sm:$0xff]
    %v4212 = vld [vmem:[%s3 + $0x2c8] sm:$0xff]
    %v4213 = vld [vmem:[%s3 + $0x2d0] sm:$0xff]
    %v4214 = vld [vmem:[%s3 + $0x2d8] sm:$0xff]
    %v4215 = vld [vmem:[%s3 + $0x2e0] sm:$0xff]
    %v4216 = vld [vmem:[%s3 + $0x2e8] sm:$0xff]
    %v4217 = vld [vmem:[%s3 + $0x2f0] sm:$0xff]
    %v4218 = vld [vmem:[%s3 + $0x2f8] sm:$0xff]
    %v4219 = vld [vmem:[%s3 + $0x300] sm:$0xff]
    %v4220 = vld [vmem:[%s3 + $0x308] sm:$0xff]
    %v4221 = vld [vmem:[%s3 + $0x310] sm:$0xff]
    %v4222 = vld [vmem:[%s3 + $0x318] sm:$0xff]
    %v4223 = vld [vmem:[%s3 + $0x320] sm:$0xff]
    %v4224 = vld [vmem:[%s3 + $0x328] sm:$0xff]
    %v4225 = vld [vmem:[%s3 + $0x330] sm:$0xff]
    %v4226 = vld [vmem:[%s3 + $0x338] sm:$0xff]
    %v4227 = vld [vmem:[%s3 + $0x340] sm:$0xff]
    %v4228 = vld [vmem:[%s3 + $0x348] sm:$0xff]
    %v4229 = vld [vmem:[%s3 + $0x350] sm:$0xff]
    %v4230 = vld [vmem:[%s3 + $0x358] sm:$0xff]
    %v4231 = vld [vmem:[%s3 + $0x360] sm:$0xff]
    %v4232 = vld [vmem:[%s3 + $0x368] sm:$0xff]
    %v4233 = vld [vmem:[%s3 + $0x370] sm:$0xff]
    %v4234 = vld [vmem:[%s3 + $0x378] sm:$0xff]
    %v4235 = vld [vmem:[%s3 + $0x380] sm:$0xff]
    %v4236 = vld [vmem:[%s3 + $0x388] sm:$0xff]
    %v4237 = vld [vmem:[%s3 + $0x390] sm:$0xff]
    %v4238 = vld [vmem:[%s3 + $0x398] sm:$0xff]
    %v4239 = vld [vmem:[%s3 + $0x3a0] sm:$0xff]
    %v4240 = vld [vmem:[%s3 + $0x3a8] sm:$0xff]
    %v4241 = vld [vmem:[%s3 + $0x3b0] sm:$0xff]
    %v4242 = vld [vmem:[%s3 + $0x3b8] sm:$0xff]
    %v4243 = vld [vmem:[%s3 + $0x3c0] sm:$0xff]
    %v4244 = vld [vmem:[%s3 + $0x3c8] sm:$0xff]
    %v4245 = vld [vmem:[%s3 + $0x3d0] sm:$0xff]
    %v4246 = vld [vmem:[%s3 + $0x3d8] sm:$0xff]
    %v4247 = vld [vmem:[%s3 + $0x3e0] sm:$0xff]
    %v4248 = vld [vmem:[%s3 + $0x3e8] sm:$0xff]
    %v4249 = vld [vmem:[%s3 + $0x3f0] sm:$0xff]
    %v4250 = vld [vmem:[%s3 + $0x3f8] sm:$0xff]
    %v4251 = vld [vmem:[%s3 + $0x400] sm:$0xff]
    %v4252 = vld [vmem:[%s3 + $0x408] sm:$0xff]
    %v4253 = vld [vmem:[%s3 + $0x410] sm:$0xff]
    %v4254 = vld [vmem:[%s3 + $0x418] sm:$0xff]
    %v4255 = vld [vmem:[%s3 + $0x420] sm:$0xff]
    %v4256 = vld [vmem:[%s3 + $0x428] sm:$0xff]
    %v4257 = vld [vmem:[%s3 + $0x430] sm:$0xff]
    %v4258 = vld [vmem:[%s3 + $0x438] sm:$0xff]
    %v4259 = vld [vmem:[%s3 + $0x440] sm:$0xff]
    %v4260 = vld [vmem:[%s3 + $0x448] sm:$0xff]
    %v4261 = vld [vmem:[%s3 + $0x450] sm:$0xff]
    %v4262 = vld [vmem:[%s3 + $0x458] sm:$0xff]
    %v4263 = vld [vmem:[%s3 + $0x460] sm:$0xff]
    %v4264 = vld [vmem:[%s3 + $0x468] sm:$0xff]
    %v4265 = vld [vmem:[%s3 + $0x470] sm:$0xff]
    %v4266 = vld [vmem:[%s3 + $0x478] sm:$0xff]
    %v4267 = vld [vmem:[%s3 + $0x480] sm:$0xff]
    %v4268 = vld [vmem:[%s3 + $0x488] sm:$0xff]
    %v4269 = vld [vmem:[%s3 + $0x490] sm:$0xff]
    %v4270 = vld [vmem:[%s3 + $0x498] sm:$0xff]
    %v4271 = vld [vmem:[%s3 + $0x4a0] sm:$0xff]
    %v4272 = vld [vmem:[%s3 + $0x4a8] sm:$0xff]
    %v4273 = vld [vmem:[%s3 + $0x4b0] sm:$0xff]
    %v4274 = vld [vmem:[%s3 + $0x4b8] sm:$0xff]
    %v4275 = vld [vmem:[%s3 + $0x4c0] sm:$0xff]
    %v4276 = vld [vmem:[%s3 + $0x4c8] sm:$0xff]
    %v4277 = vld [vmem:[%s3 + $0x4d0] sm:$0xff]
    %v4278 = vld [vmem:[%s3 + $0x4d8] sm:$0xff]
    %v4279 = vld [vmem:[%s3 + $0x4e0] sm:$0xff]
    %v4280 = vld [vmem:[%s3 + $0x4e8] sm:$0xff]
    %v4281 = vld [vmem:[%s3 + $0x4f0] sm:$0xff]
    %v4282 = vld [vmem:[%s3 + $0x4f8] sm:$0xff]
    %v4283 = vld [vmem:[%s3 + $0x500] sm:$0xff]
    %v4284 = vld [vmem:[%s3 + $0x508] sm:$0xff]
    %v4285 = vld [vmem:[%s3 + $0x510] sm:$0xff]
    %v4286 = vld [vmem:[%s3 + $0x518] sm:$0xff]
    %v4287 = vld [vmem:[%s3 + $0x520] sm:$0xff]
    %v4288 = vld [vmem:[%s3 + $0x528] sm:$0xff]
    %v4289 = vld [vmem:[%s3 + $0x530] sm:$0xff]
    %v4290 = vld [vmem:[%s3 + $0x538] sm:$0xff]
    %v4291 = vld [vmem:[%s3 + $0x540] sm:$0xff]
    %v4292 = vld [vmem:[%s3 + $0x548] sm:$0xff]
    %v4293 = vld [vmem:[%s3 + $0x550] sm:$0xff]
    %v4294 = vld [vmem:[%s3 + $0x558] sm:$0xff]
    %v4295 = vld [vmem:[%s3 + $0x560] sm:$0xff]
    %v4296 = vld [vmem:[%s3 + $0x568] sm:$0xff]
    %v4297 = vld [vmem:[%s3 + $0x570] sm:$0xff]
    %v4298 = vld [vmem:[%s3 + $0x578] sm:$0xff]
    %v4299 = vld [vmem:[%s3 + $0x580] sm:$0xff]
    %v4300 = vld [vmem:[%s3 + $0x588] sm:$0xff]
    %v4301 = vld [vmem:[%s3 + $0x590] sm:$0xff]
    %v4302 = vld [vmem:[%s3 + $0x598] sm:$0xff]
    %v4303 = vld [vmem:[%s3 + $0x5a0] sm:$0xff]
    %v4304 = vld [vmem:[%s3 + $0x5a8] sm:$0xff]
    %v4305 = vld [vmem:[%s3 + $0x5b0] sm:$0xff]
    %v4306 = vld [vmem:[%s3 + $0x5b8] sm:$0xff]
    %v4307 = vld [vmem:[%s3 + $0x5c0] sm:$0xff]
    %v4308 = vld [vmem:[%s3 + $0x5c8] sm:$0xff]
    %v4309 = vld [vmem:[%s3 + $0x5d0] sm:$0xff]
    %v4310 = vld [vmem:[%s3 + $0x5d8] sm:$0xff]
    %v4311 = vld [vmem:[%s3 + $0x5e0] sm:$0xff]
    %v4312 = vld [vmem:[%s3 + $0x5e8] sm:$0xff]
    %v4313 = vld [vmem:[%s3 + $0x5f0] sm:$0xff]
    %v4314 = vld [vmem:[%s3 + $0x5f8] sm:$0xff]
    %v4507 = vunpack.c.l.b16 %v4123
    %v4508 = vunpack.c.h.b16 %v4123
    %v4509 = vunpack.c.l.b16 %v4124
    %v4510 = vunpack.c.h.b16 %v4124
    %v4511 = vunpack.c.l.b16 %v4125
    %v4512 = vunpack.c.h.b16 %v4125
    %v4513 = vunpack.c.l.b16 %v4126
    %v4514 = vunpack.c.h.b16 %v4126
    %v4515 = vunpack.c.l.b16 %v4127
    %v4516 = vunpack.c.h.b16 %v4127
    %v4517 = vunpack.c.l.b16 %v4128
    %v4518 = vunpack.c.h.b16 %v4128
    %v4519 = vunpack.c.l.b16 %v4129
    %v4520 = vunpack.c.h.b16 %v4129
    %v4521 = vunpack.c.l.b16 %v4130
    %v4522 = vunpack.c.h.b16 %v4130
    %v4523 = vunpack.c.l.b16 %v4131
    %v4524 = vunpack.c.h.b16 %v4131
    %v4525 = vunpack.c.l.b16 %v4132
    %v4526 = vunpack.c.h.b16 %v4132
    %v4527 = vunpack.c.l.b16 %v4133
    %v4528 = vunpack.c.h.b16 %v4133
    %v4529 = vunpack.c.l.b16 %v4134
    %v4530 = vunpack.c.h.b16 %v4134
    %v4531 = vunpack.c.l.b16 %v4135
    %v4532 = vunpack.c.h.b16 %v4135
    %v4533 = vunpack.c.l.b16 %v4136
    %v4534 = vunpack.c.h.b16 %v4136
    %v4535 = vunpack.c.l.b16 %v4137
    %v4536 = vunpack.c.h.b16 %v4137
    %v4537 = vunpack.c.l.b16 %v4138
    %v4538 = vunpack.c.h.b16 %v4138
    %v4539 = vunpack.c.l.b16 %v4139
    %v4540 = vunpack.c.h.b16 %v4139
    %v4541 = vunpack.c.l.b16 %v4140
    %v4542 = vunpack.c.h.b16 %v4140
    %v4543 = vunpack.c.l.b16 %v4141
    %v4544 = vunpack.c.h.b16 %v4141
    %v4545 = vunpack.c.l.b16 %v4142
    %v4546 = vunpack.c.h.b16 %v4142
    %v4547 = vunpack.c.l.b16 %v4143
    %v4548 = vunpack.c.h.b16 %v4143
    %v4549 = vunpack.c.l.b16 %v4144
    %v4550 = vunpack.c.h.b16 %v4144
    %v4551 = vunpack.c.l.b16 %v4145
    %v4552 = vunpack.c.h.b16 %v4145
    %v4553 = vunpack.c.l.b16 %v4146
    %v4554 = vunpack.c.h.b16 %v4146
    %v4555 = vunpack.c.l.b16 %v4147
    %v4556 = vunpack.c.h.b16 %v4147
    %v4557 = vunpack.c.l.b16 %v4148
    %v4558 = vunpack.c.h.b16 %v4148
    %v4559 = vunpack.c.l.b16 %v4149
    %v4560 = vunpack.c.h.b16 %v4149
    %v4561 = vunpack.c.l.b16 %v4150
    %v4562 = vunpack.c.h.b16 %v4150
    %v4563 = vunpack.c.l.b16 %v4151
    %v4564 = vunpack.c.h.b16 %v4151
    %v4565 = vunpack.c.l.b16 %v4152
    %v4566 = vunpack.c.h.b16 %v4152
    %v4567 = vunpack.c.l.b16 %v4153
    %v4568 = vunpack.c.h.b16 %v4153
    %v4569 = vunpack.c.l.b16 %v4154
    %v4570 = vunpack.c.h.b16 %v4154
    %v4571 = vunpack.c.l.b16 %v4155
    %v4572 = vunpack.c.h.b16 %v4155
    %v4573 = vunpack.c.l.b16 %v4156
    %v4574 = vunpack.c.h.b16 %v4156
    %v4575 = vunpack.c.l.b16 %v4157
    %v4576 = vunpack.c.h.b16 %v4157
    %v4577 = vunpack.c.l.b16 %v4158
    %v4578 = vunpack.c.h.b16 %v4158
    %v4579 = vunpack.c.l.b16 %v4159
    %v4580 = vunpack.c.h.b16 %v4159
    %v4581 = vunpack.c.l.b16 %v4160
    %v4582 = vunpack.c.h.b16 %v4160
    %v4583 = vunpack.c.l.b16 %v4161
    %v4584 = vunpack.c.h.b16 %v4161
    %v4585 = vunpack.c.l.b16 %v4162
    %v4586 = vunpack.c.h.b16 %v4162
    %v4587 = vunpack.c.l.b16 %v4163
    %v4588 = vunpack.c.h.b16 %v4163
    %v4589 = vunpack.c.l.b16 %v4164
    %v4590 = vunpack.c.h.b16 %v4164
    %v4591 = vunpack.c.l.b16 %v4165
    %v4592 = vunpack.c.h.b16 %v4165
    %v4593 = vunpack.c.l.b16 %v4166
    %v4594 = vunpack.c.h.b16 %v4166
    %v4595 = vunpack.c.l.b16 %v4167
    %v4596 = vunpack.c.h.b16 %v4167
    %v4597 = vunpack.c.l.b16 %v4168
    %v4598 = vunpack.c.h.b16 %v4168
    %v4599 = vunpack.c.l.b16 %v4169
    %v4600 = vunpack.c.h.b16 %v4169
    %v4601 = vunpack.c.l.b16 %v4170
    %v4602 = vunpack.c.h.b16 %v4170
    %v4603 = vunpack.c.l.b16 %v4171
    %v4604 = vunpack.c.h.b16 %v4171
    %v4605 = vunpack.c.l.b16 %v4172
    %v4606 = vunpack.c.h.b16 %v4172
    %v4607 = vunpack.c.l.b16 %v4173
    %v4608 = vunpack.c.h.b16 %v4173
    %v4609 = vunpack.c.l.b16 %v4174
    %v4610 = vunpack.c.h.b16 %v4174
    %v4611 = vunpack.c.l.b16 %v4175
    %v4612 = vunpack.c.h.b16 %v4175
    %v4613 = vunpack.c.l.b16 %v4176
    %v4614 = vunpack.c.h.b16 %v4176
    %v4615 = vunpack.c.l.b16 %v4177
    %v4616 = vunpack.c.h.b16 %v4177
    %v4617 = vunpack.c.l.b16 %v4178
    %v4618 = vunpack.c.h.b16 %v4178
    %v4619 = vunpack.c.l.b16 %v4179
    %v4620 = vunpack.c.h.b16 %v4179
    %v4621 = vunpack.c.l.b16 %v4180
    %v4622 = vunpack.c.h.b16 %v4180
    %v4623 = vunpack.c.l.b16 %v4181
    %v4624 = vunpack.c.h.b16 %v4181
    %v4625 = vunpack.c.l.b16 %v4182
    %v4626 = vunpack.c.h.b16 %v4182
    %v4627 = vunpack.c.l.b16 %v4183
    %v4628 = vunpack.c.h.b16 %v4183
    %v4629 = vunpack.c.l.b16 %v4184
    %v4630 = vunpack.c.h.b16 %v4184
    %v4631 = vunpack.c.l.b16 %v4185
    %v4632 = vunpack.c.h.b16 %v4185
    %v4633 = vunpack.c.l.b16 %v4186
    %v4634 = vunpack.c.h.b16 %v4186
    %v4635 = vunpack.c.l.b16 %v4187
    %v4636 = vunpack.c.h.b16 %v4187
    %v4637 = vunpack.c.l.b16 %v4188
    %v4638 = vunpack.c.h.b16 %v4188
    %v4639 = vunpack.c.l.b16 %v4189
    %v4640 = vunpack.c.h.b16 %v4189
    %v4641 = vunpack.c.l.b16 %v4190
    %v4642 = vunpack.c.h.b16 %v4190
    %v4643 = vunpack.c.l.b16 %v4191
    %v4644 = vunpack.c.h.b16 %v4191
    %v4645 = vunpack.c.l.b16 %v4192
    %v4646 = vunpack.c.h.b16 %v4192
    %v4647 = vunpack.c.l.b16 %v4193
    %v4648 = vunpack.c.h.b16 %v4193
    %v4649 = vunpack.c.l.b16 %v4194
    %v4650 = vunpack.c.h.b16 %v4194
    %v4651 = vunpack.c.l.b16 %v4195
    %v4652 = vunpack.c.h.b16 %v4195
    %v4653 = vunpack.c.l.b16 %v4196
    %v4654 = vunpack.c.h.b16 %v4196
    %v4655 = vunpack.c.l.b16 %v4197
    %v4656 = vunpack.c.h.b16 %v4197
    %v4657 = vunpack.c.l.b16 %v4198
    %v4658 = vunpack.c.h.b16 %v4198
    %v4659 = vunpack.c.l.b16 %v4199
    %v4660 = vunpack.c.h.b16 %v4199
    %v4661 = vunpack.c.l.b16 %v4200
    %v4662 = vunpack.c.h.b16 %v4200
    %v4663 = vunpack.c.l.b16 %v4201
    %v4664 = vunpack.c.h.b16 %v4201
    %v4665 = vunpack.c.l.b16 %v4202
    %v4666 = vunpack.c.h.b16 %v4202
    %v4667 = vunpack.c.l.b16 %v4203
    %v4668 = vunpack.c.h.b16 %v4203
    %v4669 = vunpack.c.l.b16 %v4204
    %v4670 = vunpack.c.h.b16 %v4204
    %v4671 = vunpack.c.l.b16 %v4205
    %v4672 = vunpack.c.h.b16 %v4205
    %v4673 = vunpack.c.l.b16 %v4206
    %v4674 = vunpack.c.h.b16 %v4206
    %v4675 = vunpack.c.l.b16 %v4207
    %v4676 = vunpack.c.h.b16 %v4207
    %v4677 = vunpack.c.l.b16 %v4208
    %v4678 = vunpack.c.h.b16 %v4208
    %v4679 = vunpack.c.l.b16 %v4209
    %v4680 = vunpack.c.h.b16 %v4209
    %v4681 = vunpack.c.l.b16 %v4210
    %v4682 = vunpack.c.h.b16 %v4210
    %v4683 = vunpack.c.l.b16 %v4211
    %v4684 = vunpack.c.h.b16 %v4211
    %v4685 = vunpack.c.l.b16 %v4212
    %v4686 = vunpack.c.h.b16 %v4212
    %v4687 = vunpack.c.l.b16 %v4213
    %v4688 = vunpack.c.h.b16 %v4213
    %v4689 = vunpack.c.l.b16 %v4214
    %v4690 = vunpack.c.h.b16 %v4214
    %v4691 = vunpack.c.l.b16 %v4215
    %v4692 = vunpack.c.h.b16 %v4215
    %v4693 = vunpack.c.l.b16 %v4216
    %v4694 = vunpack.c.h.b16 %v4216
    %v4695 = vunpack.c.l.b16 %v4217
    %v4696 = vunpack.c.h.b16 %v4217
    %v4697 = vunpack.c.l.b16 %v4218
    %v4698 = vunpack.c.h.b16 %v4218
    %v4699 = vunpack.c.l.b16 %v4219
    %v4700 = vunpack.c.h.b16 %v4219
    %v4701 = vunpack.c.l.b16 %v4220
    %v4702 = vunpack.c.h.b16 %v4220
    %v4703 = vunpack.c.l.b16 %v4221
    %v4704 = vunpack.c.h.b16 %v4221
    %v4705 = vunpack.c.l.b16 %v4222
    %v4706 = vunpack.c.h.b16 %v4222
    %v4707 = vunpack.c.l.b16 %v4223
    %v4708 = vunpack.c.h.b16 %v4223
    %v4709 = vunpack.c.l.b16 %v4224
    %v4710 = vunpack.c.h.b16 %v4224
    %v4711 = vunpack.c.l.b16 %v4225
    %v4712 = vunpack.c.h.b16 %v4225
    %v4713 = vunpack.c.l.b16 %v4226
    %v4714 = vunpack.c.h.b16 %v4226
    %v4715 = vunpack.c.l.b16 %v4227
    %v4716 = vunpack.c.h.b16 %v4227
    %v4717 = vunpack.c.l.b16 %v4228
    %v4718 = vunpack.c.h.b16 %v4228
    %v4719 = vunpack.c.l.b16 %v4229
    %v4720 = vunpack.c.h.b16 %v4229
    %v4721 = vunpack.c.l.b16 %v4230
    %v4722 = vunpack.c.h.b16 %v4230
    %v4723 = vunpack.c.l.b16 %v4231
    %v4724 = vunpack.c.h.b16 %v4231
    %v4725 = vunpack.c.l.b16 %v4232
    %v4726 = vunpack.c.h.b16 %v4232
    %v4727 = vunpack.c.l.b16 %v4233
    %v4728 = vunpack.c.h.b16 %v4233
    %v4729 = vunpack.c.l.b16 %v4234
    %v4730 = vunpack.c.h.b16 %v4234
    %v4731 = vunpack.c.l.b16 %v4235
    %v4732 = vunpack.c.h.b16 %v4235
    %v4733 = vunpack.c.l.b16 %v4236
    %v4734 = vunpack.c.h.b16 %v4236
    %v4735 = vunpack.c.l.b16 %v4237
    %v4736 = vunpack.c.h.b16 %v4237
    %v4737 = vunpack.c.l.b16 %v4238
    %v4738 = vunpack.c.h.b16 %v4238
    %v4739 = vunpack.c.l.b16 %v4239
    %v4740 = vunpack.c.h.b16 %v4239
    %v4741 = vunpack.c.l.b16 %v4240
    %v4742 = vunpack.c.h.b16 %v4240
    %v4743 = vunpack.c.l.b16 %v4241
    %v4744 = vunpack.c.h.b16 %v4241
    %v4745 = vunpack.c.l.b16 %v4242
    %v4746 = vunpack.c.h.b16 %v4242
    %v4747 = vunpack.c.l.b16 %v4243
    %v4748 = vunpack.c.h.b16 %v4243
    %v4749 = vunpack.c.l.b16 %v4244
    %v4750 = vunpack.c.h.b16 %v4244
    %v4751 = vunpack.c.l.b16 %v4245
    %v4752 = vunpack.c.h.b16 %v4245
    %v4753 = vunpack.c.l.b16 %v4246
    %v4754 = vunpack.c.h.b16 %v4246
    %v4755 = vunpack.c.l.b16 %v4247
    %v4756 = vunpack.c.h.b16 %v4247
    %v4757 = vunpack.c.l.b16 %v4248
    %v4758 = vunpack.c.h.b16 %v4248
    %v4759 = vunpack.c.l.b16 %v4249
    %v4760 = vunpack.c.h.b16 %v4249
    %v4761 = vunpack.c.l.b16 %v4250
    %v4762 = vunpack.c.h.b16 %v4250
    %v4763 = vunpack.c.l.b16 %v4251
    %v4764 = vunpack.c.h.b16 %v4251
    %v4765 = vunpack.c.l.b16 %v4252
    %v4766 = vunpack.c.h.b16 %v4252
    %v4767 = vunpack.c.l.b16 %v4253
    %v4768 = vunpack.c.h.b16 %v4253
    %v4769 = vunpack.c.l.b16 %v4254
    %v4770 = vunpack.c.h.b16 %v4254
    %v4771 = vunpack.c.l.b16 %v4255
    %v4772 = vunpack.c.h.b16 %v4255
    %v4773 = vunpack.c.l.b16 %v4256
    %v4774 = vunpack.c.h.b16 %v4256
    %v4775 = vunpack.c.l.b16 %v4257
    %v4776 = vunpack.c.h.b16 %v4257
    %v4777 = vunpack.c.l.b16 %v4258
    %v4778 = vunpack.c.h.b16 %v4258
    %v4779 = vunpack.c.l.b16 %v4259
    %v4780 = vunpack.c.h.b16 %v4259
    %v4781 = vunpack.c.l.b16 %v4260
    %v4782 = vunpack.c.h.b16 %v4260
    %v4783 = vunpack.c.l.b16 %v4261
    %v4784 = vunpack.c.h.b16 %v4261
    %v4785 = vunpack.c.l.b16 %v4262
    %v4786 = vunpack.c.h.b16 %v4262
    %v4787 = vunpack.c.l.b16 %v4263
    %v4788 = vunpack.c.h.b16 %v4263
    %v4789 = vunpack.c.l.b16 %v4264
    %v4790 = vunpack.c.h.b16 %v4264
    %v4791 = vunpack.c.l.b16 %v4265
    %v4792 = vunpack.c.h.b16 %v4265
    %v4793 = vunpack.c.l.b16 %v4266
    %v4794 = vunpack.c.h.b16 %v4266
    %v4795 = vunpack.c.l.b16 %v4267
    %v4796 = vunpack.c.h.b16 %v4267
    %v4797 = vunpack.c.l.b16 %v4268
    %v4798 = vunpack.c.h.b16 %v4268
    %v4799 = vunpack.c.l.b16 %v4269
    %v4800 = vunpack.c.h.b16 %v4269
    %v4801 = vunpack.c.l.b16 %v4270
    %v4802 = vunpack.c.h.b16 %v4270
    %v4803 = vunpack.c.l.b16 %v4271
    %v4804 = vunpack.c.h.b16 %v4271
    %v4805 = vunpack.c.l.b16 %v4272
    %v4806 = vunpack.c.h.b16 %v4272
    %v4807 = vunpack.c.l.b16 %v4273
    %v4808 = vunpack.c.h.b16 %v4273
    %v4809 = vunpack.c.l.b16 %v4274
    %v4810 = vunpack.c.h.b16 %v4274
    %v4811 = vunpack.c.l.b16 %v4275
    %v4812 = vunpack.c.h.b16 %v4275
    %v4813 = vunpack.c.l.b16 %v4276
    %v4814 = vunpack.c.h.b16 %v4276
    %v4815 = vunpack.c.l.b16 %v4277
    %v4816 = vunpack.c.h.b16 %v4277
    %v4817 = vunpack.c.l.b16 %v4278
    %v4818 = vunpack.c.h.b16 %v4278
    %v4819 = vunpack.c.l.b16 %v4279
    %v4820 = vunpack.c.h.b16 %v4279
    %v4821 = vunpack.c.l.b16 %v4280
    %v4822 = vunpack.c.h.b16 %v4280
    %v4823 = vunpack.c.l.b16 %v4281
    %v4824 = vunpack.c.h.b16 %v4281
    %v4825 = vunpack.c.l.b16 %v4282
    %v4826 = vunpack.c.h.b16 %v4282
    %v4827 = vunpack.c.l.b16 %v4283
    %v4828 = vunpack.c.h.b16 %v4283
    %v4829 = vunpack.c.l.b16 %v4284
    %v4830 = vunpack.c.h.b16 %v4284
    %v4831 = vunpack.c.l.b16 %v4285
    %v4832 = vunpack.c.h.b16 %v4285
    %v4833 = vunpack.c.l.b16 %v4286
    %v4834 = vunpack.c.h.b16 %v4286
    %v4835 = vunpack.c.l.b16 %v4287
    %v4836 = vunpack.c.h.b16 %v4287
    %v4837 = vunpack.c.l.b16 %v4288
    %v4838 = vunpack.c.h.b16 %v4288
    %v4839 = vunpack.c.l.b16 %v4289
    %v4840 = vunpack.c.h.b16 %v4289
    %v4841 = vunpack.c.l.b16 %v4290
    %v4842 = vunpack.c.h.b16 %v4290
    %v4843 = vunpack.c.l.b16 %v4291
    %v4844 = vunpack.c.h.b16 %v4291
    %v4845 = vunpack.c.l.b16 %v4292
    %v4846 = vunpack.c.h.b16 %v4292
    %v4847 = vunpack.c.l.b16 %v4293
    %v4848 = vunpack.c.h.b16 %v4293
    %v4849 = vunpack.c.l.b16 %v4294
    %v4850 = vunpack.c.h.b16 %v4294
    %v4851 = vunpack.c.l.b16 %v4295
    %v4852 = vunpack.c.h.b16 %v4295
    %v4853 = vunpack.c.l.b16 %v4296
    %v4854 = vunpack.c.h.b16 %v4296
    %v4855 = vunpack.c.l.b16 %v4297
    %v4856 = vunpack.c.h.b16 %v4297
    %v4857 = vunpack.c.l.b16 %v4298
    %v4858 = vunpack.c.h.b16 %v4298
    %v4859 = vunpack.c.l.b16 %v4299
    %v4860 = vunpack.c.h.b16 %v4299
    %v4861 = vunpack.c.l.b16 %v4300
    %v4862 = vunpack.c.h.b16 %v4300
    %v4863 = vunpack.c.l.b16 %v4301
    %v4864 = vunpack.c.h.b16 %v4301
    %v4865 = vunpack.c.l.b16 %v4302
    %v4866 = vunpack.c.h.b16 %v4302
    %v4867 = vunpack.c.l.b16 %v4303
    %v4868 = vunpack.c.h.b16 %v4303
    %v4869 = vunpack.c.l.b16 %v4304
    %v4870 = vunpack.c.h.b16 %v4304
    %v4871 = vunpack.c.l.b16 %v4305
    %v4872 = vunpack.c.h.b16 %v4305
    %v4873 = vunpack.c.l.b16 %v4306
    %v4874 = vunpack.c.h.b16 %v4306
    %v4875 = vunpack.c.l.b16 %v4307
    %v4876 = vunpack.c.h.b16 %v4307
    %v4877 = vunpack.c.l.b16 %v4308
    %v4878 = vunpack.c.h.b16 %v4308
    %v4879 = vunpack.c.l.b16 %v4309
    %v4880 = vunpack.c.h.b16 %v4309
    %v4881 = vunpack.c.l.b16 %v4310
    %v4882 = vunpack.c.h.b16 %v4310
    %v4883 = vunpack.c.l.b16 %v4311
    %v4884 = vunpack.c.h.b16 %v4311
    %v4885 = vunpack.c.l.b16 %v4312
    %v4886 = vunpack.c.h.b16 %v4312
    %v4887 = vunpack.c.l.b16 %v4313
    %v4888 = vunpack.c.h.b16 %v4313
    %v4889 = vunpack.c.l.b16 %v4314
    %v4890 = vunpack.c.h.b16 %v4314
    %v4891 = vpack.c.b16 %v4511, %v4507
    %v4892 = vpack.c.b16 %v4512, %v4508
    %v4893 = vpack.c.b16 %v4513, %v4509
    %v4894 = vpack.c.b16 %v4514, %v4510
    %v4895 = vpack.c.b16 %v4519, %v4515
    %v4896 = vpack.c.b16 %v4520, %v4516
    %v4897 = vpack.c.b16 %v4521, %v4517
    %v4898 = vpack.c.b16 %v4522, %v4518
    %v4899 = vpack.c.b16 %v4527, %v4523
    %v4900 = vpack.c.b16 %v4528, %v4524
    %v4901 = vpack.c.b16 %v4529, %v4525
    %v4902 = vpack.c.b16 %v4530, %v4526
    %v4903 = vpack.c.b16 %v4535, %v4531
    %v4904 = vpack.c.b16 %v4536, %v4532
    %v4905 = vpack.c.b16 %v4537, %v4533
    %v4906 = vpack.c.b16 %v4538, %v4534
    %v4907 = vpack.c.b16 %v4543, %v4539
    %v4908 = vpack.c.b16 %v4544, %v4540
    %v4909 = vpack.c.b16 %v4545, %v4541
    %v4910 = vpack.c.b16 %v4546, %v4542
    %v4911 = vpack.c.b16 %v4551, %v4547
    %v4912 = vpack.c.b16 %v4552, %v4548
    %v4913 = vpack.c.b16 %v4553, %v4549
    %v4914 = vpack.c.b16 %v4554, %v4550
    %v4915 = vpack.c.b16 %v4559, %v4555
    %v4916 = vpack.c.b16 %v4560, %v4556
    %v4917 = vpack.c.b16 %v4561, %v4557
    %v4918 = vpack.c.b16 %v4562, %v4558
    %v4919 = vpack.c.b16 %v4567, %v4563
    %v4920 = vpack.c.b16 %v4568, %v4564
    %v4921 = vpack.c.b16 %v4569, %v4565
    %v4922 = vpack.c.b16 %v4570, %v4566
    %v4923 = vpack.c.b16 %v4575, %v4571
    %v4924 = vpack.c.b16 %v4576, %v4572
    %v4925 = vpack.c.b16 %v4577, %v4573
    %v4926 = vpack.c.b16 %v4578, %v4574
    %v4927 = vpack.c.b16 %v4583, %v4579
    %v4928 = vpack.c.b16 %v4584, %v4580
    %v4929 = vpack.c.b16 %v4585, %v4581
    %v4930 = vpack.c.b16 %v4586, %v4582
    %v4931 = vpack.c.b16 %v4591, %v4587
    %v4932 = vpack.c.b16 %v4592, %v4588
    %v4933 = vpack.c.b16 %v4593, %v4589
    %v4934 = vpack.c.b16 %v4594, %v4590
    %v4935 = vpack.c.b16 %v4599, %v4595
    %v4936 = vpack.c.b16 %v4600, %v4596
    %v4937 = vpack.c.b16 %v4601, %v4597
    %v4938 = vpack.c.b16 %v4602, %v4598
    %v4939 = vpack.c.b16 %v4607, %v4603
    %v4940 = vpack.c.b16 %v4608, %v4604
    %v4941 = vpack.c.b16 %v4609, %v4605
    %v4942 = vpack.c.b16 %v4610, %v4606
    %v4943 = vpack.c.b16 %v4615, %v4611
    %v4944 = vpack.c.b16 %v4616, %v4612
    %v4945 = vpack.c.b16 %v4617, %v4613
    %v4946 = vpack.c.b16 %v4618, %v4614
    %v4947 = vpack.c.b16 %v4623, %v4619
    %v4948 = vpack.c.b16 %v4624, %v4620
    %v4949 = vpack.c.b16 %v4625, %v4621
    %v4950 = vpack.c.b16 %v4626, %v4622
    %v4951 = vpack.c.b16 %v4631, %v4627
    %v4952 = vpack.c.b16 %v4632, %v4628
    %v4953 = vpack.c.b16 %v4633, %v4629
    %v4954 = vpack.c.b16 %v4634, %v4630
    %v4955 = vpack.c.b16 %v4639, %v4635
    %v4956 = vpack.c.b16 %v4640, %v4636
    %v4957 = vpack.c.b16 %v4641, %v4637
    %v4958 = vpack.c.b16 %v4642, %v4638
    %v4959 = vpack.c.b16 %v4647, %v4643
    %v4960 = vpack.c.b16 %v4648, %v4644
    %v4961 = vpack.c.b16 %v4649, %v4645
    %v4962 = vpack.c.b16 %v4650, %v4646
    %v4963 = vpack.c.b16 %v4655, %v4651
    %v4964 = vpack.c.b16 %v4656, %v4652
    %v4965 = vpack.c.b16 %v4657, %v4653
    %v4966 = vpack.c.b16 %v4658, %v4654
    %v4967 = vpack.c.b16 %v4663, %v4659
    %v4968 = vpack.c.b16 %v4664, %v4660
    %v4969 = vpack.c.b16 %v4665, %v4661
    %v4970 = vpack.c.b16 %v4666, %v4662
    %v4971 = vpack.c.b16 %v4671, %v4667
    %v4972 = vpack.c.b16 %v4672, %v4668
    %v4973 = vpack.c.b16 %v4673, %v4669
    %v4974 = vpack.c.b16 %v4674, %v4670
    %v4975 = vpack.c.b16 %v4679, %v4675
    %v4976 = vpack.c.b16 %v4680, %v4676
    %v4977 = vpack.c.b16 %v4681, %v4677
    %v4978 = vpack.c.b16 %v4682, %v4678
    %v4979 = vpack.c.b16 %v4687, %v4683
    %v4980 = vpack.c.b16 %v4688, %v4684
    %v4981 = vpack.c.b16 %v4689, %v4685
    %v4982 = vpack.c.b16 %v4690, %v4686
    %v4983 = vpack.c.b16 %v4695, %v4691
    %v4984 = vpack.c.b16 %v4696, %v4692
    %v4985 = vpack.c.b16 %v4697, %v4693
    %v4986 = vpack.c.b16 %v4698, %v4694
    %v4987 = vpack.c.b16 %v4703, %v4699
    %v4988 = vpack.c.b16 %v4704, %v4700
    %v4989 = vpack.c.b16 %v4705, %v4701
    %v4990 = vpack.c.b16 %v4706, %v4702
    %v4991 = vpack.c.b16 %v4711, %v4707
    %v4992 = vpack.c.b16 %v4712, %v4708
    %v4993 = vpack.c.b16 %v4713, %v4709
    %v4994 = vpack.c.b16 %v4714, %v4710
    %v4995 = vpack.c.b16 %v4719, %v4715
    %v4996 = vpack.c.b16 %v4720, %v4716
    %v4997 = vpack.c.b16 %v4721, %v4717
    %v4998 = vpack.c.b16 %v4722, %v4718
    %v4999 = vpack.c.b16 %v4727, %v4723
    %v5000 = vpack.c.b16 %v4728, %v4724
    %v5001 = vpack.c.b16 %v4729, %v4725
    %v5002 = vpack.c.b16 %v4730, %v4726
    %v5003 = vpack.c.b16 %v4735, %v4731
    %v5004 = vpack.c.b16 %v4736, %v4732
    %v5005 = vpack.c.b16 %v4737, %v4733
    %v5006 = vpack.c.b16 %v4738, %v4734
    %v5007 = vpack.c.b16 %v4743, %v4739
    %v5008 = vpack.c.b16 %v4744, %v4740
    %v5009 = vpack.c.b16 %v4745, %v4741
    %v5010 = vpack.c.b16 %v4746, %v4742
    %v5011 = vpack.c.b16 %v4751, %v4747
    %v5012 = vpack.c.b16 %v4752, %v4748
    %v5013 = vpack.c.b16 %v4753, %v4749
    %v5014 = vpack.c.b16 %v4754, %v4750
    %v5015 = vpack.c.b16 %v4759, %v4755
    %v5016 = vpack.c.b16 %v4760, %v4756
    %v5017 = vpack.c.b16 %v4761, %v4757
    %v5018 = vpack.c.b16 %v4762, %v4758
    %v5019 = vpack.c.b16 %v4767, %v4763
    %v5020 = vpack.c.b16 %v4768, %v4764
    %v5021 = vpack.c.b16 %v4769, %v4765
    %v5022 = vpack.c.b16 %v4770, %v4766
    %v5023 = vpack.c.b16 %v4775, %v4771
    %v5024 = vpack.c.b16 %v4776, %v4772
    %v5025 = vpack.c.b16 %v4777, %v4773
    %v5026 = vpack.c.b16 %v4778, %v4774
    %v5027 = vpack.c.b16 %v4783, %v4779
    %v5028 = vpack.c.b16 %v4784, %v4780
    %v5029 = vpack.c.b16 %v4785, %v4781
    %v5030 = vpack.c.b16 %v4786, %v4782
    %v5031 = vpack.c.b16 %v4791, %v4787
    %v5032 = vpack.c.b16 %v4792, %v4788
    %v5033 = vpack.c.b16 %v4793, %v4789
    %v5034 = vpack.c.b16 %v4794, %v4790
    %v5035 = vpack.c.b16 %v4799, %v4795
    %v5036 = vpack.c.b16 %v4800, %v4796
    %v5037 = vpack.c.b16 %v4801, %v4797
    %v5038 = vpack.c.b16 %v4802, %v4798
    %v5039 = vpack.c.b16 %v4807, %v4803
    %v5040 = vpack.c.b16 %v4808, %v4804
    %v5041 = vpack.c.b16 %v4809, %v4805
    %v5042 = vpack.c.b16 %v4810, %v4806
    %v5043 = vpack.c.b16 %v4815, %v4811
    %v5044 = vpack.c.b16 %v4816, %v4812
    %v5045 = vpack.c.b16 %v4817, %v4813
    %v5046 = vpack.c.b16 %v4818, %v4814
    %v5047 = vpack.c.b16 %v4823, %v4819
    %v5048 = vpack.c.b16 %v4824, %v4820
    %v5049 = vpack.c.b16 %v4825, %v4821
    %v5050 = vpack.c.b16 %v4826, %v4822
    %v5051 = vpack.c.b16 %v4831, %v4827
    %v5052 = vpack.c.b16 %v4832, %v4828
    %v5053 = vpack.c.b16 %v4833, %v4829
    %v5054 = vpack.c.b16 %v4834, %v4830
    %v5055 = vpack.c.b16 %v4839, %v4835
    %v5056 = vpack.c.b16 %v4840, %v4836
    %v5057 = vpack.c.b16 %v4841, %v4837
    %v5058 = vpack.c.b16 %v4842, %v4838
    %v5059 = vpack.c.b16 %v4847, %v4843
    %v5060 = vpack.c.b16 %v4848, %v4844
    %v5061 = vpack.c.b16 %v4849, %v4845
    %v5062 = vpack.c.b16 %v4850, %v4846
    %v5063 = vpack.c.b16 %v4855, %v4851
    %v5064 = vpack.c.b16 %v4856, %v4852
    %v5065 = vpack.c.b16 %v4857, %v4853
    %v5066 = vpack.c.b16 %v4858, %v4854
    %v5067 = vpack.c.b16 %v4863, %v4859
    %v5068 = vpack.c.b16 %v4864, %v4860
    %v5069 = vpack.c.b16 %v4865, %v4861
    %v5070 = vpack.c.b16 %v4866, %v4862
    %v5071 = vpack.c.b16 %v4871, %v4867
    %v5072 = vpack.c.b16 %v4872, %v4868
    %v5073 = vpack.c.b16 %v4873, %v4869
    %v5074 = vpack.c.b16 %v4874, %v4870
    %v5075 = vpack.c.b16 %v4879, %v4875
    %v5076 = vpack.c.b16 %v4880, %v4876
    %v5077 = vpack.c.b16 %v4881, %v4877
    %v5078 = vpack.c.b16 %v4882, %v4878
    %v5079 = vpack.c.b16 %v4887, %v4883
    %v5080 = vpack.c.b16 %v4888, %v4884
    %v5081 = vpack.c.b16 %v4889, %v4885
    %v5082 = vpack.c.b16 %v4890, %v4886
    %5275 = vmatprep.subr.bf16.mxu0 %v4892
    %5276 = vmatpush1.bf16.msra.mxu0 %v4891
    %5277 = vmatprep.subr.bf16.mxu0 %v4896
    %5278 = vmatpush1.bf16.msra.mxu0 %v4895
    %5279 = vmatprep.subr.bf16.mxu0 %v4900
    %5280 = vmatpush1.bf16.msra.mxu0 %v4899
    %5281 = vmatprep.subr.bf16.mxu0 %v4904
    %5282 = vmatpush1.bf16.msra.mxu0 %v4903
    %5283 = vmatprep.subr.bf16.mxu0 %v4908
    %5284 = vmatpush1.bf16.msra.mxu0 %v4907
    %5285 = vmatprep.subr.bf16.mxu0 %v4912
    %5286 = vmatpush1.bf16.msra.mxu0 %v4911
    %5287 = vmatprep.subr.bf16.mxu0 %v4916
    %5288 = vmatpush1.bf16.msra.mxu0 %v4915
    %5289 = vmatprep.subr.bf16.mxu0 %v4920
    %5290 = vmatpush1.bf16.msra.mxu0 %v4919
    %5291 = vmatprep.subr.bf16.mxu0 %v4924
    %5292 = vmatpush1.bf16.msra.mxu0 %v4923
    %5293 = vmatprep.subr.bf16.mxu0 %v4928
    %5294 = vmatpush1.bf16.msra.mxu0 %v4927
    %5295 = vmatprep.subr.bf16.mxu0 %v4932
    %5296 = vmatpush1.bf16.msra.mxu0 %v4931
    %5297 = vmatprep.subr.bf16.mxu0 %v4936
    %5298 = vmatpush1.bf16.msra.mxu0 %v4935
    %5299 = vmatprep.subr.bf16.mxu0 %v4940
    %5300 = vmatpush1.bf16.msra.mxu0 %v4939
    %5301 = vmatprep.subr.bf16.mxu0 %v4944
    %5302 = vmatpush1.bf16.msra.mxu0 %v4943
    %5303 = vmatprep.subr.bf16.mxu0 %v4948
    %5304 = vmatpush1.bf16.msra.mxu0 %v4947
    %5305 = vmatprep.subr.bf16.mxu0 %v4952
    %5306 = vmatpush1.bf16.msra.mxu0 %v4951
    %5307 = vmatprep.mubr.bf16.mxu0 %v4028
    %5308 = vmatmul.mubr.bf16.gmra.mrb[0].mxu0 %v4027
    %v5309 = vpop.f32.mrb[0].mxu0
    %v5310 = vadd.f32 0.0, %v5309
    %v5311 = vpop.f32.mrb[0].mxu0
    %v5312 = vadd.f32 0.0, %v5311
    %v5313 = vpop.f32.mrb[0].mxu0
    %v5314 = vadd.f32 0.0, %v5313
    %v5315 = vpop.f32.mrb[0].mxu0
    %v5316 = vadd.f32 0.0, %v5315
    %5317 = vmatprep.mubr.bf16.mxu0 %v4034
    %5318 = vmatmul.mubr.bf16.gmra.mrb[0].mxu0 %v4033
    %v5319 = vpop.f32.mrb[0].mxu0
    %v5320 = vadd.f32 0.0, %v5319
    %v5321 = vpop.f32.mrb[0].mxu0
    %v5322 = vadd.f32 0.0, %v5321
    %v5323 = vpop.f32.mrb[0].mxu0
    %v5324 = vadd.f32 0.0, %v5323
    %v5325 = vpop.f32.mrb[0].mxu0
    %v5326 = vadd.f32 0.0, %v5325
    %5327 = vmatprep.mubr.bf16.mxu0 %v4040
    %5328 = vmatmul.mubr.bf16.gmra.mrb[0].mxu0 %v4039
    %v5329 = vpop.f32.mrb[0].mxu0
    %v5330 = vadd.f32 0.0, %v5329
    %v5331 = vpop.f32.mrb[0].mxu0
    %v5332 = vadd.f32 0.0, %v5331
    %v5333 = vpop.f32.mrb[0].mxu0
    %v5334 = vadd.f32 0.0, %v5333
    %v5335 = vpop.f32.mrb[0].mxu0
    %v5336 = vadd.f32 0.0, %v5335
    %5337 = vmatprep.mubr.bf16.mxu0 %v4046
    %5338 = vmatmul.mubr.bf16.gmra.mrb[0].mxu0 %v4045
    %v5339 = vpop.f32.mrb[0].mxu0
    %v5340 = vadd.f32 0.0, %v5339
    %v5341 = vpop.f32.mrb[0].mxu0
    %v5342 = vadd.f32 0.0, %v5341
    %v5343 = vpop.f32.mrb[0].mxu0
    %v5344 = vadd.f32 0.0, %v5343
    %v5345 = vpop.f32.mrb[0].mxu0
    %v5346 = vadd.f32 0.0, %v5345
    %5347 = vmatprep.mubr.bf16.mxu0 %v4052
    %5348 = vmatmul.mubr.bf16.gmra.mrb[0].mxu0 %v4051
    %v5349 = vpop.f32.mrb[0].mxu0
    %v5350 = vadd.f32 0.0, %v5349
    %v5351 = vpop.f32.mrb[0].mxu0
    %v5352 = vadd.f32 0.0, %v5351
    %v5353 = vpop.f32.mrb[0].mxu0
    %v5354 = vadd.f32 0.0, %v5353
    %v5355 = vpop.f32.mrb[0].mxu0
    %v5356 = vadd.f32 0.0, %v5355
    %5357 = vmatprep.mubr.bf16.mxu0 %v4058
    %5358 = vmatmul.mubr.bf16.gmra.mrb[0].mxu0 %v4057
    %v5359 = vpop.f32.mrb[0].mxu0
    %v5360 = vadd.f32 0.0, %v5359
    %v5361 = vpop.f32.mrb[0].mxu0
    %v5362 = vadd.f32 0.0, %v5361
    %v5363 = vpop.f32.mrb[0].mxu0
    %v5364 = vadd.f32 0.0, %v5363
    %v5365 = vpop.f32.mrb[0].mxu0
    %v5366 = vadd.f32 0.0, %v5365
    %5367 = vmatprep.mubr.bf16.mxu0 %v4064
    %5368 = vmatmul.mubr.bf16.gmra.mrb[0].mxu0 %v4063
    %v5369 = vpop.f32.mrb[0].mxu0
    %v5370 = vadd.f32 0.0, %v5369
    %v5371 = vpop.f32.mrb[0].mxu0
    %v5372 = vadd.f32 0.0, %v5371
    %v5373 = vpop.f32.mrb[0].mxu0
    %v5374 = vadd.f32 0.0, %v5373
    %v5375 = vpop.f32.mrb[0].mxu0
    %v5376 = vadd.f32 0.0, %v5375
    %5377 = vmatprep.mubr.bf16.mxu0 %v4070
    %5378 = vmatmul.mubr.bf16.gmra.mrb[0].mxu0 %v4069
    %v5379 = vpop.f32.mrb[0].mxu0
    %v5380 = vadd.f32 0.0, %v5379
    %v5381 = vpop.f32.mrb[0].mxu0
    %v5382 = vadd.f32 0.0, %v5381
    %v5383 = vpop.f32.mrb[0].mxu0
    %v5384 = vadd.f32 0.0, %v5383
    %v5385 = vpop.f32.mrb[0].mxu0
    %v5386 = vadd.f32 0.0, %v5385
    %5387 = vmatprep.mubr.bf16.mxu0 %v4076
    %5388 = vmatmul.mubr.bf16.gmra.mrb[0].mxu0 %v4075
    %v5389 = vpop.f32.mrb[0].mxu0
    %v5390 = vadd.f32 0.0, %v5389
    %v5391 = vpop.f32.mrb[0].mxu0
    %v5392 = vadd.f32 0.0, %v5391
    %v5393 = vpop.f32.mrb[0].mxu0
    %v5394 = vadd.f32 0.0, %v5393
    %v5395 = vpop.f32.mrb[0].mxu0
    %v5396 = vadd.f32 0.0, %v5395
    %5397 = vmatprep.mubr.bf16.mxu0 %v4082
    %5398 = vmatmul.mubr.bf16.gmra.mrb[0].mxu0 %v4081
    %v5399 = vpop.f32.mrb[0].mxu0
    %v5400 = vadd.f32 0.0, %v5399
    %v5401 = vpop.f32.mrb[0].mxu0
    %v5402 = vadd.f32 0.0, %v5401
    %v5403 = vpop.f32.mrb[0].mxu0
    %v5404 = vadd.f32 0.0, %v5403
    %v5405 = vpop.f32.mrb[0].mxu0
    %v5406 = vadd.f32 0.0, %v5405
    %5407 = vmatprep.mubr.bf16.mxu0 %v4088
    %5408 = vmatmul.mubr.bf16.gmra.mrb[0].mxu0 %v4087
    %v5409 = vpop.f32.mrb[0].mxu0
    %v5410 = vadd.f32 0.0, %v5409
    %v5411 = vpop.f32.mrb[0].mxu0
    %v5412 = vadd.f32 0.0, %v5411
    %v5413 = vpop.f32.mrb[0].mxu0
    %v5414 = vadd.f32 0.0, %v5413
    %v5415 = vpop.f32.mrb[0].mxu0
    %v5416 = vadd.f32 0.0, %v5415
    %5417 = vmatprep.mubr.bf16.mxu0 %v4094
    %5418 = vmatmul.mubr.bf16.gmra.mrb[0].mxu0 %v4093
    %v5419 = vpop.f32.mrb[0].mxu0
    %v5420 = vadd.f32 0.0, %v5419
    %v5421 = vpop.f32.mrb[0].mxu0
    %v5422 = vadd.f32 0.0, %v5421
    %v5423 = vpop.f32.mrb[0].mxu0
    %v5424 = vadd.f32 0.0, %v5423
    %v5425 = vpop.f32.mrb[0].mxu0
    %v5426 = vadd.f32 0.0, %v5425
    %5427 = vmatprep.mubr.bf16.mxu0 %v4100
    %5428 = vmatmul.mubr.bf16.gmra.mrb[0].mxu0 %v4099
    %v5429 = vpop.f32.mrb[0].mxu0
    %v5430 = vadd.f32 0.0, %v5429
    %v5431 = vpop.f32.mrb[0].mxu0
    %v5432 = vadd.f32 0.0, %v5431
    %v5433 = vpop.f32.mrb[0].mxu0
    %v5434 = vadd.f32 0.0, %v5433
    %v5435 = vpop.f32.mrb[0].mxu0
    %v5436 = vadd.f32 0.0, %v5435
    %5437 = vmatprep.mubr.bf16.mxu0 %v4106
    %5438 = vmatmul.mubr.bf16.gmra.mrb[0].mxu0 %v4105
    %v5439 = vpop.f32.mrb[0].mxu0
    %v5440 = vadd.f32 0.0, %v5439
    %v5441 = vpop.f32.mrb[0].mxu0
    %v5442 = vadd.f32 0.0, %v5441
    %v5443 = vpop.f32.mrb[0].mxu0
    %v5444 = vadd.f32 0.0, %v5443
    %v5445 = vpop.f32.mrb[0].mxu0
    %v5446 = vadd.f32 0.0, %v5445
    %5447 = vmatprep.mubr.bf16.mxu0 %v4112
    %5448 = vmatmul.mubr.bf16.gmra.mrb[0].mxu0 %v4111
    %v5449 = vpop.f32.mrb[0].mxu0
    %v5450 = vadd.f32 0.0, %v5449
    %v5451 = vpop.f32.mrb[0].mxu0
    %v5452 = vadd.f32 0.0, %v5451
    %v5453 = vpop.f32.mrb[0].mxu0
    %v5454 = vadd.f32 0.0, %v5453
    %v5455 = vpop.f32.mrb[0].mxu0
    %v5456 = vadd.f32 0.0, %v5455
    %5457 = vmatprep.mubr.bf16.mxu0 %v4118
    %5458 = vmatmul.mubr.bf16.gmra.mrb[0].mxu0 %v4117
    %v5459 = vpop.f32.mrb[0].mxu0
    %v5460 = vadd.f32 0.0, %v5459
    %v5461 = vpop.f32.mrb[0].mxu0
    %v5462 = vadd.f32 0.0, %v5461
    %v5463 = vpop.f32.mrb[0].mxu0
    %v5464 = vadd.f32 0.0, %v5463
    %v5465 = vpop.f32.mrb[0].mxu0
    %v5466 = vadd.f32 0.0, %v5465
    %5467 = vdwg.mxu0
    %5468 = vmatprep.subr.bf16.mxu0 %v4956
    %5469 = vmatpush1.bf16.msra.mxu0 %v4955
    %5470 = vmatprep.subr.bf16.mxu0 %v4960
    %5471 = vmatpush1.bf16.msra.mxu0 %v4959
    %5472 = vmatprep.subr.bf16.mxu0 %v4964
    %5473 = vmatpush1.bf16.msra.mxu0 %v4963
    %5474 = vmatprep.subr.bf16.mxu0 %v4968
    %5475 = vmatpush1.bf16.msra.mxu0 %v4967
    %5476 = vmatprep.subr.bf16.mxu0 %v4972
    %5477 = vmatpush1.bf16.msra.mxu0 %v4971
    %5478 = vmatprep.subr.bf16.mxu0 %v4976
    %5479 = vmatpush1.bf16.msra.mxu0 %v4975
    %5480 = vmatprep.subr.bf16.mxu0 %v4980
    %5481 = vmatpush1.bf16.msra.mxu0 %v4979
    %5482 = vmatprep.subr.bf16.mxu0 %v4984
    %5483 = vmatpush1.bf16.msra.mxu0 %v4983
    %5484 = vmatprep.subr.bf16.mxu0 %v4988
    %5485 = vmatpush1.bf16.msra.mxu0 %v4987
    %5486 = vmatprep.subr.bf16.mxu0 %v4992
    %5487 = vmatpush1.bf16.msra.mxu0 %v4991
    %5488 = vmatprep.subr.bf16.mxu0 %v4996
    %5489 = vmatpush1.bf16.msra.mxu0 %v4995
    %5490 = vmatprep.subr.bf16.mxu0 %v5000
    %5491 = vmatpush1.bf16.msra.mxu0 %v4999
    %5492 = vmatprep.subr.bf16.mxu0 %v5004
    %5493 = vmatpush1.bf16.msra.mxu0 %v5003
    %5494 = vmatprep.subr.bf16.mxu0 %v5008
    %5495 = vmatpush1.bf16.msra.mxu0 %v5007
    %5496 = vmatprep.subr.bf16.mxu0 %v5012
    %5497 = vmatpush1.bf16.msra.mxu0 %v5011
    %5498 = vmatprep.subr.bf16.mxu0 %v5016
    %5499 = vmatpush1.bf16.msra.mxu0 %v5015
    %5500 = vmatprep.mubr.bf16.mxu0 %v4030
    %5501 = vmatmul.mubr.bf16.gmra.mrb[0].mxu0 %v4029
    %v5502 = vpop.f32.mrb[0].mxu0
    %v5503 = vadd.f32 %v5310, %v5502
    %v5504 = vpop.f32.mrb[0].mxu0
    %v5505 = vadd.f32 %v5312, %v5504
    %v5506 = vpop.f32.mrb[0].mxu0
    %v5507 = vadd.f32 %v5314, %v5506
    %v5508 = vpop.f32.mrb[0].mxu0
    %v5509 = vadd.f32 %v5316, %v5508
    %5510 = vmatprep.mubr.bf16.mxu0 %v4036
    %5511 = vmatmul.mubr.bf16.gmra.mrb[0].mxu0 %v4035
    %v5512 = vpop.f32.mrb[0].mxu0
    %v5513 = vadd.f32 %v5320, %v5512
    %v5514 = vpop.f32.mrb[0].mxu0
    %v5515 = vadd.f32 %v5322, %v5514
    %v5516 = vpop.f32.mrb[0].mxu0
    %v5517 = vadd.f32 %v5324, %v5516
    %v5518 = vpop.f32.mrb[0].mxu0
    %v5519 = vadd.f32 %v5326, %v5518
    %5520 = vmatprep.mubr.bf16.mxu0 %v4042
    %5521 = vmatmul.mubr.bf16.gmra.mrb[0].mxu0 %v4041
    %v5522 = vpop.f32.mrb[0].mxu0
    %v5523 = vadd.f32 %v5330, %v5522
    %v5524 = vpop.f32.mrb[0].mxu0
    %v5525 = vadd.f32 %v5332, %v5524
    %v5526 = vpop.f32.mrb[0].mxu0
    %v5527 = vadd.f32 %v5334, %v5526
    %v5528 = vpop.f32.mrb[0].mxu0
    %v5529 = vadd.f32 %v5336, %v5528
    %5530 = vmatprep.mubr.bf16.mxu0 %v4048
    %5531 = vmatmul.mubr.bf16.gmra.mrb[0].mxu0 %v4047
    %v5532 = vpop.f32.mrb[0].mxu0
    %v5533 = vadd.f32 %v5340, %v5532
    %v5534 = vpop.f32.mrb[0].mxu0
    %v5535 = vadd.f32 %v5342, %v5534
    %v5536 = vpop.f32.mrb[0].mxu0
    %v5537 = vadd.f32 %v5344, %v5536
    %v5538 = vpop.f32.mrb[0].mxu0
    %v5539 = vadd.f32 %v5346, %v5538
    %5540 = vmatprep.mubr.bf16.mxu0 %v4054
    %5541 = vmatmul.mubr.bf16.gmra.mrb[0].mxu0 %v4053
    %v5542 = vpop.f32.mrb[0].mxu0
    %v5543 = vadd.f32 %v5350, %v5542
    %v5544 = vpop.f32.mrb[0].mxu0
    %v5545 = vadd.f32 %v5352, %v5544
    %v5546 = vpop.f32.mrb[0].mxu0
    %v5547 = vadd.f32 %v5354, %v5546
    %v5548 = vpop.f32.mrb[0].mxu0
    %v5549 = vadd.f32 %v5356, %v5548
    %5550 = vmatprep.mubr.bf16.mxu0 %v4060
    %5551 = vmatmul.mubr.bf16.gmra.mrb[0].mxu0 %v4059
    %v5552 = vpop.f32.mrb[0].mxu0
    %v5553 = vadd.f32 %v5360, %v5552
    %v5554 = vpop.f32.mrb[0].mxu0
    %v5555 = vadd.f32 %v5362, %v5554
    %v5556 = vpop.f32.mrb[0].mxu0
    %v5557 = vadd.f32 %v5364, %v5556
    %v5558 = vpop.f32.mrb[0].mxu0
    %v5559 = vadd.f32 %v5366, %v5558
    %5560 = vmatprep.mubr.bf16.mxu0 %v4066
    %5561 = vmatmul.mubr.bf16.gmra.mrb[0].mxu0 %v4065
    %v5562 = vpop.f32.mrb[0].mxu0
    %v5563 = vadd.f32 %v5370, %v5562
    %v5564 = vpop.f32.mrb[0].mxu0
    %v5565 = vadd.f32 %v5372, %v5564
    %v5566 = vpop.f32.mrb[0].mxu0
    %v5567 = vadd.f32 %v5374, %v5566
    %v5568 = vpop.f32.mrb[0].mxu0
    %v5569 = vadd.f32 %v5376, %v5568
    %5570 = vmatprep.mubr.bf16.mxu0 %v4072
    %5571 = vmatmul.mubr.bf16.gmra.mrb[0].mxu0 %v4071
    %v5572 = vpop.f32.mrb[0].mxu0
    %v5573 = vadd.f32 %v5380, %v5572
    %v5574 = vpop.f32.mrb[0].mxu0
    %v5575 = vadd.f32 %v5382, %v5574
    %v5576 = vpop.f32.mrb[0].mxu0
    %v5577 = vadd.f32 %v5384, %v5576
    %v5578 = vpop.f32.mrb[0].mxu0
    %v5579 = vadd.f32 %v5386, %v5578
    %5580 = vmatprep.mubr.bf16.mxu0 %v4078
    %5581 = vmatmul.mubr.bf16.gmra.mrb[0].mxu0 %v4077
    %v5582 = vpop.f32.mrb[0].mxu0
    %v5583 = vadd.f32 %v5390, %v5582
    %v5584 = vpop.f32.mrb[0].mxu0
    %v5585 = vadd.f32 %v5392, %v5584
    %v5586 = vpop.f32.mrb[0].mxu0
    %v5587 = vadd.f32 %v5394, %v5586
    %v5588 = vpop.f32.mrb[0].mxu0
    %v5589 = vadd.f32 %v5396, %v5588
    %5590 = vmatprep.mubr.bf16.mxu0 %v4084
    %5591 = vmatmul.mubr.bf16.gmra.mrb[0].mxu0 %v4083
    %v5592 = vpop.f32.mrb[0].mxu0
    %v5593 = vadd.f32 %v5400, %v5592
    %v5594 = vpop.f32.mrb[0].mxu0
    %v5595 = vadd.f32 %v5402, %v5594
    %v5596 = vpop.f32.mrb[0].mxu0
    %v5597 = vadd.f32 %v5404, %v5596
    %v5598 = vpop.f32.mrb[0].mxu0
    %v5599 = vadd.f32 %v5406, %v5598
    %5600 = vmatprep.mubr.bf16.mxu0 %v4090
    %5601 = vmatmul.mubr.bf16.gmra.mrb[0].mxu0 %v4089
    %v5602 = vpop.f32.mrb[0].mxu0
    %v5603 = vadd.f32 %v5410, %v5602
    %v5604 = vpop.f32.mrb[0].mxu0
    %v5605 = vadd.f32 %v5412, %v5604
    %v5606 = vpop.f32.mrb[0].mxu0
    %v5607 = vadd.f32 %v5414, %v5606
    %v5608 = vpop.f32.mrb[0].mxu0
    %v5609 = vadd.f32 %v5416, %v5608
    %5610 = vmatprep.mubr.bf16.mxu0 %v4096
    %5611 = vmatmul.mubr.bf16.gmra.mrb[0].mxu0 %v4095
    %v5612 = vpop.f32.mrb[0].mxu0
    %v5613 = vadd.f32 %v5420, %v5612
    %v5614 = vpop.f32.mrb[0].mxu0
    %v5615 = vadd.f32 %v5422, %v5614
    %v5616 = vpop.f32.mrb[0].mxu0
    %v5617 = vadd.f32 %v5424, %v5616
    %v5618 = vpop.f32.mrb[0].mxu0
    %v5619 = vadd.f32 %v5426, %v5618
    %5620 = vmatprep.mubr.bf16.mxu0 %v4102
    %5621 = vmatmul.mubr.bf16.gmra.mrb[0].mxu0 %v4101
    %v5622 = vpop.f32.mrb[0].mxu0
    %v5623 = vadd.f32 %v5430, %v5622
    %v5624 = vpop.f32.mrb[0].mxu0
    %v5625 = vadd.f32 %v5432, %v5624
    %v5626 = vpop.f32.mrb[0].mxu0
    %v5627 = vadd.f32 %v5434, %v5626
    %v5628 = vpop.f32.mrb[0].mxu0
    %v5629 = vadd.f32 %v5436, %v5628
    %5630 = vmatprep.mubr.bf16.mxu0 %v4108
    %5631 = vmatmul.mubr.bf16.gmra.mrb[0].mxu0 %v4107
    %v5632 = vpop.f32.mrb[0].mxu0
    %v5633 = vadd.f32 %v5440, %v5632
    %v5634 = vpop.f32.mrb[0].mxu0
    %v5635 = vadd.f32 %v5442, %v5634
    %v5636 = vpop.f32.mrb[0].mxu0
    %v5637 = vadd.f32 %v5444, %v5636
    %v5638 = vpop.f32.mrb[0].mxu0
    %v5639 = vadd.f32 %v5446, %v5638
    %5640 = vmatprep.mubr.bf16.mxu0 %v4114
    %5641 = vmatmul.mubr.bf16.gmra.mrb[0].mxu0 %v4113
    %v5642 = vpop.f32.mrb[0].mxu0
    %v5643 = vadd.f32 %v5450, %v5642
    %v5644 = vpop.f32.mrb[0].mxu0
    %v5645 = vadd.f32 %v5452, %v5644
    %v5646 = vpop.f32.mrb[0].mxu0
    %v5647 = vadd.f32 %v5454, %v5646
    %v5648 = vpop.f32.mrb[0].mxu0
    %v5649 = vadd.f32 %v5456, %v5648
    %5650 = vmatprep.mubr.bf16.mxu0 %v4120
    %5651 = vmatmul.mubr.bf16.gmra.mrb[0].mxu0 %v4119
    %v5652 = vpop.f32.mrb[0].mxu0
    %v5653 = vadd.f32 %v5460, %v5652
    %v5654 = vpop.f32.mrb[0].mxu0
    %v5655 = vadd.f32 %v5462, %v5654
    %v5656 = vpop.f32.mrb[0].mxu0
    %v5657 = vadd.f32 %v5464, %v5656
    %v5658 = vpop.f32.mrb[0].mxu0
    %v5659 = vadd.f32 %v5466, %v5658
    %5660 = vdwg.mxu0
    %5661 = vmatprep.subr.bf16.mxu0 %v5020
    %5662 = vmatpush1.bf16.msra.mxu0 %v5019
    %5663 = vmatprep.subr.bf16.mxu0 %v5024
    %5664 = vmatpush1.bf16.msra.mxu0 %v5023
    %5665 = vmatprep.subr.bf16.mxu0 %v5028
    %5666 = vmatpush1.bf16.msra.mxu0 %v5027
    %5667 = vmatprep.subr.bf16.mxu0 %v5032
    %5668 = vmatpush1.bf16.msra.mxu0 %v5031
    %5669 = vmatprep.subr.bf16.mxu0 %v5036
    %5670 = vmatpush1.bf16.msra.mxu0 %v5035
    %5671 = vmatprep.subr.bf16.mxu0 %v5040
    %5672 = vmatpush1.bf16.msra.mxu0 %v5039
    %5673 = vmatprep.subr.bf16.mxu0 %v5044
    %5674 = vmatpush1.bf16.msra.mxu0 %v5043
    %5675 = vmatprep.subr.bf16.mxu0 %v5048
    %5676 = vmatpush1.bf16.msra.mxu0 %v5047
    %5677 = vmatprep.subr.bf16.mxu0 %v5052
    %5678 = vmatpush1.bf16.msra.mxu0 %v5051
    %5679 = vmatprep.subr.bf16.mxu0 %v5056
    %5680 = vmatpush1.bf16.msra.mxu0 %v5055
    %5681 = vmatprep.subr.bf16.mxu0 %v5060
    %5682 = vmatpush1.bf16.msra.mxu0 %v5059
    %5683 = vmatprep.subr.bf16.mxu0 %v5064
    %5684 = vmatpush1.bf16.msra.mxu0 %v5063
    %5685 = vmatprep.subr.bf16.mxu0 %v5068
    %5686 = vmatpush1.bf16.msra.mxu0 %v5067
    %5687 = vmatprep.subr.bf16.mxu0 %v5072
    %5688 = vmatpush1.bf16.msra.mxu0 %v5071
    %5689 = vmatprep.subr.bf16.mxu0 %v5076
    %5690 = vmatpush1.bf16.msra.mxu0 %v5075
    %5691 = vmatprep.subr.bf16.mxu0 %v5080
    %5692 = vmatpush1.bf16.msra.mxu0 %v5079
    %5693 = vmatprep.mubr.bf16.mxu0 %v4032
    %5694 = vmatmul.mubr.bf16.gmra.mrb[0].mxu0 %v4031
    %v5695 = vpop.f32.mrb[0].mxu0
    %v5696 = vadd.f32 %v5503, %v5695
    %v5697 = vpop.f32.mrb[0].mxu0
    %v5698 = vadd.f32 %v5505, %v5697
    %v5699 = vpop.f32.mrb[0].mxu0
    %v5700 = vadd.f32 %v5507, %v5699
    %v5701 = vpop.f32.mrb[0].mxu0
    %v5702 = vadd.f32 %v5509, %v5701
    %5703 = vmatprep.mubr.bf16.mxu0 %v4038
    %5704 = vmatmul.mubr.bf16.gmra.mrb[0].mxu0 %v4037
    %v5705 = vpop.f32.mrb[0].mxu0
    %v5706 = vadd.f32 %v5513, %v5705
    %v5707 = vpop.f32.mrb[0].mxu0
    %v5708 = vadd.f32 %v5515, %v5707
    %v5709 = vpop.f32.mrb[0].mxu0
    %v5710 = vadd.f32 %v5517, %v5709
    %v5711 = vpop.f32.mrb[0].mxu0
    %v5712 = vadd.f32 %v5519, %v5711
    %5713 = vmatprep.mubr.bf16.mxu0 %v4044
    %5714 = vmatmul.mubr.bf16.gmra.mrb[0].mxu0 %v4043
    %v5715 = vpop.f32.mrb[0].mxu0
    %v5716 = vadd.f32 %v5523, %v5715
    %v5717 = vpop.f32.mrb[0].mxu0
    %v5718 = vadd.f32 %v5525, %v5717
    %v5719 = vpop.f32.mrb[0].mxu0
    %v5720 = vadd.f32 %v5527, %v5719
    %v5721 = vpop.f32.mrb[0].mxu0
    %v5722 = vadd.f32 %v5529, %v5721
    %5723 = vmatprep.mubr.bf16.mxu0 %v4050
    %5724 = vmatmul.mubr.bf16.gmra.mrb[0].mxu0 %v4049
    %v5725 = vpop.f32.mrb[0].mxu0
    %v5726 = vadd.f32 %v5533, %v5725
    %v5727 = vpop.f32.mrb[0].mxu0
    %v5728 = vadd.f32 %v5535, %v5727
    %v5729 = vpop.f32.mrb[0].mxu0
    %v5730 = vadd.f32 %v5537, %v5729
    %v5731 = vpop.f32.mrb[0].mxu0
    %v5732 = vadd.f32 %v5539, %v5731
    %5733 = vmatprep.mubr.bf16.mxu0 %v4056
    %5734 = vmatmul.mubr.bf16.gmra.mrb[0].mxu0 %v4055
    %v5735 = vpop.f32.mrb[0].mxu0
    %v5736 = vadd.f32 %v5543, %v5735
    %v5737 = vpop.f32.mrb[0].mxu0
    %v5738 = vadd.f32 %v5545, %v5737
    %v5739 = vpop.f32.mrb[0].mxu0
    %v5740 = vadd.f32 %v5547, %v5739
    %v5741 = vpop.f32.mrb[0].mxu0
    %v5742 = vadd.f32 %v5549, %v5741
    %5743 = vmatprep.mubr.bf16.mxu0 %v4062
    %5744 = vmatmul.mubr.bf16.gmra.mrb[0].mxu0 %v4061
    %v5745 = vpop.f32.mrb[0].mxu0
    %v5746 = vadd.f32 %v5553, %v5745
    %v5747 = vpop.f32.mrb[0].mxu0
    %v5748 = vadd.f32 %v5555, %v5747
    %v5749 = vpop.f32.mrb[0].mxu0
    %v5750 = vadd.f32 %v5557, %v5749
    %v5751 = vpop.f32.mrb[0].mxu0
    %v5752 = vadd.f32 %v5559, %v5751
    %5753 = vmatprep.mubr.bf16.mxu0 %v4068
    %5754 = vmatmul.mubr.bf16.gmra.mrb[0].mxu0 %v4067
    %v5755 = vpop.f32.mrb[0].mxu0
    %v5756 = vadd.f32 %v5563, %v5755
    %v5757 = vpop.f32.mrb[0].mxu0
    %v5758 = vadd.f32 %v5565, %v5757
    %v5759 = vpop.f32.mrb[0].mxu0
    %v5760 = vadd.f32 %v5567, %v5759
    %v5761 = vpop.f32.mrb[0].mxu0
    %v5762 = vadd.f32 %v5569, %v5761
    %5763 = vmatprep.mubr.bf16.mxu0 %v4074
    %5764 = vmatmul.mubr.bf16.gmra.mrb[0].mxu0 %v4073
    %v5765 = vpop.f32.mrb[0].mxu0
    %v5766 = vadd.f32 %v5573, %v5765
    %v5767 = vpop.f32.mrb[0].mxu0
    %v5768 = vadd.f32 %v5575, %v5767
    %v5769 = vpop.f32.mrb[0].mxu0
    %v5770 = vadd.f32 %v5577, %v5769
    %v5771 = vpop.f32.mrb[0].mxu0
    %v5772 = vadd.f32 %v5579, %v5771
    %5773 = vmatprep.mubr.bf16.mxu0 %v4080
    %5774 = vmatmul.mubr.bf16.gmra.mrb[0].mxu0 %v4079
    %v5775 = vpop.f32.mrb[0].mxu0
    %v5776 = vadd.f32 %v5583, %v5775
    %v5777 = vpop.f32.mrb[0].mxu0
    %v5778 = vadd.f32 %v5585, %v5777
    %v5779 = vpop.f32.mrb[0].mxu0
    %v5780 = vadd.f32 %v5587, %v5779
    %v5781 = vpop.f32.mrb[0].mxu0
    %v5782 = vadd.f32 %v5589, %v5781
    %5783 = vmatprep.mubr.bf16.mxu0 %v4086
    %5784 = vmatmul.mubr.bf16.gmra.mrb[0].mxu0 %v4085
    %v5785 = vpop.f32.mrb[0].mxu0
    %v5786 = vadd.f32 %v5593, %v5785
    %v5787 = vpop.f32.mrb[0].mxu0
    %v5788 = vadd.f32 %v5595, %v5787
    %v5789 = vpop.f32.mrb[0].mxu0
    %v5790 = vadd.f32 %v5597, %v5789
    %v5791 = vpop.f32.mrb[0].mxu0
    %v5792 = vadd.f32 %v5599, %v5791
    %5793 = vmatprep.mubr.bf16.mxu0 %v4092
    %5794 = vmatmul.mubr.bf16.gmra.mrb[0].mxu0 %v4091
    %v5795 = vpop.f32.mrb[0].mxu0
    %v5796 = vadd.f32 %v5603, %v5795
    %v5797 = vpop.f32.mrb[0].mxu0
    %v5798 = vadd.f32 %v5605, %v5797
    %v5799 = vpop.f32.mrb[0].mxu0
    %v5800 = vadd.f32 %v5607, %v5799
    %v5801 = vpop.f32.mrb[0].mxu0
    %v5802 = vadd.f32 %v5609, %v5801
    %5803 = vmatprep.mubr.bf16.mxu0 %v4098
    %5804 = vmatmul.mubr.bf16.gmra.mrb[0].mxu0 %v4097
    %v5805 = vpop.f32.mrb[0].mxu0
    %v5806 = vadd.f32 %v5613, %v5805
    %v5807 = vpop.f32.mrb[0].mxu0
    %v5808 = vadd.f32 %v5615, %v5807
    %v5809 = vpop.f32.mrb[0].mxu0
    %v5810 = vadd.f32 %v5617, %v5809
    %v5811 = vpop.f32.mrb[0].mxu0
    %v5812 = vadd.f32 %v5619, %v5811
    %5813 = vmatprep.mubr.bf16.mxu0 %v4104
    %5814 = vmatmul.mubr.bf16.gmra.mrb[0].mxu0 %v4103
    %v5815 = vpop.f32.mrb[0].mxu0
    %v5816 = vadd.f32 %v5623, %v5815
    %v5817 = vpop.f32.mrb[0].mxu0
    %v5818 = vadd.f32 %v5625, %v5817
    %v5819 = vpop.f32.mrb[0].mxu0
    %v5820 = vadd.f32 %v5627, %v5819
    %v5821 = vpop.f32.mrb[0].mxu0
    %v5822 = vadd.f32 %v5629, %v5821
    %5823 = vmatprep.mubr.bf16.mxu0 %v4110
    %5824 = vmatmul.mubr.bf16.gmra.mrb[0].mxu0 %v4109
    %v5825 = vpop.f32.mrb[0].mxu0
    %v5826 = vadd.f32 %v5633, %v5825
    %v5827 = vpop.f32.mrb[0].mxu0
    %v5828 = vadd.f32 %v5635, %v5827
    %v5829 = vpop.f32.mrb[0].mxu0
    %v5830 = vadd.f32 %v5637, %v5829
    %v5831 = vpop.f32.mrb[0].mxu0
    %v5832 = vadd.f32 %v5639, %v5831
    %5833 = vmatprep.mubr.bf16.mxu0 %v4116
    %5834 = vmatmul.mubr.bf16.gmra.mrb[0].mxu0 %v4115
    %v5835 = vpop.f32.mrb[0].mxu0
    %v5836 = vadd.f32 %v5643, %v5835
    %v5837 = vpop.f32.mrb[0].mxu0
    %v5838 = vadd.f32 %v5645, %v5837
    %v5839 = vpop.f32.mrb[0].mxu0
    %v5840 = vadd.f32 %v5647, %v5839
    %v5841 = vpop.f32.mrb[0].mxu0
    %v5842 = vadd.f32 %v5649, %v5841
    %5843 = vmatprep.mubr.bf16.mxu0 %v4122
    %5844 = vmatmul.mubr.bf16.gmra.mrb[0].mxu0 %v4121
    %v5845 = vpop.f32.mrb[0].mxu0
    %v5846 = vadd.f32 %v5653, %v5845
    %v5847 = vpop.f32.mrb[0].mxu0
    %v5848 = vadd.f32 %v5655, %v5847
    %v5849 = vpop.f32.mrb[0].mxu0
    %v5850 = vadd.f32 %v5657, %v5849
    %v5851 = vpop.f32.mrb[0].mxu0
    %v5852 = vadd.f32 %v5659, %v5851
    %5853 = vdwg.mxu0
    %5854 = vmatprep.subr.bf16.mxu0 %v4894
    %5855 = vmatpush1.bf16.msra.mxu0 %v4893
    %5856 = vmatprep.subr.bf16.mxu0 %v4898
    %5857 = vmatpush1.bf16.msra.mxu0 %v4897
    %5858 = vmatprep.subr.bf16.mxu0 %v4902
    %5859 = vmatpush1.bf16.msra.mxu0 %v4901
    %5860 = vmatprep.subr.bf16.mxu0 %v4906
    %5861 = vmatpush1.bf16.msra.mxu0 %v4905
    %5862 = vmatprep.subr.bf16.mxu0 %v4910
    %5863 = vmatpush1.bf16.msra.mxu0 %v4909
    %5864 = vmatprep.subr.bf16.mxu0 %v4914
    %5865 = vmatpush1.bf16.msra.mxu0 %v4913
    %5866 = vmatprep.subr.bf16.mxu0 %v4918
    %5867 = vmatpush1.bf16.msra.mxu0 %v4917
    %5868 = vmatprep.subr.bf16.mxu0 %v4922
    %5869 = vmatpush1.bf16.msra.mxu0 %v4921
    %5870 = vmatprep.subr.bf16.mxu0 %v4926
    %5871 = vmatpush1.bf16.msra.mxu0 %v4925
    %5872 = vmatprep.subr.bf16.mxu0 %v4930
    %5873 = vmatpush1.bf16.msra.mxu0 %v4929
    %5874 = vmatprep.subr.bf16.mxu0 %v4934
    %5875 = vmatpush1.bf16.msra.mxu0 %v4933
    %5876 = vmatprep.subr.bf16.mxu0 %v4938
    %5877 = vmatpush1.bf16.msra.mxu0 %v4937
    %5878 = vmatprep.subr.bf16.mxu0 %v4942
    %5879 = vmatpush1.bf16.msra.mxu0 %v4941
    %5880 = vmatprep.subr.bf16.mxu0 %v4946
    %5881 = vmatpush1.bf16.msra.mxu0 %v4945
    %5882 = vmatprep.subr.bf16.mxu0 %v4950
    %5883 = vmatpush1.bf16.msra.mxu0 %v4949
    %5884 = vmatprep.subr.bf16.mxu0 %v4954
    %5885 = vmatpush1.bf16.msra.mxu0 %v4953
    %5886 = vmatprep.mubr.bf16.mxu0 %v4028
    %5887 = vmatmul.mubr.bf16.gmra.mrb[0].mxu0 %v4027
    %v5888 = vpop.f32.mrb[0].mxu0
    %v5889 = vadd.f32 0.0, %v5888
    %v5890 = vpop.f32.mrb[0].mxu0
    %v5891 = vadd.f32 0.0, %v5890
    %v5892 = vpop.f32.mrb[0].mxu0
    %v5893 = vadd.f32 0.0, %v5892
    %v5894 = vpop.f32.mrb[0].mxu0
    %v5895 = vadd.f32 0.0, %v5894
    %5896 = vmatprep.mubr.bf16.mxu0 %v4034
    %5897 = vmatmul.mubr.bf16.gmra.mrb[0].mxu0 %v4033
    %v5898 = vpop.f32.mrb[0].mxu0
    %v5899 = vadd.f32 0.0, %v5898
    %v5900 = vpop.f32.mrb[0].mxu0
    %v5901 = vadd.f32 0.0, %v5900
    %v5902 = vpop.f32.mrb[0].mxu0
    %v5903 = vadd.f32 0.0, %v5902
    %v5904 = vpop.f32.mrb[0].mxu0
    %v5905 = vadd.f32 0.0, %v5904
    %5906 = vmatprep.mubr.bf16.mxu0 %v4040
    %5907 = vmatmul.mubr.bf16.gmra.mrb[0].mxu0 %v4039
    %v5908 = vpop.f32.mrb[0].mxu0
    %v5909 = vadd.f32 0.0, %v5908
    %v5910 = vpop.f32.mrb[0].mxu0
    %v5911 = vadd.f32 0.0, %v5910
    %v5912 = vpop.f32.mrb[0].mxu0
    %v5913 = vadd.f32 0.0, %v5912
    %v5914 = vpop.f32.mrb[0].mxu0
    %v5915 = vadd.f32 0.0, %v5914
    %5916 = vmatprep.mubr.bf16.mxu0 %v4046
    %5917 = vmatmul.mubr.bf16.gmra.mrb[0].mxu0 %v4045
    %v5918 = vpop.f32.mrb[0].mxu0
    %v5919 = vadd.f32 0.0, %v5918
    %v5920 = vpop.f32.mrb[0].mxu0
    %v5921 = vadd.f32 0.0, %v5920
    %v5922 = vpop.f32.mrb[0].mxu0
    %v5923 = vadd.f32 0.0, %v5922
    %v5924 = vpop.f32.mrb[0].mxu0
    %v5925 = vadd.f32 0.0, %v5924
    %5926 = vmatprep.mubr.bf16.mxu0 %v4052
    %5927 = vmatmul.mubr.bf16.gmra.mrb[0].mxu0 %v4051
    %v5928 = vpop.f32.mrb[0].mxu0
    %v5929 = vadd.f32 0.0, %v5928
    %v5930 = vpop.f32.mrb[0].mxu0
    %v5931 = vadd.f32 0.0, %v5930
    %v5932 = vpop.f32.mrb[0].mxu0
    %v5933 = vadd.f32 0.0, %v5932
    %v5934 = vpop.f32.mrb[0].mxu0
    %v5935 = vadd.f32 0.0, %v5934
    %5936 = vmatprep.mubr.bf16.mxu0 %v4058
    %5937 = vmatmul.mubr.bf16.gmra.mrb[0].mxu0 %v4057
    %v5938 = vpop.f32.mrb[0].mxu0
    %v5939 = vadd.f32 0.0, %v5938
    %v5940 = vpop.f32.mrb[0].mxu0
    %v5941 = vadd.f32 0.0, %v5940
    %v5942 = vpop.f32.mrb[0].mxu0
    %v5943 = vadd.f32 0.0, %v5942
    %v5944 = vpop.f32.mrb[0].mxu0
    %v5945 = vadd.f32 0.0, %v5944
    %5946 = vmatprep.mubr.bf16.mxu0 %v4064
    %5947 = vmatmul.mubr.bf16.gmra.mrb[0].mxu0 %v4063
    %v5948 = vpop.f32.mrb[0].mxu0
    %v5949 = vadd.f32 0.0, %v5948
    %v5950 = vpop.f32.mrb[0].mxu0
    %v5951 = vadd.f32 0.0, %v5950
    %v5952 = vpop.f32.mrb[0].mxu0
    %v5953 = vadd.f32 0.0, %v5952
    %v5954 = vpop.f32.mrb[0].mxu0
    %v5955 = vadd.f32 0.0, %v5954
    %5956 = vmatprep.mubr.bf16.mxu0 %v4070
    %5957 = vmatmul.mubr.bf16.gmra.mrb[0].mxu0 %v4069
    %v5958 = vpop.f32.mrb[0].mxu0
    %v5959 = vadd.f32 0.0, %v5958
    %v5960 = vpop.f32.mrb[0].mxu0
    %v5961 = vadd.f32 0.0, %v5960
    %v5962 = vpop.f32.mrb[0].mxu0
    %v5963 = vadd.f32 0.0, %v5962
    %v5964 = vpop.f32.mrb[0].mxu0
    %v5965 = vadd.f32 0.0, %v5964
    %5966 = vmatprep.mubr.bf16.mxu0 %v4076
    %5967 = vmatmul.mubr.bf16.gmra.mrb[0].mxu0 %v4075
    %v5968 = vpop.f32.mrb[0].mxu0
    %v5969 = vadd.f32 0.0, %v5968
    %v5970 = vpop.f32.mrb[0].mxu0
    %v5971 = vadd.f32 0.0, %v5970
    %v5972 = vpop.f32.mrb[0].mxu0
    %v5973 = vadd.f32 0.0, %v5972
    %v5974 = vpop.f32.mrb[0].mxu0
    %v5975 = vadd.f32 0.0, %v5974
    %5976 = vmatprep.mubr.bf16.mxu0 %v4082
    %5977 = vmatmul.mubr.bf16.gmra.mrb[0].mxu0 %v4081
    %v5978 = vpop.f32.mrb[0].mxu0
    %v5979 = vadd.f32 0.0, %v5978
    %v5980 = vpop.f32.mrb[0].mxu0
    %v5981 = vadd.f32 0.0, %v5980
    %v5982 = vpop.f32.mrb[0].mxu0
    %v5983 = vadd.f32 0.0, %v5982
    %v5984 = vpop.f32.mrb[0].mxu0
    %v5985 = vadd.f32 0.0, %v5984
    %5986 = vmatprep.mubr.bf16.mxu0 %v4088
    %5987 = vmatmul.mubr.bf16.gmra.mrb[0].mxu0 %v4087
    %v5988 = vpop.f32.mrb[0].mxu0
    %v5989 = vadd.f32 0.0, %v5988
    %v5990 = vpop.f32.mrb[0].mxu0
    %v5991 = vadd.f32 0.0, %v5990
    %v5992 = vpop.f32.mrb[0].mxu0
    %v5993 = vadd.f32 0.0, %v5992
    %v5994 = vpop.f32.mrb[0].mxu0
    %v5995 = vadd.f32 0.0, %v5994
    %5996 = vmatprep.mubr.bf16.mxu0 %v4094
    %5997 = vmatmul.mubr.bf16.gmra.mrb[0].mxu0 %v4093
    %v5998 = vpop.f32.mrb[0].mxu0
    %v5999 = vadd.f32 0.0, %v5998
    %v6000 = vpop.f32.mrb[0].mxu0
    %v6001 = vadd.f32 0.0, %v6000
    %v6002 = vpop.f32.mrb[0].mxu0
    %v6003 = vadd.f32 0.0, %v6002
    %v6004 = vpop.f32.mrb[0].mxu0
    %v6005 = vadd.f32 0.0, %v6004
    %6006 = vmatprep.mubr.bf16.mxu0 %v4100
    %6007 = vmatmul.mubr.bf16.gmra.mrb[0].mxu0 %v4099
    %v6008 = vpop.f32.mrb[0].mxu0
    %v6009 = vadd.f32 0.0, %v6008
    %v6010 = vpop.f32.mrb[0].mxu0
    %v6011 = vadd.f32 0.0, %v6010
    %v6012 = vpop.f32.mrb[0].mxu0
    %v6013 = vadd.f32 0.0, %v6012
    %v6014 = vpop.f32.mrb[0].mxu0
    %v6015 = vadd.f32 0.0, %v6014
    %6016 = vmatprep.mubr.bf16.mxu0 %v4106
    %6017 = vmatmul.mubr.bf16.gmra.mrb[0].mxu0 %v4105
    %v6018 = vpop.f32.mrb[0].mxu0
    %v6019 = vadd.f32 0.0, %v6018
    %v6020 = vpop.f32.mrb[0].mxu0
    %v6021 = vadd.f32 0.0, %v6020
    %v6022 = vpop.f32.mrb[0].mxu0
    %v6023 = vadd.f32 0.0, %v6022
    %v6024 = vpop.f32.mrb[0].mxu0
    %v6025 = vadd.f32 0.0, %v6024
    %6026 = vmatprep.mubr.bf16.mxu0 %v4112
    %6027 = vmatmul.mubr.bf16.gmra.mrb[0].mxu0 %v4111
    %v6028 = vpop.f32.mrb[0].mxu0
    %v6029 = vadd.f32 0.0, %v6028
    %v6030 = vpop.f32.mrb[0].mxu0
    %v6031 = vadd.f32 0.0, %v6030
    %v6032 = vpop.f32.mrb[0].mxu0
    %v6033 = vadd.f32 0.0, %v6032
    %v6034 = vpop.f32.mrb[0].mxu0
    %v6035 = vadd.f32 0.0, %v6034
    %6036 = vmatprep.mubr.bf16.mxu0 %v4118
    %6037 = vmatmul.mubr.bf16.gmra.mrb[0].mxu0 %v4117
    %v6038 = vpop.f32.mrb[0].mxu0
    %v6039 = vadd.f32 0.0, %v6038
    %v6040 = vpop.f32.mrb[0].mxu0
    %v6041 = vadd.f32 0.0, %v6040
    %v6042 = vpop.f32.mrb[0].mxu0
    %v6043 = vadd.f32 0.0, %v6042
    %v6044 = vpop.f32.mrb[0].mxu0
    %v6045 = vadd.f32 0.0, %v6044
    %6046 = vdwg.mxu0
    %6047 = vmatprep.subr.bf16.mxu0 %v4958
    %6048 = vmatpush1.bf16.msra.mxu0 %v4957
    %6049 = vmatprep.subr.bf16.mxu0 %v4962
    %6050 = vmatpush1.bf16.msra.mxu0 %v4961
    %6051 = vmatprep.subr.bf16.mxu0 %v4966
    %6052 = vmatpush1.bf16.msra.mxu0 %v4965
    %6053 = vmatprep.subr.bf16.mxu0 %v4970
    %6054 = vmatpush1.bf16.msra.mxu0 %v4969
    %6055 = vmatprep.subr.bf16.mxu0 %v4974
    %6056 = vmatpush1.bf16.msra.mxu0 %v4973
    %6057 = vmatprep.subr.bf16.mxu0 %v4978
    %6058 = vmatpush1.bf16.msra.mxu0 %v4977
    %6059 = vmatprep.subr.bf16.mxu0 %v4982
    %6060 = vmatpush1.bf16.msra.mxu0 %v4981
    %6061 = vmatprep.subr.bf16.mxu0 %v4986
    %6062 = vmatpush1.bf16.msra.mxu0 %v4985
    %6063 = vmatprep.subr.bf16.mxu0 %v4990
    %6064 = vmatpush1.bf16.msra.mxu0 %v4989
    %6065 = vmatprep.subr.bf16.mxu0 %v4994
    %6066 = vmatpush1.bf16.msra.mxu0 %v4993
    %6067 = vmatprep.subr.bf16.mxu0 %v4998
    %6068 = vmatpush1.bf16.msra.mxu0 %v4997
    %6069 = vmatprep.subr.bf16.mxu0 %v5002
    %6070 = vmatpush1.bf16.msra.mxu0 %v5001
    %6071 = vmatprep.subr.bf16.mxu0 %v5006
    %6072 = vmatpush1.bf16.msra.mxu0 %v5005
    %6073 = vmatprep.subr.bf16.mxu0 %v5010
    %6074 = vmatpush1.bf16.msra.mxu0 %v5009
    %6075 = vmatprep.subr.bf16.mxu0 %v5014
    %6076 = vmatpush1.bf16.msra.mxu0 %v5013
    %6077 = vmatprep.subr.bf16.mxu0 %v5018
    %6078 = vmatpush1.bf16.msra.mxu0 %v5017
    %6079 = vmatprep.mubr.bf16.mxu0 %v4030
    %6080 = vmatmul.mubr.bf16.gmra.mrb[0].mxu0 %v4029
    %v6081 = vpop.f32.mrb[0].mxu0
    %v6082 = vadd.f32 %v5889, %v6081
    %v6083 = vpop.f32.mrb[0].mxu0
    %v6084 = vadd.f32 %v5891, %v6083
    %v6085 = vpop.f32.mrb[0].mxu0
    %v6086 = vadd.f32 %v5893, %v6085
    %v6087 = vpop.f32.mrb[0].mxu0
    %v6088 = vadd.f32 %v5895, %v6087
    %6089 = vmatprep.mubr.bf16.mxu0 %v4036
    %6090 = vmatmul.mubr.bf16.gmra.mrb[0].mxu0 %v4035
    %v6091 = vpop.f32.mrb[0].mxu0
    %v6092 = vadd.f32 %v5899, %v6091
    %v6093 = vpop.f32.mrb[0].mxu0
    %v6094 = vadd.f32 %v5901, %v6093
    %v6095 = vpop.f32.mrb[0].mxu0
    %v6096 = vadd.f32 %v5903, %v6095
    %v6097 = vpop.f32.mrb[0].mxu0
    %v6098 = vadd.f32 %v5905, %v6097
    %6099 = vmatprep.mubr.bf16.mxu0 %v4042
    %6100 = vmatmul.mubr.bf16.gmra.mrb[0].mxu0 %v4041
    %v6101 = vpop.f32.mrb[0].mxu0
    %v6102 = vadd.f32 %v5909, %v6101
    %v6103 = vpop.f32.mrb[0].mxu0
    %v6104 = vadd.f32 %v5911, %v6103
    %v6105 = vpop.f32.mrb[0].mxu0
    %v6106 = vadd.f32 %v5913, %v6105
    %v6107 = vpop.f32.mrb[0].mxu0
    %v6108 = vadd.f32 %v5915, %v6107
    %6109 = vmatprep.mubr.bf16.mxu0 %v4048
    %6110 = vmatmul.mubr.bf16.gmra.mrb[0].mxu0 %v4047
    %v6111 = vpop.f32.mrb[0].mxu0
    %v6112 = vadd.f32 %v5919, %v6111
    %v6113 = vpop.f32.mrb[0].mxu0
    %v6114 = vadd.f32 %v5921, %v6113
    %v6115 = vpop.f32.mrb[0].mxu0
    %v6116 = vadd.f32 %v5923, %v6115
    %v6117 = vpop.f32.mrb[0].mxu0
    %v6118 = vadd.f32 %v5925, %v6117
    %6119 = vmatprep.mubr.bf16.mxu0 %v4054
    %6120 = vmatmul.mubr.bf16.gmra.mrb[0].mxu0 %v4053
    %v6121 = vpop.f32.mrb[0].mxu0
    %v6122 = vadd.f32 %v5929, %v6121
    %v6123 = vpop.f32.mrb[0].mxu0
    %v6124 = vadd.f32 %v5931, %v6123
    %v6125 = vpop.f32.mrb[0].mxu0
    %v6126 = vadd.f32 %v5933, %v6125
    %v6127 = vpop.f32.mrb[0].mxu0
    %v6128 = vadd.f32 %v5935, %v6127
    %6129 = vmatprep.mubr.bf16.mxu0 %v4060
    %6130 = vmatmul.mubr.bf16.gmra.mrb[0].mxu0 %v4059
    %v6131 = vpop.f32.mrb[0].mxu0
    %v6132 = vadd.f32 %v5939, %v6131
    %v6133 = vpop.f32.mrb[0].mxu0
    %v6134 = vadd.f32 %v5941, %v6133
    %v6135 = vpop.f32.mrb[0].mxu0
    %v6136 = vadd.f32 %v5943, %v6135
    %v6137 = vpop.f32.mrb[0].mxu0
    %v6138 = vadd.f32 %v5945, %v6137
    %6139 = vmatprep.mubr.bf16.mxu0 %v4066
    %6140 = vmatmul.mubr.bf16.gmra.mrb[0].mxu0 %v4065
    %v6141 = vpop.f32.mrb[0].mxu0
    %v6142 = vadd.f32 %v5949, %v6141
    %v6143 = vpop.f32.mrb[0].mxu0
    %v6144 = vadd.f32 %v5951, %v6143
    %v6145 = vpop.f32.mrb[0].mxu0
    %v6146 = vadd.f32 %v5953, %v6145
    %v6147 = vpop.f32.mrb[0].mxu0
    %v6148 = vadd.f32 %v5955, %v6147
    %6149 = vmatprep.mubr.bf16.mxu0 %v4072
    %6150 = vmatmul.mubr.bf16.gmra.mrb[0].mxu0 %v4071
    %v6151 = vpop.f32.mrb[0].mxu0
    %v6152 = vadd.f32 %v5959, %v6151
    %v6153 = vpop.f32.mrb[0].mxu0
    %v6154 = vadd.f32 %v5961, %v6153
    %v6155 = vpop.f32.mrb[0].mxu0
    %v6156 = vadd.f32 %v5963, %v6155
    %v6157 = vpop.f32.mrb[0].mxu0
    %v6158 = vadd.f32 %v5965, %v6157
    %6159 = vmatprep.mubr.bf16.mxu0 %v4078
    %6160 = vmatmul.mubr.bf16.gmra.mrb[0].mxu0 %v4077
    %v6161 = vpop.f32.mrb[0].mxu0
    %v6162 = vadd.f32 %v5969, %v6161
    %v6163 = vpop.f32.mrb[0].mxu0
    %v6164 = vadd.f32 %v5971, %v6163
    %v6165 = vpop.f32.mrb[0].mxu0
    %v6166 = vadd.f32 %v5973, %v6165
    %v6167 = vpop.f32.mrb[0].mxu0
    %v6168 = vadd.f32 %v5975, %v6167
    %6169 = vmatprep.mubr.bf16.mxu0 %v4084
    %6170 = vmatmul.mubr.bf16.gmra.mrb[0].mxu0 %v4083
    %v6171 = vpop.f32.mrb[0].mxu0
    %v6172 = vadd.f32 %v5979, %v6171
    %v6173 = vpop.f32.mrb[0].mxu0
    %v6174 = vadd.f32 %v5981, %v6173
    %v6175 = vpop.f32.mrb[0].mxu0
    %v6176 = vadd.f32 %v5983, %v6175
    %v6177 = vpop.f32.mrb[0].mxu0
    %v6178 = vadd.f32 %v5985, %v6177
    %6179 = vmatprep.mubr.bf16.mxu0 %v4090
    %6180 = vmatmul.mubr.bf16.gmra.mrb[0].mxu0 %v4089
    %v6181 = vpop.f32.mrb[0].mxu0
    %v6182 = vadd.f32 %v5989, %v6181
    %v6183 = vpop.f32.mrb[0].mxu0
    %v6184 = vadd.f32 %v5991, %v6183
    %v6185 = vpop.f32.mrb[0].mxu0
    %v6186 = vadd.f32 %v5993, %v6185
    %v6187 = vpop.f32.mrb[0].mxu0
    %v6188 = vadd.f32 %v5995, %v6187
    %6189 = vmatprep.mubr.bf16.mxu0 %v4096
    %6190 = vmatmul.mubr.bf16.gmra.mrb[0].mxu0 %v4095
    %v6191 = vpop.f32.mrb[0].mxu0
    %v6192 = vadd.f32 %v5999, %v6191
    %v6193 = vpop.f32.mrb[0].mxu0
    %v6194 = vadd.f32 %v6001, %v6193
    %v6195 = vpop.f32.mrb[0].mxu0
    %v6196 = vadd.f32 %v6003, %v6195
    %v6197 = vpop.f32.mrb[0].mxu0
    %v6198 = vadd.f32 %v6005, %v6197
    %6199 = vmatprep.mubr.bf16.mxu0 %v4102
    %6200 = vmatmul.mubr.bf16.gmra.mrb[0].mxu0 %v4101
    %v6201 = vpop.f32.mrb[0].mxu0
    %v6202 = vadd.f32 %v6009, %v6201
    %v6203 = vpop.f32.mrb[0].mxu0
    %v6204 = vadd.f32 %v6011, %v6203
    %v6205 = vpop.f32.mrb[0].mxu0
    %v6206 = vadd.f32 %v6013, %v6205
    %v6207 = vpop.f32.mrb[0].mxu0
    %v6208 = vadd.f32 %v6015, %v6207
    %6209 = vmatprep.mubr.bf16.mxu0 %v4108
    %6210 = vmatmul.mubr.bf16.gmra.mrb[0].mxu0 %v4107
    %v6211 = vpop.f32.mrb[0].mxu0
    %v6212 = vadd.f32 %v6019, %v6211
    %v6213 = vpop.f32.mrb[0].mxu0
    %v6214 = vadd.f32 %v6021, %v6213
    %v6215 = vpop.f32.mrb[0].mxu0
    %v6216 = vadd.f32 %v6023, %v6215
    %v6217 = vpop.f32.mrb[0].mxu0
    %v6218 = vadd.f32 %v6025, %v6217
    %6219 = vmatprep.mubr.bf16.mxu0 %v4114
    %6220 = vmatmul.mubr.bf16.gmra.mrb[0].mxu0 %v4113
    %v6221 = vpop.f32.mrb[0].mxu0
    %v6222 = vadd.f32 %v6029, %v6221
    %v6223 = vpop.f32.mrb[0].mxu0
    %v6224 = vadd.f32 %v6031, %v6223
    %v6225 = vpop.f32.mrb[0].mxu0
    %v6226 = vadd.f32 %v6033, %v6225
    %v6227 = vpop.f32.mrb[0].mxu0
    %v6228 = vadd.f32 %v6035, %v6227
    %6229 = vmatprep.mubr.bf16.mxu0 %v4120
    %6230 = vmatmul.mubr.bf16.gmra.mrb[0].mxu0 %v4119
    %v6231 = vpop.f32.mrb[0].mxu0
    %v6232 = vadd.f32 %v6039, %v6231
    %v6233 = vpop.f32.mrb[0].mxu0
    %v6234 = vadd.f32 %v6041, %v6233
    %v6235 = vpop.f32.mrb[0].mxu0
    %v6236 = vadd.f32 %v6043, %v6235
    %v6237 = vpop.f32.mrb[0].mxu0
    %v6238 = vadd.f32 %v6045, %v6237
    %6239 = vdwg.mxu0
    %6240 = vmatprep.subr.bf16.mxu0 %v5022
    %6241 = vmatpush1.bf16.msra.mxu0 %v5021
    %6242 = vmatprep.subr.bf16.mxu0 %v5026
    %6243 = vmatpush1.bf16.msra.mxu0 %v5025
    %6244 = vmatprep.subr.bf16.mxu0 %v5030
    %6245 = vmatpush1.bf16.msra.mxu0 %v5029
    %6246 = vmatprep.subr.bf16.mxu0 %v5034
    %6247 = vmatpush1.bf16.msra.mxu0 %v5033
    %6248 = vmatprep.subr.bf16.mxu0 %v5038
    %6249 = vmatpush1.bf16.msra.mxu0 %v5037
    %6250 = vmatprep.subr.bf16.mxu0 %v5042
    %6251 = vmatpush1.bf16.msra.mxu0 %v5041
    %6252 = vmatprep.subr.bf16.mxu0 %v5046
    %6253 = vmatpush1.bf16.msra.mxu0 %v5045
    %6254 = vmatprep.subr.bf16.mxu0 %v5050
    %6255 = vmatpush1.bf16.msra.mxu0 %v5049
    %6256 = vmatprep.subr.bf16.mxu0 %v5054
    %6257 = vmatpush1.bf16.msra.mxu0 %v5053
    %6258 = vmatprep.subr.bf16.mxu0 %v5058
    %6259 = vmatpush1.bf16.msra.mxu0 %v5057
    %6260 = vmatprep.subr.bf16.mxu0 %v5062
    %6261 = vmatpush1.bf16.msra.mxu0 %v5061
    %6262 = vmatprep.subr.bf16.mxu0 %v5066
    %6263 = vmatpush1.bf16.msra.mxu0 %v5065
    %6264 = vmatprep.subr.bf16.mxu0 %v5070
    %6265 = vmatpush1.bf16.msra.mxu0 %v5069
    %6266 = vmatprep.subr.bf16.mxu0 %v5074
    %6267 = vmatpush1.bf16.msra.mxu0 %v5073
    %6268 = vmatprep.subr.bf16.mxu0 %v5078
    %6269 = vmatpush1.bf16.msra.mxu0 %v5077
    %6270 = vmatprep.subr.bf16.mxu0 %v5082
    %6271 = vmatpush1.bf16.msra.mxu0 %v5081
    %6272 = vmatprep.mubr.bf16.mxu0 %v4032
    %6273 = vmatmul.mubr.bf16.gmra.mrb[0].mxu0 %v4031
    %v6274 = vpop.f32.mrb[0].mxu0
    %v6275 = vadd.f32 %v6082, %v6274
    %v6276 = vpop.f32.mrb[0].mxu0
    %v6277 = vadd.f32 %v6084, %v6276
    %v6278 = vpop.f32.mrb[0].mxu0
    %v6279 = vadd.f32 %v6086, %v6278
    %v6280 = vpop.f32.mrb[0].mxu0
    %v6281 = vadd.f32 %v6088, %v6280
    %6282 = vmatprep.mubr.bf16.mxu0 %v4038
    %6283 = vmatmul.mubr.bf16.gmra.mrb[0].mxu0 %v4037
    %v6284 = vpop.f32.mrb[0].mxu0
    %v6285 = vadd.f32 %v6092, %v6284
    %v6286 = vpop.f32.mrb[0].mxu0
    %v6287 = vadd.f32 %v6094, %v6286
    %v6288 = vpop.f32.mrb[0].mxu0
    %v6289 = vadd.f32 %v6096, %v6288
    %v6290 = vpop.f32.mrb[0].mxu0
    %v6291 = vadd.f32 %v6098, %v6290
    %6292 = vmatprep.mubr.bf16.mxu0 %v4044
    %6293 = vmatmul.mubr.bf16.gmra.mrb[0].mxu0 %v4043
    %v6294 = vpop.f32.mrb[0].mxu0
    %v6295 = vadd.f32 %v6102, %v6294
    %v6296 = vpop.f32.mrb[0].mxu0
    %v6297 = vadd.f32 %v6104, %v6296
    %v6298 = vpop.f32.mrb[0].mxu0
    %v6299 = vadd.f32 %v6106, %v6298
    %v6300 = vpop.f32.mrb[0].mxu0
    %v6301 = vadd.f32 %v6108, %v6300
    %6302 = vmatprep.mubr.bf16.mxu0 %v4050
    %6303 = vmatmul.mubr.bf16.gmra.mrb[0].mxu0 %v4049
    %v6304 = vpop.f32.mrb[0].mxu0
    %v6305 = vadd.f32 %v6112, %v6304
    %v6306 = vpop.f32.mrb[0].mxu0
    %v6307 = vadd.f32 %v6114, %v6306
    %v6308 = vpop.f32.mrb[0].mxu0
    %v6309 = vadd.f32 %v6116, %v6308
    %v6310 = vpop.f32.mrb[0].mxu0
    %v6311 = vadd.f32 %v6118, %v6310
    %6312 = vmatprep.mubr.bf16.mxu0 %v4056
    %6313 = vmatmul.mubr.bf16.gmra.mrb[0].mxu0 %v4055
    %v6314 = vpop.f32.mrb[0].mxu0
    %v6315 = vadd.f32 %v6122, %v6314
    %v6316 = vpop.f32.mrb[0].mxu0
    %v6317 = vadd.f32 %v6124, %v6316
    %v6318 = vpop.f32.mrb[0].mxu0
    %v6319 = vadd.f32 %v6126, %v6318
    %v6320 = vpop.f32.mrb[0].mxu0
    %v6321 = vadd.f32 %v6128, %v6320
    %6322 = vmatprep.mubr.bf16.mxu0 %v4062
    %6323 = vmatmul.mubr.bf16.gmra.mrb[0].mxu0 %v4061
    %v6324 = vpop.f32.mrb[0].mxu0
    %v6325 = vadd.f32 %v6132, %v6324
    %v6326 = vpop.f32.mrb[0].mxu0
    %v6327 = vadd.f32 %v6134, %v6326
    %v6328 = vpop.f32.mrb[0].mxu0
    %v6329 = vadd.f32 %v6136, %v6328
    %v6330 = vpop.f32.mrb[0].mxu0
    %v6331 = vadd.f32 %v6138, %v6330
    %6332 = vmatprep.mubr.bf16.mxu0 %v4068
    %6333 = vmatmul.mubr.bf16.gmra.mrb[0].mxu0 %v4067
    %v6334 = vpop.f32.mrb[0].mxu0
    %v6335 = vadd.f32 %v6142, %v6334
    %v6336 = vpop.f32.mrb[0].mxu0
    %v6337 = vadd.f32 %v6144, %v6336
    %v6338 = vpop.f32.mrb[0].mxu0
    %v6339 = vadd.f32 %v6146, %v6338
    %v6340 = vpop.f32.mrb[0].mxu0
    %v6341 = vadd.f32 %v6148, %v6340
    %6342 = vmatprep.mubr.bf16.mxu0 %v4074
    %6343 = vmatmul.mubr.bf16.gmra.mrb[0].mxu0 %v4073
    %v6344 = vpop.f32.mrb[0].mxu0
    %v6345 = vadd.f32 %v6152, %v6344
    %v6346 = vpop.f32.mrb[0].mxu0
    %v6347 = vadd.f32 %v6154, %v6346
    %v6348 = vpop.f32.mrb[0].mxu0
    %v6349 = vadd.f32 %v6156, %v6348
    %v6350 = vpop.f32.mrb[0].mxu0
    %v6351 = vadd.f32 %v6158, %v6350
    %6352 = vmatprep.mubr.bf16.mxu0 %v4080
    %6353 = vmatmul.mubr.bf16.gmra.mrb[0].mxu0 %v4079
    %v6354 = vpop.f32.mrb[0].mxu0
    %v6355 = vadd.f32 %v6162, %v6354
    %v6356 = vpop.f32.mrb[0].mxu0
    %v6357 = vadd.f32 %v6164, %v6356
    %v6358 = vpop.f32.mrb[0].mxu0
    %v6359 = vadd.f32 %v6166, %v6358
    %v6360 = vpop.f32.mrb[0].mxu0
    %v6361 = vadd.f32 %v6168, %v6360
    %6362 = vmatprep.mubr.bf16.mxu0 %v4086
    %6363 = vmatmul.mubr.bf16.gmra.mrb[0].mxu0 %v4085
    %v6364 = vpop.f32.mrb[0].mxu0
    %v6365 = vadd.f32 %v6172, %v6364
    %v6366 = vpop.f32.mrb[0].mxu0
    %v6367 = vadd.f32 %v6174, %v6366
    %v6368 = vpop.f32.mrb[0].mxu0
    %v6369 = vadd.f32 %v6176, %v6368
    %v6370 = vpop.f32.mrb[0].mxu0
    %v6371 = vadd.f32 %v6178, %v6370
    %6372 = vmatprep.mubr.bf16.mxu0 %v4092
    %6373 = vmatmul.mubr.bf16.gmra.mrb[0].mxu0 %v4091
    %v6374 = vpop.f32.mrb[0].mxu0
    %v6375 = vadd.f32 %v6182, %v6374
    %v6376 = vpop.f32.mrb[0].mxu0
    %v6377 = vadd.f32 %v6184, %v6376
    %v6378 = vpop.f32.mrb[0].mxu0
    %v6379 = vadd.f32 %v6186, %v6378
    %v6380 = vpop.f32.mrb[0].mxu0
    %v6381 = vadd.f32 %v6188, %v6380
    %6382 = vmatprep.mubr.bf16.mxu0 %v4098
    %6383 = vmatmul.mubr.bf16.gmra.mrb[0].mxu0 %v4097
    %v6384 = vpop.f32.mrb[0].mxu0
    %v6385 = vadd.f32 %v6192, %v6384
    %v6386 = vpop.f32.mrb[0].mxu0
    %v6387 = vadd.f32 %v6194, %v6386
    %v6388 = vpop.f32.mrb[0].mxu0
    %v6389 = vadd.f32 %v6196, %v6388
    %v6390 = vpop.f32.mrb[0].mxu0
    %v6391 = vadd.f32 %v6198, %v6390
    %6392 = vmatprep.mubr.bf16.mxu0 %v4104
    %6393 = vmatmul.mubr.bf16.gmra.mrb[0].mxu0 %v4103
    %v6394 = vpop.f32.mrb[0].mxu0
    %v6395 = vadd.f32 %v6202, %v6394
    %v6396 = vpop.f32.mrb[0].mxu0
    %v6397 = vadd.f32 %v6204, %v6396
    %v6398 = vpop.f32.mrb[0].mxu0
    %v6399 = vadd.f32 %v6206, %v6398
    %v6400 = vpop.f32.mrb[0].mxu0
    %v6401 = vadd.f32 %v6208, %v6400
    %6402 = vmatprep.mubr.bf16.mxu0 %v4110
    %6403 = vmatmul.mubr.bf16.gmra.mrb[0].mxu0 %v4109
    %v6404 = vpop.f32.mrb[0].mxu0
    %v6405 = vadd.f32 %v6212, %v6404
    %v6406 = vpop.f32.mrb[0].mxu0
    %v6407 = vadd.f32 %v6214, %v6406
    %v6408 = vpop.f32.mrb[0].mxu0
    %v6409 = vadd.f32 %v6216, %v6408
    %v6410 = vpop.f32.mrb[0].mxu0
    %v6411 = vadd.f32 %v6218, %v6410
    %6412 = vmatprep.mubr.bf16.mxu0 %v4116
    %6413 = vmatmul.mubr.bf16.gmra.mrb[0].mxu0 %v4115
    %v6414 = vpop.f32.mrb[0].mxu0
    %v6415 = vadd.f32 %v6222, %v6414
    %v6416 = vpop.f32.mrb[0].mxu0
    %v6417 = vadd.f32 %v6224, %v6416
    %v6418 = vpop.f32.mrb[0].mxu0
    %v6419 = vadd.f32 %v6226, %v6418
    %v6420 = vpop.f32.mrb[0].mxu0
    %v6421 = vadd.f32 %v6228, %v6420
    %6422 = vmatprep.mubr.bf16.mxu0 %v4122
    %6423 = vmatmul.mubr.bf16.gmra.mrb[0].mxu0 %v4121
    %v6424 = vpop.f32.mrb[0].mxu0
    %v6425 = vadd.f32 %v6232, %v6424
    %v6426 = vpop.f32.mrb[0].mxu0
    %v6427 = vadd.f32 %v6234, %v6426
    %v6428 = vpop.f32.mrb[0].mxu0
    %v6429 = vadd.f32 %v6236, %v6428
    %v6430 = vpop.f32.mrb[0].mxu0
    %v6431 = vadd.f32 %v6238, %v6430
    %6432 = vdwg.mxu0
    %v6433 = vmax.f32 %v5696, %v5698
    %v6434 = vmax.f32 %v5700, %v5702
    %v6435 = vmax.f32 %v5706, %v5708
    %v6436 = vmax.f32 %v5710, %v5712
    %v6437 = vmax.f32 %v5716, %v5718
    %v6438 = vmax.f32 %v5720, %v5722
    %v6439 = vmax.f32 %v5726, %v5728
    %v6440 = vmax.f32 %v5730, %v5732
    %v6441 = vmax.f32 %v5736, %v5738
    %v6442 = vmax.f32 %v5740, %v5742
    %v6443 = vmax.f32 %v5746, %v5748
    %v6444 = vmax.f32 %v5750, %v5752
    %v6445 = vmax.f32 %v5756, %v5758
    %v6446 = vmax.f32 %v5760, %v5762
    %v6447 = vmax.f32 %v5766, %v5768
    %v6448 = vmax.f32 %v5770, %v5772
    %v6449 = vmax.f32 %v5776, %v5778
    %v6450 = vmax.f32 %v5780, %v5782
    %v6451 = vmax.f32 %v5786, %v5788
    %v6452 = vmax.f32 %v5790, %v5792
    %v6453 = vmax.f32 %v5796, %v5798
    %v6454 = vmax.f32 %v5800, %v5802
    %v6455 = vmax.f32 %v5806, %v5808
    %v6456 = vmax.f32 %v5810, %v5812
    %v6457 = vmax.f32 %v5816, %v5818
    %v6458 = vmax.f32 %v5820, %v5822
    %v6459 = vmax.f32 %v5826, %v5828
    %v6460 = vmax.f32 %v5830, %v5832
    %v6461 = vmax.f32 %v5836, %v5838
    %v6462 = vmax.f32 %v5840, %v5842
    %v6463 = vmax.f32 %v5846, %v5848
    %v6464 = vmax.f32 %v5850, %v5852
    %v6465 = vmax.f32 %v6275, %v6277
    %v6466 = vmax.f32 %v6279, %v6281
    %v6467 = vmax.f32 %v6285, %v6287
    %v6468 = vmax.f32 %v6289, %v6291
    %v6469 = vmax.f32 %v6295, %v6297
    %v6470 = vmax.f32 %v6299, %v6301
    %v6471 = vmax.f32 %v6305, %v6307
    %v6472 = vmax.f32 %v6309, %v6311
    %v6473 = vmax.f32 %v6315, %v6317
    %v6474 = vmax.f32 %v6319, %v6321
    %v6475 = vmax.f32 %v6325, %v6327
    %v6476 = vmax.f32 %v6329, %v6331
    %v6477 = vmax.f32 %v6335, %v6337
    %v6478 = vmax.f32 %v6339, %v6341
    %v6479 = vmax.f32 %v6345, %v6347
    %v6480 = vmax.f32 %v6349, %v6351
    %v6481 = vmax.f32 %v6355, %v6357
    %v6482 = vmax.f32 %v6359, %v6361
    %v6483 = vmax.f32 %v6365, %v6367
    %v6484 = vmax.f32 %v6369, %v6371
    %v6485 = vmax.f32 %v6375, %v6377
    %v6486 = vmax.f32 %v6379, %v6381
    %v6487 = vmax.f32 %v6385, %v6387
    %v6488 = vmax.f32 %v6389, %v6391
    %v6489 = vmax.f32 %v6395, %v6397
    %v6490 = vmax.f32 %v6399, %v6401
    %v6491 = vmax.f32 %v6405, %v6407
    %v6492 = vmax.f32 %v6409, %v6411
    %v6493 = vmax.f32 %v6415, %v6417
    %v6494 = vmax.f32 %v6419, %v6421
    %v6495 = vmax.f32 %v6425, %v6427
    %v6496 = vmax.f32 %v6429, %v6431
    %v6497 = vmax.f32 %v6433, %v6465
    %v6498 = vmax.f32 %v6434, %v6466
    %v6499 = vmax.f32 %v6435, %v6467
    %v6500 = vmax.f32 %v6436, %v6468
    %v6501 = vmax.f32 %v6437, %v6469
    %v6502 = vmax.f32 %v6438, %v6470
    %v6503 = vmax.f32 %v6439, %v6471
    %v6504 = vmax.f32 %v6440, %v6472
    %v6505 = vmax.f32 %v6441, %v6473
    %v6506 = vmax.f32 %v6442, %v6474
    %v6507 = vmax.f32 %v6443, %v6475
    %v6508 = vmax.f32 %v6444, %v6476
    %v6509 = vmax.f32 %v6445, %v6477
    %v6510 = vmax.f32 %v6446, %v6478
    %v6511 = vmax.f32 %v6447, %v6479
    %v6512 = vmax.f32 %v6448, %v6480
    %v6513 = vmax.f32 %v6449, %v6481
    %v6514 = vmax.f32 %v6450, %v6482
    %v6515 = vmax.f32 %v6451, %v6483
    %v6516 = vmax.f32 %v6452, %v6484
    %v6517 = vmax.f32 %v6453, %v6485
    %v6518 = vmax.f32 %v6454, %v6486
    %v6519 = vmax.f32 %v6455, %v6487
    %v6520 = vmax.f32 %v6456, %v6488
    %v6521 = vmax.f32 %v6457, %v6489
    %v6522 = vmax.f32 %v6458, %v6490
    %v6523 = vmax.f32 %v6459, %v6491
    %v6524 = vmax.f32 %v6460, %v6492
    %v6525 = vmax.f32 %v6461, %v6493
    %v6526 = vmax.f32 %v6462, %v6494
    %v6527 = vmax.f32 %v6463, %v6495
    %v6528 = vmax.f32 %v6464, %v6496
    %v6529 = vld [vmem:[%s4] sm:$0x1]
    %v6531 = vlaneseq
    %v6532 = vshrl.u32 %v6531, 7
    %v6533 = vsub.s32 0, %v6532
    %v6534 = vrot.slane %v6529, %v6533
    %v6536 = vadd.f32 %v6497, %v6534
    %v6537 = vadd.f32 %v6498, %v6534
    %v6538 = vadd.f32 %v6499, %v6534
    %v6539 = vadd.f32 %v6500, %v6534
    %v6540 = vadd.f32 %v6501, %v6534
    %v6541 = vadd.f32 %v6502, %v6534
    %v6542 = vadd.f32 %v6503, %v6534
    %v6543 = vadd.f32 %v6504, %v6534
    %v6544 = vadd.f32 %v6505, %v6534
    %v6545 = vadd.f32 %v6506, %v6534
    %v6546 = vadd.f32 %v6507, %v6534
    %v6547 = vadd.f32 %v6508, %v6534
    %v6548 = vadd.f32 %v6509, %v6534
    %v6549 = vadd.f32 %v6510, %v6534
    %v6550 = vadd.f32 %v6511, %v6534
    %v6551 = vadd.f32 %v6512, %v6534
    %v6552 = vadd.f32 %v6513, %v6534
    %v6553 = vadd.f32 %v6514, %v6534
    %v6554 = vadd.f32 %v6515, %v6534
    %v6555 = vadd.f32 %v6516, %v6534
    %v6556 = vadd.f32 %v6517, %v6534
    %v6557 = vadd.f32 %v6518, %v6534
    %v6558 = vadd.f32 %v6519, %v6534
    %v6559 = vadd.f32 %v6520, %v6534
    %v6560 = vadd.f32 %v6521, %v6534
    %v6561 = vadd.f32 %v6522, %v6534
    %v6562 = vadd.f32 %v6523, %v6534
    %v6563 = vadd.f32 %v6524, %v6534
    %v6564 = vadd.f32 %v6525, %v6534
    %v6565 = vadd.f32 %v6526, %v6534
    %v6566 = vadd.f32 %v6527, %v6534
    %v6567 = vadd.f32 %v6528, %v6534
    %v6568 = vmax.f32 %v6536, 0.0
    %v6569 = vmax.f32 %v6537, 0.0
    %v6570 = vmax.f32 %v6538, 0.0
    %v6571 = vmax.f32 %v6539, 0.0
    %v6572 = vmax.f32 %v6540, 0.0
    %v6573 = vmax.f32 %v6541, 0.0
    %v6574 = vmax.f32 %v6542, 0.0
    %v6575 = vmax.f32 %v6543, 0.0
    %v6576 = vmax.f32 %v6544, 0.0
    %v6577 = vmax.f32 %v6545, 0.0
    %v6578 = vmax.f32 %v6546, 0.0
    %v6579 = vmax.f32 %v6547, 0.0
    %v6580 = vmax.f32 %v6548, 0.0
    %v6581 = vmax.f32 %v6549, 0.0
    %v6582 = vmax.f32 %v6550, 0.0
    %v6583 = vmax.f32 %v6551, 0.0
    %v6584 = vmax.f32 %v6552, 0.0
    %v6585 = vmax.f32 %v6553, 0.0
    %v6586 = vmax.f32 %v6554, 0.0
    %v6587 = vmax.f32 %v6555, 0.0
    %v6588 = vmax.f32 %v6556, 0.0
    %v6589 = vmax.f32 %v6557, 0.0
    %v6590 = vmax.f32 %v6558, 0.0
    %v6591 = vmax.f32 %v6559, 0.0
    %v6592 = vmax.f32 %v6560, 0.0
    %v6593 = vmax.f32 %v6561, 0.0
    %v6594 = vmax.f32 %v6562, 0.0
    %v6595 = vmax.f32 %v6563, 0.0
    %v6596 = vmax.f32 %v6564, 0.0
    %v6597 = vmax.f32 %v6565, 0.0
    %v6598 = vmax.f32 %v6566, 0.0
    %v6599 = vmax.f32 %v6567, 0.0
    %6600 = vst [vmem:[#allocation3] sm:$0xff] %v6568
    %6601 = vst [vmem:[#allocation3 + $0x8] sm:$0xff] %v6569
    %6602 = vst [vmem:[#allocation3 + $0x10] sm:$0xff] %v6570
    %6603 = vst [vmem:[#allocation3 + $0x18] sm:$0xff] %v6571
    %6604 = vst [vmem:[#allocation3 + $0x20] sm:$0xff] %v6572
    %6605 = vst [vmem:[#allocation3 + $0x28] sm:$0xff] %v6573
    %6606 = vst [vmem:[#allocation3 + $0x30] sm:$0xff] %v6574
    %6607 = vst [vmem:[#allocation3 + $0x38] sm:$0xff] %v6575
    %6608 = vst [vmem:[#allocation3 + $0x40] sm:$0xff] %v6576
    %6609 = vst [vmem:[#allocation3 + $0x48] sm:$0xff] %v6577
    %6610 = vst [vmem:[#allocation3 + $0x50] sm:$0xff] %v6578
    %6611 = vst [vmem:[#allocation3 + $0x58] sm:$0xff] %v6579
    %6612 = vst [vmem:[#allocation3 + $0x60] sm:$0xff] %v6580
    %6613 = vst [vmem:[#allocation3 + $0x68] sm:$0xff] %v6581
    %6614 = vst [vmem:[#allocation3 + $0x70] sm:$0xff] %v6582
    %6615 = vst [vmem:[#allocation3 + $0x78] sm:$0xff] %v6583
    %6616 = vst [vmem:[#allocation3 + $0x80] sm:$0xff] %v6584
    %6617 = vst [vmem:[#allocation3 + $0x88] sm:$0xff] %v6585
    %6618 = vst [vmem:[#allocation3 + $0x90] sm:$0xff] %v6586
    %6619 = vst [vmem:[#allocation3 + $0x98] sm:$0xff] %v6587
    %6620 = vst [vmem:[#allocation3 + $0xa0] sm:$0xff] %v6588
    %6621 = vst [vmem:[#allocation3 + $0xa8] sm:$0xff] %v6589
    %6622 = vst [vmem:[#allocation3 + $0xb0] sm:$0xff] %v6590
    %6623 = vst [vmem:[#allocation3 + $0xb8] sm:$0xff] %v6591
    %6624 = vst [vmem:[#allocation3 + $0xc0] sm:$0xff] %v6592
    %6625 = vst [vmem:[#allocation3 + $0xc8] sm:$0xff] %v6593
    %6626 = vst [vmem:[#allocation3 + $0xd0] sm:$0xff] %v6594
    %6627 = vst [vmem:[#allocation3 + $0xd8] sm:$0xff] %v6595
    %6628 = vst [vmem:[#allocation3 + $0xe0] sm:$0xff] %v6596
    %6629 = vst [vmem:[#allocation3 + $0xe8] sm:$0xff] %v6597
    %6630 = vst [vmem:[#allocation3 + $0xf0] sm:$0xff] %v6598
    %6631 = vst [vmem:[#allocation3 + $0xf8] sm:$0xff] %v6599
    %v6632 = vld [vmem:[#allocation3] ss:$8 sm:$0xf]
    %v6633 = vld [vmem:[#allocation3] ss:$8 sm:$0xf0]
    %v6634 = vor.u32 %v6632, %v6633
    %s6635 = scalar_lea.vmem [#allocation3], 64
    %v6636 = vld [vmem:[%s6635] ss:$8 sm:$0xf]
    %v6637 = vld [vmem:[%s6635] ss:$8 sm:$0xf0]
    %v6638 = vor.u32 %v6636, %v6637
    %s6639 = scalar_lea.vmem [#allocation3], 128
    %v6640 = vld [vmem:[%s6639] ss:$8 sm:$0xf]
    %v6641 = vld [vmem:[%s6639] ss:$8 sm:$0xf0]
    %v6642 = vor.u32 %v6640, %v6641
    %s6643 = scalar_lea.vmem [#allocation3], 192
    %v6644 = vld [vmem:[%s6643] ss:$8 sm:$0xf]
    %v6645 = vld [vmem:[%s6643] ss:$8 sm:$0xf0]
    %v6646 = vor.u32 %v6644, %v6645
    %s6647 = scalar_lea.vmem [#allocation3], 1
    %v6648 = vld [vmem:[%s6647] ss:$8 sm:$0xf]
    %v6649 = vld [vmem:[%s6647] ss:$8 sm:$0xf0]
    %v6650 = vor.u32 %v6648, %v6649
    %s6651 = scalar_lea.vmem [#allocation3], 65
    %v6652 = vld [vmem:[%s6651] ss:$8 sm:$0xf]
    %v6653 = vld [vmem:[%s6651] ss:$8 sm:$0xf0]
    %v6654 = vor.u32 %v6652, %v6653
    %s6655 = scalar_lea.vmem [#allocation3], 129
    %v6656 = vld [vmem:[%s6655] ss:$8 sm:$0xf]
    %v6657 = vld [vmem:[%s6655] ss:$8 sm:$0xf0]
    %v6658 = vor.u32 %v6656, %v6657
    %s6659 = scalar_lea.vmem [#allocation3], 193
    %v6660 = vld [vmem:[%s6659] ss:$8 sm:$0xf]
    %v6661 = vld [vmem:[%s6659] ss:$8 sm:$0xf0]
    %v6662 = vor.u32 %v6660, %v6661
    %s6663 = scalar_lea.vmem [#allocation3], 2
    %v6664 = vld [vmem:[%s6663] ss:$8 sm:$0xf]
    %v6665 = vld [vmem:[%s6663] ss:$8 sm:$0xf0]
    %v6666 = vor.u32 %v6664, %v6665
    %s6667 = scalar_lea.vmem [#allocation3], 66
    %v6668 = vld [vmem:[%s6667] ss:$8 sm:$0xf]
    %v6669 = vld [vmem:[%s6667] ss:$8 sm:$0xf0]
    %v6670 = vor.u32 %v6668, %v6669
    %s6671 = scalar_lea.vmem [#allocation3], 130
    %v6672 = vld [vmem:[%s6671] ss:$8 sm:$0xf]
    %v6673 = vld [vmem:[%s6671] ss:$8 sm:$0xf0]
    %v6674 = vor.u32 %v6672, %v6673
    %s6675 = scalar_lea.vmem [#allocation3], 194
    %v6676 = vld [vmem:[%s6675] ss:$8 sm:$0xf]
    %v6677 = vld [vmem:[%s6675] ss:$8 sm:$0xf0]
    %v6678 = vor.u32 %v6676, %v6677
    %s6679 = scalar_lea.vmem [#allocation3], 3
    %v6680 = vld [vmem:[%s6679] ss:$8 sm:$0xf]
    %v6681 = vld [vmem:[%s6679] ss:$8 sm:$0xf0]
    %v6682 = vor.u32 %v6680, %v6681
    %s6683 = scalar_lea.vmem [#allocation3], 67
    %v6684 = vld [vmem:[%s6683] ss:$8 sm:$0xf]
    %v6685 = vld [vmem:[%s6683] ss:$8 sm:$0xf0]
    %v6686 = vor.u32 %v6684, %v6685
    %s6687 = scalar_lea.vmem [#allocation3], 131
    %v6688 = vld [vmem:[%s6687] ss:$8 sm:$0xf]
    %v6689 = vld [vmem:[%s6687] ss:$8 sm:$0xf0]
    %v6690 = vor.u32 %v6688, %v6689
    %s6691 = scalar_lea.vmem [#allocation3], 195
    %v6692 = vld [vmem:[%s6691] ss:$8 sm:$0xf]
    %v6693 = vld [vmem:[%s6691] ss:$8 sm:$0xf0]
    %v6694 = vor.u32 %v6692, %v6693
    %v6695 = vpack.c.bf16 %v6638, %v6634
    %v6696 = vpack.c.bf16 %v6654, %v6650
    %v6697 = vpack.c.bf16 %v6670, %v6666
    %v6698 = vpack.c.bf16 %v6686, %v6682
    %v6699 = vpack.c.bf16 %v6646, %v6642
    %v6700 = vpack.c.bf16 %v6662, %v6658
    %v6701 = vpack.c.bf16 %v6678, %v6674
    %v6702 = vpack.c.bf16 %v6694, %v6690
    %v6703 = vld [vmem:[%s5] sm:$0xf]
    %v6704 = vld [vmem:[%s5 + $0x4] sm:$0xf]
    %v6705 = vld [vmem:[%s5 + $0x8] sm:$0xf]
    %v6706 = vld [vmem:[%s5 + $0xc] sm:$0xf]
    %v6707 = vld [vmem:[%s5 + $0x10] sm:$0xf]
    %v6708 = vld [vmem:[%s5 + $0x14] sm:$0xf]
    %v6709 = vld [vmem:[%s5 + $0x18] sm:$0xf]
    %v6710 = vld [vmem:[%s5 + $0x1c] sm:$0xf]
    %v6711 = vld [vmem:[%s5 + $0x20] sm:$0xf]
    %v6712 = vld [vmem:[%s5 + $0x24] sm:$0xf]
    %v6713 = vld [vmem:[%s5 + $0x28] sm:$0xf]
    %v6714 = vld [vmem:[%s5 + $0x2c] sm:$0xf]
    %v6715 = vld [vmem:[%s5 + $0x30] sm:$0xf]
    %v6716 = vld [vmem:[%s5 + $0x34] sm:$0xf]
    %v6717 = vld [vmem:[%s5 + $0x38] sm:$0xf]
    %v6718 = vld [vmem:[%s5 + $0x3c] sm:$0xf]
    %v6719 = vld [vmem:[%s5 + $0x40] sm:$0xf]
    %v6720 = vld [vmem:[%s5 + $0x44] sm:$0xf]
    %v6721 = vld [vmem:[%s5 + $0x48] sm:$0xf]
    %v6722 = vld [vmem:[%s5 + $0x4c] sm:$0xf]
    %v6723 = vld [vmem:[%s5 + $0x50] sm:$0xf]
    %v6724 = vld [vmem:[%s5 + $0x54] sm:$0xf]
    %v6725 = vld [vmem:[%s5 + $0x58] sm:$0xf]
    %v6726 = vld [vmem:[%s5 + $0x5c] sm:$0xf]
    %v6727 = vld [vmem:[%s5 + $0x60] sm:$0xf]
    %v6728 = vld [vmem:[%s5 + $0x64] sm:$0xf]
    %v6729 = vld [vmem:[%s5 + $0x68] sm:$0xf]
    %v6730 = vld [vmem:[%s5 + $0x6c] sm:$0xf]
    %v6731 = vld [vmem:[%s5 + $0x70] sm:$0xf]
    %v6732 = vld [vmem:[%s5 + $0x74] sm:$0xf]
    %v6733 = vld [vmem:[%s5 + $0x78] sm:$0xf]
    %v6734 = vld [vmem:[%s5 + $0x7c] sm:$0xf]
    %v6735 = vld [vmem:[%s5 + $0x80] sm:$0xf]
    %v6736 = vld [vmem:[%s5 + $0x84] sm:$0xf]
    %v6737 = vld [vmem:[%s5 + $0x88] sm:$0xf]
    %v6738 = vld [vmem:[%s5 + $0x8c] sm:$0xf]
    %v6739 = vld [vmem:[%s5 + $0x90] sm:$0xf]
    %v6740 = vld [vmem:[%s5 + $0x94] sm:$0xf]
    %v6741 = vld [vmem:[%s5 + $0x98] sm:$0xf]
    %v6742 = vld [vmem:[%s5 + $0x9c] sm:$0xf]
    %v6743 = vld [vmem:[%s5 + $0xa0] sm:$0xf]
    %v6744 = vld [vmem:[%s5 + $0xa4] sm:$0xf]
    %v6745 = vld [vmem:[%s5 + $0xa8] sm:$0xf]
    %v6746 = vld [vmem:[%s5 + $0xac] sm:$0xf]
    %v6747 = vld [vmem:[%s5 + $0xb0] sm:$0xf]
    %v6748 = vld [vmem:[%s5 + $0xb4] sm:$0xf]
    %v6749 = vld [vmem:[%s5 + $0xb8] sm:$0xf]
    %v6750 = vld [vmem:[%s5 + $0xbc] sm:$0xf]
    %v6751 = vld [vmem:[%s5 + $0xc0] sm:$0xf]
    %v6752 = vld [vmem:[%s5 + $0xc4] sm:$0xf]
    %v6753 = vld [vmem:[%s5 + $0xc8] sm:$0xf]
    %v6754 = vld [vmem:[%s5 + $0xcc] sm:$0xf]
    %v6755 = vld [vmem:[%s5 + $0xd0] sm:$0xf]
    %v6756 = vld [vmem:[%s5 + $0xd4] sm:$0xf]
    %v6757 = vld [vmem:[%s5 + $0xd8] sm:$0xf]
    %v6758 = vld [vmem:[%s5 + $0xdc] sm:$0xf]
    %v6759 = vld [vmem:[%s5 + $0xe0] sm:$0xf]
    %v6760 = vld [vmem:[%s5 + $0xe4] sm:$0xf]
    %v6761 = vld [vmem:[%s5 + $0xe8] sm:$0xf]
    %v6762 = vld [vmem:[%s5 + $0xec] sm:$0xf]
    %v6763 = vld [vmem:[%s5 + $0xf0] sm:$0xf]
    %v6764 = vld [vmem:[%s5 + $0xf4] sm:$0xf]
    %v6765 = vld [vmem:[%s5 + $0xf8] sm:$0xf]
    %v6766 = vld [vmem:[%s5 + $0xfc] sm:$0xf]
    %v6767 = vld [vmem:[%s6] sm:$0x1]
    %v6769 = vlaneseq
    %v6770 = vshrl.u32 %v6769, 7
    %v6771 = vsub.s32 0, %v6770
    %v6772 = vrot.slane %v6767, %v6771
    %v6838 = vunpack.c.l.b16 %v6703
    %v6839 = vunpack.c.l.b16 %v6704
    %v6840 = vunpack.c.l.b16 %v6705
    %v6841 = vunpack.c.l.b16 %v6706
    %v6842 = vunpack.c.l.b16 %v6707
    %v6843 = vunpack.c.l.b16 %v6708
    %v6844 = vunpack.c.l.b16 %v6709
    %v6845 = vunpack.c.l.b16 %v6710
    %v6846 = vunpack.c.l.b16 %v6711
    %v6847 = vunpack.c.l.b16 %v6712
    %v6848 = vunpack.c.l.b16 %v6713
    %v6849 = vunpack.c.l.b16 %v6714
    %v6850 = vunpack.c.l.b16 %v6715
    %v6851 = vunpack.c.l.b16 %v6716
    %v6852 = vunpack.c.l.b16 %v6717
    %v6853 = vunpack.c.l.b16 %v6718
    %v6854 = vunpack.c.l.b16 %v6719
    %v6855 = vunpack.c.l.b16 %v6720
    %v6856 = vunpack.c.l.b16 %v6721
    %v6857 = vunpack.c.l.b16 %v6722
    %v6858 = vunpack.c.l.b16 %v6723
    %v6859 = vunpack.c.l.b16 %v6724
    %v6860 = vunpack.c.l.b16 %v6725
    %v6861 = vunpack.c.l.b16 %v6726
    %v6862 = vunpack.c.l.b16 %v6727
    %v6863 = vunpack.c.l.b16 %v6728
    %v6864 = vunpack.c.l.b16 %v6729
    %v6865 = vunpack.c.l.b16 %v6730
    %v6866 = vunpack.c.l.b16 %v6731
    %v6867 = vunpack.c.l.b16 %v6732
    %v6868 = vunpack.c.l.b16 %v6733
    %v6869 = vunpack.c.l.b16 %v6734
    %v6870 = vunpack.c.l.b16 %v6735
    %v6871 = vunpack.c.l.b16 %v6736
    %v6872 = vunpack.c.l.b16 %v6737
    %v6873 = vunpack.c.l.b16 %v6738
    %v6874 = vunpack.c.l.b16 %v6739
    %v6875 = vunpack.c.l.b16 %v6740
    %v6876 = vunpack.c.l.b16 %v6741
    %v6877 = vunpack.c.l.b16 %v6742
    %v6878 = vunpack.c.l.b16 %v6743
    %v6879 = vunpack.c.l.b16 %v6744
    %v6880 = vunpack.c.l.b16 %v6745
    %v6881 = vunpack.c.l.b16 %v6746
    %v6882 = vunpack.c.l.b16 %v6747
    %v6883 = vunpack.c.l.b16 %v6748
    %v6884 = vunpack.c.l.b16 %v6749
    %v6885 = vunpack.c.l.b16 %v6750
    %v6886 = vunpack.c.l.b16 %v6751
    %v6887 = vunpack.c.l.b16 %v6752
    %v6888 = vunpack.c.l.b16 %v6753
    %v6889 = vunpack.c.l.b16 %v6754
    %v6890 = vunpack.c.l.b16 %v6755
    %v6891 = vunpack.c.l.b16 %v6756
    %v6892 = vunpack.c.l.b16 %v6757
    %v6893 = vunpack.c.l.b16 %v6758
    %v6894 = vunpack.c.l.b16 %v6759
    %v6895 = vunpack.c.l.b16 %v6760
    %v6896 = vunpack.c.l.b16 %v6761
    %v6897 = vunpack.c.l.b16 %v6762
    %v6898 = vunpack.c.l.b16 %v6763
    %v6899 = vunpack.c.l.b16 %v6764
    %v6900 = vunpack.c.l.b16 %v6765
    %v6901 = vunpack.c.l.b16 %v6766
    %v6902 = vpack.c.b16 %v6839, %v6838
    %v6903 = vpack.c.b16 %v6841, %v6840
    %v6904 = vpack.c.b16 %v6843, %v6842
    %v6905 = vpack.c.b16 %v6845, %v6844
    %v6906 = vpack.c.b16 %v6847, %v6846
    %v6907 = vpack.c.b16 %v6849, %v6848
    %v6908 = vpack.c.b16 %v6851, %v6850
    %v6909 = vpack.c.b16 %v6853, %v6852
    %v6910 = vpack.c.b16 %v6855, %v6854
    %v6911 = vpack.c.b16 %v6857, %v6856
    %v6912 = vpack.c.b16 %v6859, %v6858
    %v6913 = vpack.c.b16 %v6861, %v6860
    %v6914 = vpack.c.b16 %v6863, %v6862
    %v6915 = vpack.c.b16 %v6865, %v6864
    %v6916 = vpack.c.b16 %v6867, %v6866
    %v6917 = vpack.c.b16 %v6869, %v6868
    %v6918 = vpack.c.b16 %v6871, %v6870
    %v6919 = vpack.c.b16 %v6873, %v6872
    %v6920 = vpack.c.b16 %v6875, %v6874
    %v6921 = vpack.c.b16 %v6877, %v6876
    %v6922 = vpack.c.b16 %v6879, %v6878
    %v6923 = vpack.c.b16 %v6881, %v6880
    %v6924 = vpack.c.b16 %v6883, %v6882
    %v6925 = vpack.c.b16 %v6885, %v6884
    %v6926 = vpack.c.b16 %v6887, %v6886
    %v6927 = vpack.c.b16 %v6889, %v6888
    %v6928 = vpack.c.b16 %v6891, %v6890
    %v6929 = vpack.c.b16 %v6893, %v6892
    %v6930 = vpack.c.b16 %v6895, %v6894
    %v6931 = vpack.c.b16 %v6897, %v6896
    %v6932 = vpack.c.b16 %v6899, %v6898
    %v6933 = vpack.c.b16 %v6901, %v6900
    %6966 = vmatprep.subr.bf16.mxu0 0
    %6967 = vmatpush1.bf16.msra.mxu0 %v6902
    %6968 = vmatprep.subr.bf16.mxu0 0
    %6969 = vmatpush1.bf16.msra.mxu0 %v6903
    %6970 = vmatprep.subr.bf16.mxu0 0
    %6971 = vmatpush1.bf16.msra.mxu0 %v6904
    %6972 = vmatprep.subr.bf16.mxu0 0
    %6973 = vmatpush1.bf16.msra.mxu0 %v6905
    %6974 = vmatprep.subr.bf16.mxu0 0
    %6975 = vmatpush1.bf16.msra.mxu0 %v6906
    %6976 = vmatprep.subr.bf16.mxu0 0
    %6977 = vmatpush1.bf16.msra.mxu0 %v6907
    %6978 = vmatprep.subr.bf16.mxu0 0
    %6979 = vmatpush1.bf16.msra.mxu0 %v6908
    %6980 = vmatprep.subr.bf16.mxu0 0
    %6981 = vmatpush1.bf16.msra.mxu0 %v6909
    %6982 = vmatprep.subr.bf16.mxu0 0
    %6983 = vmatpush1.bf16.msra.mxu0 %v6910
    %6984 = vmatprep.subr.bf16.mxu0 0
    %6985 = vmatpush1.bf16.msra.mxu0 %v6911
    %6986 = vmatprep.subr.bf16.mxu0 0
    %6987 = vmatpush1.bf16.msra.mxu0 %v6912
    %6988 = vmatprep.subr.bf16.mxu0 0
    %6989 = vmatpush1.bf16.msra.mxu0 %v6913
    %6990 = vmatprep.subr.bf16.mxu0 0
    %6991 = vmatpush1.bf16.msra.mxu0 %v6914
    %6992 = vmatprep.subr.bf16.mxu0 0
    %6993 = vmatpush1.bf16.msra.mxu0 %v6915
    %6994 = vmatprep.subr.bf16.mxu0 0
    %6995 = vmatpush1.bf16.msra.mxu0 %v6916
    %6996 = vmatprep.subr.bf16.mxu0 0
    %6997 = vmatpush1.bf16.msra.mxu0 %v6917
    %6998 = vmatprep.mubr.bf16.mxu0 %v6696
    %6999 = vmatmul.mubr.bf16.gmra.mrb[0].mxu0 %v6695
    %v7000 = vpop.f32.mrb[0].mxu0
    %v7001 = vadd.f32 %v6772, %v7000
    %v7002 = vpop.f32.mrb[0].mxu0
    %v7003 = vpop.f32.mrb[0].mxu0
    %v7004 = vadd.f32 %v6772, %v7003
    %v7005 = vpop.f32.mrb[0].mxu0
    %7006 = vmatprep.mubr.bf16.mxu0 %v6700
    %7007 = vmatmul.mubr.bf16.gmra.mrb[0].mxu0 %v6699
    %v7008 = vpop.f32.mrb[0].mxu0
    %v7009 = vadd.f32 %v6772, %v7008
    %v7010 = vpop.f32.mrb[0].mxu0
    %v7011 = vpop.f32.mrb[0].mxu0
    %v7012 = vadd.f32 %v6772, %v7011
    %v7013 = vpop.f32.mrb[0].mxu0
    %7014 = vdwg.mxu0
    %7015 = vmatprep.subr.bf16.mxu0 0
    %7016 = vmatpush1.bf16.msra.mxu0 %v6918
    %7017 = vmatprep.subr.bf16.mxu0 0
    %7018 = vmatpush1.bf16.msra.mxu0 %v6919
    %7019 = vmatprep.subr.bf16.mxu0 0
    %7020 = vmatpush1.bf16.msra.mxu0 %v6920
    %7021 = vmatprep.subr.bf16.mxu0 0
    %7022 = vmatpush1.bf16.msra.mxu0 %v6921
    %7023 = vmatprep.subr.bf16.mxu0 0
    %7024 = vmatpush1.bf16.msra.mxu0 %v6922
    %7025 = vmatprep.subr.bf16.mxu0 0
    %7026 = vmatpush1.bf16.msra.mxu0 %v6923
    %7027 = vmatprep.subr.bf16.mxu0 0
    %7028 = vmatpush1.bf16.msra.mxu0 %v6924
    %7029 = vmatprep.subr.bf16.mxu0 0
    %7030 = vmatpush1.bf16.msra.mxu0 %v6925
    %7031 = vmatprep.subr.bf16.mxu0 0
    %7032 = vmatpush1.bf16.msra.mxu0 %v6926
    %7033 = vmatprep.subr.bf16.mxu0 0
    %7034 = vmatpush1.bf16.msra.mxu0 %v6927
    %7035 = vmatprep.subr.bf16.mxu0 0
    %7036 = vmatpush1.bf16.msra.mxu0 %v6928
    %7037 = vmatprep.subr.bf16.mxu0 0
    %7038 = vmatpush1.bf16.msra.mxu0 %v6929
    %7039 = vmatprep.subr.bf16.mxu0 0
    %7040 = vmatpush1.bf16.msra.mxu0 %v6930
    %7041 = vmatprep.subr.bf16.mxu0 0
    %7042 = vmatpush1.bf16.msra.mxu0 %v6931
    %7043 = vmatprep.subr.bf16.mxu0 0
    %7044 = vmatpush1.bf16.msra.mxu0 %v6932
    %7045 = vmatprep.subr.bf16.mxu0 0
    %7046 = vmatpush1.bf16.msra.mxu0 %v6933
    %7047 = vmatprep.mubr.bf16.mxu0 %v6698
    %7048 = vmatmul.mubr.bf16.gmra.mrb[0].mxu0 %v6697
    %v7049 = vpop.f32.mrb[0].mxu0
    %v7050 = vadd.f32 %v7001, %v7049
    %v7051 = vpop.f32.mrb[0].mxu0
    %v7052 = vpop.f32.mrb[0].mxu0
    %v7053 = vadd.f32 %v7004, %v7052
    %v7054 = vpop.f32.mrb[0].mxu0
    %7055 = vmatprep.mubr.bf16.mxu0 %v6702
    %7056 = vmatmul.mubr.bf16.gmra.mrb[0].mxu0 %v6701
    %v7057 = vpop.f32.mrb[0].mxu0
    %v7058 = vadd.f32 %v7009, %v7057
    %v7059 = vpop.f32.mrb[0].mxu0
    %v7060 = vpop.f32.mrb[0].mxu0
    %v7061 = vadd.f32 %v7012, %v7060
    %v7062 = vpop.f32.mrb[0].mxu0
    %7063 = vdwg.mxu0
    %v7064 = vmax.f32 %v7050, 0.0
    %v7065 = vmax.f32 %v7053, 0.0
    %v7066 = vmax.f32 %v7058, 0.0
    %v7067 = vmax.f32 %v7061, 0.0
    %v7068 = vpack.c.bf16 %v7065, %v7064
    %v7069 = vpack.c.bf16 %v7067, %v7066
    %v7070 = vld [vmem:[%s7] sm:$0xf]
    %v7071 = vld [vmem:[%s7 + $0x4] sm:$0xf]
    %v7072 = vld [vmem:[%s7 + $0x8] sm:$0xf]
    %v7073 = vld [vmem:[%s7 + $0xc] sm:$0xf]
    %v7074 = vld [vmem:[%s7 + $0x10] sm:$0xf]
    %v7075 = vld [vmem:[%s7 + $0x14] sm:$0xf]
    %v7076 = vld [vmem:[%s7 + $0x18] sm:$0xf]
    %v7077 = vld [vmem:[%s7 + $0x1c] sm:$0xf]
    %v7078 = vld [vmem:[%s8] sm:$0x1]
    %v7080 = vlaneseq
    %v7081 = vshrl.u32 %v7080, 7
    %v7082 = vsub.s32 0, %v7081
    %v7083 = vrot.slane %v7078, %v7082
    %v7093 = vunpack.c.l.b16 %v7070
    %v7094 = vunpack.c.l.b16 %v7071
    %v7095 = vunpack.c.l.b16 %v7072
    %v7096 = vunpack.c.l.b16 %v7073
    %v7097 = vunpack.c.l.b16 %v7074
    %v7098 = vunpack.c.l.b16 %v7075
    %v7099 = vunpack.c.l.b16 %v7076
    %v7100 = vunpack.c.l.b16 %v7077
    %v7101 = vpack.c.b16 %v7094, %v7093
    %v7102 = vpack.c.b16 %v7096, %v7095
    %v7103 = vpack.c.b16 %v7098, %v7097
    %v7104 = vpack.c.b16 %v7100, %v7099
    %v7110 = vsel %vm1903, %v7068, 0
    %v7113 = vsel %vm1903, %v7069, 0
    %7115 = vmatprep.subr.bf16.mxu0 0
    %7116 = vmatpush1.bf16.msra.mxu0 %v7101
    %7117 = vmatprep.subr.bf16.mxu0 0
    %7118 = vmatpush1.bf16.msra.mxu0 %v7102
    %7119 = vmatprep.subr.bf16.mxu0 0
    %7120 = vmatpush1.bf16.msra.mxu0 %v7103
    %7121 = vmatprep.subr.bf16.mxu0 0
    %7122 = vmatpush1.bf16.msra.mxu0 %v7104
    %7123 = vmatprep.subr.bf16.mxu0 0
    %7124 = vmatpush1.bf16.msra.mxu0 0
    %7125 = vmatprep.subr.bf16.mxu0 0
    %7126 = vmatpush1.bf16.msra.mxu0 0
    %7127 = vmatprep.subr.bf16.mxu0 0
    %7128 = vmatpush1.bf16.msra.mxu0 0
    %7129 = vmatprep.subr.bf16.mxu0 0
    %7130 = vmatpush1.bf16.msra.mxu0 0
    %7131 = vmatprep.subr.bf16.mxu0 0
    %7132 = vmatpush1.bf16.msra.mxu0 0
    %7133 = vmatprep.subr.bf16.mxu0 0
    %7134 = vmatpush1.bf16.msra.mxu0 0
    %7135 = vmatprep.subr.bf16.mxu0 0
    %7136 = vmatpush1.bf16.msra.mxu0 0
    %7137 = vmatprep.subr.bf16.mxu0 0
    %7138 = vmatpush1.bf16.msra.mxu0 0
    %7139 = vmatprep.subr.bf16.mxu0 0
    %7140 = vmatpush1.bf16.msra.mxu0 0
    %7141 = vmatprep.subr.bf16.mxu0 0
    %7142 = vmatpush1.bf16.msra.mxu0 0
    %7143 = vmatprep.subr.bf16.mxu0 0
    %7144 = vmatpush1.bf16.msra.mxu0 0
    %7145 = vmatprep.subr.bf16.mxu0 0
    %7146 = vmatpush1.bf16.msra.mxu0 0
    %7147 = vmatprep.mubr.bf16.mxu0 0
    %7148 = vmatmul.mubr.bf16.gmra.mrb[0].mxu0 %v7110
    %v7149 = vpop.f32.mrb[0].mxu0
    %v7150 = vadd.f32 %v7083, %v7149
    %v7151 = vpop.f32.mrb[0].mxu0
    %v7152 = vpop.f32.mrb[0].mxu0
    %v7153 = vadd.f32 %v7083, %v7152
    %v7154 = vpop.f32.mrb[0].mxu0
    %7155 = vmatprep.mubr.bf16.mxu0 0
    %7156 = vmatmul.mubr.bf16.gmra.mrb[0].mxu0 %v7113
    %v7157 = vpop.f32.mrb[0].mxu0
    %v7158 = vadd.f32 %v7083, %v7157
    %v7159 = vpop.f32.mrb[0].mxu0
    %v7160 = vpop.f32.mrb[0].mxu0
    %v7161 = vadd.f32 %v7083, %v7160
    %v7162 = vpop.f32.mrb[0].mxu0
    %7163 = vdwg.mxu0
    %7164 = vmax.xlane.f32.xlu0 %v7150
    %v7165 = vpop.xlane.xlu0 %7164
    %7166 = vmax.xlane.f32.xlu0 %v7153
    %v7167 = vpop.xlane.xlu0 %7166
    %7168 = vmax.xlane.f32.xlu0 %v7158
    %v7169 = vpop.xlane.xlu0 %7168
    %7170 = vmax.xlane.f32.xlu0 %v7161
    %v7171 = vpop.xlane.xlu0 %7170
    %v7172 = vsub.f32 %v7150, %v7165
    %v7173 = vsub.f32 %v7153, %v7167
    %v7174 = vsub.f32 %v7158, %v7169
    %v7175 = vsub.f32 %v7161, %v7171
    %v7176 = vmul.f32 %v7172, 1.442695
    %v7177 = vpow.pop %v7176
    %v7178 = vmul.f32 %v7173, 1.442695
    %v7179 = vpow.pop %v7178
    %v7180 = vmul.f32 %v7174, 1.442695
    %v7181 = vpow.pop %v7180
    %v7182 = vmul.f32 %v7175, 1.442695
    %v7183 = vpow.pop %v7182
    %7184 = vadd.xlane.f32.xlu0 %v7177
    %v7185 = vpop.xlane.xlu0 %7184
    %7186 = vadd.xlane.f32.xlu0 %v7179
    %v7187 = vpop.xlane.xlu0 %7186
    %7188 = vadd.xlane.f32.xlu0 %v7181
    %v7189 = vpop.xlane.xlu0 %7188
    %7190 = vadd.xlane.f32.xlu0 %v7183
    %v7191 = vpop.xlane.xlu0 %7190
    %v7192 = vlog2.pop %v7185
    %v7193 = vmul.f32 %v7192, 0.6931472
    %v7194 = vlog2.pop %v7187
    %v7195 = vmul.f32 %v7194, 0.6931472
    %v7196 = vlog2.pop %v7189
    %v7197 = vmul.f32 %v7196, 0.6931472
    %v7198 = vlog2.pop %v7191
    %v7199 = vmul.f32 %v7198, 0.6931472
    %v7200 = vadd.f32 %v7193, %v7165
    %v7201 = vadd.f32 %v7195, %v7167
    %v7202 = vadd.f32 %v7197, %v7169
    %v7203 = vadd.f32 %v7199, %v7171
    %v7204 = vsub.f32 %v7150, %v7200
    %v7205 = vsub.f32 %v7153, %v7201
    %v7206 = vsub.f32 %v7158, %v7202
    %v7207 = vsub.f32 %v7161, %v7203
    %7208 = vst [vmem:[%s9] sm:$0xff] %v7204
    %7209 = vst [vmem:[%s9 + $0x8] sm:$0xff] %v7205
    %7210 = vst [vmem:[%s9 + $0x10] sm:$0xff] %v7206
    %7211 = vst [vmem:[%s9 + $0x18] sm:$0xff] %v7207
    // Predicated region
    $region42: #{cnn_emnist_forward.1} parent=1 // pred_check
      _
    $region43: #{cnn_emnist_forward.1} parent=1 // pred_check_branch
      %7213 = sbr.rel (0) target = $region45
    $region44: #{cnn_emnist_forward.1} parent=1 // pred_region
      _
    $region45: #{cnn_emnist_forward.1} parent=1 // pred_fallthru
      _
    // Predicated region
    $region46: #{cnn_emnist_forward.1} parent=1 // pred_check
      _
    $region47: #{cnn_emnist_forward.1} parent=1 // pred_check_branch
      %7215 = sbr.rel (0) target = $region49
    $region48: #{cnn_emnist_forward.1} parent=1 // pred_region
      _
    $region49: #{cnn_emnist_forward.1} parent=1 // pred_fallthru
      _
    %7216 = vsyncpa [#allocation5], 1

</llo_original>
